<compile_context>
chip_gen: v6e
topology: v6e:2x2x1
jax: 0.10.0
libtpu: 0.0.40
codegen_flags: <defaults>
</compile_context>

<pallas_src>
import math

import numpy as np
import jax
import jax.numpy as jnp
from jax import lax
from jax.experimental import pallas as pl
from jax.experimental.pallas import tpu as pltpu

# ----- module-consistent config (ConfigParams) --------------------------------
EMB_DIM = 256          # config.emb_dim / hidden_size
INTERMEDIATE = 512     # config.intermediate_size
N_HEADS = 4            # config.num_attention_heads
HEAD_DIM = EMB_DIM // N_HEADS
LN_EPS = 1e-6          # config.layer_norm_eps
BATCH = 4
T_DEC = 16             # decoder sequence length
T_ENC = 32             # encoder sequence length

NEG_INF = -1e30        # large finite negative (safe additive mask; no fully-masked rows here)

# row indices inside the packed (15, C) bias / LayerNorm vector table
(V_BQ1, V_BK1, V_BV1, V_BO1,
 V_BQ2, V_BK2, V_BV2, V_BO2,
 V_G1, V_BE1, V_G2, V_BE2, V_G3, V_BE3, V_BFC2) = range(15)


# ----- in-kernel math helpers (f32 VPU/EUP math) -------------------------------
def _layer_norm(x, g, b):
    mu = jnp.mean(x, axis=-1, keepdims=True)
    var = jnp.mean((x - mu) * (x - mu), axis=-1, keepdims=True)
    return (x - mu) * lax.rsqrt(var + LN_EPS) * g + b


def _softmax(s):
    m = jnp.max(s, axis=-1, keepdims=True)
    e = jnp.exp(s - m)
    denom = jnp.sum(e, axis=-1, keepdims=True)
    return e * pl.reciprocal(denom, approx=True)


def _gelu_tanh(x):
    c = math.sqrt(2.0 / math.pi)
    return 0.5 * x * (1.0 + jnp.tanh(c * (x + 0.044715 * x * x * x)))


def _mha(xq, xkv, wq_ref, bq, wkv_ref, bk, bv, wo_ref, bo, mask):
    """Multi-head attention with fused full-width (lane-dense) projections.

    xq:   (R, C)  f32 query-side activations
    xkv:  (Rk, C) f32 key/value-side activations
    wq_ref:  (C, C)  bf16  (softmax scale pre-folded)
    wkv_ref: (C, 2C) bf16  [wk | wv]
    wo_ref:  (C, C)  bf16  output projection
    bq/bk/bv/bo: (1, C) f32 lane-dense bias rows (bq pre-scaled)
    mask: (R, Rk) f32 additive mask (0 / NEG_INF)
    """
    C = EMB_DIM
    xq_bf = xq.astype(jnp.bfloat16)
    xkv_bf = xkv.astype(jnp.bfloat16)

    # fused projections: one (R,C)x(C,C) dot for q, one (Rk,C)x(C,2C) dot for k/v
    q = jnp.dot(xq_bf, wq_ref[...], preferred_element_type=jnp.float32) + bq        # (R, C)
    kv = jnp.dot(xkv_bf, wkv_ref[...], preferred_element_type=jnp.float32)          # (Rk, 2C)
    k = kv[:, :C] + bk                                                               # (Rk, C)
    v = kv[:, C:] + bv                                                               # (Rk, C)

    dn = (((1,), (1,)), ((), ()))          # contract last dims (q·kᵀ, no transpose materialized)
    ctx = []
    for h in range(N_HEADS):
        sl = slice(h * HEAD_DIM, (h + 1) * HEAD_DIM)
        qh = q[:, sl].astype(jnp.bfloat16)                                           # (R, D)
        kh = k[:, sl].astype(jnp.bfloat16)                                           # (Rk, D)
        vh = v[:, sl].astype(jnp.bfloat16)                                           # (Rk, D)
        s = lax.dot_general(qh, kh, dn, preferred_element_type=jnp.float32)          # (R, Rk)
        p = _softmax(s + mask)
        ctx.append(jnp.dot(p.astype(jnp.bfloat16), vh,
                           preferred_element_type=jnp.float32))                      # (R, D)
    ctx = jnp.concatenate(ctx, axis=1)      # (R, C) lane concat (XLU; head order matches wo)
    return jnp.dot(ctx.astype(jnp.bfloat16), wo_ref[...],
                   preferred_element_type=jnp.float32) + bo


# ----- the Pallas kernel: one invocation handles the whole folded batch --------
def decoder_block_kernel(dec_ref, enc_ref, smask_ref, cmask_ref,
                         wq1_ref, wkv1_ref, wo1_ref,
                         wq2_ref, wkv2_ref, wo2_ref,
                         wfc1_ref, bfc1_ref, wfc2_ref, vecs_ref, out_ref):
    x = dec_ref[...]          # (R, C)  f32, R = B * T_dec
    enc = enc_ref[...]        # (Re, C) f32, Re = B * T_enc
    smask = smask_ref[...]    # (R, R)  f32 block-diagonal causal mask
    cmask = cmask_ref[...]    # (R, Re) f32 block-diagonal cross mask
    vecs = vecs_ref[...]      # (15, C) f32 bias / LayerNorm table

    def row(i):
        return vecs[i:i + 1]  # (1, C)

    # 1) masked multi-head self-attention + residual + LN
    a1 = _mha(x, x, wq1_ref, row(V_BQ1), wkv1_ref, row(V_BK1), row(V_BV1),
              wo1_ref, row(V_BO1), smask)
    n1 = _layer_norm(a1 + x, row(V_G1), row(V_BE1))

    # 2) cross attention (Q from decoder, K/V from encoder) + residual + LN
    a2 = _mha(n1, enc, wq2_ref, row(V_BQ2), wkv2_ref, row(V_BK2), row(V_BV2),
              wo2_ref, row(V_BO2), cmask)
    n2 = _layer_norm(a2 + n1, row(V_G2), row(V_BE2))

    # 3) FFN (Linear -> GELU(tanh) -> Linear) + residual + LN
    h = jnp.dot(n2.astype(jnp.bfloat16), wfc1_ref[...],
                preferred_element_type=jnp.float32) + bfc1_ref[...]
    h = _gelu_tanh(h)
    h = jnp.dot(h.astype(jnp.bfloat16), wfc2_ref[...],
                preferred_element_type=jnp.float32) + row(V_BFC2)
    out_ref[...] = _layer_norm(h + n2, row(V_G3), row(V_BE3))


# ----- parameter construction (deterministic, logical layout) -------------------
PARAM_ORDER = [
    "wq1", "bq1", "wk1", "bk1", "wv1", "bv1", "wo1", "bo1",
    "wq2", "bq2", "wk2", "bk2", "wv2", "bv2", "wo2", "bo2",
    "g1", "be1", "g2", "be2", "g3", "be3",
    "w_fc1", "b_fc1", "w_fc2", "b_fc2",
]


def make_params(key):
    C, I = EMB_DIM, INTERMEDIATE
    shapes = {
        "wq1": (C, C), "bq1": (C,), "wk1": (C, C), "bk1": (C,),
        "wv1": (C, C), "bv1": (C,), "wo1": (C, C), "bo1": (C,),
        "wq2": (C, C), "bq2": (C,), "wk2": (C, C), "bk2": (C,),
        "wv2": (C, C), "bv2": (C,), "wo2": (C, C), "bo2": (C,),
        "g1": (C,), "be1": (C,), "g2": (C,), "be2": (C,), "g3": (C,), "be3": (C,),
        "w_fc1": (C, I), "b_fc1": (I,), "w_fc2": (I, C), "b_fc2": (C,),
    }
    params = {}
    keys = jax.random.split(key, len(PARAM_ORDER))
    for k, name in zip(keys, PARAM_ORDER):
        if name.startswith("g"):    # LN gain ~ 1
            params[name] = 1.0 + 0.02 * jax.random.normal(k, shapes[name], jnp.float32)
        else:
            params[name] = 0.02 * jax.random.normal(k, shapes[name], jnp.float32)
    return params


def pack_params(p):
    """Pack the 26 logical params into 10 kernel arrays (bf16 for MXU operands).

    The softmax scale 1/sqrt(HEAD_DIM) (= 0.125, exact in bf16) is folded into the
    q weights and biases, so the kernel never multiplies the scores.
    """
    C, I = EMB_DIM, INTERMEDIATE
    scale = 1.0 / math.sqrt(HEAD_DIM)

    wq1 = (p["wq1"] * scale).astype(jnp.bfloat16)                       # (C, C)
    wkv1 = jnp.concatenate([p["wk1"], p["wv1"]], axis=1).astype(jnp.bfloat16)   # (C, 2C)
    wo1 = p["wo1"].astype(jnp.bfloat16)                                 # (C, C)
    wq2 = (p["wq2"] * scale).astype(jnp.bfloat16)
    wkv2 = jnp.concatenate([p["wk2"], p["wv2"]], axis=1).astype(jnp.bfloat16)
    wo2 = p["wo2"].astype(jnp.bfloat16)
    w_fc1 = p["w_fc1"].astype(jnp.bfloat16)                             # (C, I)
    b_fc1 = p["b_fc1"].reshape(1, I).astype(jnp.float32)                # (1, I)
    w_fc2 = p["w_fc2"].astype(jnp.bfloat16)                             # (I, C)

    vecs = jnp.stack([
        p["bq1"] * scale, p["bk1"], p["bv1"], p["bo1"],
        p["bq2"] * scale, p["bk2"], p["bv2"], p["bo2"],
        p["g1"], p["be1"], p["g2"], p["be2"], p["g3"], p["be3"],
        p["b_fc2"],
    ], axis=0).astype(jnp.float32)                                      # (15, C)

    return (wq1, wkv1, wo1, wq2, wkv2, wo2, w_fc1, b_fc1, w_fc2, vecs)


def make_masks(B, T, Te):
    """Host-precomputed block-diagonal (causal) masks for the batch-folded layout."""
    R, Re = B * T, B * Te
    r = np.arange(R)
    rk = np.arange(Re)
    self_ok = ((r[:, None] // T) == (r[None, :] // T)) & (r[None, :] <= r[:, None])
    cross_ok = (r[:, None] // T) == (rk[None, :] // Te)
    smask = np.where(self_ok, 0.0, NEG_INF).astype(np.float32)          # (R, R)
    cmask = np.where(cross_ok, 0.0, NEG_INF).astype(np.float32)         # (R, Re)
    return jnp.asarray(smask), jnp.asarray(cmask)


# ----- wrapper ------------------------------------------------------------------
@jax.jit
def decoder_block(dec, enc, smask, cmask, packed):
    wq1, wkv1, wo1, wq2, wkv2, wo2, w_fc1, b_fc1, w_fc2, vecs = packed
    B, T, C = dec.shape
    Te = enc.shape[1]
    R, Re = B * T, B * Te

    dec2 = dec.reshape(R, C)
    enc2 = enc.reshape(Re, C)

    n_in = 14
    out = pl.pallas_call(
        decoder_block_kernel,
        out_shape=jax.ShapeDtypeStruct((R, C), jnp.float32),
        in_specs=[pl.BlockSpec(memory_space=pltpu.MemorySpace.VMEM) for _ in range(n_in)],
        out_specs=pl.BlockSpec(memory_space=pltpu.MemorySpace.VMEM),
    )(dec2, enc2, smask, cmask,
      wq1, wkv1, wo1, wq2, wkv2, wo2, w_fc1, b_fc1, w_fc2, vecs)
    return out.reshape(B, T, C)


# ----- pure-JAX reference for verification (f32, mirrors the PyTorch module) ----
def ref_decoder_block(dec, enc, p):
    def ln(x, g, b):
        mu = jnp.mean(x, axis=-1, keepdims=True)
        var = jnp.mean((x - mu) ** 2, axis=-1, keepdims=True)
        return (x - mu) / jnp.sqrt(var + LN_EPS) * g + b

    def mha(xq, xkv, wq, bq, wk, bk, wv, bv, wo, bo, causal):
        B, T, C = xq.shape
        Tk = xkv.shape[1]
        q = xq @ wq + bq
        k = xkv @ wk + bk
        v = xkv @ wv + bv
        q = q.reshape(B, T, N_HEADS, HEAD_DIM).transpose(0, 2, 1, 3)
        k = k.reshape(B, Tk, N_HEADS, HEAD_DIM).transpose(0, 2, 1, 3)
        v = v.reshape(B, Tk, N_HEADS, HEAD_DIM).transpose(0, 2, 1, 3)
        s = jnp.einsum("bhqd,bhkd->bhqk", q, k) / math.sqrt(HEAD_DIM)
        if causal:
            m = jnp.where(jnp.triu(jnp.ones((T, T)), 1) == 1, -jnp.inf, 0.0)
            s = s + m
        a = jax.nn.softmax(s, axis=-1)
        o = jnp.einsum("bhqk,bhkd->bhqd", a, v)
        o = o.transpose(0, 2, 1, 3).reshape(B, T, C)
        return o @ wo + bo

    x = dec
    a1 = mha(x, x, p["wq1"], p["bq1"], p["wk1"], p["bk1"],
             p["wv1"], p["bv1"], p["wo1"], p["bo1"], True)
    n1 = ln(a1 + x, p["g1"], p["be1"])
    a2 = mha(n1, enc, p["wq2"], p["bq2"], p["wk2"], p["bk2"],
             p["wv2"], p["bv2"], p["wo2"], p["bo2"], False)
    n2 = ln(a2 + n1, p["g2"], p["be2"])
    h = jax.nn.gelu(n2 @ p["w_fc1"] + p["b_fc1"], approximate=True)
    h = h @ p["w_fc2"] + p["b_fc2"]
    return ln(h + n2, p["g3"], p["be3"])


if __name__ == "__main__":
    key = jax.random.PRNGKey(0)
    k_dec, k_enc, k_par = jax.random.split(key, 3)

    dec = jax.random.normal(k_dec, (BATCH, T_DEC, EMB_DIM), jnp.float32)
    enc = jax.random.normal(k_enc, (BATCH, T_ENC, EMB_DIM), jnp.float32)
    params = make_params(k_par)
    packed = pack_params(params)
    smask, cmask = make_masks(BATCH, T_DEC, T_ENC)

    out = decoder_block(dec, enc, smask, cmask, packed)
    out = jax.block_until_ready(out)

    ref = ref_decoder_block(dec, enc, params)
    assert out.shape == (BATCH, T_DEC, EMB_DIM)
    # bf16 MXU operands + approx reciprocal -> slightly relaxed tolerance vs f32 reference
    assert jnp.allclose(out, ref, rtol=2e-2, atol=2e-2), "mismatch vs. pure-JAX reference"

    print("KERNEL_OK")
</pallas_src>

<mosaic_0001>
module attributes {stable_mosaic.version = 11 : i64} {
  func.func @decoder_block_kernel(%arg0: memref<64x256xf32, #tpu.memory_space<vmem>>, %arg1: memref<128x256xf32, #tpu.memory_space<vmem>>, %arg2: memref<64x64xf32, #tpu.memory_space<vmem>>, %arg3: memref<64x128xf32, #tpu.memory_space<vmem>>, %arg4: memref<256x256xbf16, #tpu.memory_space<vmem>>, %arg5: memref<256x512xbf16, #tpu.memory_space<vmem>>, %arg6: memref<256x256xbf16, #tpu.memory_space<vmem>>, %arg7: memref<256x256xbf16, #tpu.memory_space<vmem>>, %arg8: memref<256x512xbf16, #tpu.memory_space<vmem>>, %arg9: memref<256x256xbf16, #tpu.memory_space<vmem>>, %arg10: memref<256x512xbf16, #tpu.memory_space<vmem>>, %arg11: memref<1x512xf32, #tpu.memory_space<vmem>>, %arg12: memref<512x256xbf16, #tpu.memory_space<vmem>>, %arg13: memref<15x256xf32, #tpu.memory_space<vmem>>, %arg14: memref<64x256xf32, #tpu.memory_space<vmem>>) attributes {dimension_semantics = [], scalar_prefetch = 0 : i64, scratch_operands = 0 : i64, tpu.core_type = #tpu.core_type<tc>} {
    %c0 = arith.constant 0 : index
    %c0_0 = arith.constant 0 : index
    %0 = vector.load %arg0[%c0, %c0_0] : memref<64x256xf32, #tpu.memory_space<vmem>>, vector<64x256xf32>
    %c0_1 = arith.constant 0 : index
    %c0_2 = arith.constant 0 : index
    %1 = vector.load %arg1[%c0_1, %c0_2] : memref<128x256xf32, #tpu.memory_space<vmem>>, vector<128x256xf32>
    %c0_3 = arith.constant 0 : index
    %c0_4 = arith.constant 0 : index
    %2 = vector.load %arg2[%c0_3, %c0_4] : memref<64x64xf32, #tpu.memory_space<vmem>>, vector<64x64xf32>
    %c0_5 = arith.constant 0 : index
    %c0_6 = arith.constant 0 : index
    %3 = vector.load %arg3[%c0_5, %c0_6] : memref<64x128xf32, #tpu.memory_space<vmem>>, vector<64x128xf32>
    %c0_7 = arith.constant 0 : index
    %c0_8 = arith.constant 0 : index
    %4 = vector.load %arg13[%c0_7, %c0_8] : memref<15x256xf32, #tpu.memory_space<vmem>>, vector<15x256xf32>
    %5 = vector.extract_strided_slice %4 {offsets = [0, 0], sizes = [1, 256], strides = [1, 1]} : vector<15x256xf32> to vector<1x256xf32>
    %6 = vector.extract_strided_slice %4 {offsets = [1, 0], sizes = [1, 256], strides = [1, 1]} : vector<15x256xf32> to vector<1x256xf32>
    %7 = vector.extract_strided_slice %4 {offsets = [2, 0], sizes = [1, 256], strides = [1, 1]} : vector<15x256xf32> to vector<1x256xf32>
    %8 = vector.extract_strided_slice %4 {offsets = [3, 0], sizes = [1, 256], strides = [1, 1]} : vector<15x256xf32> to vector<1x256xf32>
    %9 = arith.truncf %0 : vector<64x256xf32> to vector<64x256xbf16>
    %10 = arith.truncf %0 : vector<64x256xf32> to vector<64x256xbf16>
    %c0_9 = arith.constant 0 : index
    %c0_10 = arith.constant 0 : index
    %11 = vector.load %arg4[%c0_9, %c0_10] : memref<256x256xbf16, #tpu.memory_space<vmem>>, vector<256x256xbf16>
    %cst = arith.constant dense<0.000000e+00> : vector<64x256xf32>
    %12 = tpu.matmul %9, %11, %cst {dimension_numbers = #tpu.dot_dimension_numbers<[1], [0], [0], [1], [0, 0, 1, 1], [], []>} : vector<64x256xbf16>, vector<256x256xbf16>, vector<64x256xf32> -> vector<64x256xf32>
    %13 = vector.broadcast %5 : vector<1x256xf32> to vector<64x256xf32>
    %14 = arith.addf %12, %13 : vector<64x256xf32>
    %c0_11 = arith.constant 0 : index
    %c0_12 = arith.constant 0 : index
    %15 = vector.load %arg5[%c0_11, %c0_12] : memref<256x512xbf16, #tpu.memory_space<vmem>>, vector<256x512xbf16>
    %cst_13 = arith.constant dense<0.000000e+00> : vector<64x512xf32>
    %16 = tpu.matmul %10, %15, %cst_13 {dimension_numbers = #tpu.dot_dimension_numbers<[1], [0], [0], [1], [0, 0, 1, 1], [], []>} : vector<64x256xbf16>, vector<256x512xbf16>, vector<64x512xf32> -> vector<64x512xf32>
    %17 = vector.extract_strided_slice %16 {offsets = [0, 0], sizes = [64, 256], strides = [1, 1]} : vector<64x512xf32> to vector<64x256xf32>
    %18 = vector.broadcast %6 : vector<1x256xf32> to vector<64x256xf32>
    %19 = arith.addf %17, %18 : vector<64x256xf32>
    %20 = vector.extract_strided_slice %16 {offsets = [0, 256], sizes = [64, 256], strides = [1, 1]} : vector<64x512xf32> to vector<64x256xf32>
    %21 = vector.broadcast %7 : vector<1x256xf32> to vector<64x256xf32>
    %22 = arith.addf %20, %21 : vector<64x256xf32>
    %23 = vector.extract_strided_slice %14 {offsets = [0, 0], sizes = [64, 64], strides = [1, 1]} : vector<64x256xf32> to vector<64x64xf32>
    %24 = arith.truncf %23 : vector<64x64xf32> to vector<64x64xbf16>
    %25 = vector.extract_strided_slice %19 {offsets = [0, 0], sizes = [64, 64], strides = [1, 1]} : vector<64x256xf32> to vector<64x64xf32>
    %26 = arith.truncf %25 : vector<64x64xf32> to vector<64x64xbf16>
    %27 = vector.extract_strided_slice %22 {offsets = [0, 0], sizes = [64, 64], strides = [1, 1]} : vector<64x256xf32> to vector<64x64xf32>
    %28 = arith.truncf %27 : vector<64x64xf32> to vector<64x64xbf16>
    %cst_14 = arith.constant dense<0.000000e+00> : vector<64x64xf32>
    %29 = tpu.matmul %24, %26, %cst_14 {dimension_numbers = #tpu.dot_dimension_numbers<[1], [1], [0], [0], [0, 0, 1, 0], [], []>} : vector<64x64xbf16>, vector<64x64xbf16>, vector<64x64xf32> -> vector<64x64xf32>
    %30 = arith.addf %29, %2 : vector<64x64xf32>
    %cst_15 = arith.constant dense<0xFF800000> : vector<64xf32>
    %31 = vector.multi_reduction <maximumf>, %30, %cst_15 [1] : vector<64x64xf32> to vector<64xf32>
    %32 = vector.shape_cast %31 : vector<64xf32> to vector<64x1xf32>
    %33 = vector.broadcast %32 : vector<64x1xf32> to vector<64x64xf32>
    %34 = arith.subf %30, %33 : vector<64x64xf32>
    %35 = math.exp %34 : vector<64x64xf32>
    %cst_16 = arith.constant dense<0.000000e+00> : vector<64xf32>
    %36 = vector.multi_reduction <add>, %35, %cst_16 [1] : vector<64x64xf32> to vector<64xf32>
    %37 = vector.shape_cast %36 : vector<64xf32> to vector<64x1xf32>
    %38 = tpu.reciprocal %37 {approx = true} : vector<64x1xf32> -> vector<64x1xf32>
    %39 = vector.broadcast %38 : vector<64x1xf32> to vector<64x64xf32>
    %40 = arith.mulf %35, %39 : vector<64x64xf32>
    %41 = arith.truncf %40 : vector<64x64xf32> to vector<64x64xbf16>
    %cst_17 = arith.constant dense<0.000000e+00> : vector<64x64xf32>
    %42 = tpu.matmul %41, %28, %cst_17 {dimension_numbers = #tpu.dot_dimension_numbers<[1], [0], [0], [1], [0, 0, 1, 1], [], []>} : vector<64x64xbf16>, vector<64x64xbf16>, vector<64x64xf32> -> vector<64x64xf32>
    %43 = vector.extract_strided_slice %14 {offsets = [0, 64], sizes = [64, 64], strides = [1, 1]} : vector<64x256xf32> to vector<64x64xf32>
    %44 = arith.truncf %43 : vector<64x64xf32> to vector<64x64xbf16>
    %45 = vector.extract_strided_slice %19 {offsets = [0, 64], sizes = [64, 64], strides = [1, 1]} : vector<64x256xf32> to vector<64x64xf32>
    %46 = arith.truncf %45 : vector<64x64xf32> to vector<64x64xbf16>
    %47 = vector.extract_strided_slice %22 {offsets = [0, 64], sizes = [64, 64], strides = [1, 1]} : vector<64x256xf32> to vector<64x64xf32>
    %48 = arith.truncf %47 : vector<64x64xf32> to vector<64x64xbf16>
    %cst_18 = arith.constant dense<0.000000e+00> : vector<64x64xf32>
    %49 = tpu.matmul %44, %46, %cst_18 {dimension_numbers = #tpu.dot_dimension_numbers<[1], [1], [0], [0], [0, 0, 1, 0], [], []>} : vector<64x64xbf16>, vector<64x64xbf16>, vector<64x64xf32> -> vector<64x64xf32>
    %50 = arith.addf %49, %2 : vector<64x64xf32>
    %cst_19 = arith.constant dense<0xFF800000> : vector<64xf32>
    %51 = vector.multi_reduction <maximumf>, %50, %cst_19 [1] : vector<64x64xf32> to vector<64xf32>
    %52 = vector.shape_cast %51 : vector<64xf32> to vector<64x1xf32>
    %53 = vector.broadcast %52 : vector<64x1xf32> to vector<64x64xf32>
    %54 = arith.subf %50, %53 : vector<64x64xf32>
    %55 = math.exp %54 : vector<64x64xf32>
    %cst_20 = arith.constant dense<0.000000e+00> : vector<64xf32>
    %56 = vector.multi_reduction <add>, %55, %cst_20 [1] : vector<64x64xf32> to vector<64xf32>
    %57 = vector.shape_cast %56 : vector<64xf32> to vector<64x1xf32>
    %58 = tpu.reciprocal %57 {approx = true} : vector<64x1xf32> -> vector<64x1xf32>
    %59 = vector.broadcast %58 : vector<64x1xf32> to vector<64x64xf32>
    %60 = arith.mulf %55, %59 : vector<64x64xf32>
    %61 = arith.truncf %60 : vector<64x64xf32> to vector<64x64xbf16>
    %cst_21 = arith.constant dense<0.000000e+00> : vector<64x64xf32>
    %62 = tpu.matmul %61, %48, %cst_21 {dimension_numbers = #tpu.dot_dimension_numbers<[1], [0], [0], [1], [0, 0, 1, 1], [], []>} : vector<64x64xbf16>, vector<64x64xbf16>, vector<64x64xf32> -> vector<64x64xf32>
    %63 = vector.extract_strided_slice %14 {offsets = [0, 128], sizes = [64, 64], strides = [1, 1]} : vector<64x256xf32> to vector<64x64xf32>
    %64 = arith.truncf %63 : vector<64x64xf32> to vector<64x64xbf16>
    %65 = vector.extract_strided_slice %19 {offsets = [0, 128], sizes = [64, 64], strides = [1, 1]} : vector<64x256xf32> to vector<64x64xf32>
    %66 = arith.truncf %65 : vector<64x64xf32> to vector<64x64xbf16>
    %67 = vector.extract_strided_slice %22 {offsets = [0, 128], sizes = [64, 64], strides = [1, 1]} : vector<64x256xf32> to vector<64x64xf32>
    %68 = arith.truncf %67 : vector<64x64xf32> to vector<64x64xbf16>
    %cst_22 = arith.constant dense<0.000000e+00> : vector<64x64xf32>
    %69 = tpu.matmul %64, %66, %cst_22 {dimension_numbers = #tpu.dot_dimension_numbers<[1], [1], [0], [0], [0, 0, 1, 0], [], []>} : vector<64x64xbf16>, vector<64x64xbf16>, vector<64x64xf32> -> vector<64x64xf32>
    %70 = arith.addf %69, %2 : vector<64x64xf32>
    %cst_23 = arith.constant dense<0xFF800000> : vector<64xf32>
    %71 = vector.multi_reduction <maximumf>, %70, %cst_23 [1] : vector<64x64xf32> to vector<64xf32>
    %72 = vector.shape_cast %71 : vector<64xf32> to vector<64x1xf32>
    %73 = vector.broadcast %72 : vector<64x1xf32> to vector<64x64xf32>
    %74 = arith.subf %70, %73 : vector<64x64xf32>
    %75 = math.exp %74 : vector<64x64xf32>
    %cst_24 = arith.constant dense<0.000000e+00> : vector<64xf32>
    %76 = vector.multi_reduction <add>, %75, %cst_24 [1] : vector<64x64xf32> to vector<64xf32>
    %77 = vector.shape_cast %76 : vector<64xf32> to vector<64x1xf32>
    %78 = tpu.reciprocal %77 {approx = true} : vector<64x1xf32> -> vector<64x1xf32>
    %79 = vector.broadcast %78 : vector<64x1xf32> to vector<64x64xf32>
    %80 = arith.mulf %75, %79 : vector<64x64xf32>
    %81 = arith.truncf %80 : vector<64x64xf32> to vector<64x64xbf16>
    %cst_25 = arith.constant dense<0.000000e+00> : vector<64x64xf32>
    %82 = tpu.matmul %81, %68, %cst_25 {dimension_numbers = #tpu.dot_dimension_numbers<[1], [0], [0], [1], [0, 0, 1, 1], [], []>} : vector<64x64xbf16>, vector<64x64xbf16>, vector<64x64xf32> -> vector<64x64xf32>
    %83 = vector.extract_strided_slice %14 {offsets = [0, 192], sizes = [64, 64], strides = [1, 1]} : vector<64x256xf32> to vector<64x64xf32>
    %84 = arith.truncf %83 : vector<64x64xf32> to vector<64x64xbf16>
    %85 = vector.extract_strided_slice %19 {offsets = [0, 192], sizes = [64, 64], strides = [1, 1]} : vector<64x256xf32> to vector<64x64xf32>
    %86 = arith.truncf %85 : vector<64x64xf32> to vector<64x64xbf16>
    %87 = vector.extract_strided_slice %22 {offsets = [0, 192], sizes = [64, 64], strides = [1, 1]} : vector<64x256xf32> to vector<64x64xf32>
    %88 = arith.truncf %87 : vector<64x64xf32> to vector<64x64xbf16>
    %cst_26 = arith.constant dense<0.000000e+00> : vector<64x64xf32>
    %89 = tpu.matmul %84, %86, %cst_26 {dimension_numbers = #tpu.dot_dimension_numbers<[1], [1], [0], [0], [0, 0, 1, 0], [], []>} : vector<64x64xbf16>, vector<64x64xbf16>, vector<64x64xf32> -> vector<64x64xf32>
    %90 = arith.addf %89, %2 : vector<64x64xf32>
    %cst_27 = arith.constant dense<0xFF800000> : vector<64xf32>
    %91 = vector.multi_reduction <maximumf>, %90, %cst_27 [1] : vector<64x64xf32> to vector<64xf32>
    %92 = vector.shape_cast %91 : vector<64xf32> to vector<64x1xf32>
    %93 = vector.broadcast %92 : vector<64x1xf32> to vector<64x64xf32>
    %94 = arith.subf %90, %93 : vector<64x64xf32>
    %95 = math.exp %94 : vector<64x64xf32>
    %cst_28 = arith.constant dense<0.000000e+00> : vector<64xf32>
    %96 = vector.multi_reduction <add>, %95, %cst_28 [1] : vector<64x64xf32> to vector<64xf32>
    %97 = vector.shape_cast %96 : vector<64xf32> to vector<64x1xf32>
    %98 = tpu.reciprocal %97 {approx = true} : vector<64x1xf32> -> vector<64x1xf32>
    %99 = vector.broadcast %98 : vector<64x1xf32> to vector<64x64xf32>
    %100 = arith.mulf %95, %99 : vector<64x64xf32>
    %101 = arith.truncf %100 : vector<64x64xf32> to vector<64x64xbf16>
    %cst_29 = arith.constant dense<0.000000e+00> : vector<64x64xf32>
    %102 = tpu.matmul %101, %88, %cst_29 {dimension_numbers = #tpu.dot_dimension_numbers<[1], [0], [0], [1], [0, 0, 1, 1], [], []>} : vector<64x64xbf16>, vector<64x64xbf16>, vector<64x64xf32> -> vector<64x64xf32>
    %103 = tpu.concatenate %42, %62, %82, %102 in 1 : vector<64x64xf32>, vector<64x64xf32>, vector<64x64xf32>, vector<64x64xf32> -> vector<64x256xf32>
    %104 = arith.truncf %103 : vector<64x256xf32> to vector<64x256xbf16>
    %c0_30 = arith.constant 0 : index
    %c0_31 = arith.constant 0 : index
    %105 = vector.load %arg6[%c0_30, %c0_31] : memref<256x256xbf16, #tpu.memory_space<vmem>>, vector<256x256xbf16>
    %cst_32 = arith.constant dense<0.000000e+00> : vector<64x256xf32>
    %106 = tpu.matmul %104, %105, %cst_32 {dimension_numbers = #tpu.dot_dimension_numbers<[1], [0], [0], [1], [0, 0, 1, 1], [], []>} : vector<64x256xbf16>, vector<256x256xbf16>, vector<64x256xf32> -> vector<64x256xf32>
    %107 = vector.broadcast %8 : vector<1x256xf32> to vector<64x256xf32>
    %108 = arith.addf %106, %107 : vector<64x256xf32>
    %109 = arith.addf %108, %0 : vector<64x256xf32>
    %110 = vector.extract_strided_slice %4 {offsets = [8, 0], sizes = [1, 256], strides = [1, 1]} : vector<15x256xf32> to vector<1x256xf32>
    %111 = vector.extract_strided_slice %4 {offsets = [9, 0], sizes = [1, 256], strides = [1, 1]} : vector<15x256xf32> to vector<1x256xf32>
    %cst_33 = arith.constant dense<0.000000e+00> : vector<64xf32>
    %112 = vector.multi_reduction <add>, %109, %cst_33 [1] : vector<64x256xf32> to vector<64xf32>
    %113 = vector.shape_cast %112 : vector<64xf32> to vector<64x1xf32>
    %cst_34 = arith.constant 2.560000e+02 : f32
    %114 = vector.broadcast %cst_34 : f32 to vector<64x1xf32>
    %115 = arith.divf %113, %114 : vector<64x1xf32>
    %116 = vector.broadcast %115 : vector<64x1xf32> to vector<64x256xf32>
    %117 = arith.subf %109, %116 : vector<64x256xf32>
    %118 = vector.broadcast %115 : vector<64x1xf32> to vector<64x256xf32>
    %119 = arith.subf %109, %118 : vector<64x256xf32>
    %120 = arith.mulf %117, %119 : vector<64x256xf32>
    %cst_35 = arith.constant dense<0.000000e+00> : vector<64xf32>
    %121 = vector.multi_reduction <add>, %120, %cst_35 [1] : vector<64x256xf32> to vector<64xf32>
    %122 = vector.shape_cast %121 : vector<64xf32> to vector<64x1xf32>
    %cst_36 = arith.constant 2.560000e+02 : f32
    %123 = vector.broadcast %cst_36 : f32 to vector<64x1xf32>
    %124 = arith.divf %122, %123 : vector<64x1xf32>
    %125 = vector.broadcast %115 : vector<64x1xf32> to vector<64x256xf32>
    %126 = arith.subf %109, %125 : vector<64x256xf32>
    %cst_37 = arith.constant 9.99999997E-7 : f32
    %127 = vector.broadcast %cst_37 : f32 to vector<64x1xf32>
    %128 = arith.addf %124, %127 : vector<64x1xf32>
    %129 = math.rsqrt %128 : vector<64x1xf32>
    %130 = vector.broadcast %129 : vector<64x1xf32> to vector<64x256xf32>
    %131 = arith.mulf %126, %130 : vector<64x256xf32>
    %132 = vector.broadcast %110 : vector<1x256xf32> to vector<64x256xf32>
    %133 = arith.mulf %131, %132 : vector<64x256xf32>
    %134 = vector.broadcast %111 : vector<1x256xf32> to vector<64x256xf32>
    %135 = arith.addf %133, %134 : vector<64x256xf32>
    %136 = vector.extract_strided_slice %4 {offsets = [4, 0], sizes = [1, 256], strides = [1, 1]} : vector<15x256xf32> to vector<1x256xf32>
    %137 = vector.extract_strided_slice %4 {offsets = [5, 0], sizes = [1, 256], strides = [1, 1]} : vector<15x256xf32> to vector<1x256xf32>
    %138 = vector.extract_strided_slice %4 {offsets = [6, 0], sizes = [1, 256], strides = [1, 1]} : vector<15x256xf32> to vector<1x256xf32>
    %139 = vector.extract_strided_slice %4 {offsets = [7, 0], sizes = [1, 256], strides = [1, 1]} : vector<15x256xf32> to vector<1x256xf32>
    %140 = arith.truncf %135 : vector<64x256xf32> to vector<64x256xbf16>
    %141 = arith.truncf %1 : vector<128x256xf32> to vector<128x256xbf16>
    %c0_38 = arith.constant 0 : index
    %c0_39 = arith.constant 0 : index
    %142 = vector.load %arg7[%c0_38, %c0_39] : memref<256x256xbf16, #tpu.memory_space<vmem>>, vector<256x256xbf16>
    %cst_40 = arith.constant dense<0.000000e+00> : vector<64x256xf32>
    %143 = tpu.matmul %140, %142, %cst_40 {dimension_numbers = #tpu.dot_dimension_numbers<[1], [0], [0], [1], [0, 0, 1, 1], [], []>} : vector<64x256xbf16>, vector<256x256xbf16>, vector<64x256xf32> -> vector<64x256xf32>
    %144 = vector.broadcast %136 : vector<1x256xf32> to vector<64x256xf32>
    %145 = arith.addf %143, %144 : vector<64x256xf32>
    %c0_41 = arith.constant 0 : index
    %c0_42 = arith.constant 0 : index
    %146 = vector.load %arg8[%c0_41, %c0_42] : memref<256x512xbf16, #tpu.memory_space<vmem>>, vector<256x512xbf16>
    %cst_43 = arith.constant dense<0.000000e+00> : vector<128x512xf32>
    %147 = tpu.matmul %141, %146, %cst_43 {dimension_numbers = #tpu.dot_dimension_numbers<[1], [0], [0], [1], [0, 0, 1, 1], [], []>} : vector<128x256xbf16>, vector<256x512xbf16>, vector<128x512xf32> -> vector<128x512xf32>
    %148 = vector.extract_strided_slice %147 {offsets = [0, 0], sizes = [128, 256], strides = [1, 1]} : vector<128x512xf32> to vector<128x256xf32>
    %149 = vector.broadcast %137 : vector<1x256xf32> to vector<128x256xf32>
    %150 = arith.addf %148, %149 : vector<128x256xf32>
    %151 = vector.extract_strided_slice %147 {offsets = [0, 256], sizes = [128, 256], strides = [1, 1]} : vector<128x512xf32> to vector<128x256xf32>
    %152 = vector.broadcast %138 : vector<1x256xf32> to vector<128x256xf32>
    %153 = arith.addf %151, %152 : vector<128x256xf32>
    %154 = vector.extract_strided_slice %145 {offsets = [0, 0], sizes = [64, 64], strides = [1, 1]} : vector<64x256xf32> to vector<64x64xf32>
    %155 = arith.truncf %154 : vector<64x64xf32> to vector<64x64xbf16>
    %156 = vector.extract_strided_slice %150 {offsets = [0, 0], sizes = [128, 64], strides = [1, 1]} : vector<128x256xf32> to vector<128x64xf32>
    %157 = arith.truncf %156 : vector<128x64xf32> to vector<128x64xbf16>
    %158 = vector.extract_strided_slice %153 {offsets = [0, 0], sizes = [128, 64], strides = [1, 1]} : vector<128x256xf32> to vector<128x64xf32>
    %159 = arith.truncf %158 : vector<128x64xf32> to vector<128x64xbf16>
    %cst_44 = arith.constant dense<0.000000e+00> : vector<64x128xf32>
    %160 = tpu.matmul %155, %157, %cst_44 {dimension_numbers = #tpu.dot_dimension_numbers<[1], [1], [0], [0], [0, 0, 1, 0], [], []>} : vector<64x64xbf16>, vector<128x64xbf16>, vector<64x128xf32> -> vector<64x128xf32>
    %161 = arith.addf %160, %3 : vector<64x128xf32>
    %cst_45 = arith.constant dense<0xFF800000> : vector<64xf32>
    %162 = vector.multi_reduction <maximumf>, %161, %cst_45 [1] : vector<64x128xf32> to vector<64xf32>
    %163 = vector.shape_cast %162 : vector<64xf32> to vector<64x1xf32>
    %164 = vector.broadcast %163 : vector<64x1xf32> to vector<64x128xf32>
    %165 = arith.subf %161, %164 : vector<64x128xf32>
    %166 = math.exp %165 : vector<64x128xf32>
    %cst_46 = arith.constant dense<0.000000e+00> : vector<64xf32>
    %167 = vector.multi_reduction <add>, %166, %cst_46 [1] : vector<64x128xf32> to vector<64xf32>
    %168 = vector.shape_cast %167 : vector<64xf32> to vector<64x1xf32>
    %169 = tpu.reciprocal %168 {approx = true} : vector<64x1xf32> -> vector<64x1xf32>
    %170 = vector.broadcast %169 : vector<64x1xf32> to vector<64x128xf32>
    %171 = arith.mulf %166, %170 : vector<64x128xf32>
    %172 = arith.truncf %171 : vector<64x128xf32> to vector<64x128xbf16>
    %cst_47 = arith.constant dense<0.000000e+00> : vector<64x64xf32>
    %173 = tpu.matmul %172, %159, %cst_47 {dimension_numbers = #tpu.dot_dimension_numbers<[1], [0], [0], [1], [0, 0, 1, 1], [], []>} : vector<64x128xbf16>, vector<128x64xbf16>, vector<64x64xf32> -> vector<64x64xf32>
    %174 = vector.extract_strided_slice %145 {offsets = [0, 64], sizes = [64, 64], strides = [1, 1]} : vector<64x256xf32> to vector<64x64xf32>
    %175 = arith.truncf %174 : vector<64x64xf32> to vector<64x64xbf16>
    %176 = vector.extract_strided_slice %150 {offsets = [0, 64], sizes = [128, 64], strides = [1, 1]} : vector<128x256xf32> to vector<128x64xf32>
    %177 = arith.truncf %176 : vector<128x64xf32> to vector<128x64xbf16>
    %178 = vector.extract_strided_slice %153 {offsets = [0, 64], sizes = [128, 64], strides = [1, 1]} : vector<128x256xf32> to vector<128x64xf32>
    %179 = arith.truncf %178 : vector<128x64xf32> to vector<128x64xbf16>
    %cst_48 = arith.constant dense<0.000000e+00> : vector<64x128xf32>
    %180 = tpu.matmul %175, %177, %cst_48 {dimension_numbers = #tpu.dot_dimension_numbers<[1], [1], [0], [0], [0, 0, 1, 0], [], []>} : vector<64x64xbf16>, vector<128x64xbf16>, vector<64x128xf32> -> vector<64x128xf32>
    %181 = arith.addf %180, %3 : vector<64x128xf32>
    %cst_49 = arith.constant dense<0xFF800000> : vector<64xf32>
    %182 = vector.multi_reduction <maximumf>, %181, %cst_49 [1] : vector<64x128xf32> to vector<64xf32>
    %183 = vector.shape_cast %182 : vector<64xf32> to vector<64x1xf32>
    %184 = vector.broadcast %183 : vector<64x1xf32> to vector<64x128xf32>
    %185 = arith.subf %181, %184 : vector<64x128xf32>
    %186 = math.exp %185 : vector<64x128xf32>
    %cst_50 = arith.constant dense<0.000000e+00> : vector<64xf32>
    %187 = vector.multi_reduction <add>, %186, %cst_50 [1] : vector<64x128xf32> to vector<64xf32>
    %188 = vector.shape_cast %187 : vector<64xf32> to vector<64x1xf32>
    %189 = tpu.reciprocal %188 {approx = true} : vector<64x1xf32> -> vector<64x1xf32>
    %190 = vector.broadcast %189 : vector<64x1xf32> to vector<64x128xf32>
    %191 = arith.mulf %186, %190 : vector<64x128xf32>
    %192 = arith.truncf %191 : vector<64x128xf32> to vector<64x128xbf16>
    %cst_51 = arith.constant dense<0.000000e+00> : vector<64x64xf32>
    %193 = tpu.matmul %192, %179, %cst_51 {dimension_numbers = #tpu.dot_dimension_numbers<[1], [0], [0], [1], [0, 0, 1, 1], [], []>} : vector<64x128xbf16>, vector<128x64xbf16>, vector<64x64xf32> -> vector<64x64xf32>
    %194 = vector.extract_strided_slice %145 {offsets = [0, 128], sizes = [64, 64], strides = [1, 1]} : vector<64x256xf32> to vector<64x64xf32>
    %195 = arith.truncf %194 : vector<64x64xf32> to vector<64x64xbf16>
    %196 = vector.extract_strided_slice %150 {offsets = [0, 128], sizes = [128, 64], strides = [1, 1]} : vector<128x256xf32> to vector<128x64xf32>
    %197 = arith.truncf %196 : vector<128x64xf32> to vector<128x64xbf16>
    %198 = vector.extract_strided_slice %153 {offsets = [0, 128], sizes = [128, 64], strides = [1, 1]} : vector<128x256xf32> to vector<128x64xf32>
    %199 = arith.truncf %198 : vector<128x64xf32> to vector<128x64xbf16>
    %cst_52 = arith.constant dense<0.000000e+00> : vector<64x128xf32>
    %200 = tpu.matmul %195, %197, %cst_52 {dimension_numbers = #tpu.dot_dimension_numbers<[1], [1], [0], [0], [0, 0, 1, 0], [], []>} : vector<64x64xbf16>, vector<128x64xbf16>, vector<64x128xf32> -> vector<64x128xf32>
    %201 = arith.addf %200, %3 : vector<64x128xf32>
    %cst_53 = arith.constant dense<0xFF800000> : vector<64xf32>
    %202 = vector.multi_reduction <maximumf>, %201, %cst_53 [1] : vector<64x128xf32> to vector<64xf32>
    %203 = vector.shape_cast %202 : vector<64xf32> to vector<64x1xf32>
    %204 = vector.broadcast %203 : vector<64x1xf32> to vector<64x128xf32>
    %205 = arith.subf %201, %204 : vector<64x128xf32>
    %206 = math.exp %205 : vector<64x128xf32>
    %cst_54 = arith.constant dense<0.000000e+00> : vector<64xf32>
    %207 = vector.multi_reduction <add>, %206, %cst_54 [1] : vector<64x128xf32> to vector<64xf32>
    %208 = vector.shape_cast %207 : vector<64xf32> to vector<64x1xf32>
    %209 = tpu.reciprocal %208 {approx = true} : vector<64x1xf32> -> vector<64x1xf32>
    %210 = vector.broadcast %209 : vector<64x1xf32> to vector<64x128xf32>
    %211 = arith.mulf %206, %210 : vector<64x128xf32>
    %212 = arith.truncf %211 : vector<64x128xf32> to vector<64x128xbf16>
    %cst_55 = arith.constant dense<0.000000e+00> : vector<64x64xf32>
    %213 = tpu.matmul %212, %199, %cst_55 {dimension_numbers = #tpu.dot_dimension_numbers<[1], [0], [0], [1], [0, 0, 1, 1], [], []>} : vector<64x128xbf16>, vector<128x64xbf16>, vector<64x64xf32> -> vector<64x64xf32>
    %214 = vector.extract_strided_slice %145 {offsets = [0, 192], sizes = [64, 64], strides = [1, 1]} : vector<64x256xf32> to vector<64x64xf32>
    %215 = arith.truncf %214 : vector<64x64xf32> to vector<64x64xbf16>
    %216 = vector.extract_strided_slice %150 {offsets = [0, 192], sizes = [128, 64], strides = [1, 1]} : vector<128x256xf32> to vector<128x64xf32>
    %217 = arith.truncf %216 : vector<128x64xf32> to vector<128x64xbf16>
    %218 = vector.extract_strided_slice %153 {offsets = [0, 192], sizes = [128, 64], strides = [1, 1]} : vector<128x256xf32> to vector<128x64xf32>
    %219 = arith.truncf %218 : vector<128x64xf32> to vector<128x64xbf16>
    %cst_56 = arith.constant dense<0.000000e+00> : vector<64x128xf32>
    %220 = tpu.matmul %215, %217, %cst_56 {dimension_numbers = #tpu.dot_dimension_numbers<[1], [1], [0], [0], [0, 0, 1, 0], [], []>} : vector<64x64xbf16>, vector<128x64xbf16>, vector<64x128xf32> -> vector<64x128xf32>
    %221 = arith.addf %220, %3 : vector<64x128xf32>
    %cst_57 = arith.constant dense<0xFF800000> : vector<64xf32>
    %222 = vector.multi_reduction <maximumf>, %221, %cst_57 [1] : vector<64x128xf32> to vector<64xf32>
    %223 = vector.shape_cast %222 : vector<64xf32> to vector<64x1xf32>
    %224 = vector.broadcast %223 : vector<64x1xf32> to vector<64x128xf32>
    %225 = arith.subf %221, %224 : vector<64x128xf32>
    %226 = math.exp %225 : vector<64x128xf32>
    %cst_58 = arith.constant dense<0.000000e+00> : vector<64xf32>
    %227 = vector.multi_reduction <add>, %226, %cst_58 [1] : vector<64x128xf32> to vector<64xf32>
    %228 = vector.shape_cast %227 : vector<64xf32> to vector<64x1xf32>
    %229 = tpu.reciprocal %228 {approx = true} : vector<64x1xf32> -> vector<64x1xf32>
    %230 = vector.broadcast %229 : vector<64x1xf32> to vector<64x128xf32>
    %231 = arith.mulf %226, %230 : vector<64x128xf32>
    %232 = arith.truncf %231 : vector<64x128xf32> to vector<64x128xbf16>
    %cst_59 = arith.constant dense<0.000000e+00> : vector<64x64xf32>
    %233 = tpu.matmul %232, %219, %cst_59 {dimension_numbers = #tpu.dot_dimension_numbers<[1], [0], [0], [1], [0, 0, 1, 1], [], []>} : vector<64x128xbf16>, vector<128x64xbf16>, vector<64x64xf32> -> vector<64x64xf32>
    %234 = tpu.concatenate %173, %193, %213, %233 in 1 : vector<64x64xf32>, vector<64x64xf32>, vector<64x64xf32>, vector<64x64xf32> -> vector<64x256xf32>
    %235 = arith.truncf %234 : vector<64x256xf32> to vector<64x256xbf16>
    %c0_60 = arith.constant 0 : index
    %c0_61 = arith.constant 0 : index
    %236 = vector.load %arg9[%c0_60, %c0_61] : memref<256x256xbf16, #tpu.memory_space<vmem>>, vector<256x256xbf16>
    %cst_62 = arith.constant dense<0.000000e+00> : vector<64x256xf32>
    %237 = tpu.matmul %235, %236, %cst_62 {dimension_numbers = #tpu.dot_dimension_numbers<[1], [0], [0], [1], [0, 0, 1, 1], [], []>} : vector<64x256xbf16>, vector<256x256xbf16>, vector<64x256xf32> -> vector<64x256xf32>
    %238 = vector.broadcast %139 : vector<1x256xf32> to vector<64x256xf32>
    %239 = arith.addf %237, %238 : vector<64x256xf32>
    %240 = arith.addf %239, %135 : vector<64x256xf32>
    %241 = vector.extract_strided_slice %4 {offsets = [10, 0], sizes = [1, 256], strides = [1, 1]} : vector<15x256xf32> to vector<1x256xf32>
    %242 = vector.extract_strided_slice %4 {offsets = [11, 0], sizes = [1, 256], strides = [1, 1]} : vector<15x256xf32> to vector<1x256xf32>
    %cst_63 = arith.constant dense<0.000000e+00> : vector<64xf32>
    %243 = vector.multi_reduction <add>, %240, %cst_63 [1] : vector<64x256xf32> to vector<64xf32>
    %244 = vector.shape_cast %243 : vector<64xf32> to vector<64x1xf32>
    %cst_64 = arith.constant 2.560000e+02 : f32
    %245 = vector.broadcast %cst_64 : f32 to vector<64x1xf32>
    %246 = arith.divf %244, %245 : vector<64x1xf32>
    %247 = vector.broadcast %246 : vector<64x1xf32> to vector<64x256xf32>
    %248 = arith.subf %240, %247 : vector<64x256xf32>
    %249 = vector.broadcast %246 : vector<64x1xf32> to vector<64x256xf32>
    %250 = arith.subf %240, %249 : vector<64x256xf32>
    %251 = arith.mulf %248, %250 : vector<64x256xf32>
    %cst_65 = arith.constant dense<0.000000e+00> : vector<64xf32>
    %252 = vector.multi_reduction <add>, %251, %cst_65 [1] : vector<64x256xf32> to vector<64xf32>
    %253 = vector.shape_cast %252 : vector<64xf32> to vector<64x1xf32>
    %cst_66 = arith.constant 2.560000e+02 : f32
    %254 = vector.broadcast %cst_66 : f32 to vector<64x1xf32>
    %255 = arith.divf %253, %254 : vector<64x1xf32>
    %256 = vector.broadcast %246 : vector<64x1xf32> to vector<64x256xf32>
    %257 = arith.subf %240, %256 : vector<64x256xf32>
    %cst_67 = arith.constant 9.99999997E-7 : f32
    %258 = vector.broadcast %cst_67 : f32 to vector<64x1xf32>
    %259 = arith.addf %255, %258 : vector<64x1xf32>
    %260 = math.rsqrt %259 : vector<64x1xf32>
    %261 = vector.broadcast %260 : vector<64x1xf32> to vector<64x256xf32>
    %262 = arith.mulf %257, %261 : vector<64x256xf32>
    %263 = vector.broadcast %241 : vector<1x256xf32> to vector<64x256xf32>
    %264 = arith.mulf %262, %263 : vector<64x256xf32>
    %265 = vector.broadcast %242 : vector<1x256xf32> to vector<64x256xf32>
    %266 = arith.addf %264, %265 : vector<64x256xf32>
    %267 = arith.truncf %266 : vector<64x256xf32> to vector<64x256xbf16>
    %c0_68 = arith.constant 0 : index
    %c0_69 = arith.constant 0 : index
    %268 = vector.load %arg10[%c0_68, %c0_69] : memref<256x512xbf16, #tpu.memory_space<vmem>>, vector<256x512xbf16>
    %cst_70 = arith.constant dense<0.000000e+00> : vector<64x512xf32>
    %269 = tpu.matmul %267, %268, %cst_70 {dimension_numbers = #tpu.dot_dimension_numbers<[1], [0], [0], [1], [0, 0, 1, 1], [], []>} : vector<64x256xbf16>, vector<256x512xbf16>, vector<64x512xf32> -> vector<64x512xf32>
    %c0_71 = arith.constant 0 : index
    %c0_72 = arith.constant 0 : index
    %270 = vector.load %arg11[%c0_71, %c0_72] : memref<1x512xf32, #tpu.memory_space<vmem>>, vector<1x512xf32>
    %271 = vector.broadcast %270 : vector<1x512xf32> to vector<64x512xf32>
    %272 = arith.addf %269, %271 : vector<64x512xf32>
    %cst_73 = arith.constant 5.000000e-01 : f32
    %273 = vector.broadcast %cst_73 : f32 to vector<64x512xf32>
    %274 = arith.mulf %273, %272 : vector<64x512xf32>
    %cst_74 = arith.constant 4.471500e-02 : f32
    %275 = vector.broadcast %cst_74 : f32 to vector<64x512xf32>
    %276 = arith.mulf %275, %272 : vector<64x512xf32>
    %277 = arith.mulf %276, %272 : vector<64x512xf32>
    %278 = arith.mulf %277, %272 : vector<64x512xf32>
    %279 = arith.addf %272, %278 : vector<64x512xf32>
    %cst_75 = arith.constant 0.797884583 : f32
    %280 = vector.broadcast %cst_75 : f32 to vector<64x512xf32>
    %281 = arith.mulf %280, %279 : vector<64x512xf32>
    %282 = math.tanh %281 : vector<64x512xf32>
    %cst_76 = arith.constant 1.000000e+00 : f32
    %283 = vector.broadcast %cst_76 : f32 to vector<64x512xf32>
    %284 = arith.addf %283, %282 : vector<64x512xf32>
    %285 = arith.mulf %274, %284 : vector<64x512xf32>
    %286 = arith.truncf %285 : vector<64x512xf32> to vector<64x512xbf16>
    %c0_77 = arith.constant 0 : index
    %c0_78 = arith.constant 0 : index
    %287 = vector.load %arg12[%c0_77, %c0_78] : memref<512x256xbf16, #tpu.memory_space<vmem>>, vector<512x256xbf16>
    %cst_79 = arith.constant dense<0.000000e+00> : vector<64x256xf32>
    %288 = tpu.matmul %286, %287, %cst_79 {dimension_numbers = #tpu.dot_dimension_numbers<[1], [0], [0], [1], [0, 0, 1, 1], [], []>} : vector<64x512xbf16>, vector<512x256xbf16>, vector<64x256xf32> -> vector<64x256xf32>
    %289 = vector.extract_strided_slice %4 {offsets = [14, 0], sizes = [1, 256], strides = [1, 1]} : vector<15x256xf32> to vector<1x256xf32>
    %290 = vector.broadcast %289 : vector<1x256xf32> to vector<64x256xf32>
    %291 = arith.addf %288, %290 : vector<64x256xf32>
    %292 = arith.addf %291, %266 : vector<64x256xf32>
    %293 = vector.extract_strided_slice %4 {offsets = [12, 0], sizes = [1, 256], strides = [1, 1]} : vector<15x256xf32> to vector<1x256xf32>
    %294 = vector.extract_strided_slice %4 {offsets = [13, 0], sizes = [1, 256], strides = [1, 1]} : vector<15x256xf32> to vector<1x256xf32>
    %cst_80 = arith.constant dense<0.000000e+00> : vector<64xf32>
    %295 = vector.multi_reduction <add>, %292, %cst_80 [1] : vector<64x256xf32> to vector<64xf32>
    %296 = vector.shape_cast %295 : vector<64xf32> to vector<64x1xf32>
    %cst_81 = arith.constant 2.560000e+02 : f32
    %297 = vector.broadcast %cst_81 : f32 to vector<64x1xf32>
    %298 = arith.divf %296, %297 : vector<64x1xf32>
    %299 = vector.broadcast %298 : vector<64x1xf32> to vector<64x256xf32>
    %300 = arith.subf %292, %299 : vector<64x256xf32>
    %301 = vector.broadcast %298 : vector<64x1xf32> to vector<64x256xf32>
    %302 = arith.subf %292, %301 : vector<64x256xf32>
    %303 = arith.mulf %300, %302 : vector<64x256xf32>
    %cst_82 = arith.constant dense<0.000000e+00> : vector<64xf32>
    %304 = vector.multi_reduction <add>, %303, %cst_82 [1] : vector<64x256xf32> to vector<64xf32>
    %305 = vector.shape_cast %304 : vector<64xf32> to vector<64x1xf32>
    %cst_83 = arith.constant 2.560000e+02 : f32
    %306 = vector.broadcast %cst_83 : f32 to vector<64x1xf32>
    %307 = arith.divf %305, %306 : vector<64x1xf32>
    %308 = vector.broadcast %298 : vector<64x1xf32> to vector<64x256xf32>
    %309 = arith.subf %292, %308 : vector<64x256xf32>
    %cst_84 = arith.constant 9.99999997E-7 : f32
    %310 = vector.broadcast %cst_84 : f32 to vector<64x1xf32>
    %311 = arith.addf %307, %310 : vector<64x1xf32>
    %312 = math.rsqrt %311 : vector<64x1xf32>
    %313 = vector.broadcast %312 : vector<64x1xf32> to vector<64x256xf32>
    %314 = arith.mulf %309, %313 : vector<64x256xf32>
    %315 = vector.broadcast %293 : vector<1x256xf32> to vector<64x256xf32>
    %316 = arith.mulf %314, %315 : vector<64x256xf32>
    %317 = vector.broadcast %294 : vector<1x256xf32> to vector<64x256xf32>
    %318 = arith.addf %316, %317 : vector<64x256xf32>
    %c0_85 = arith.constant 0 : index
    %c0_86 = arith.constant 0 : index
    %319 = vector.load %arg14[%c0_85, %c0_86] : memref<64x256xf32, #tpu.memory_space<vmem>>, vector<64x256xf32>
    tpu.vector_store %arg14[%c0_85, %c0_86], %318 {strides = array<i32>} : memref<64x256xf32, #tpu.memory_space<vmem>>, vector<64x256xf32>,
    return
  }
}

</mosaic_0001>

<llo_original>
// kernel: decoder_block.1
$region0: #{decoder_block.1}
  #allocation0 [shape = 'u32[]', space=smem, size = 0x4, offset = 0x4, fixed_abs, tag = 'smem constant byte address 0x4 - core index']
  #allocation1 [shape = 'u32[144,128]{1,0:T(1,128)}', space=vmem, size = 0x12000, scoped, tag = 'internal scratch']
  %s0 = inlined_call_operand.hbm [shape: f32[64,256], index: 0, kind: input, shape index: {}]
  %s1 = inlined_call_operand.hbm [shape: f32[128,256], index: 1, kind: input, shape index: {}]
  %s2 = inlined_call_operand.hbm [shape: f32[64,64], index: 2, kind: input, shape index: {}]
  %s3 = inlined_call_operand.hbm [shape: f32[64,128], index: 3, kind: input, shape index: {}]
  %s4 = inlined_call_operand.hbm [shape: bf16[256,256], index: 4, kind: input, shape index: {}]
  %s5 = inlined_call_operand.hbm [shape: bf16[256,512], index: 5, kind: input, shape index: {}]
  %s6 = inlined_call_operand.hbm [shape: bf16[256,256], index: 6, kind: input, shape index: {}]
  %s7 = inlined_call_operand.hbm [shape: bf16[256,256], index: 7, kind: input, shape index: {}]
  %s8 = inlined_call_operand.hbm [shape: bf16[256,512], index: 8, kind: input, shape index: {}]
  %s9 = inlined_call_operand.hbm [shape: bf16[256,256], index: 9, kind: input, shape index: {}]
  %s10 = inlined_call_operand.hbm [shape: bf16[256,512], index: 10, kind: input, shape index: {}]
  %s11 = inlined_call_operand.vmem [shape: f32[1,512], index: 11, kind: input, shape index: {}]
  %s12 = inlined_call_operand.hbm [shape: bf16[512,256], index: 12, kind: input, shape index: {}]
  %s13 = inlined_call_operand.hbm [shape: f32[15,256], index: 13, kind: input, shape index: {}]
  %s14 = inlined_call_operand.hbm [shape: f32[64,256], index: 14, kind: output, shape index: {}]
  %s15 = sld [smem:[#allocation0]]
  $region118: #{decoder_block.1} parent=0
    _
  %s17 = ssub.s32 1, %s15
  %s18 = scalar_select 0, %s17, %s15
  $region1: #{decoder_block.1} parent=0
    #allocation2 [shape = 'u8[65536]{0}', space=vmem, size = 0x10000, scoped, tag = 'input window, operand 0, single buffered']
    #allocation3 [shape = 's32[1]{0}', space=sflag, size = 0x4, scoped, tag = 'scoped memory for decoder_block.1']
    #allocation4 [shape = 's32[1]{0}', space=sflag, size = 0x4, scoped, tag = 'scoped memory for decoder_block.1']
    #allocation5 [shape = 'u8[131072]{0}', space=vmem, size = 0x20000, scoped, tag = 'input window, operand 1, single buffered']
    #allocation6 [shape = 's32[1]{0}', space=sflag, size = 0x4, scoped, tag = 'scoped memory for decoder_block.1']
    #allocation7 [shape = 'u8[32768]{0}', space=vmem, size = 0x8000, scoped, tag = 'input window, operand 2, single buffered']
    #allocation8 [shape = 'u8[32768]{0}', space=vmem, size = 0x8000, scoped, tag = 'input window, operand 3, single buffered']
    #allocation9 [shape = 's32[1]{0}', space=sflag, size = 0x4, scoped, tag = 'scoped memory for decoder_block.1']
    #allocation10 [shape = 'u8[131072]{0}', space=vmem, size = 0x20000, scoped, tag = 'input window, operand 4, single buffered']
    #allocation11 [shape = 'u8[262144]{0}', space=vmem, size = 0x40000, scoped, tag = 'input window, operand 5, single buffered']
    #allocation12 [shape = 's32[1]{0}', space=sflag, size = 0x4, scoped, tag = 'scoped memory for decoder_block.1']
    #allocation13 [shape = 'u8[131072]{0}', space=vmem, size = 0x20000, scoped, tag = 'input window, operand 6, single buffered']
    #allocation14 [shape = 'u8[131072]{0}', space=vmem, size = 0x20000, scoped, tag = 'input window, operand 7, single buffered']
    #allocation15 [shape = 's32[1]{0}', space=sflag, size = 0x4, scoped, tag = 'scoped memory for decoder_block.1']
    #allocation16 [shape = 'u8[262144]{0}', space=vmem, size = 0x40000, scoped, tag = 'input window, operand 8, single buffered']
    #allocation17 [shape = 'u8[131072]{0}', space=vmem, size = 0x20000, scoped, tag = 'input window, operand 9, single buffered']
    #allocation18 [shape = 's32[1]{0}', space=sflag, size = 0x4, scoped, tag = 'scoped memory for decoder_block.1']
    #allocation19 [shape = 'u8[262144]{0}', space=vmem, size = 0x40000, scoped, tag = 'input window, operand 10, single buffered']
    #allocation20 [shape = 'u8[262144]{0}', space=vmem, size = 0x40000, scoped, tag = 'input window, operand 12, single buffered']
    #allocation21 [shape = 's32[1]{0}', space=sflag, size = 0x4, scoped, tag = 'scoped memory for decoder_block.1']
    #allocation22 [shape = 'u8[16384]{0}', space=vmem, size = 0x4000, scoped, tag = 'input window, operand 13, single buffered']
    #allocation23 [shape = 'u8[65536]{0}', space=vmem, size = 0x10000, scoped, tag = 'output window, operand 0, single buffered']
    %19 = vsyncpa [#allocation3], 0
    %20 = vsyncpa [#allocation6], 0
    %21 = vsyncpa [#allocation9], 0
    %22 = vsyncpa [#allocation12], 0
    %23 = vsyncpa [#allocation15], 0
    %24 = vsyncpa [#allocation18], 0
    %25 = vsyncpa [#allocation21], 0
    %26 = vsyncpa [#allocation4], 0
    // Predicated region
    $region2: #{decoder_block.1} parent=1 // pred_check
      _
    $region3: #{decoder_block.1} parent=1 // pred_check_branch
      %28 = sbr.rel (0) target = $region5
    $region4: #{decoder_block.1} parent=1 // pred_region
      %s30 = ssub.s32 2048, 2048
      %31 = vsyncadd [#allocation3], %s30
      %s32 = sshll.u32 [#allocation2], 4
      %s33 = int_to_ptr.vmem [resolvable:$true] %s32
      %38 = dma.hbm_to_vmem [thread:$0]  %s0, 2048, %s33, [#allocation3], 256, 256, 16
    $region5: #{decoder_block.1} parent=1 // pred_fallthru
      _
    // Predicated region
    $region6: #{decoder_block.1} parent=1 // pred_check
      _
    $region7: #{decoder_block.1} parent=1 // pred_check_branch
      %40 = sbr.rel (0) target = $region9
    $region8: #{decoder_block.1} parent=1 // pred_region
      %s42 = ssub.s32 4096, 4096
      %43 = vsyncadd [#allocation6], %s42
      %s44 = sshll.u32 [#allocation5], 4
      %s45 = int_to_ptr.vmem [resolvable:$true] %s44
      %50 = dma.hbm_to_vmem [thread:$0]  %s1, 4096, %s45, [#allocation6], 256, 256, 16
    $region9: #{decoder_block.1} parent=1 // pred_fallthru
      _
    // Predicated region
    $region10: #{decoder_block.1} parent=1 // pred_check
      _
    $region11: #{decoder_block.1} parent=1 // pred_check_branch
      %52 = sbr.rel (0) target = $region13
    $region12: #{decoder_block.1} parent=1 // pred_region
      %s54 = ssub.s32 1024, 1024
      %55 = vsyncadd [#allocation6], %s54
      %s56 = sshll.u32 [#allocation7], 4
      %s57 = int_to_ptr.vmem [resolvable:$true] %s56
      %62 = dma.hbm_to_vmem [thread:$0]  %s2, 1024, %s57, [#allocation6], 128, 128, 8
    $region13: #{decoder_block.1} parent=1 // pred_fallthru
      _
    // Predicated region
    $region14: #{decoder_block.1} parent=1 // pred_check
      _
    $region15: #{decoder_block.1} parent=1 // pred_check_branch
      %64 = sbr.rel (0) target = $region17
    $region16: #{decoder_block.1} parent=1 // pred_region
      %s66 = ssub.s32 1024, 1024
      %67 = vsyncadd [#allocation9], %s66
      %s68 = sshll.u32 [#allocation8], 4
      %s69 = int_to_ptr.vmem [resolvable:$true] %s68
      %74 = dma.hbm_to_vmem [thread:$0]  %s3, 1024, %s69, [#allocation9], 128, 128, 8
    $region17: #{decoder_block.1} parent=1 // pred_fallthru
      _
    // Predicated region
    $region18: #{decoder_block.1} parent=1 // pred_check
      _
    $region19: #{decoder_block.1} parent=1 // pred_check_branch
      %76 = sbr.rel (0) target = $region21
    $region20: #{decoder_block.1} parent=1 // pred_region
      %s78 = ssub.s32 4096, 4096
      %79 = vsyncadd [#allocation9], %s78
      %s80 = sshll.u32 [#allocation10], 4
      %s81 = int_to_ptr.vmem [resolvable:$true] %s80
      %86 = dma.hbm_to_vmem [thread:$0]  %s4, 4096, %s81, [#allocation9], 128, 128, 8
    $region21: #{decoder_block.1} parent=1 // pred_fallthru
      _
    // Predicated region
    $region22: #{decoder_block.1} parent=1 // pred_check
      _
    $region23: #{decoder_block.1} parent=1 // pred_check_branch
      %88 = sbr.rel (0) target = $region25
    $region24: #{decoder_block.1} parent=1 // pred_region
      %s90 = ssub.s32 8192, 8192
      %91 = vsyncadd [#allocation12], %s90
      %s92 = sshll.u32 [#allocation11], 4
      %s93 = int_to_ptr.vmem [resolvable:$true] %s92
      %98 = dma.hbm_to_vmem [thread:$0]  %s5, 8192, %s93, [#allocation12], 256, 256, 16
    $region25: #{decoder_block.1} parent=1 // pred_fallthru
      _
    // Predicated region
    $region26: #{decoder_block.1} parent=1 // pred_check
      _
    $region27: #{decoder_block.1} parent=1 // pred_check_branch
      %100 = sbr.rel (0) target = $region29
    $region28: #{decoder_block.1} parent=1 // pred_region
      %s102 = ssub.s32 4096, 4096
      %103 = vsyncadd [#allocation12], %s102
      %s104 = sshll.u32 [#allocation13], 4
      %s105 = int_to_ptr.vmem [resolvable:$true] %s104
      %110 = dma.hbm_to_vmem [thread:$0]  %s6, 4096, %s105, [#allocation12], 128, 128, 8
    $region29: #{decoder_block.1} parent=1 // pred_fallthru
      _
    // Predicated region
    $region30: #{decoder_block.1} parent=1 // pred_check
      _
    $region31: #{decoder_block.1} parent=1 // pred_check_branch
      %112 = sbr.rel (0) target = $region33
    $region32: #{decoder_block.1} parent=1 // pred_region
      %s114 = ssub.s32 4096, 4096
      %115 = vsyncadd [#allocation15], %s114
      %s116 = sshll.u32 [#allocation14], 4
      %s117 = int_to_ptr.vmem [resolvable:$true] %s116
      %122 = dma.hbm_to_vmem [thread:$0]  %s7, 4096, %s117, [#allocation15], 128, 128, 8
    $region33: #{decoder_block.1} parent=1 // pred_fallthru
      _
    // Predicated region
    $region34: #{decoder_block.1} parent=1 // pred_check
      _
    $region35: #{decoder_block.1} parent=1 // pred_check_branch
      %124 = sbr.rel (0) target = $region37
    $region36: #{decoder_block.1} parent=1 // pred_region
      %s126 = ssub.s32 8192, 8192
      %127 = vsyncadd [#allocation15], %s126
      %s128 = sshll.u32 [#allocation16], 4
      %s129 = int_to_ptr.vmem [resolvable:$true] %s128
      %134 = dma.hbm_to_vmem [thread:$0]  %s8, 8192, %s129, [#allocation15], 256, 256, 16
    $region37: #{decoder_block.1} parent=1 // pred_fallthru
      _
    // Predicated region
    $region38: #{decoder_block.1} parent=1 // pred_check
      _
    $region39: #{decoder_block.1} parent=1 // pred_check_branch
      %136 = sbr.rel (0) target = $region41
    $region40: #{decoder_block.1} parent=1 // pred_region
      %s138 = ssub.s32 4096, 4096
      %139 = vsyncadd [#allocation18], %s138
      %s140 = sshll.u32 [#allocation17], 4
      %s141 = int_to_ptr.vmem [resolvable:$true] %s140
      %146 = dma.hbm_to_vmem [thread:$0]  %s9, 4096, %s141, [#allocation18], 128, 128, 8
    $region41: #{decoder_block.1} parent=1 // pred_fallthru
      _
    // Predicated region
    $region42: #{decoder_block.1} parent=1 // pred_check
      _
    $region43: #{decoder_block.1} parent=1 // pred_check_branch
      %148 = sbr.rel (0) target = $region45
    $region44: #{decoder_block.1} parent=1 // pred_region
      %s150 = ssub.s32 8192, 8192
      %151 = vsyncadd [#allocation18], %s150
      %s152 = sshll.u32 [#allocation19], 4
      %s153 = int_to_ptr.vmem [resolvable:$true] %s152
      %158 = dma.hbm_to_vmem [thread:$0]  %s10, 8192, %s153, [#allocation18], 256, 256, 16
    $region45: #{decoder_block.1} parent=1 // pred_fallthru
      _
    // Predicated region
    $region46: #{decoder_block.1} parent=1 // pred_check
      _
    $region47: #{decoder_block.1} parent=1 // pred_check_branch
      %160 = sbr.rel (0) target = $region49
    $region48: #{decoder_block.1} parent=1 // pred_region
      _
    $region49: #{decoder_block.1} parent=1 // pred_fallthru
      _
    // Predicated region
    $region50: #{decoder_block.1} parent=1 // pred_check
      _
    $region51: #{decoder_block.1} parent=1 // pred_check_branch
      %162 = sbr.rel (0) target = $region53
    $region52: #{decoder_block.1} parent=1 // pred_region
      %s164 = ssub.s32 8192, 8192
      %165 = vsyncadd [#allocation21], %s164
      %s166 = sshll.u32 [#allocation20], 4
      %s167 = int_to_ptr.vmem [resolvable:$true] %s166
      %172 = dma.hbm_to_vmem [thread:$0]  %s12, 8192, %s167, [#allocation21], 128, 128, 8
    $region53: #{decoder_block.1} parent=1 // pred_fallthru
      _
    // Predicated region
    $region54: #{decoder_block.1} parent=1 // pred_check
      _
    $region55: #{decoder_block.1} parent=1 // pred_check_branch
      %174 = sbr.rel (0) target = $region57
    $region56: #{decoder_block.1} parent=1 // pred_region
      %s176 = ssub.s32 512, 512
      %177 = vsyncadd [#allocation21], %s176
      %s178 = sshll.u32 [#allocation22], 4
      %s179 = int_to_ptr.vmem [resolvable:$true] %s178
      %184 = dma.hbm_to_vmem [thread:$0]  %s13, 512, %s179, [#allocation21], 256, 256, 16
    $region57: #{decoder_block.1} parent=1 // pred_fallthru
      _
    // Predicated region
    $region58: #{decoder_block.1} parent=1 // pred_check
      _
    $region59: #{decoder_block.1} parent=1 // pred_check_branch
      %186 = sbr.rel (0) target = $region61
    $region60: #{decoder_block.1} parent=1 // pred_region
      %187 = dma.done [#allocation3], 2048
    $region61: #{decoder_block.1} parent=1 // pred_fallthru
      _
    // Predicated region
    $region62: #{decoder_block.1} parent=1 // pred_check
      _
    $region63: #{decoder_block.1} parent=1 // pred_check_branch
      %189 = sbr.rel (0) target = $region65
    $region64: #{decoder_block.1} parent=1 // pred_region
      %190 = dma.done [#allocation6], 4096
    $region65: #{decoder_block.1} parent=1 // pred_fallthru
      _
    // Predicated region
    $region66: #{decoder_block.1} parent=1 // pred_check
      _
    $region67: #{decoder_block.1} parent=1 // pred_check_branch
      %192 = sbr.rel (0) target = $region69
    $region68: #{decoder_block.1} parent=1 // pred_region
      %193 = dma.done [#allocation6], 1024
    $region69: #{decoder_block.1} parent=1 // pred_fallthru
      _
    // Predicated region
    $region70: #{decoder_block.1} parent=1 // pred_check
      _
    $region71: #{decoder_block.1} parent=1 // pred_check_branch
      %195 = sbr.rel (0) target = $region73
    $region72: #{decoder_block.1} parent=1 // pred_region
      %196 = dma.done [#allocation9], 1024
    $region73: #{decoder_block.1} parent=1 // pred_fallthru
      _
    // Predicated region
    $region74: #{decoder_block.1} parent=1 // pred_check
      _
    $region75: #{decoder_block.1} parent=1 // pred_check_branch
      %198 = sbr.rel (0) target = $region77
    $region76: #{decoder_block.1} parent=1 // pred_region
      %199 = dma.done [#allocation9], 4096
    $region77: #{decoder_block.1} parent=1 // pred_fallthru
      _
    // Predicated region
    $region78: #{decoder_block.1} parent=1 // pred_check
      _
    $region79: #{decoder_block.1} parent=1 // pred_check_branch
      %201 = sbr.rel (0) target = $region81
    $region80: #{decoder_block.1} parent=1 // pred_region
      %202 = dma.done [#allocation12], 8192
    $region81: #{decoder_block.1} parent=1 // pred_fallthru
      _
    // Predicated region
    $region82: #{decoder_block.1} parent=1 // pred_check
      _
    $region83: #{decoder_block.1} parent=1 // pred_check_branch
      %204 = sbr.rel (0) target = $region85
    $region84: #{decoder_block.1} parent=1 // pred_region
      %205 = dma.done [#allocation12], 4096
    $region85: #{decoder_block.1} parent=1 // pred_fallthru
      _
    // Predicated region
    $region86: #{decoder_block.1} parent=1 // pred_check
      _
    $region87: #{decoder_block.1} parent=1 // pred_check_branch
      %207 = sbr.rel (0) target = $region89
    $region88: #{decoder_block.1} parent=1 // pred_region
      %208 = dma.done [#allocation15], 4096
    $region89: #{decoder_block.1} parent=1 // pred_fallthru
      _
    // Predicated region
    $region90: #{decoder_block.1} parent=1 // pred_check
      _
    $region91: #{decoder_block.1} parent=1 // pred_check_branch
      %210 = sbr.rel (0) target = $region93
    $region92: #{decoder_block.1} parent=1 // pred_region
      %211 = dma.done [#allocation15], 8192
    $region93: #{decoder_block.1} parent=1 // pred_fallthru
      _
    // Predicated region
    $region94: #{decoder_block.1} parent=1 // pred_check
      _
    $region95: #{decoder_block.1} parent=1 // pred_check_branch
      %213 = sbr.rel (0) target = $region97
    $region96: #{decoder_block.1} parent=1 // pred_region
      %214 = dma.done [#allocation18], 4096
    $region97: #{decoder_block.1} parent=1 // pred_fallthru
      _
    // Predicated region
    $region98: #{decoder_block.1} parent=1 // pred_check
      _
    $region99: #{decoder_block.1} parent=1 // pred_check_branch
      %216 = sbr.rel (0) target = $region101
    $region100: #{decoder_block.1} parent=1 // pred_region
      %217 = dma.done [#allocation18], 8192
    $region101: #{decoder_block.1} parent=1 // pred_fallthru
      _
    // Predicated region
    $region102: #{decoder_block.1} parent=1 // pred_check
      _
    $region103: #{decoder_block.1} parent=1 // pred_check_branch
      %219 = sbr.rel (0) target = $region105
    $region104: #{decoder_block.1} parent=1 // pred_region
      %220 = dma.done [#allocation21], 8192
    $region105: #{decoder_block.1} parent=1 // pred_fallthru
      _
    // Predicated region
    $region106: #{decoder_block.1} parent=1 // pred_check
      _
    $region107: #{decoder_block.1} parent=1 // pred_check_branch
      %222 = sbr.rel (0) target = $region109
    $region108: #{decoder_block.1} parent=1 // pred_region
      %223 = dma.done [#allocation21], 512
    $region109: #{decoder_block.1} parent=1 // pred_fallthru
      _
    %v225 = vld [vmem:[#allocation2] sm:$0xff]
    %v226 = vld [vmem:[#allocation2 + $0x8] sm:$0xff]
    %v227 = vld [vmem:[#allocation2 + $0x10] sm:$0xff]
    %v228 = vld [vmem:[#allocation2 + $0x18] sm:$0xff]
    %v229 = vld [vmem:[#allocation2 + $0x20] sm:$0xff]
    %v230 = vld [vmem:[#allocation2 + $0x28] sm:$0xff]
    %v231 = vld [vmem:[#allocation2 + $0x30] sm:$0xff]
    %v232 = vld [vmem:[#allocation2 + $0x38] sm:$0xff]
    %v233 = vld [vmem:[#allocation2 + $0x40] sm:$0xff]
    %v234 = vld [vmem:[#allocation2 + $0x48] sm:$0xff]
    %v235 = vld [vmem:[#allocation2 + $0x50] sm:$0xff]
    %v236 = vld [vmem:[#allocation2 + $0x58] sm:$0xff]
    %v237 = vld [vmem:[#allocation2 + $0x60] sm:$0xff]
    %v238 = vld [vmem:[#allocation2 + $0x68] sm:$0xff]
    %v239 = vld [vmem:[#allocation2 + $0x70] sm:$0xff]
    %v240 = vld [vmem:[#allocation2 + $0x78] sm:$0xff]
    %v241 = vld [vmem:[#allocation5] sm:$0xff]
    %v242 = vld [vmem:[#allocation5 + $0x8] sm:$0xff]
    %v243 = vld [vmem:[#allocation5 + $0x10] sm:$0xff]
    %v244 = vld [vmem:[#allocation5 + $0x18] sm:$0xff]
    %v245 = vld [vmem:[#allocation5 + $0x20] sm:$0xff]
    %v246 = vld [vmem:[#allocation5 + $0x28] sm:$0xff]
    %v247 = vld [vmem:[#allocation5 + $0x30] sm:$0xff]
    %v248 = vld [vmem:[#allocation5 + $0x38] sm:$0xff]
    %v249 = vld [vmem:[#allocation5 + $0x40] sm:$0xff]
    %v250 = vld [vmem:[#allocation5 + $0x48] sm:$0xff]
    %v251 = vld [vmem:[#allocation5 + $0x50] sm:$0xff]
    %v252 = vld [vmem:[#allocation5 + $0x58] sm:$0xff]
    %v253 = vld [vmem:[#allocation5 + $0x60] sm:$0xff]
    %v254 = vld [vmem:[#allocation5 + $0x68] sm:$0xff]
    %v255 = vld [vmem:[#allocation5 + $0x70] sm:$0xff]
    %v256 = vld [vmem:[#allocation5 + $0x78] sm:$0xff]
    %v257 = vld [vmem:[#allocation5 + $0x80] sm:$0xff]
    %v258 = vld [vmem:[#allocation5 + $0x88] sm:$0xff]
    %v259 = vld [vmem:[#allocation5 + $0x90] sm:$0xff]
    %v260 = vld [vmem:[#allocation5 + $0x98] sm:$0xff]
    %v261 = vld [vmem:[#allocation5 + $0xa0] sm:$0xff]
    %v262 = vld [vmem:[#allocation5 + $0xa8] sm:$0xff]
    %v263 = vld [vmem:[#allocation5 + $0xb0] sm:$0xff]
    %v264 = vld [vmem:[#allocation5 + $0xb8] sm:$0xff]
    %v265 = vld [vmem:[#allocation5 + $0xc0] sm:$0xff]
    %v266 = vld [vmem:[#allocation5 + $0xc8] sm:$0xff]
    %v267 = vld [vmem:[#allocation5 + $0xd0] sm:$0xff]
    %v268 = vld [vmem:[#allocation5 + $0xd8] sm:$0xff]
    %v269 = vld [vmem:[#allocation5 + $0xe0] sm:$0xff]
    %v270 = vld [vmem:[#allocation5 + $0xe8] sm:$0xff]
    %v271 = vld [vmem:[#allocation5 + $0xf0] sm:$0xff]
    %v272 = vld [vmem:[#allocation5 + $0xf8] sm:$0xff]
    %v273 = vld [vmem:[#allocation7] sm:$0xff]
    %v274 = vld [vmem:[#allocation7 + $0x8] sm:$0xff]
    %v275 = vld [vmem:[#allocation7 + $0x10] sm:$0xff]
    %v276 = vld [vmem:[#allocation7 + $0x18] sm:$0xff]
    %v277 = vld [vmem:[#allocation7 + $0x20] sm:$0xff]
    %v278 = vld [vmem:[#allocation7 + $0x28] sm:$0xff]
    %v279 = vld [vmem:[#allocation7 + $0x30] sm:$0xff]
    %v280 = vld [vmem:[#allocation7 + $0x38] sm:$0xff]
    %v281 = vld [vmem:[#allocation8] sm:$0xff]
    %v282 = vld [vmem:[#allocation8 + $0x8] sm:$0xff]
    %v283 = vld [vmem:[#allocation8 + $0x10] sm:$0xff]
    %v284 = vld [vmem:[#allocation8 + $0x18] sm:$0xff]
    %v285 = vld [vmem:[#allocation8 + $0x20] sm:$0xff]
    %v286 = vld [vmem:[#allocation8 + $0x28] sm:$0xff]
    %v287 = vld [vmem:[#allocation8 + $0x30] sm:$0xff]
    %v288 = vld [vmem:[#allocation8 + $0x38] sm:$0xff]
    %v289 = vld [vmem:[#allocation22] sm:$0xff]
    %v290 = vld [vmem:[#allocation22 + $0x8] sm:$0xff]
    %v291 = vld [vmem:[#allocation22 + $0x10] sm:$0x7f]
    %v292 = vld [vmem:[#allocation22 + $0x18] sm:$0x7f]
    %v293 = vpack.c.bf16 %v227, %v225
    %v294 = vpack.c.bf16 %v228, %v226
    %v295 = vpack.c.bf16 %v231, %v229
    %v296 = vpack.c.bf16 %v232, %v230
    %v297 = vpack.c.bf16 %v235, %v233
    %v298 = vpack.c.bf16 %v236, %v234
    %v299 = vpack.c.bf16 %v239, %v237
    %v300 = vpack.c.bf16 %v240, %v238
    %v301 = vld [vmem:[#allocation10] sm:$0xff]
    %v302 = vld [vmem:[#allocation10 + $0x8] sm:$0xff]
    %v303 = vld [vmem:[#allocation10 + $0x10] sm:$0xff]
    %v304 = vld [vmem:[#allocation10 + $0x18] sm:$0xff]
    %v305 = vld [vmem:[#allocation10 + $0x20] sm:$0xff]
    %v306 = vld [vmem:[#allocation10 + $0x28] sm:$0xff]
    %v307 = vld [vmem:[#allocation10 + $0x30] sm:$0xff]
    %v308 = vld [vmem:[#allocation10 + $0x38] sm:$0xff]
    %v309 = vld [vmem:[#allocation10 + $0x40] sm:$0xff]
    %v310 = vld [vmem:[#allocation10 + $0x48] sm:$0xff]
    %v311 = vld [vmem:[#allocation10 + $0x50] sm:$0xff]
    %v312 = vld [vmem:[#allocation10 + $0x58] sm:$0xff]
    %v313 = vld [vmem:[#allocation10 + $0x60] sm:$0xff]
    %v314 = vld [vmem:[#allocation10 + $0x68] sm:$0xff]
    %v315 = vld [vmem:[#allocation10 + $0x70] sm:$0xff]
    %v316 = vld [vmem:[#allocation10 + $0x78] sm:$0xff]
    %v317 = vld [vmem:[#allocation10 + $0x80] sm:$0xff]
    %v318 = vld [vmem:[#allocation10 + $0x88] sm:$0xff]
    %v319 = vld [vmem:[#allocation10 + $0x90] sm:$0xff]
    %v320 = vld [vmem:[#allocation10 + $0x98] sm:$0xff]
    %v321 = vld [vmem:[#allocation10 + $0xa0] sm:$0xff]
    %v322 = vld [vmem:[#allocation10 + $0xa8] sm:$0xff]
    %v323 = vld [vmem:[#allocation10 + $0xb0] sm:$0xff]
    %v324 = vld [vmem:[#allocation10 + $0xb8] sm:$0xff]
    %v325 = vld [vmem:[#allocation10 + $0xc0] sm:$0xff]
    %v326 = vld [vmem:[#allocation10 + $0xc8] sm:$0xff]
    %v327 = vld [vmem:[#allocation10 + $0xd0] sm:$0xff]
    %v328 = vld [vmem:[#allocation10 + $0xd8] sm:$0xff]
    %v329 = vld [vmem:[#allocation10 + $0xe0] sm:$0xff]
    %v330 = vld [vmem:[#allocation10 + $0xe8] sm:$0xff]
    %v331 = vld [vmem:[#allocation10 + $0xf0] sm:$0xff]
    %v332 = vld [vmem:[#allocation10 + $0xf8] sm:$0xff]
    %v333 = vlaneseq
    %v334 = vshrl.u32 %v333, 7
    %v335 = vsub.s32 0, %v334
    %v336 = vrot.slane %v289, %v335
    %v337 = vlaneseq
    %v338 = vshrl.u32 %v337, 7
    %v339 = vsub.s32 0, %v338
    %v340 = vrot.slane %v290, %v339
    %v373 = vunpack.c.l.b16 %v301
    %v374 = vunpack.c.h.b16 %v301
    %v375 = vunpack.c.l.b16 %v302
    %v376 = vunpack.c.h.b16 %v302
    %v377 = vunpack.c.l.b16 %v303
    %v378 = vunpack.c.h.b16 %v303
    %v379 = vunpack.c.l.b16 %v304
    %v380 = vunpack.c.h.b16 %v304
    %v381 = vunpack.c.l.b16 %v305
    %v382 = vunpack.c.h.b16 %v305
    %v383 = vunpack.c.l.b16 %v306
    %v384 = vunpack.c.h.b16 %v306
    %v385 = vunpack.c.l.b16 %v307
    %v386 = vunpack.c.h.b16 %v307
    %v387 = vunpack.c.l.b16 %v308
    %v388 = vunpack.c.h.b16 %v308
    %v389 = vunpack.c.l.b16 %v309
    %v390 = vunpack.c.h.b16 %v309
    %v391 = vunpack.c.l.b16 %v310
    %v392 = vunpack.c.h.b16 %v310
    %v393 = vunpack.c.l.b16 %v311
    %v394 = vunpack.c.h.b16 %v311
    %v395 = vunpack.c.l.b16 %v312
    %v396 = vunpack.c.h.b16 %v312
    %v397 = vunpack.c.l.b16 %v313
    %v398 = vunpack.c.h.b16 %v313
    %v399 = vunpack.c.l.b16 %v314
    %v400 = vunpack.c.h.b16 %v314
    %v401 = vunpack.c.l.b16 %v315
    %v402 = vunpack.c.h.b16 %v315
    %v403 = vunpack.c.l.b16 %v316
    %v404 = vunpack.c.h.b16 %v316
    %v405 = vunpack.c.l.b16 %v317
    %v406 = vunpack.c.h.b16 %v317
    %v407 = vunpack.c.l.b16 %v318
    %v408 = vunpack.c.h.b16 %v318
    %v409 = vunpack.c.l.b16 %v319
    %v410 = vunpack.c.h.b16 %v319
    %v411 = vunpack.c.l.b16 %v320
    %v412 = vunpack.c.h.b16 %v320
    %v413 = vunpack.c.l.b16 %v321
    %v414 = vunpack.c.h.b16 %v321
    %v415 = vunpack.c.l.b16 %v322
    %v416 = vunpack.c.h.b16 %v322
    %v417 = vunpack.c.l.b16 %v323
    %v418 = vunpack.c.h.b16 %v323
    %v419 = vunpack.c.l.b16 %v324
    %v420 = vunpack.c.h.b16 %v324
    %v421 = vunpack.c.l.b16 %v325
    %v422 = vunpack.c.h.b16 %v325
    %v423 = vunpack.c.l.b16 %v326
    %v424 = vunpack.c.h.b16 %v326
    %v425 = vunpack.c.l.b16 %v327
    %v426 = vunpack.c.h.b16 %v327
    %v427 = vunpack.c.l.b16 %v328
    %v428 = vunpack.c.h.b16 %v328
    %v429 = vunpack.c.l.b16 %v329
    %v430 = vunpack.c.h.b16 %v329
    %v431 = vunpack.c.l.b16 %v330
    %v432 = vunpack.c.h.b16 %v330
    %v433 = vunpack.c.l.b16 %v331
    %v434 = vunpack.c.h.b16 %v331
    %v435 = vunpack.c.l.b16 %v332
    %v436 = vunpack.c.h.b16 %v332
    %v437 = vpack.c.b16 %v375, %v373
    %v438 = vpack.c.b16 %v376, %v374
    %v439 = vpack.c.b16 %v379, %v377
    %v440 = vpack.c.b16 %v380, %v378
    %v441 = vpack.c.b16 %v383, %v381
    %v442 = vpack.c.b16 %v384, %v382
    %v443 = vpack.c.b16 %v387, %v385
    %v444 = vpack.c.b16 %v388, %v386
    %v445 = vpack.c.b16 %v391, %v389
    %v446 = vpack.c.b16 %v392, %v390
    %v447 = vpack.c.b16 %v395, %v393
    %v448 = vpack.c.b16 %v396, %v394
    %v449 = vpack.c.b16 %v399, %v397
    %v450 = vpack.c.b16 %v400, %v398
    %v451 = vpack.c.b16 %v403, %v401
    %v452 = vpack.c.b16 %v404, %v402
    %v453 = vpack.c.b16 %v407, %v405
    %v454 = vpack.c.b16 %v408, %v406
    %v455 = vpack.c.b16 %v411, %v409
    %v456 = vpack.c.b16 %v412, %v410
    %v457 = vpack.c.b16 %v415, %v413
    %v458 = vpack.c.b16 %v416, %v414
    %v459 = vpack.c.b16 %v419, %v417
    %v460 = vpack.c.b16 %v420, %v418
    %v461 = vpack.c.b16 %v423, %v421
    %v462 = vpack.c.b16 %v424, %v422
    %v463 = vpack.c.b16 %v427, %v425
    %v464 = vpack.c.b16 %v428, %v426
    %v465 = vpack.c.b16 %v431, %v429
    %v466 = vpack.c.b16 %v432, %v430
    %v467 = vpack.c.b16 %v435, %v433
    %v468 = vpack.c.b16 %v436, %v434
    %501 = vmatprep.subr.bf16.mxu0 %v452
    %502 = vmatpush1.bf16.msra.mxu0 %v451
    %503 = vmatprep.subr.bf16.mxu0 %v450
    %504 = vmatpush1.bf16.msra.mxu0 %v449
    %505 = vmatprep.subr.bf16.mxu0 %v448
    %506 = vmatpush1.bf16.msra.mxu0 %v447
    %507 = vmatprep.subr.bf16.mxu0 %v446
    %508 = vmatpush1.bf16.msra.mxu0 %v445
    %509 = vmatprep.subr.bf16.mxu0 %v444
    %510 = vmatpush1.bf16.msra.mxu0 %v443
    %511 = vmatprep.subr.bf16.mxu0 %v442
    %512 = vmatpush1.bf16.msra.mxu0 %v441
    %513 = vmatprep.subr.bf16.mxu0 %v440
    %514 = vmatpush1.bf16.msra.mxu0 %v439
    %515 = vmatprep.subr.bf16.mxu0 %v438
    %516 = vmatpush1.bf16.msra.mxu0 %v437
    %517 = vmatprep.subr.bf16.mxu0 %v468
    %518 = vmatpush2.bf16.msra.mxu0 %v467
    %519 = vmatprep.subr.bf16.mxu0 %v466
    %520 = vmatpush2.bf16.msra.mxu0 %v465
    %521 = vmatprep.subr.bf16.mxu0 %v464
    %522 = vmatpush2.bf16.msra.mxu0 %v463
    %523 = vmatprep.subr.bf16.mxu0 %v462
    %524 = vmatpush2.bf16.msra.mxu0 %v461
    %525 = vmatprep.subr.bf16.mxu0 %v460
    %526 = vmatpush2.bf16.msra.mxu0 %v459
    %527 = vmatprep.subr.bf16.mxu0 %v458
    %528 = vmatpush2.bf16.msra.mxu0 %v457
    %529 = vmatprep.subr.bf16.mxu0 %v456
    %530 = vmatpush2.bf16.msra.mxu0 %v455
    %531 = vmatprep.subr.bf16.mxu0 %v454
    %532 = vmatpush2.bf16.msra.mxu0 %v453
    %533 = vmatprep.mubr.bf16.mxu0 %v294
    %534 = vmatmul.mubr.bf16.gmra.mxu0 %v293
    %v535 = vpop.f32.mrf.mxu0
    %v536 = vadd.f32 %v336, %v535
    %v537 = vpop.f32.mrf.mxu0
    %v538 = vadd.f32 %v340, %v537
    %v539 = vpop.f32.mrf.mxu0
    %v540 = vadd.f32 %v336, %v539
    %v541 = vpop.f32.mrf.mxu0
    %v542 = vadd.f32 %v340, %v541
    %543 = vmatprep.mubr.bf16.mxu0 %v296
    %544 = vmatmul.mubr.bf16.gmra.mxu0 %v295
    %v545 = vpop.f32.mrf.mxu0
    %v546 = vadd.f32 %v336, %v545
    %v547 = vpop.f32.mrf.mxu0
    %v548 = vadd.f32 %v340, %v547
    %v549 = vpop.f32.mrf.mxu0
    %v550 = vadd.f32 %v336, %v549
    %v551 = vpop.f32.mrf.mxu0
    %v552 = vadd.f32 %v340, %v551
    %553 = vmatprep.mubr.bf16.mxu0 %v298
    %554 = vmatmul.mubr.bf16.gmra.mxu0 %v297
    %v555 = vpop.f32.mrf.mxu0
    %v556 = vadd.f32 %v336, %v555
    %v557 = vpop.f32.mrf.mxu0
    %v558 = vadd.f32 %v340, %v557
    %v559 = vpop.f32.mrf.mxu0
    %v560 = vadd.f32 %v336, %v559
    %v561 = vpop.f32.mrf.mxu0
    %v562 = vadd.f32 %v340, %v561
    %563 = vmatprep.mubr.bf16.mxu0 %v300
    %564 = vmatmul.mubr.bf16.gmra.mxu0 %v299
    %v565 = vpop.f32.mrf.mxu0
    %v566 = vadd.f32 %v336, %v565
    %v567 = vpop.f32.mrf.mxu0
    %v568 = vadd.f32 %v340, %v567
    %v569 = vpop.f32.mrf.mxu0
    %v570 = vadd.f32 %v336, %v569
    %v571 = vpop.f32.mrf.mxu0
    %v572 = vadd.f32 %v340, %v571
    %573 = vdwg.mxu0
    %v574 = vld [vmem:[#allocation11] sm:$0xff]
    %v575 = vld [vmem:[#allocation11 + $0x8] sm:$0xff]
    %v576 = vld [vmem:[#allocation11 + $0x10] sm:$0xff]
    %v577 = vld [vmem:[#allocation11 + $0x18] sm:$0xff]
    %v578 = vld [vmem:[#allocation11 + $0x20] sm:$0xff]
    %v579 = vld [vmem:[#allocation11 + $0x28] sm:$0xff]
    %v580 = vld [vmem:[#allocation11 + $0x30] sm:$0xff]
    %v581 = vld [vmem:[#allocation11 + $0x38] sm:$0xff]
    %v582 = vld [vmem:[#allocation11 + $0x40] sm:$0xff]
    %v583 = vld [vmem:[#allocation11 + $0x48] sm:$0xff]
    %v584 = vld [vmem:[#allocation11 + $0x50] sm:$0xff]
    %v585 = vld [vmem:[#allocation11 + $0x58] sm:$0xff]
    %v586 = vld [vmem:[#allocation11 + $0x60] sm:$0xff]
    %v587 = vld [vmem:[#allocation11 + $0x68] sm:$0xff]
    %v588 = vld [vmem:[#allocation11 + $0x70] sm:$0xff]
    %v589 = vld [vmem:[#allocation11 + $0x78] sm:$0xff]
    %v590 = vld [vmem:[#allocation11 + $0x80] sm:$0xff]
    %v591 = vld [vmem:[#allocation11 + $0x88] sm:$0xff]
    %v592 = vld [vmem:[#allocation11 + $0x90] sm:$0xff]
    %v593 = vld [vmem:[#allocation11 + $0x98] sm:$0xff]
    %v594 = vld [vmem:[#allocation11 + $0xa0] sm:$0xff]
    %v595 = vld [vmem:[#allocation11 + $0xa8] sm:$0xff]
    %v596 = vld [vmem:[#allocation11 + $0xb0] sm:$0xff]
    %v597 = vld [vmem:[#allocation11 + $0xb8] sm:$0xff]
    %v598 = vld [vmem:[#allocation11 + $0xc0] sm:$0xff]
    %v599 = vld [vmem:[#allocation11 + $0xc8] sm:$0xff]
    %v600 = vld [vmem:[#allocation11 + $0xd0] sm:$0xff]
    %v601 = vld [vmem:[#allocation11 + $0xd8] sm:$0xff]
    %v602 = vld [vmem:[#allocation11 + $0xe0] sm:$0xff]
    %v603 = vld [vmem:[#allocation11 + $0xe8] sm:$0xff]
    %v604 = vld [vmem:[#allocation11 + $0xf0] sm:$0xff]
    %v605 = vld [vmem:[#allocation11 + $0xf8] sm:$0xff]
    %v606 = vld [vmem:[#allocation11 + $0x100] sm:$0xff]
    %v607 = vld [vmem:[#allocation11 + $0x108] sm:$0xff]
    %v608 = vld [vmem:[#allocation11 + $0x110] sm:$0xff]
    %v609 = vld [vmem:[#allocation11 + $0x118] sm:$0xff]
    %v610 = vld [vmem:[#allocation11 + $0x120] sm:$0xff]
    %v611 = vld [vmem:[#allocation11 + $0x128] sm:$0xff]
    %v612 = vld [vmem:[#allocation11 + $0x130] sm:$0xff]
    %v613 = vld [vmem:[#allocation11 + $0x138] sm:$0xff]
    %v614 = vld [vmem:[#allocation11 + $0x140] sm:$0xff]
    %v615 = vld [vmem:[#allocation11 + $0x148] sm:$0xff]
    %v616 = vld [vmem:[#allocation11 + $0x150] sm:$0xff]
    %v617 = vld [vmem:[#allocation11 + $0x158] sm:$0xff]
    %v618 = vld [vmem:[#allocation11 + $0x160] sm:$0xff]
    %v619 = vld [vmem:[#allocation11 + $0x168] sm:$0xff]
    %v620 = vld [vmem:[#allocation11 + $0x170] sm:$0xff]
    %v621 = vld [vmem:[#allocation11 + $0x178] sm:$0xff]
    %v622 = vld [vmem:[#allocation11 + $0x180] sm:$0xff]
    %v623 = vld [vmem:[#allocation11 + $0x188] sm:$0xff]
    %v624 = vld [vmem:[#allocation11 + $0x190] sm:$0xff]
    %v625 = vld [vmem:[#allocation11 + $0x198] sm:$0xff]
    %v626 = vld [vmem:[#allocation11 + $0x1a0] sm:$0xff]
    %v627 = vld [vmem:[#allocation11 + $0x1a8] sm:$0xff]
    %v628 = vld [vmem:[#allocation11 + $0x1b0] sm:$0xff]
    %v629 = vld [vmem:[#allocation11 + $0x1b8] sm:$0xff]
    %v630 = vld [vmem:[#allocation11 + $0x1c0] sm:$0xff]
    %v631 = vld [vmem:[#allocation11 + $0x1c8] sm:$0xff]
    %v632 = vld [vmem:[#allocation11 + $0x1d0] sm:$0xff]
    %v633 = vld [vmem:[#allocation11 + $0x1d8] sm:$0xff]
    %v634 = vld [vmem:[#allocation11 + $0x1e0] sm:$0xff]
    %v635 = vld [vmem:[#allocation11 + $0x1e8] sm:$0xff]
    %v636 = vld [vmem:[#allocation11 + $0x1f0] sm:$0xff]
    %v637 = vld [vmem:[#allocation11 + $0x1f8] sm:$0xff]
    %v702 = vunpack.c.l.b16 %v574
    %v703 = vunpack.c.h.b16 %v574
    %v704 = vunpack.c.l.b16 %v575
    %v705 = vunpack.c.h.b16 %v575
    %v706 = vunpack.c.l.b16 %v576
    %v707 = vunpack.c.h.b16 %v576
    %v708 = vunpack.c.l.b16 %v577
    %v709 = vunpack.c.h.b16 %v577
    %v710 = vunpack.c.l.b16 %v578
    %v711 = vunpack.c.h.b16 %v578
    %v712 = vunpack.c.l.b16 %v579
    %v713 = vunpack.c.h.b16 %v579
    %v714 = vunpack.c.l.b16 %v580
    %v715 = vunpack.c.h.b16 %v580
    %v716 = vunpack.c.l.b16 %v581
    %v717 = vunpack.c.h.b16 %v581
    %v718 = vunpack.c.l.b16 %v582
    %v719 = vunpack.c.h.b16 %v582
    %v720 = vunpack.c.l.b16 %v583
    %v721 = vunpack.c.h.b16 %v583
    %v722 = vunpack.c.l.b16 %v584
    %v723 = vunpack.c.h.b16 %v584
    %v724 = vunpack.c.l.b16 %v585
    %v725 = vunpack.c.h.b16 %v585
    %v726 = vunpack.c.l.b16 %v586
    %v727 = vunpack.c.h.b16 %v586
    %v728 = vunpack.c.l.b16 %v587
    %v729 = vunpack.c.h.b16 %v587
    %v730 = vunpack.c.l.b16 %v588
    %v731 = vunpack.c.h.b16 %v588
    %v732 = vunpack.c.l.b16 %v589
    %v733 = vunpack.c.h.b16 %v589
    %v734 = vunpack.c.l.b16 %v590
    %v735 = vunpack.c.h.b16 %v590
    %v736 = vunpack.c.l.b16 %v591
    %v737 = vunpack.c.h.b16 %v591
    %v738 = vunpack.c.l.b16 %v592
    %v739 = vunpack.c.h.b16 %v592
    %v740 = vunpack.c.l.b16 %v593
    %v741 = vunpack.c.h.b16 %v593
    %v742 = vunpack.c.l.b16 %v594
    %v743 = vunpack.c.h.b16 %v594
    %v744 = vunpack.c.l.b16 %v595
    %v745 = vunpack.c.h.b16 %v595
    %v746 = vunpack.c.l.b16 %v596
    %v747 = vunpack.c.h.b16 %v596
    %v748 = vunpack.c.l.b16 %v597
    %v749 = vunpack.c.h.b16 %v597
    %v750 = vunpack.c.l.b16 %v598
    %v751 = vunpack.c.h.b16 %v598
    %v752 = vunpack.c.l.b16 %v599
    %v753 = vunpack.c.h.b16 %v599
    %v754 = vunpack.c.l.b16 %v600
    %v755 = vunpack.c.h.b16 %v600
    %v756 = vunpack.c.l.b16 %v601
    %v757 = vunpack.c.h.b16 %v601
    %v758 = vunpack.c.l.b16 %v602
    %v759 = vunpack.c.h.b16 %v602
    %v760 = vunpack.c.l.b16 %v603
    %v761 = vunpack.c.h.b16 %v603
    %v762 = vunpack.c.l.b16 %v604
    %v763 = vunpack.c.h.b16 %v604
    %v764 = vunpack.c.l.b16 %v605
    %v765 = vunpack.c.h.b16 %v605
    %v766 = vunpack.c.l.b16 %v606
    %v767 = vunpack.c.h.b16 %v606
    %v768 = vunpack.c.l.b16 %v607
    %v769 = vunpack.c.h.b16 %v607
    %v770 = vunpack.c.l.b16 %v608
    %v771 = vunpack.c.h.b16 %v608
    %v772 = vunpack.c.l.b16 %v609
    %v773 = vunpack.c.h.b16 %v609
    %v774 = vunpack.c.l.b16 %v610
    %v775 = vunpack.c.h.b16 %v610
    %v776 = vunpack.c.l.b16 %v611
    %v777 = vunpack.c.h.b16 %v611
    %v778 = vunpack.c.l.b16 %v612
    %v779 = vunpack.c.h.b16 %v612
    %v780 = vunpack.c.l.b16 %v613
    %v781 = vunpack.c.h.b16 %v613
    %v782 = vunpack.c.l.b16 %v614
    %v783 = vunpack.c.h.b16 %v614
    %v784 = vunpack.c.l.b16 %v615
    %v785 = vunpack.c.h.b16 %v615
    %v786 = vunpack.c.l.b16 %v616
    %v787 = vunpack.c.h.b16 %v616
    %v788 = vunpack.c.l.b16 %v617
    %v789 = vunpack.c.h.b16 %v617
    %v790 = vunpack.c.l.b16 %v618
    %v791 = vunpack.c.h.b16 %v618
    %v792 = vunpack.c.l.b16 %v619
    %v793 = vunpack.c.h.b16 %v619
    %v794 = vunpack.c.l.b16 %v620
    %v795 = vunpack.c.h.b16 %v620
    %v796 = vunpack.c.l.b16 %v621
    %v797 = vunpack.c.h.b16 %v621
    %v798 = vunpack.c.l.b16 %v622
    %v799 = vunpack.c.h.b16 %v622
    %v800 = vunpack.c.l.b16 %v623
    %v801 = vunpack.c.h.b16 %v623
    %v802 = vunpack.c.l.b16 %v624
    %v803 = vunpack.c.h.b16 %v624
    %v804 = vunpack.c.l.b16 %v625
    %v805 = vunpack.c.h.b16 %v625
    %v806 = vunpack.c.l.b16 %v626
    %v807 = vunpack.c.h.b16 %v626
    %v808 = vunpack.c.l.b16 %v627
    %v809 = vunpack.c.h.b16 %v627
    %v810 = vunpack.c.l.b16 %v628
    %v811 = vunpack.c.h.b16 %v628
    %v812 = vunpack.c.l.b16 %v629
    %v813 = vunpack.c.h.b16 %v629
    %v814 = vunpack.c.l.b16 %v630
    %v815 = vunpack.c.h.b16 %v630
    %v816 = vunpack.c.l.b16 %v631
    %v817 = vunpack.c.h.b16 %v631
    %v818 = vunpack.c.l.b16 %v632
    %v819 = vunpack.c.h.b16 %v632
    %v820 = vunpack.c.l.b16 %v633
    %v821 = vunpack.c.h.b16 %v633
    %v822 = vunpack.c.l.b16 %v634
    %v823 = vunpack.c.h.b16 %v634
    %v824 = vunpack.c.l.b16 %v635
    %v825 = vunpack.c.h.b16 %v635
    %v826 = vunpack.c.l.b16 %v636
    %v827 = vunpack.c.h.b16 %v636
    %v828 = vunpack.c.l.b16 %v637
    %v829 = vunpack.c.h.b16 %v637
    %v830 = vpack.c.b16 %v706, %v702
    %v831 = vpack.c.b16 %v707, %v703
    %v832 = vpack.c.b16 %v708, %v704
    %v833 = vpack.c.b16 %v709, %v705
    %v834 = vpack.c.b16 %v714, %v710
    %v835 = vpack.c.b16 %v715, %v711
    %v836 = vpack.c.b16 %v716, %v712
    %v837 = vpack.c.b16 %v717, %v713
    %v838 = vpack.c.b16 %v722, %v718
    %v839 = vpack.c.b16 %v723, %v719
    %v840 = vpack.c.b16 %v724, %v720
    %v841 = vpack.c.b16 %v725, %v721
    %v842 = vpack.c.b16 %v730, %v726
    %v843 = vpack.c.b16 %v731, %v727
    %v844 = vpack.c.b16 %v732, %v728
    %v845 = vpack.c.b16 %v733, %v729
    %v846 = vpack.c.b16 %v738, %v734
    %v847 = vpack.c.b16 %v739, %v735
    %v848 = vpack.c.b16 %v740, %v736
    %v849 = vpack.c.b16 %v741, %v737
    %v850 = vpack.c.b16 %v746, %v742
    %v851 = vpack.c.b16 %v747, %v743
    %v852 = vpack.c.b16 %v748, %v744
    %v853 = vpack.c.b16 %v749, %v745
    %v854 = vpack.c.b16 %v754, %v750
    %v855 = vpack.c.b16 %v755, %v751
    %v856 = vpack.c.b16 %v756, %v752
    %v857 = vpack.c.b16 %v757, %v753
    %v858 = vpack.c.b16 %v762, %v758
    %v859 = vpack.c.b16 %v763, %v759
    %v860 = vpack.c.b16 %v764, %v760
    %v861 = vpack.c.b16 %v765, %v761
    %v862 = vpack.c.b16 %v770, %v766
    %v863 = vpack.c.b16 %v771, %v767
    %v864 = vpack.c.b16 %v772, %v768
    %v865 = vpack.c.b16 %v773, %v769
    %v866 = vpack.c.b16 %v778, %v774
    %v867 = vpack.c.b16 %v779, %v775
    %v868 = vpack.c.b16 %v780, %v776
    %v869 = vpack.c.b16 %v781, %v777
    %v870 = vpack.c.b16 %v786, %v782
    %v871 = vpack.c.b16 %v787, %v783
    %v872 = vpack.c.b16 %v788, %v784
    %v873 = vpack.c.b16 %v789, %v785
    %v874 = vpack.c.b16 %v794, %v790
    %v875 = vpack.c.b16 %v795, %v791
    %v876 = vpack.c.b16 %v796, %v792
    %v877 = vpack.c.b16 %v797, %v793
    %v878 = vpack.c.b16 %v802, %v798
    %v879 = vpack.c.b16 %v803, %v799
    %v880 = vpack.c.b16 %v804, %v800
    %v881 = vpack.c.b16 %v805, %v801
    %v882 = vpack.c.b16 %v810, %v806
    %v883 = vpack.c.b16 %v811, %v807
    %v884 = vpack.c.b16 %v812, %v808
    %v885 = vpack.c.b16 %v813, %v809
    %v886 = vpack.c.b16 %v818, %v814
    %v887 = vpack.c.b16 %v819, %v815
    %v888 = vpack.c.b16 %v820, %v816
    %v889 = vpack.c.b16 %v821, %v817
    %v890 = vpack.c.b16 %v826, %v822
    %v891 = vpack.c.b16 %v827, %v823
    %v892 = vpack.c.b16 %v828, %v824
    %v893 = vpack.c.b16 %v829, %v825
    %958 = vmatprep.subr.bf16.mxu0 %v859
    %959 = vmatpush1.bf16.msra.mxu0 %v858
    %960 = vmatprep.subr.bf16.mxu0 %v855
    %961 = vmatpush1.bf16.msra.mxu0 %v854
    %962 = vmatprep.subr.bf16.mxu0 %v851
    %963 = vmatpush1.bf16.msra.mxu0 %v850
    %964 = vmatprep.subr.bf16.mxu0 %v847
    %965 = vmatpush1.bf16.msra.mxu0 %v846
    %966 = vmatprep.subr.bf16.mxu0 %v843
    %967 = vmatpush1.bf16.msra.mxu0 %v842
    %968 = vmatprep.subr.bf16.mxu0 %v839
    %969 = vmatpush1.bf16.msra.mxu0 %v838
    %970 = vmatprep.subr.bf16.mxu0 %v835
    %971 = vmatpush1.bf16.msra.mxu0 %v834
    %972 = vmatprep.subr.bf16.mxu0 %v831
    %973 = vmatpush1.bf16.msra.mxu0 %v830
    %974 = vmatprep.subr.bf16.mxu0 %v891
    %975 = vmatpush2.bf16.msra.mxu0 %v890
    %976 = vmatprep.subr.bf16.mxu0 %v887
    %977 = vmatpush2.bf16.msra.mxu0 %v886
    %978 = vmatprep.subr.bf16.mxu0 %v883
    %979 = vmatpush2.bf16.msra.mxu0 %v882
    %980 = vmatprep.subr.bf16.mxu0 %v879
    %981 = vmatpush2.bf16.msra.mxu0 %v878
    %982 = vmatprep.subr.bf16.mxu0 %v875
    %983 = vmatpush2.bf16.msra.mxu0 %v874
    %984 = vmatprep.subr.bf16.mxu0 %v871
    %985 = vmatpush2.bf16.msra.mxu0 %v870
    %986 = vmatprep.subr.bf16.mxu0 %v867
    %987 = vmatpush2.bf16.msra.mxu0 %v866
    %988 = vmatprep.subr.bf16.mxu0 %v863
    %989 = vmatpush2.bf16.msra.mxu0 %v862
    %990 = vmatprep.mubr.bf16.mxu0 %v294
    %991 = vmatmul.mubr.bf16.gmra.mxu0 %v293
    %v992 = vpop.f32.mrf.mxu0
    %v993 = vadd.f32 0.0, %v992
    %v994 = vpop.f32.mrf.mxu0
    %v995 = vadd.f32 0.0, %v994
    %v996 = vpop.f32.mrf.mxu0
    %v997 = vadd.f32 0.0, %v996
    %v998 = vpop.f32.mrf.mxu0
    %v999 = vadd.f32 0.0, %v998
    %1000 = vmatprep.mubr.bf16.mxu0 %v296
    %1001 = vmatmul.mubr.bf16.gmra.mxu0 %v295
    %v1002 = vpop.f32.mrf.mxu0
    %v1003 = vadd.f32 0.0, %v1002
    %v1004 = vpop.f32.mrf.mxu0
    %v1005 = vadd.f32 0.0, %v1004
    %v1006 = vpop.f32.mrf.mxu0
    %v1007 = vadd.f32 0.0, %v1006
    %v1008 = vpop.f32.mrf.mxu0
    %v1009 = vadd.f32 0.0, %v1008
    %1010 = vmatprep.mubr.bf16.mxu0 %v298
    %1011 = vmatmul.mubr.bf16.gmra.mxu0 %v297
    %v1012 = vpop.f32.mrf.mxu0
    %v1013 = vadd.f32 0.0, %v1012
    %v1014 = vpop.f32.mrf.mxu0
    %v1015 = vadd.f32 0.0, %v1014
    %v1016 = vpop.f32.mrf.mxu0
    %v1017 = vadd.f32 0.0, %v1016
    %v1018 = vpop.f32.mrf.mxu0
    %v1019 = vadd.f32 0.0, %v1018
    %1020 = vmatprep.mubr.bf16.mxu0 %v300
    %1021 = vmatmul.mubr.bf16.gmra.mxu0 %v299
    %v1022 = vpop.f32.mrf.mxu0
    %v1023 = vadd.f32 0.0, %v1022
    %v1024 = vpop.f32.mrf.mxu0
    %v1025 = vadd.f32 0.0, %v1024
    %v1026 = vpop.f32.mrf.mxu0
    %v1027 = vadd.f32 0.0, %v1026
    %v1028 = vpop.f32.mrf.mxu0
    %v1029 = vadd.f32 0.0, %v1028
    %1030 = vdwg.mxu0
    %1031 = vmatprep.subr.bf16.mxu0 %v861
    %1032 = vmatpush1.bf16.msra.mxu0 %v860
    %1033 = vmatprep.subr.bf16.mxu0 %v857
    %1034 = vmatpush1.bf16.msra.mxu0 %v856
    %1035 = vmatprep.subr.bf16.mxu0 %v853
    %1036 = vmatpush1.bf16.msra.mxu0 %v852
    %1037 = vmatprep.subr.bf16.mxu0 %v849
    %1038 = vmatpush1.bf16.msra.mxu0 %v848
    %1039 = vmatprep.subr.bf16.mxu0 %v845
    %1040 = vmatpush1.bf16.msra.mxu0 %v844
    %1041 = vmatprep.subr.bf16.mxu0 %v841
    %1042 = vmatpush1.bf16.msra.mxu0 %v840
    %1043 = vmatprep.subr.bf16.mxu0 %v837
    %1044 = vmatpush1.bf16.msra.mxu0 %v836
    %1045 = vmatprep.subr.bf16.mxu0 %v833
    %1046 = vmatpush1.bf16.msra.mxu0 %v832
    %1047 = vmatprep.subr.bf16.mxu0 %v893
    %1048 = vmatpush2.bf16.msra.mxu0 %v892
    %1049 = vmatprep.subr.bf16.mxu0 %v889
    %1050 = vmatpush2.bf16.msra.mxu0 %v888
    %1051 = vmatprep.subr.bf16.mxu0 %v885
    %1052 = vmatpush2.bf16.msra.mxu0 %v884
    %1053 = vmatprep.subr.bf16.mxu0 %v881
    %1054 = vmatpush2.bf16.msra.mxu0 %v880
    %1055 = vmatprep.subr.bf16.mxu0 %v877
    %1056 = vmatpush2.bf16.msra.mxu0 %v876
    %1057 = vmatprep.subr.bf16.mxu0 %v873
    %1058 = vmatpush2.bf16.msra.mxu0 %v872
    %1059 = vmatprep.subr.bf16.mxu0 %v869
    %1060 = vmatpush2.bf16.msra.mxu0 %v868
    %1061 = vmatprep.subr.bf16.mxu0 %v865
    %1062 = vmatpush2.bf16.msra.mxu0 %v864
    %1063 = vmatprep.mubr.bf16.mxu0 %v294
    %1064 = vmatmul.mubr.bf16.gmra.mxu0 %v293
    %v1065 = vpop.f32.mrf.mxu0
    %v1066 = vadd.f32 0.0, %v1065
    %v1067 = vpop.f32.mrf.mxu0
    %v1068 = vadd.f32 0.0, %v1067
    %v1069 = vpop.f32.mrf.mxu0
    %v1070 = vadd.f32 0.0, %v1069
    %v1071 = vpop.f32.mrf.mxu0
    %v1072 = vadd.f32 0.0, %v1071
    %1073 = vmatprep.mubr.bf16.mxu0 %v296
    %1074 = vmatmul.mubr.bf16.gmra.mxu0 %v295
    %v1075 = vpop.f32.mrf.mxu0
    %v1076 = vadd.f32 0.0, %v1075
    %v1077 = vpop.f32.mrf.mxu0
    %v1078 = vadd.f32 0.0, %v1077
    %v1079 = vpop.f32.mrf.mxu0
    %v1080 = vadd.f32 0.0, %v1079
    %v1081 = vpop.f32.mrf.mxu0
    %v1082 = vadd.f32 0.0, %v1081
    %1083 = vmatprep.mubr.bf16.mxu0 %v298
    %1084 = vmatmul.mubr.bf16.gmra.mxu0 %v297
    %v1085 = vpop.f32.mrf.mxu0
    %v1086 = vadd.f32 0.0, %v1085
    %v1087 = vpop.f32.mrf.mxu0
    %v1088 = vadd.f32 0.0, %v1087
    %v1089 = vpop.f32.mrf.mxu0
    %v1090 = vadd.f32 0.0, %v1089
    %v1091 = vpop.f32.mrf.mxu0
    %v1092 = vadd.f32 0.0, %v1091
    %1093 = vmatprep.mubr.bf16.mxu0 %v300
    %1094 = vmatmul.mubr.bf16.gmra.mxu0 %v299
    %v1095 = vpop.f32.mrf.mxu0
    %v1096 = vadd.f32 0.0, %v1095
    %v1097 = vpop.f32.mrf.mxu0
    %v1098 = vadd.f32 0.0, %v1097
    %v1099 = vpop.f32.mrf.mxu0
    %v1100 = vadd.f32 0.0, %v1099
    %v1101 = vpop.f32.mrf.mxu0
    %v1102 = vadd.f32 0.0, %v1101
    %1103 = vdwg.mxu0
    %v1104 = vlaneseq
    %v1105 = vshrl.u32 %v1104, 7
    %v1106 = vsub.s32 1, %v1105
    %v1107 = vrot.slane %v289, %v1106
    %v1108 = vlaneseq
    %v1109 = vshrl.u32 %v1108, 7
    %v1110 = vsub.s32 1, %v1109
    %v1111 = vrot.slane %v290, %v1110
    %v1112 = vadd.f32 %v993, %v1107
    %v1113 = vadd.f32 %v995, %v1111
    %v1114 = vadd.f32 %v997, %v1107
    %v1115 = vadd.f32 %v999, %v1111
    %v1116 = vadd.f32 %v1003, %v1107
    %v1117 = vadd.f32 %v1005, %v1111
    %v1118 = vadd.f32 %v1007, %v1107
    %v1119 = vadd.f32 %v1009, %v1111
    %v1120 = vadd.f32 %v1013, %v1107
    %v1121 = vadd.f32 %v1015, %v1111
    %v1122 = vadd.f32 %v1017, %v1107
    %v1123 = vadd.f32 %v1019, %v1111
    %v1124 = vadd.f32 %v1023, %v1107
    %v1125 = vadd.f32 %v1025, %v1111
    %v1126 = vadd.f32 %v1027, %v1107
    %v1127 = vadd.f32 %v1029, %v1111
    %v1128 = vlaneseq
    %v1129 = vshrl.u32 %v1128, 7
    %v1130 = vsub.s32 2, %v1129
    %v1131 = vrot.slane %v289, %v1130
    %v1132 = vlaneseq
    %v1133 = vshrl.u32 %v1132, 7
    %v1134 = vsub.s32 2, %v1133
    %v1135 = vrot.slane %v290, %v1134
    %v1136 = vadd.f32 %v1066, %v1131
    %v1137 = vadd.f32 %v1068, %v1135
    %v1138 = vadd.f32 %v1070, %v1131
    %v1139 = vadd.f32 %v1072, %v1135
    %v1140 = vadd.f32 %v1076, %v1131
    %v1141 = vadd.f32 %v1078, %v1135
    %v1142 = vadd.f32 %v1080, %v1131
    %v1143 = vadd.f32 %v1082, %v1135
    %v1144 = vadd.f32 %v1086, %v1131
    %v1145 = vadd.f32 %v1088, %v1135
    %v1146 = vadd.f32 %v1090, %v1131
    %v1147 = vadd.f32 %v1092, %v1135
    %v1148 = vadd.f32 %v1096, %v1131
    %v1149 = vadd.f32 %v1098, %v1135
    %v1150 = vadd.f32 %v1100, %v1131
    %v1151 = vadd.f32 %v1102, %v1135
    %v1152 = vpack.c.bf16 %v540, %v536
    %v1153 = vpack.c.bf16 %v550, %v546
    %v1154 = vpack.c.bf16 %v560, %v556
    %v1155 = vpack.c.bf16 %v570, %v566
    %v1156 = vpack.c.bf16 %v1114, %v1112
    %v1157 = vpack.c.bf16 %v1118, %v1116
    %v1158 = vpack.c.bf16 %v1122, %v1120
    %v1159 = vpack.c.bf16 %v1126, %v1124
    %v1160 = vpack.c.bf16 %v1138, %v1136
    %v1161 = vpack.c.bf16 %v1142, %v1140
    %v1162 = vpack.c.bf16 %v1146, %v1144
    %v1163 = vpack.c.bf16 %v1150, %v1148
    %vm1164 = vcmask 523264
    %v1166 = vsel %vm1164, %v1152, 0
    %v1169 = vsel %vm1164, %v1153, 0
    %v1172 = vsel %vm1164, %v1154, 0
    %v1175 = vsel %vm1164, %v1155, 0
    %v1178 = vsel %vm1164, %v1156, 0
    %v1181 = vsel %vm1164, %v1157, 0
    %v1184 = vsel %vm1164, %v1158, 0
    %v1187 = vsel %vm1164, %v1159, 0
    %1189 = vmatprep.subr.bf16.mxu0 0
    %1190 = vmatpush1.bf16.xpose.msra.mxu0 0
    %1191 = vmatprep.subr.bf16.mxu0 0
    %1192 = vmatpush1.bf16.xpose.msra.mxu0 0
    %1193 = vmatprep.subr.bf16.mxu0 0
    %1194 = vmatpush1.bf16.xpose.msra.mxu0 0
    %1195 = vmatprep.subr.bf16.mxu0 0
    %1196 = vmatpush1.bf16.xpose.msra.mxu0 0
    %1197 = vmatprep.subr.bf16.mxu0 0
    %1198 = vmatpush1.bf16.xpose.msra.mxu0 %v1187
    %1199 = vmatprep.subr.bf16.mxu0 0
    %1200 = vmatpush1.bf16.xpose.msra.mxu0 %v1184
    %1201 = vmatprep.subr.bf16.mxu0 0
    %1202 = vmatpush1.bf16.xpose.msra.mxu0 %v1181
    %1203 = vmatprep.subr.bf16.mxu0 0
    %1204 = vmatpush1.bf16.xpose.msra.mxu0 %v1178
    %1205 = vmatprep.subr.bf16.mxu0 0
    %1206 = vmatpush2.bf16.xpose.msra.mxu0 0
    %1207 = vmatprep.subr.bf16.mxu0 0
    %1208 = vmatpush2.bf16.xpose.msra.mxu0 0
    %1209 = vmatprep.subr.bf16.mxu0 0
    %1210 = vmatpush2.bf16.xpose.msra.mxu0 0
    %1211 = vmatprep.subr.bf16.mxu0 0
    %1212 = vmatpush2.bf16.xpose.msra.mxu0 0
    %1213 = vmatprep.subr.bf16.mxu0 0
    %1214 = vmatpush2.bf16.xpose.msra.mxu0 0
    %1215 = vmatprep.subr.bf16.mxu0 0
    %1216 = vmatpush2.bf16.xpose.msra.mxu0 0
    %1217 = vmatprep.subr.bf16.mxu0 0
    %1218 = vmatpush2.bf16.xpose.msra.mxu0 0
    %1219 = vmatprep.subr.bf16.mxu0 0
    %1220 = vmatpush2.bf16.xpose.msra.mxu0 0
    %1221 = vmatprep.mubr.bf16.mxu0 0
    %1222 = vmatmul.mubr.bf16.gmra.mxu0 %v1166
    %v1223 = vpop.f32.mrf.mxu0
    %v1224 = vadd.f32 %v273, %v1223
    %v1225 = vpop.f32.mrf.mxu0
    %v1226 = vpop.f32.mrf.mxu0
    %v1227 = vadd.f32 %v274, %v1226
    %v1228 = vpop.f32.mrf.mxu0
    %1229 = vmatprep.mubr.bf16.mxu0 0
    %1230 = vmatmul.mubr.bf16.gmra.mxu0 %v1169
    %v1231 = vpop.f32.mrf.mxu0
    %v1232 = vadd.f32 %v275, %v1231
    %v1233 = vpop.f32.mrf.mxu0
    %v1234 = vpop.f32.mrf.mxu0
    %v1235 = vadd.f32 %v276, %v1234
    %v1236 = vpop.f32.mrf.mxu0
    %1237 = vmatprep.mubr.bf16.mxu0 0
    %1238 = vmatmul.mubr.bf16.gmra.mxu0 %v1172
    %v1239 = vpop.f32.mrf.mxu0
    %v1240 = vadd.f32 %v277, %v1239
    %v1241 = vpop.f32.mrf.mxu0
    %v1242 = vpop.f32.mrf.mxu0
    %v1243 = vadd.f32 %v278, %v1242
    %v1244 = vpop.f32.mrf.mxu0
    %1245 = vmatprep.mubr.bf16.mxu0 0
    %1246 = vmatmul.mubr.bf16.gmra.mxu0 %v1175
    %v1247 = vpop.f32.mrf.mxu0
    %v1248 = vadd.f32 %v279, %v1247
    %v1249 = vpop.f32.mrf.mxu0
    %v1250 = vpop.f32.mrf.mxu0
    %v1251 = vadd.f32 %v280, %v1250
    %v1252 = vpop.f32.mrf.mxu0
    %1253 = vdwg.mxu0
    %v1254 = vsel %vm1164, %v1224, -inf
    %1255 = vmax.xlane.f32.xlu0 %v1254
    %v1256 = vpop.xlane.xlu0 %1255
    %v1257 = vsel %vm1164, %v1227, -inf
    %1258 = vmax.xlane.f32.xlu0 %v1257
    %v1259 = vpop.xlane.xlu0 %1258
    %v1260 = vsel %vm1164, %v1232, -inf
    %1261 = vmax.xlane.f32.xlu0 %v1260
    %v1262 = vpop.xlane.xlu0 %1261
    %v1263 = vsel %vm1164, %v1235, -inf
    %1264 = vmax.xlane.f32.xlu0 %v1263
    %v1265 = vpop.xlane.xlu0 %1264
    %v1266 = vsel %vm1164, %v1240, -inf
    %1267 = vmax.xlane.f32.xlu0 %v1266
    %v1268 = vpop.xlane.xlu0 %1267
    %v1269 = vsel %vm1164, %v1243, -inf
    %1270 = vmax.xlane.f32.xlu0 %v1269
    %v1271 = vpop.xlane.xlu0 %1270
    %v1272 = vsel %vm1164, %v1248, -inf
    %1273 = vmax.xlane.f32.xlu0 %v1272
    %v1274 = vpop.xlane.xlu0 %1273
    %v1275 = vsel %vm1164, %v1251, -inf
    %1276 = vmax.xlane.f32.xlu0 %v1275
    %v1277 = vpop.xlane.xlu0 %1276
    %v1278 = vsub.f32 %v1224, %v1256
    %v1279 = vsub.f32 %v1227, %v1259
    %v1280 = vsub.f32 %v1232, %v1262
    %v1281 = vsub.f32 %v1235, %v1265
    %v1282 = vsub.f32 %v1240, %v1268
    %v1283 = vsub.f32 %v1243, %v1271
    %v1284 = vsub.f32 %v1248, %v1274
    %v1285 = vsub.f32 %v1251, %v1277
    %v1286 = vmul.f32 %v1278, 1.442695
    %v1287 = vpow.pop %v1286
    %v1288 = vmul.f32 %v1279, 1.442695
    %v1289 = vpow.pop %v1288
    %v1290 = vmul.f32 %v1280, 1.442695
    %v1291 = vpow.pop %v1290
    %v1292 = vmul.f32 %v1281, 1.442695
    %v1293 = vpow.pop %v1292
    %v1294 = vmul.f32 %v1282, 1.442695
    %v1295 = vpow.pop %v1294
    %v1296 = vmul.f32 %v1283, 1.442695
    %v1297 = vpow.pop %v1296
    %v1298 = vmul.f32 %v1284, 1.442695
    %v1299 = vpow.pop %v1298
    %v1300 = vmul.f32 %v1285, 1.442695
    %v1301 = vpow.pop %v1300
    %v1302 = vsel %vm1164, %v1287, 0.0
    %1303 = vadd.xlane.f32.xlu0 %v1302
    %v1304 = vpop.xlane.xlu0 %1303
    %v1305 = vsel %vm1164, %v1289, 0.0
    %1306 = vadd.xlane.f32.xlu0 %v1305
    %v1307 = vpop.xlane.xlu0 %1306
    %v1308 = vsel %vm1164, %v1291, 0.0
    %1309 = vadd.xlane.f32.xlu0 %v1308
    %v1310 = vpop.xlane.xlu0 %1309
    %v1311 = vsel %vm1164, %v1293, 0.0
    %1312 = vadd.xlane.f32.xlu0 %v1311
    %v1313 = vpop.xlane.xlu0 %1312
    %v1314 = vsel %vm1164, %v1295, 0.0
    %1315 = vadd.xlane.f32.xlu0 %v1314
    %v1316 = vpop.xlane.xlu0 %1315
    %v1317 = vsel %vm1164, %v1297, 0.0
    %1318 = vadd.xlane.f32.xlu0 %v1317
    %v1319 = vpop.xlane.xlu0 %1318
    %v1320 = vsel %vm1164, %v1299, 0.0
    %1321 = vadd.xlane.f32.xlu0 %v1320
    %v1322 = vpop.xlane.xlu0 %1321
    %v1323 = vsel %vm1164, %v1301, 0.0
    %1324 = vadd.xlane.f32.xlu0 %v1323
    %v1325 = vpop.xlane.xlu0 %1324
    %v1326 = vrcp.pop %v1304
    %v1327 = vrcp.pop %v1307
    %v1328 = vrcp.pop %v1310
    %v1329 = vrcp.pop %v1313
    %v1330 = vrcp.pop %v1316
    %v1331 = vrcp.pop %v1319
    %v1332 = vrcp.pop %v1322
    %v1333 = vrcp.pop %v1325
    %v1334 = vmul.f32 %v1287, %v1326
    %v1335 = vmul.f32 %v1289, %v1327
    %v1336 = vmul.f32 %v1291, %v1328
    %v1337 = vmul.f32 %v1293, %v1329
    %v1338 = vmul.f32 %v1295, %v1330
    %v1339 = vmul.f32 %v1297, %v1331
    %v1340 = vmul.f32 %v1299, %v1332
    %v1341 = vmul.f32 %v1301, %v1333
    %v1342 = vpack.c.bf16 %v1335, %v1334
    %v1343 = vpack.c.bf16 %v1337, %v1336
    %v1344 = vpack.c.bf16 %v1339, %v1338
    %v1345 = vpack.c.bf16 %v1341, %v1340
    %v1347 = vsel %vm1164, %v1342, 0
    %v1350 = vsel %vm1164, %v1343, 0
    %v1353 = vsel %vm1164, %v1344, 0
    %v1356 = vsel %vm1164, %v1345, 0
    %1358 = vmatprep.subr.bf16.mxu0 0
    %1359 = vmatpush1.bf16.msra.mxu0 0
    %1360 = vmatprep.subr.bf16.mxu0 0
    %1361 = vmatpush1.bf16.msra.mxu0 0
    %1362 = vmatprep.subr.bf16.mxu0 0
    %1363 = vmatpush1.bf16.msra.mxu0 0
    %1364 = vmatprep.subr.bf16.mxu0 0
    %1365 = vmatpush1.bf16.msra.mxu0 0
    %1366 = vmatprep.subr.bf16.mxu0 0
    %1367 = vmatpush1.bf16.msra.mxu0 %v1163
    %1368 = vmatprep.subr.bf16.mxu0 0
    %1369 = vmatpush1.bf16.msra.mxu0 %v1162
    %1370 = vmatprep.subr.bf16.mxu0 0
    %1371 = vmatpush1.bf16.msra.mxu0 %v1161
    %1372 = vmatprep.subr.bf16.mxu0 0
    %1373 = vmatpush1.bf16.msra.mxu0 %v1160
    %1374 = vmatprep.subr.bf16.mxu0 0
    %1375 = vmatpush2.bf16.msra.mxu0 0
    %1376 = vmatprep.subr.bf16.mxu0 0
    %1377 = vmatpush2.bf16.msra.mxu0 0
    %1378 = vmatprep.subr.bf16.mxu0 0
    %1379 = vmatpush2.bf16.msra.mxu0 0
    %1380 = vmatprep.subr.bf16.mxu0 0
    %1381 = vmatpush2.bf16.msra.mxu0 0
    %1382 = vmatprep.subr.bf16.mxu0 0
    %1383 = vmatpush2.bf16.msra.mxu0 0
    %1384 = vmatprep.subr.bf16.mxu0 0
    %1385 = vmatpush2.bf16.msra.mxu0 0
    %1386 = vmatprep.subr.bf16.mxu0 0
    %1387 = vmatpush2.bf16.msra.mxu0 0
    %1388 = vmatprep.subr.bf16.mxu0 0
    %1389 = vmatpush2.bf16.msra.mxu0 0
    %1390 = vmatprep.mubr.bf16.mxu0 0
    %1391 = vmatmul.mubr.bf16.gmra.mxu0 %v1347
    %v1392 = vpop.f32.mrf.mxu0
    %v1393 = vadd.f32 0.0, %v1392
    %v1394 = vpop.f32.mrf.mxu0
    %v1395 = vpop.f32.mrf.mxu0
    %v1396 = vadd.f32 0.0, %v1395
    %v1397 = vpop.f32.mrf.mxu0
    %1398 = vmatprep.mubr.bf16.mxu0 0
    %1399 = vmatmul.mubr.bf16.gmra.mxu0 %v1350
    %v1400 = vpop.f32.mrf.mxu0
    %v1401 = vadd.f32 0.0, %v1400
    %v1402 = vpop.f32.mrf.mxu0
    %v1403 = vpop.f32.mrf.mxu0
    %v1404 = vadd.f32 0.0, %v1403
    %v1405 = vpop.f32.mrf.mxu0
    %1406 = vmatprep.mubr.bf16.mxu0 0
    %1407 = vmatmul.mubr.bf16.gmra.mxu0 %v1353
    %v1408 = vpop.f32.mrf.mxu0
    %v1409 = vadd.f32 0.0, %v1408
    %v1410 = vpop.f32.mrf.mxu0
    %v1411 = vpop.f32.mrf.mxu0
    %v1412 = vadd.f32 0.0, %v1411
    %v1413 = vpop.f32.mrf.mxu0
    %1414 = vmatprep.mubr.bf16.mxu0 0
    %1415 = vmatmul.mubr.bf16.gmra.mxu0 %v1356
    %v1416 = vpop.f32.mrf.mxu0
    %v1417 = vadd.f32 0.0, %v1416
    %v1418 = vpop.f32.mrf.mxu0
    %v1419 = vpop.f32.mrf.mxu0
    %v1420 = vadd.f32 0.0, %v1419
    %v1421 = vpop.f32.mrf.mxu0
    %1422 = vdwg.mxu0
    %1427 = vrot.lane.b32.xlu0 %v1152, 64
    %v1428 = vpop.permute.xlu0 %1427
    %1429 = vrot.lane.b32.xlu0 %v1153, 64
    %v1430 = vpop.permute.xlu0 %1429
    %1431 = vrot.lane.b32.xlu0 %v1154, 64
    %v1432 = vpop.permute.xlu0 %1431
    %1433 = vrot.lane.b32.xlu0 %v1155, 64
    %v1434 = vpop.permute.xlu0 %1433
    %1439 = vrot.lane.b32.xlu0 %v1156, 64
    %v1440 = vpop.permute.xlu0 %1439
    %1441 = vrot.lane.b32.xlu0 %v1157, 64
    %v1442 = vpop.permute.xlu0 %1441
    %1443 = vrot.lane.b32.xlu0 %v1158, 64
    %v1444 = vpop.permute.xlu0 %1443
    %1445 = vrot.lane.b32.xlu0 %v1159, 64
    %v1446 = vpop.permute.xlu0 %1445
    %v1448 = vsel %vm1164, %v1428, 0
    %v1451 = vsel %vm1164, %v1430, 0
    %v1454 = vsel %vm1164, %v1432, 0
    %v1457 = vsel %vm1164, %v1434, 0
    %v1460 = vsel %vm1164, %v1440, 0
    %v1463 = vsel %vm1164, %v1442, 0
    %v1466 = vsel %vm1164, %v1444, 0
    %v1469 = vsel %vm1164, %v1446, 0
    %1471 = vmatprep.subr.bf16.mxu0 0
    %1472 = vmatpush1.bf16.xpose.msra.mxu0 0
    %1473 = vmatprep.subr.bf16.mxu0 0
    %1474 = vmatpush1.bf16.xpose.msra.mxu0 0
    %1475 = vmatprep.subr.bf16.mxu0 0
    %1476 = vmatpush1.bf16.xpose.msra.mxu0 0
    %1477 = vmatprep.subr.bf16.mxu0 0
    %1478 = vmatpush1.bf16.xpose.msra.mxu0 0
    %1479 = vmatprep.subr.bf16.mxu0 0
    %1480 = vmatpush1.bf16.xpose.msra.mxu0 %v1469
    %1481 = vmatprep.subr.bf16.mxu0 0
    %1482 = vmatpush1.bf16.xpose.msra.mxu0 %v1466
    %1483 = vmatprep.subr.bf16.mxu0 0
    %1484 = vmatpush1.bf16.xpose.msra.mxu0 %v1463
    %1485 = vmatprep.subr.bf16.mxu0 0
    %1486 = vmatpush1.bf16.xpose.msra.mxu0 %v1460
    %1487 = vmatprep.subr.bf16.mxu0 0
    %1488 = vmatpush2.bf16.xpose.msra.mxu0 0
    %1489 = vmatprep.subr.bf16.mxu0 0
    %1490 = vmatpush2.bf16.xpose.msra.mxu0 0
    %1491 = vmatprep.subr.bf16.mxu0 0
    %1492 = vmatpush2.bf16.xpose.msra.mxu0 0
    %1493 = vmatprep.subr.bf16.mxu0 0
    %1494 = vmatpush2.bf16.xpose.msra.mxu0 0
    %1495 = vmatprep.subr.bf16.mxu0 0
    %1496 = vmatpush2.bf16.xpose.msra.mxu0 0
    %1497 = vmatprep.subr.bf16.mxu0 0
    %1498 = vmatpush2.bf16.xpose.msra.mxu0 0
    %1499 = vmatprep.subr.bf16.mxu0 0
    %1500 = vmatpush2.bf16.xpose.msra.mxu0 0
    %1501 = vmatprep.subr.bf16.mxu0 0
    %1502 = vmatpush2.bf16.xpose.msra.mxu0 0
    %1503 = vmatprep.mubr.bf16.mxu0 0
    %1504 = vmatmul.mubr.bf16.gmra.mxu0 %v1448
    %v1505 = vpop.f32.mrf.mxu0
    %v1506 = vadd.f32 %v273, %v1505
    %v1507 = vpop.f32.mrf.mxu0
    %v1508 = vpop.f32.mrf.mxu0
    %v1509 = vadd.f32 %v274, %v1508
    %v1510 = vpop.f32.mrf.mxu0
    %1511 = vmatprep.mubr.bf16.mxu0 0
    %1512 = vmatmul.mubr.bf16.gmra.mxu0 %v1451
    %v1513 = vpop.f32.mrf.mxu0
    %v1514 = vadd.f32 %v275, %v1513
    %v1515 = vpop.f32.mrf.mxu0
    %v1516 = vpop.f32.mrf.mxu0
    %v1517 = vadd.f32 %v276, %v1516
    %v1518 = vpop.f32.mrf.mxu0
    %1519 = vmatprep.mubr.bf16.mxu0 0
    %1520 = vmatmul.mubr.bf16.gmra.mxu0 %v1454
    %v1521 = vpop.f32.mrf.mxu0
    %v1522 = vadd.f32 %v277, %v1521
    %v1523 = vpop.f32.mrf.mxu0
    %v1524 = vpop.f32.mrf.mxu0
    %v1525 = vadd.f32 %v278, %v1524
    %v1526 = vpop.f32.mrf.mxu0
    %1527 = vmatprep.mubr.bf16.mxu0 0
    %1528 = vmatmul.mubr.bf16.gmra.mxu0 %v1457
    %v1529 = vpop.f32.mrf.mxu0
    %v1530 = vadd.f32 %v279, %v1529
    %v1531 = vpop.f32.mrf.mxu0
    %v1532 = vpop.f32.mrf.mxu0
    %v1533 = vadd.f32 %v280, %v1532
    %v1534 = vpop.f32.mrf.mxu0
    %1535 = vdwg.mxu0
    %v1536 = vsel %vm1164, %v1506, -inf
    %1537 = vmax.xlane.f32.xlu0 %v1536
    %v1538 = vpop.xlane.xlu0 %1537
    %v1539 = vsel %vm1164, %v1509, -inf
    %1540 = vmax.xlane.f32.xlu0 %v1539
    %v1541 = vpop.xlane.xlu0 %1540
    %v1542 = vsel %vm1164, %v1514, -inf
    %1543 = vmax.xlane.f32.xlu0 %v1542
    %v1544 = vpop.xlane.xlu0 %1543
    %v1545 = vsel %vm1164, %v1517, -inf
    %1546 = vmax.xlane.f32.xlu0 %v1545
    %v1547 = vpop.xlane.xlu0 %1546
    %v1548 = vsel %vm1164, %v1522, -inf
    %1549 = vmax.xlane.f32.xlu0 %v1548
    %v1550 = vpop.xlane.xlu0 %1549
    %v1551 = vsel %vm1164, %v1525, -inf
    %1552 = vmax.xlane.f32.xlu0 %v1551
    %v1553 = vpop.xlane.xlu0 %1552
    %v1554 = vsel %vm1164, %v1530, -inf
    %1555 = vmax.xlane.f32.xlu0 %v1554
    %v1556 = vpop.xlane.xlu0 %1555
    %v1557 = vsel %vm1164, %v1533, -inf
    %1558 = vmax.xlane.f32.xlu0 %v1557
    %v1559 = vpop.xlane.xlu0 %1558
    %v1560 = vsub.f32 %v1506, %v1538
    %v1561 = vsub.f32 %v1509, %v1541
    %v1562 = vsub.f32 %v1514, %v1544
    %v1563 = vsub.f32 %v1517, %v1547
    %v1564 = vsub.f32 %v1522, %v1550
    %v1565 = vsub.f32 %v1525, %v1553
    %v1566 = vsub.f32 %v1530, %v1556
    %v1567 = vsub.f32 %v1533, %v1559
    %v1568 = vmul.f32 %v1560, 1.442695
    %v1569 = vpow.pop %v1568
    %v1570 = vmul.f32 %v1561, 1.442695
    %v1571 = vpow.pop %v1570
    %v1572 = vmul.f32 %v1562, 1.442695
    %v1573 = vpow.pop %v1572
    %v1574 = vmul.f32 %v1563, 1.442695
    %v1575 = vpow.pop %v1574
    %v1576 = vmul.f32 %v1564, 1.442695
    %v1577 = vpow.pop %v1576
    %v1578 = vmul.f32 %v1565, 1.442695
    %v1579 = vpow.pop %v1578
    %v1580 = vmul.f32 %v1566, 1.442695
    %v1581 = vpow.pop %v1580
    %v1582 = vmul.f32 %v1567, 1.442695
    %v1583 = vpow.pop %v1582
    %v1584 = vsel %vm1164, %v1569, 0.0
    %1585 = vadd.xlane.f32.xlu0 %v1584
    %v1586 = vpop.xlane.xlu0 %1585
    %v1587 = vsel %vm1164, %v1571, 0.0
    %1588 = vadd.xlane.f32.xlu0 %v1587
    %v1589 = vpop.xlane.xlu0 %1588
    %v1590 = vsel %vm1164, %v1573, 0.0
    %1591 = vadd.xlane.f32.xlu0 %v1590
    %v1592 = vpop.xlane.xlu0 %1591
    %v1593 = vsel %vm1164, %v1575, 0.0
    %1594 = vadd.xlane.f32.xlu0 %v1593
    %v1595 = vpop.xlane.xlu0 %1594
    %v1596 = vsel %vm1164, %v1577, 0.0
    %1597 = vadd.xlane.f32.xlu0 %v1596
    %v1598 = vpop.xlane.xlu0 %1597
    %v1599 = vsel %vm1164, %v1579, 0.0
    %1600 = vadd.xlane.f32.xlu0 %v1599
    %v1601 = vpop.xlane.xlu0 %1600
    %v1602 = vsel %vm1164, %v1581, 0.0
    %1603 = vadd.xlane.f32.xlu0 %v1602
    %v1604 = vpop.xlane.xlu0 %1603
    %v1605 = vsel %vm1164, %v1583, 0.0
    %1606 = vadd.xlane.f32.xlu0 %v1605
    %v1607 = vpop.xlane.xlu0 %1606
    %v1608 = vrcp.pop %v1586
    %v1609 = vrcp.pop %v1589
    %v1610 = vrcp.pop %v1592
    %v1611 = vrcp.pop %v1595
    %v1612 = vrcp.pop %v1598
    %v1613 = vrcp.pop %v1601
    %v1614 = vrcp.pop %v1604
    %v1615 = vrcp.pop %v1607
    %v1616 = vmul.f32 %v1569, %v1608
    %v1617 = vmul.f32 %v1571, %v1609
    %v1618 = vmul.f32 %v1573, %v1610
    %v1619 = vmul.f32 %v1575, %v1611
    %v1620 = vmul.f32 %v1577, %v1612
    %v1621 = vmul.f32 %v1579, %v1613
    %v1622 = vmul.f32 %v1581, %v1614
    %v1623 = vmul.f32 %v1583, %v1615
    %v1624 = vpack.c.bf16 %v1617, %v1616
    %v1625 = vpack.c.bf16 %v1619, %v1618
    %v1626 = vpack.c.bf16 %v1621, %v1620
    %v1627 = vpack.c.bf16 %v1623, %v1622
    %1632 = vrot.lane.b32.xlu0 %v1160, 64
    %v1633 = vpop.permute.xlu0 %1632
    %1634 = vrot.lane.b32.xlu0 %v1161, 64
    %v1635 = vpop.permute.xlu0 %1634
    %1636 = vrot.lane.b32.xlu0 %v1162, 64
    %v1637 = vpop.permute.xlu0 %1636
    %1638 = vrot.lane.b32.xlu0 %v1163, 64
    %v1639 = vpop.permute.xlu0 %1638
    %v1645 = vsel %vm1164, %v1624, 0
    %v1648 = vsel %vm1164, %v1625, 0
    %v1651 = vsel %vm1164, %v1626, 0
    %v1654 = vsel %vm1164, %v1627, 0
    %1656 = vmatprep.subr.bf16.mxu0 0
    %1657 = vmatpush1.bf16.msra.mxu0 0
    %1658 = vmatprep.subr.bf16.mxu0 0
    %1659 = vmatpush1.bf16.msra.mxu0 0
    %1660 = vmatprep.subr.bf16.mxu0 0
    %1661 = vmatpush1.bf16.msra.mxu0 0
    %1662 = vmatprep.subr.bf16.mxu0 0
    %1663 = vmatpush1.bf16.msra.mxu0 0
    %1664 = vmatprep.subr.bf16.mxu0 0
    %1665 = vmatpush1.bf16.msra.mxu0 %v1639
    %1666 = vmatprep.subr.bf16.mxu0 0
    %1667 = vmatpush1.bf16.msra.mxu0 %v1637
    %1668 = vmatprep.subr.bf16.mxu0 0
    %1669 = vmatpush1.bf16.msra.mxu0 %v1635
    %1670 = vmatprep.subr.bf16.mxu0 0
    %1671 = vmatpush1.bf16.msra.mxu0 %v1633
    %1672 = vmatprep.subr.bf16.mxu0 0
    %1673 = vmatpush2.bf16.msra.mxu0 0
    %1674 = vmatprep.subr.bf16.mxu0 0
    %1675 = vmatpush2.bf16.msra.mxu0 0
    %1676 = vmatprep.subr.bf16.mxu0 0
    %1677 = vmatpush2.bf16.msra.mxu0 0
    %1678 = vmatprep.subr.bf16.mxu0 0
    %1679 = vmatpush2.bf16.msra.mxu0 0
    %1680 = vmatprep.subr.bf16.mxu0 0
    %1681 = vmatpush2.bf16.msra.mxu0 0
    %1682 = vmatprep.subr.bf16.mxu0 0
    %1683 = vmatpush2.bf16.msra.mxu0 0
    %1684 = vmatprep.subr.bf16.mxu0 0
    %1685 = vmatpush2.bf16.msra.mxu0 0
    %1686 = vmatprep.subr.bf16.mxu0 0
    %1687 = vmatpush2.bf16.msra.mxu0 0
    %1688 = vmatprep.mubr.bf16.mxu0 0
    %1689 = vmatmul.mubr.bf16.gmra.mxu0 %v1645
    %v1690 = vpop.f32.mrf.mxu0
    %v1691 = vadd.f32 0.0, %v1690
    %v1692 = vpop.f32.mrf.mxu0
    %v1693 = vpop.f32.mrf.mxu0
    %v1694 = vadd.f32 0.0, %v1693
    %v1695 = vpop.f32.mrf.mxu0
    %1696 = vmatprep.mubr.bf16.mxu0 0
    %1697 = vmatmul.mubr.bf16.gmra.mxu0 %v1648
    %v1698 = vpop.f32.mrf.mxu0
    %v1699 = vadd.f32 0.0, %v1698
    %v1700 = vpop.f32.mrf.mxu0
    %v1701 = vpop.f32.mrf.mxu0
    %v1702 = vadd.f32 0.0, %v1701
    %v1703 = vpop.f32.mrf.mxu0
    %1704 = vmatprep.mubr.bf16.mxu0 0
    %1705 = vmatmul.mubr.bf16.gmra.mxu0 %v1651
    %v1706 = vpop.f32.mrf.mxu0
    %v1707 = vadd.f32 0.0, %v1706
    %v1708 = vpop.f32.mrf.mxu0
    %v1709 = vpop.f32.mrf.mxu0
    %v1710 = vadd.f32 0.0, %v1709
    %v1711 = vpop.f32.mrf.mxu0
    %1712 = vmatprep.mubr.bf16.mxu0 0
    %1713 = vmatmul.mubr.bf16.gmra.mxu0 %v1654
    %v1714 = vpop.f32.mrf.mxu0
    %v1715 = vadd.f32 0.0, %v1714
    %v1716 = vpop.f32.mrf.mxu0
    %v1717 = vpop.f32.mrf.mxu0
    %v1718 = vadd.f32 0.0, %v1717
    %v1719 = vpop.f32.mrf.mxu0
    %1720 = vdwg.mxu0
    %v1721 = vpack.c.bf16 %v542, %v538
    %v1722 = vpack.c.bf16 %v552, %v548
    %v1723 = vpack.c.bf16 %v562, %v558
    %v1724 = vpack.c.bf16 %v572, %v568
    %v1725 = vpack.c.bf16 %v1115, %v1113
    %v1726 = vpack.c.bf16 %v1119, %v1117
    %v1727 = vpack.c.bf16 %v1123, %v1121
    %v1728 = vpack.c.bf16 %v1127, %v1125
    %v1729 = vpack.c.bf16 %v1139, %v1137
    %v1730 = vpack.c.bf16 %v1143, %v1141
    %v1731 = vpack.c.bf16 %v1147, %v1145
    %v1732 = vpack.c.bf16 %v1151, %v1149
    %v1734 = vsel %vm1164, %v1721, 0
    %v1737 = vsel %vm1164, %v1722, 0
    %v1740 = vsel %vm1164, %v1723, 0
    %v1743 = vsel %vm1164, %v1724, 0
    %v1746 = vsel %vm1164, %v1725, 0
    %v1749 = vsel %vm1164, %v1726, 0
    %v1752 = vsel %vm1164, %v1727, 0
    %v1755 = vsel %vm1164, %v1728, 0
    %1757 = vmatprep.subr.bf16.mxu0 0
    %1758 = vmatpush1.bf16.xpose.msra.mxu0 0
    %1759 = vmatprep.subr.bf16.mxu0 0
    %1760 = vmatpush1.bf16.xpose.msra.mxu0 0
    %1761 = vmatprep.subr.bf16.mxu0 0
    %1762 = vmatpush1.bf16.xpose.msra.mxu0 0
    %1763 = vmatprep.subr.bf16.mxu0 0
    %1764 = vmatpush1.bf16.xpose.msra.mxu0 0
    %1765 = vmatprep.subr.bf16.mxu0 0
    %1766 = vmatpush1.bf16.xpose.msra.mxu0 %v1755
    %1767 = vmatprep.subr.bf16.mxu0 0
    %1768 = vmatpush1.bf16.xpose.msra.mxu0 %v1752
    %1769 = vmatprep.subr.bf16.mxu0 0
    %1770 = vmatpush1.bf16.xpose.msra.mxu0 %v1749
    %1771 = vmatprep.subr.bf16.mxu0 0
    %1772 = vmatpush1.bf16.xpose.msra.mxu0 %v1746
    %1773 = vmatprep.subr.bf16.mxu0 0
    %1774 = vmatpush2.bf16.xpose.msra.mxu0 0
    %1775 = vmatprep.subr.bf16.mxu0 0
    %1776 = vmatpush2.bf16.xpose.msra.mxu0 0
    %1777 = vmatprep.subr.bf16.mxu0 0
    %1778 = vmatpush2.bf16.xpose.msra.mxu0 0
    %1779 = vmatprep.subr.bf16.mxu0 0
    %1780 = vmatpush2.bf16.xpose.msra.mxu0 0
    %1781 = vmatprep.subr.bf16.mxu0 0
    %1782 = vmatpush2.bf16.xpose.msra.mxu0 0
    %1783 = vmatprep.subr.bf16.mxu0 0
    %1784 = vmatpush2.bf16.xpose.msra.mxu0 0
    %1785 = vmatprep.subr.bf16.mxu0 0
    %1786 = vmatpush2.bf16.xpose.msra.mxu0 0
    %1787 = vmatprep.subr.bf16.mxu0 0
    %1788 = vmatpush2.bf16.xpose.msra.mxu0 0
    %1789 = vmatprep.mubr.bf16.mxu0 0
    %1790 = vmatmul.mubr.bf16.gmra.mxu0 %v1734
    %v1791 = vpop.f32.mrf.mxu0
    %v1792 = vadd.f32 %v273, %v1791
    %v1793 = vpop.f32.mrf.mxu0
    %v1794 = vpop.f32.mrf.mxu0
    %v1795 = vadd.f32 %v274, %v1794
    %v1796 = vpop.f32.mrf.mxu0
    %1797 = vmatprep.mubr.bf16.mxu0 0
    %1798 = vmatmul.mubr.bf16.gmra.mxu0 %v1737
    %v1799 = vpop.f32.mrf.mxu0
    %v1800 = vadd.f32 %v275, %v1799
    %v1801 = vpop.f32.mrf.mxu0
    %v1802 = vpop.f32.mrf.mxu0
    %v1803 = vadd.f32 %v276, %v1802
    %v1804 = vpop.f32.mrf.mxu0
    %1805 = vmatprep.mubr.bf16.mxu0 0
    %1806 = vmatmul.mubr.bf16.gmra.mxu0 %v1740
    %v1807 = vpop.f32.mrf.mxu0
    %v1808 = vadd.f32 %v277, %v1807
    %v1809 = vpop.f32.mrf.mxu0
    %v1810 = vpop.f32.mrf.mxu0
    %v1811 = vadd.f32 %v278, %v1810
    %v1812 = vpop.f32.mrf.mxu0
    %1813 = vmatprep.mubr.bf16.mxu0 0
    %1814 = vmatmul.mubr.bf16.gmra.mxu0 %v1743
    %v1815 = vpop.f32.mrf.mxu0
    %v1816 = vadd.f32 %v279, %v1815
    %v1817 = vpop.f32.mrf.mxu0
    %v1818 = vpop.f32.mrf.mxu0
    %v1819 = vadd.f32 %v280, %v1818
    %v1820 = vpop.f32.mrf.mxu0
    %1821 = vdwg.mxu0
    %v1822 = vsel %vm1164, %v1792, -inf
    %1823 = vmax.xlane.f32.xlu0 %v1822
    %v1824 = vpop.xlane.xlu0 %1823
    %v1825 = vsel %vm1164, %v1795, -inf
    %1826 = vmax.xlane.f32.xlu0 %v1825
    %v1827 = vpop.xlane.xlu0 %1826
    %v1828 = vsel %vm1164, %v1800, -inf
    %1829 = vmax.xlane.f32.xlu0 %v1828
    %v1830 = vpop.xlane.xlu0 %1829
    %v1831 = vsel %vm1164, %v1803, -inf
    %1832 = vmax.xlane.f32.xlu0 %v1831
    %v1833 = vpop.xlane.xlu0 %1832
    %v1834 = vsel %vm1164, %v1808, -inf
    %1835 = vmax.xlane.f32.xlu0 %v1834
    %v1836 = vpop.xlane.xlu0 %1835
    %v1837 = vsel %vm1164, %v1811, -inf
    %1838 = vmax.xlane.f32.xlu0 %v1837
    %v1839 = vpop.xlane.xlu0 %1838
    %v1840 = vsel %vm1164, %v1816, -inf
    %1841 = vmax.xlane.f32.xlu0 %v1840
    %v1842 = vpop.xlane.xlu0 %1841
    %v1843 = vsel %vm1164, %v1819, -inf
    %1844 = vmax.xlane.f32.xlu0 %v1843
    %v1845 = vpop.xlane.xlu0 %1844
    %v1846 = vsub.f32 %v1792, %v1824
    %v1847 = vsub.f32 %v1795, %v1827
    %v1848 = vsub.f32 %v1800, %v1830
    %v1849 = vsub.f32 %v1803, %v1833
    %v1850 = vsub.f32 %v1808, %v1836
    %v1851 = vsub.f32 %v1811, %v1839
    %v1852 = vsub.f32 %v1816, %v1842
    %v1853 = vsub.f32 %v1819, %v1845
    %v1854 = vmul.f32 %v1846, 1.442695
    %v1855 = vpow.pop %v1854
    %v1856 = vmul.f32 %v1847, 1.442695
    %v1857 = vpow.pop %v1856
    %v1858 = vmul.f32 %v1848, 1.442695
    %v1859 = vpow.pop %v1858
    %v1860 = vmul.f32 %v1849, 1.442695
    %v1861 = vpow.pop %v1860
    %v1862 = vmul.f32 %v1850, 1.442695
    %v1863 = vpow.pop %v1862
    %v1864 = vmul.f32 %v1851, 1.442695
    %v1865 = vpow.pop %v1864
    %v1866 = vmul.f32 %v1852, 1.442695
    %v1867 = vpow.pop %v1866
    %v1868 = vmul.f32 %v1853, 1.442695
    %v1869 = vpow.pop %v1868
    %v1870 = vsel %vm1164, %v1855, 0.0
    %1871 = vadd.xlane.f32.xlu0 %v1870
    %v1872 = vpop.xlane.xlu0 %1871
    %v1873 = vsel %vm1164, %v1857, 0.0
    %1874 = vadd.xlane.f32.xlu0 %v1873
    %v1875 = vpop.xlane.xlu0 %1874
    %v1876 = vsel %vm1164, %v1859, 0.0
    %1877 = vadd.xlane.f32.xlu0 %v1876
    %v1878 = vpop.xlane.xlu0 %1877
    %v1879 = vsel %vm1164, %v1861, 0.0
    %1880 = vadd.xlane.f32.xlu0 %v1879
    %v1881 = vpop.xlane.xlu0 %1880
    %v1882 = vsel %vm1164, %v1863, 0.0
    %1883 = vadd.xlane.f32.xlu0 %v1882
    %v1884 = vpop.xlane.xlu0 %1883
    %v1885 = vsel %vm1164, %v1865, 0.0
    %1886 = vadd.xlane.f32.xlu0 %v1885
    %v1887 = vpop.xlane.xlu0 %1886
    %v1888 = vsel %vm1164, %v1867, 0.0
    %1889 = vadd.xlane.f32.xlu0 %v1888
    %v1890 = vpop.xlane.xlu0 %1889
    %v1891 = vsel %vm1164, %v1869, 0.0
    %1892 = vadd.xlane.f32.xlu0 %v1891
    %v1893 = vpop.xlane.xlu0 %1892
    %v1894 = vrcp.pop %v1872
    %v1895 = vrcp.pop %v1875
    %v1896 = vrcp.pop %v1878
    %v1897 = vrcp.pop %v1881
    %v1898 = vrcp.pop %v1884
    %v1899 = vrcp.pop %v1887
    %v1900 = vrcp.pop %v1890
    %v1901 = vrcp.pop %v1893
    %v1902 = vmul.f32 %v1855, %v1894
    %v1903 = vmul.f32 %v1857, %v1895
    %v1904 = vmul.f32 %v1859, %v1896
    %v1905 = vmul.f32 %v1861, %v1897
    %v1906 = vmul.f32 %v1863, %v1898
    %v1907 = vmul.f32 %v1865, %v1899
    %v1908 = vmul.f32 %v1867, %v1900
    %v1909 = vmul.f32 %v1869, %v1901
    %v1910 = vpack.c.bf16 %v1903, %v1902
    %v1911 = vpack.c.bf16 %v1905, %v1904
    %v1912 = vpack.c.bf16 %v1907, %v1906
    %v1913 = vpack.c.bf16 %v1909, %v1908
    %v1915 = vsel %vm1164, %v1910, 0
    %v1918 = vsel %vm1164, %v1911, 0
    %v1921 = vsel %vm1164, %v1912, 0
    %v1924 = vsel %vm1164, %v1913, 0
    %1926 = vmatprep.subr.bf16.mxu0 0
    %1927 = vmatpush1.bf16.msra.mxu0 0
    %1928 = vmatprep.subr.bf16.mxu0 0
    %1929 = vmatpush1.bf16.msra.mxu0 0
    %1930 = vmatprep.subr.bf16.mxu0 0
    %1931 = vmatpush1.bf16.msra.mxu0 0
    %1932 = vmatprep.subr.bf16.mxu0 0
    %1933 = vmatpush1.bf16.msra.mxu0 0
    %1934 = vmatprep.subr.bf16.mxu0 0
    %1935 = vmatpush1.bf16.msra.mxu0 %v1732
    %1936 = vmatprep.subr.bf16.mxu0 0
    %1937 = vmatpush1.bf16.msra.mxu0 %v1731
    %1938 = vmatprep.subr.bf16.mxu0 0
    %1939 = vmatpush1.bf16.msra.mxu0 %v1730
    %1940 = vmatprep.subr.bf16.mxu0 0
    %1941 = vmatpush1.bf16.msra.mxu0 %v1729
    %1942 = vmatprep.subr.bf16.mxu0 0
    %1943 = vmatpush2.bf16.msra.mxu0 0
    %1944 = vmatprep.subr.bf16.mxu0 0
    %1945 = vmatpush2.bf16.msra.mxu0 0
    %1946 = vmatprep.subr.bf16.mxu0 0
    %1947 = vmatpush2.bf16.msra.mxu0 0
    %1948 = vmatprep.subr.bf16.mxu0 0
    %1949 = vmatpush2.bf16.msra.mxu0 0
    %1950 = vmatprep.subr.bf16.mxu0 0
    %1951 = vmatpush2.bf16.msra.mxu0 0
    %1952 = vmatprep.subr.bf16.mxu0 0
    %1953 = vmatpush2.bf16.msra.mxu0 0
    %1954 = vmatprep.subr.bf16.mxu0 0
    %1955 = vmatpush2.bf16.msra.mxu0 0
    %1956 = vmatprep.subr.bf16.mxu0 0
    %1957 = vmatpush2.bf16.msra.mxu0 0
    %1958 = vmatprep.mubr.bf16.mxu0 0
    %1959 = vmatmul.mubr.bf16.gmra.mxu0 %v1915
    %v1960 = vpop.f32.mrf.mxu0
    %v1961 = vadd.f32 0.0, %v1960
    %v1962 = vpop.f32.mrf.mxu0
    %v1963 = vpop.f32.mrf.mxu0
    %v1964 = vadd.f32 0.0, %v1963
    %v1965 = vpop.f32.mrf.mxu0
    %1966 = vmatprep.mubr.bf16.mxu0 0
    %1967 = vmatmul.mubr.bf16.gmra.mxu0 %v1918
    %v1968 = vpop.f32.mrf.mxu0
    %v1969 = vadd.f32 0.0, %v1968
    %v1970 = vpop.f32.mrf.mxu0
    %v1971 = vpop.f32.mrf.mxu0
    %v1972 = vadd.f32 0.0, %v1971
    %v1973 = vpop.f32.mrf.mxu0
    %1974 = vmatprep.mubr.bf16.mxu0 0
    %1975 = vmatmul.mubr.bf16.gmra.mxu0 %v1921
    %v1976 = vpop.f32.mrf.mxu0
    %v1977 = vadd.f32 0.0, %v1976
    %v1978 = vpop.f32.mrf.mxu0
    %v1979 = vpop.f32.mrf.mxu0
    %v1980 = vadd.f32 0.0, %v1979
    %v1981 = vpop.f32.mrf.mxu0
    %1982 = vmatprep.mubr.bf16.mxu0 0
    %1983 = vmatmul.mubr.bf16.gmra.mxu0 %v1924
    %v1984 = vpop.f32.mrf.mxu0
    %v1985 = vadd.f32 0.0, %v1984
    %v1986 = vpop.f32.mrf.mxu0
    %v1987 = vpop.f32.mrf.mxu0
    %v1988 = vadd.f32 0.0, %v1987
    %v1989 = vpop.f32.mrf.mxu0
    %1990 = vdwg.mxu0
    %1995 = vrot.lane.b32.xlu0 %v1721, 64
    %v1996 = vpop.permute.xlu0 %1995
    %1997 = vrot.lane.b32.xlu0 %v1722, 64
    %v1998 = vpop.permute.xlu0 %1997
    %1999 = vrot.lane.b32.xlu0 %v1723, 64
    %v2000 = vpop.permute.xlu0 %1999
    %2001 = vrot.lane.b32.xlu0 %v1724, 64
    %v2002 = vpop.permute.xlu0 %2001
    %2007 = vrot.lane.b32.xlu0 %v1725, 64
    %v2008 = vpop.permute.xlu0 %2007
    %2009 = vrot.lane.b32.xlu0 %v1726, 64
    %v2010 = vpop.permute.xlu0 %2009
    %2011 = vrot.lane.b32.xlu0 %v1727, 64
    %v2012 = vpop.permute.xlu0 %2011
    %2013 = vrot.lane.b32.xlu0 %v1728, 64
    %v2014 = vpop.permute.xlu0 %2013
    %v2016 = vsel %vm1164, %v1996, 0
    %v2019 = vsel %vm1164, %v1998, 0
    %v2022 = vsel %vm1164, %v2000, 0
    %v2025 = vsel %vm1164, %v2002, 0
    %v2028 = vsel %vm1164, %v2008, 0
    %v2031 = vsel %vm1164, %v2010, 0
    %v2034 = vsel %vm1164, %v2012, 0
    %v2037 = vsel %vm1164, %v2014, 0
    %2039 = vmatprep.subr.bf16.mxu0 0
    %2040 = vmatpush1.bf16.xpose.msra.mxu0 0
    %2041 = vmatprep.subr.bf16.mxu0 0
    %2042 = vmatpush1.bf16.xpose.msra.mxu0 0
    %2043 = vmatprep.subr.bf16.mxu0 0
    %2044 = vmatpush1.bf16.xpose.msra.mxu0 0
    %2045 = vmatprep.subr.bf16.mxu0 0
    %2046 = vmatpush1.bf16.xpose.msra.mxu0 0
    %2047 = vmatprep.subr.bf16.mxu0 0
    %2048 = vmatpush1.bf16.xpose.msra.mxu0 %v2037
    %2049 = vmatprep.subr.bf16.mxu0 0
    %2050 = vmatpush1.bf16.xpose.msra.mxu0 %v2034
    %2051 = vmatprep.subr.bf16.mxu0 0
    %2052 = vmatpush1.bf16.xpose.msra.mxu0 %v2031
    %2053 = vmatprep.subr.bf16.mxu0 0
    %2054 = vmatpush1.bf16.xpose.msra.mxu0 %v2028
    %2055 = vmatprep.subr.bf16.mxu0 0
    %2056 = vmatpush2.bf16.xpose.msra.mxu0 0
    %2057 = vmatprep.subr.bf16.mxu0 0
    %2058 = vmatpush2.bf16.xpose.msra.mxu0 0
    %2059 = vmatprep.subr.bf16.mxu0 0
    %2060 = vmatpush2.bf16.xpose.msra.mxu0 0
    %2061 = vmatprep.subr.bf16.mxu0 0
    %2062 = vmatpush2.bf16.xpose.msra.mxu0 0
    %2063 = vmatprep.subr.bf16.mxu0 0
    %2064 = vmatpush2.bf16.xpose.msra.mxu0 0
    %2065 = vmatprep.subr.bf16.mxu0 0
    %2066 = vmatpush2.bf16.xpose.msra.mxu0 0
    %2067 = vmatprep.subr.bf16.mxu0 0
    %2068 = vmatpush2.bf16.xpose.msra.mxu0 0
    %2069 = vmatprep.subr.bf16.mxu0 0
    %2070 = vmatpush2.bf16.xpose.msra.mxu0 0
    %2071 = vmatprep.mubr.bf16.mxu0 0
    %2072 = vmatmul.mubr.bf16.gmra.mxu0 %v2016
    %v2073 = vpop.f32.mrf.mxu0
    %v2074 = vadd.f32 %v273, %v2073
    %v2075 = vpop.f32.mrf.mxu0
    %v2076 = vpop.f32.mrf.mxu0
    %v2077 = vadd.f32 %v274, %v2076
    %v2078 = vpop.f32.mrf.mxu0
    %2079 = vmatprep.mubr.bf16.mxu0 0
    %2080 = vmatmul.mubr.bf16.gmra.mxu0 %v2019
    %v2081 = vpop.f32.mrf.mxu0
    %v2082 = vadd.f32 %v275, %v2081
    %v2083 = vpop.f32.mrf.mxu0
    %v2084 = vpop.f32.mrf.mxu0
    %v2085 = vadd.f32 %v276, %v2084
    %v2086 = vpop.f32.mrf.mxu0
    %2087 = vmatprep.mubr.bf16.mxu0 0
    %2088 = vmatmul.mubr.bf16.gmra.mxu0 %v2022
    %v2089 = vpop.f32.mrf.mxu0
    %v2090 = vadd.f32 %v277, %v2089
    %v2091 = vpop.f32.mrf.mxu0
    %v2092 = vpop.f32.mrf.mxu0
    %v2093 = vadd.f32 %v278, %v2092
    %v2094 = vpop.f32.mrf.mxu0
    %2095 = vmatprep.mubr.bf16.mxu0 0
    %2096 = vmatmul.mubr.bf16.gmra.mxu0 %v2025
    %v2097 = vpop.f32.mrf.mxu0
    %v2098 = vadd.f32 %v279, %v2097
    %v2099 = vpop.f32.mrf.mxu0
    %v2100 = vpop.f32.mrf.mxu0
    %v2101 = vadd.f32 %v280, %v2100
    %v2102 = vpop.f32.mrf.mxu0
    %2103 = vdwg.mxu0
    %v2104 = vsel %vm1164, %v2074, -inf
    %2105 = vmax.xlane.f32.xlu0 %v2104
    %v2106 = vpop.xlane.xlu0 %2105
    %v2107 = vsel %vm1164, %v2077, -inf
    %2108 = vmax.xlane.f32.xlu0 %v2107
    %v2109 = vpop.xlane.xlu0 %2108
    %v2110 = vsel %vm1164, %v2082, -inf
    %2111 = vmax.xlane.f32.xlu0 %v2110
    %v2112 = vpop.xlane.xlu0 %2111
    %v2113 = vsel %vm1164, %v2085, -inf
    %2114 = vmax.xlane.f32.xlu0 %v2113
    %v2115 = vpop.xlane.xlu0 %2114
    %v2116 = vsel %vm1164, %v2090, -inf
    %2117 = vmax.xlane.f32.xlu0 %v2116
    %v2118 = vpop.xlane.xlu0 %2117
    %v2119 = vsel %vm1164, %v2093, -inf
    %2120 = vmax.xlane.f32.xlu0 %v2119
    %v2121 = vpop.xlane.xlu0 %2120
    %v2122 = vsel %vm1164, %v2098, -inf
    %2123 = vmax.xlane.f32.xlu0 %v2122
    %v2124 = vpop.xlane.xlu0 %2123
    %v2125 = vsel %vm1164, %v2101, -inf
    %2126 = vmax.xlane.f32.xlu0 %v2125
    %v2127 = vpop.xlane.xlu0 %2126
    %v2128 = vsub.f32 %v2074, %v2106
    %v2129 = vsub.f32 %v2077, %v2109
    %v2130 = vsub.f32 %v2082, %v2112
    %v2131 = vsub.f32 %v2085, %v2115
    %v2132 = vsub.f32 %v2090, %v2118
    %v2133 = vsub.f32 %v2093, %v2121
    %v2134 = vsub.f32 %v2098, %v2124
    %v2135 = vsub.f32 %v2101, %v2127
    %v2136 = vmul.f32 %v2128, 1.442695
    %v2137 = vpow.pop %v2136
    %v2138 = vmul.f32 %v2129, 1.442695
    %v2139 = vpow.pop %v2138
    %v2140 = vmul.f32 %v2130, 1.442695
    %v2141 = vpow.pop %v2140
    %v2142 = vmul.f32 %v2131, 1.442695
    %v2143 = vpow.pop %v2142
    %v2144 = vmul.f32 %v2132, 1.442695
    %v2145 = vpow.pop %v2144
    %v2146 = vmul.f32 %v2133, 1.442695
    %v2147 = vpow.pop %v2146
    %v2148 = vmul.f32 %v2134, 1.442695
    %v2149 = vpow.pop %v2148
    %v2150 = vmul.f32 %v2135, 1.442695
    %v2151 = vpow.pop %v2150
    %v2152 = vsel %vm1164, %v2137, 0.0
    %2153 = vadd.xlane.f32.xlu0 %v2152
    %v2154 = vpop.xlane.xlu0 %2153
    %v2155 = vsel %vm1164, %v2139, 0.0
    %2156 = vadd.xlane.f32.xlu0 %v2155
    %v2157 = vpop.xlane.xlu0 %2156
    %v2158 = vsel %vm1164, %v2141, 0.0
    %2159 = vadd.xlane.f32.xlu0 %v2158
    %v2160 = vpop.xlane.xlu0 %2159
    %v2161 = vsel %vm1164, %v2143, 0.0
    %2162 = vadd.xlane.f32.xlu0 %v2161
    %v2163 = vpop.xlane.xlu0 %2162
    %v2164 = vsel %vm1164, %v2145, 0.0
    %2165 = vadd.xlane.f32.xlu0 %v2164
    %v2166 = vpop.xlane.xlu0 %2165
    %v2167 = vsel %vm1164, %v2147, 0.0
    %2168 = vadd.xlane.f32.xlu0 %v2167
    %v2169 = vpop.xlane.xlu0 %2168
    %v2170 = vsel %vm1164, %v2149, 0.0
    %2171 = vadd.xlane.f32.xlu0 %v2170
    %v2172 = vpop.xlane.xlu0 %2171
    %v2173 = vsel %vm1164, %v2151, 0.0
    %2174 = vadd.xlane.f32.xlu0 %v2173
    %v2175 = vpop.xlane.xlu0 %2174
    %v2176 = vrcp.pop %v2154
    %v2177 = vrcp.pop %v2157
    %v2178 = vrcp.pop %v2160
    %v2179 = vrcp.pop %v2163
    %v2180 = vrcp.pop %v2166
    %v2181 = vrcp.pop %v2169
    %v2182 = vrcp.pop %v2172
    %v2183 = vrcp.pop %v2175
    %v2184 = vmul.f32 %v2137, %v2176
    %v2185 = vmul.f32 %v2139, %v2177
    %v2186 = vmul.f32 %v2141, %v2178
    %v2187 = vmul.f32 %v2143, %v2179
    %v2188 = vmul.f32 %v2145, %v2180
    %v2189 = vmul.f32 %v2147, %v2181
    %v2190 = vmul.f32 %v2149, %v2182
    %v2191 = vmul.f32 %v2151, %v2183
    %v2192 = vpack.c.bf16 %v2185, %v2184
    %v2193 = vpack.c.bf16 %v2187, %v2186
    %v2194 = vpack.c.bf16 %v2189, %v2188
    %v2195 = vpack.c.bf16 %v2191, %v2190
    %2200 = vrot.lane.b32.xlu0 %v1729, 64
    %v2201 = vpop.permute.xlu0 %2200
    %2202 = vrot.lane.b32.xlu0 %v1730, 64
    %v2203 = vpop.permute.xlu0 %2202
    %2204 = vrot.lane.b32.xlu0 %v1731, 64
    %v2205 = vpop.permute.xlu0 %2204
    %2206 = vrot.lane.b32.xlu0 %v1732, 64
    %v2207 = vpop.permute.xlu0 %2206
    %v2213 = vsel %vm1164, %v2192, 0
    %v2216 = vsel %vm1164, %v2193, 0
    %v2219 = vsel %vm1164, %v2194, 0
    %v2222 = vsel %vm1164, %v2195, 0
    %2224 = vmatprep.subr.bf16.mxu0 0
    %2225 = vmatpush1.bf16.msra.mxu0 0
    %2226 = vmatprep.subr.bf16.mxu0 0
    %2227 = vmatpush1.bf16.msra.mxu0 0
    %2228 = vmatprep.subr.bf16.mxu0 0
    %2229 = vmatpush1.bf16.msra.mxu0 0
    %2230 = vmatprep.subr.bf16.mxu0 0
    %2231 = vmatpush1.bf16.msra.mxu0 0
    %2232 = vmatprep.subr.bf16.mxu0 0
    %2233 = vmatpush1.bf16.msra.mxu0 %v2207
    %2234 = vmatprep.subr.bf16.mxu0 0
    %2235 = vmatpush1.bf16.msra.mxu0 %v2205
    %2236 = vmatprep.subr.bf16.mxu0 0
    %2237 = vmatpush1.bf16.msra.mxu0 %v2203
    %2238 = vmatprep.subr.bf16.mxu0 0
    %2239 = vmatpush1.bf16.msra.mxu0 %v2201
    %2240 = vmatprep.subr.bf16.mxu0 0
    %2241 = vmatpush2.bf16.msra.mxu0 0
    %2242 = vmatprep.subr.bf16.mxu0 0
    %2243 = vmatpush2.bf16.msra.mxu0 0
    %2244 = vmatprep.subr.bf16.mxu0 0
    %2245 = vmatpush2.bf16.msra.mxu0 0
    %2246 = vmatprep.subr.bf16.mxu0 0
    %2247 = vmatpush2.bf16.msra.mxu0 0
    %2248 = vmatprep.subr.bf16.mxu0 0
    %2249 = vmatpush2.bf16.msra.mxu0 0
    %2250 = vmatprep.subr.bf16.mxu0 0
    %2251 = vmatpush2.bf16.msra.mxu0 0
    %2252 = vmatprep.subr.bf16.mxu0 0
    %2253 = vmatpush2.bf16.msra.mxu0 0
    %2254 = vmatprep.subr.bf16.mxu0 0
    %2255 = vmatpush2.bf16.msra.mxu0 0
    %2256 = vmatprep.mubr.bf16.mxu0 0
    %2257 = vmatmul.mubr.bf16.gmra.mxu0 %v2213
    %v2258 = vpop.f32.mrf.mxu0
    %v2259 = vadd.f32 0.0, %v2258
    %v2260 = vpop.f32.mrf.mxu0
    %v2261 = vpop.f32.mrf.mxu0
    %v2262 = vadd.f32 0.0, %v2261
    %v2263 = vpop.f32.mrf.mxu0
    %2264 = vmatprep.mubr.bf16.mxu0 0
    %2265 = vmatmul.mubr.bf16.gmra.mxu0 %v2216
    %v2266 = vpop.f32.mrf.mxu0
    %v2267 = vadd.f32 0.0, %v2266
    %v2268 = vpop.f32.mrf.mxu0
    %v2269 = vpop.f32.mrf.mxu0
    %v2270 = vadd.f32 0.0, %v2269
    %v2271 = vpop.f32.mrf.mxu0
    %2272 = vmatprep.mubr.bf16.mxu0 0
    %2273 = vmatmul.mubr.bf16.gmra.mxu0 %v2219
    %v2274 = vpop.f32.mrf.mxu0
    %v2275 = vadd.f32 0.0, %v2274
    %v2276 = vpop.f32.mrf.mxu0
    %v2277 = vpop.f32.mrf.mxu0
    %v2278 = vadd.f32 0.0, %v2277
    %v2279 = vpop.f32.mrf.mxu0
    %2280 = vmatprep.mubr.bf16.mxu0 0
    %2281 = vmatmul.mubr.bf16.gmra.mxu0 %v2222
    %v2282 = vpop.f32.mrf.mxu0
    %v2283 = vadd.f32 0.0, %v2282
    %v2284 = vpop.f32.mrf.mxu0
    %v2285 = vpop.f32.mrf.mxu0
    %v2286 = vadd.f32 0.0, %v2285
    %v2287 = vpop.f32.mrf.mxu0
    %2288 = vdwg.mxu0
    %2297 = vrot.lane.b32.xlu0 %v1691, 64
    %v2298 = vpop.permute.xlu0 %2297
    %2299 = vrot.lane.b32.xlu0 %v1694, 64
    %v2300 = vpop.permute.xlu0 %2299
    %2301 = vrot.lane.b32.xlu0 %v1699, 64
    %v2302 = vpop.permute.xlu0 %2301
    %2303 = vrot.lane.b32.xlu0 %v1702, 64
    %v2304 = vpop.permute.xlu0 %2303
    %2305 = vrot.lane.b32.xlu0 %v1707, 64
    %v2306 = vpop.permute.xlu0 %2305
    %2307 = vrot.lane.b32.xlu0 %v1710, 64
    %v2308 = vpop.permute.xlu0 %2307
    %2309 = vrot.lane.b32.xlu0 %v1715, 64
    %v2310 = vpop.permute.xlu0 %2309
    %2311 = vrot.lane.b32.xlu0 %v1718, 64
    %v2312 = vpop.permute.xlu0 %2311
    %2329 = vrot.lane.b32.xlu0 %v2259, 64
    %v2330 = vpop.permute.xlu0 %2329
    %2331 = vrot.lane.b32.xlu0 %v2262, 64
    %v2332 = vpop.permute.xlu0 %2331
    %2333 = vrot.lane.b32.xlu0 %v2267, 64
    %v2334 = vpop.permute.xlu0 %2333
    %2335 = vrot.lane.b32.xlu0 %v2270, 64
    %v2336 = vpop.permute.xlu0 %2335
    %2337 = vrot.lane.b32.xlu0 %v2275, 64
    %v2338 = vpop.permute.xlu0 %2337
    %2339 = vrot.lane.b32.xlu0 %v2278, 64
    %v2340 = vpop.permute.xlu0 %2339
    %2341 = vrot.lane.b32.xlu0 %v2283, 64
    %v2342 = vpop.permute.xlu0 %2341
    %2343 = vrot.lane.b32.xlu0 %v2286, 64
    %v2344 = vpop.permute.xlu0 %2343
    %v2353 = vsel %vm1164, %v1393, %v2298
    %v2354 = vsel %vm1164, %v1396, %v2300
    %v2355 = vsel %vm1164, %v1401, %v2302
    %v2356 = vsel %vm1164, %v1404, %v2304
    %v2357 = vsel %vm1164, %v1409, %v2306
    %v2358 = vsel %vm1164, %v1412, %v2308
    %v2359 = vsel %vm1164, %v1417, %v2310
    %v2360 = vsel %vm1164, %v1420, %v2312
    %v2361 = vsel %vm1164, %v1961, %v2330
    %v2362 = vsel %vm1164, %v1964, %v2332
    %v2363 = vsel %vm1164, %v1969, %v2334
    %v2364 = vsel %vm1164, %v1972, %v2336
    %v2365 = vsel %vm1164, %v1977, %v2338
    %v2366 = vsel %vm1164, %v1980, %v2340
    %v2367 = vsel %vm1164, %v1985, %v2342
    %v2368 = vsel %vm1164, %v1988, %v2344
    %v2369 = vpack.c.bf16 %v2354, %v2353
    %v2370 = vpack.c.bf16 %v2362, %v2361
    %v2371 = vpack.c.bf16 %v2356, %v2355
    %v2372 = vpack.c.bf16 %v2364, %v2363
    %v2373 = vpack.c.bf16 %v2358, %v2357
    %v2374 = vpack.c.bf16 %v2366, %v2365
    %v2375 = vpack.c.bf16 %v2360, %v2359
    %v2376 = vpack.c.bf16 %v2368, %v2367
    %v2377 = vld [vmem:[#allocation13] sm:$0xff]
    %v2378 = vld [vmem:[#allocation13 + $0x8] sm:$0xff]
    %v2379 = vld [vmem:[#allocation13 + $0x10] sm:$0xff]
    %v2380 = vld [vmem:[#allocation13 + $0x18] sm:$0xff]
    %v2381 = vld [vmem:[#allocation13 + $0x20] sm:$0xff]
    %v2382 = vld [vmem:[#allocation13 + $0x28] sm:$0xff]
    %v2383 = vld [vmem:[#allocation13 + $0x30] sm:$0xff]
    %v2384 = vld [vmem:[#allocation13 + $0x38] sm:$0xff]
    %v2385 = vld [vmem:[#allocation13 + $0x40] sm:$0xff]
    %v2386 = vld [vmem:[#allocation13 + $0x48] sm:$0xff]
    %v2387 = vld [vmem:[#allocation13 + $0x50] sm:$0xff]
    %v2388 = vld [vmem:[#allocation13 + $0x58] sm:$0xff]
    %v2389 = vld [vmem:[#allocation13 + $0x60] sm:$0xff]
    %v2390 = vld [vmem:[#allocation13 + $0x68] sm:$0xff]
    %v2391 = vld [vmem:[#allocation13 + $0x70] sm:$0xff]
    %v2392 = vld [vmem:[#allocation13 + $0x78] sm:$0xff]
    %v2393 = vld [vmem:[#allocation13 + $0x80] sm:$0xff]
    %v2394 = vld [vmem:[#allocation13 + $0x88] sm:$0xff]
    %v2395 = vld [vmem:[#allocation13 + $0x90] sm:$0xff]
    %v2396 = vld [vmem:[#allocation13 + $0x98] sm:$0xff]
    %v2397 = vld [vmem:[#allocation13 + $0xa0] sm:$0xff]
    %v2398 = vld [vmem:[#allocation13 + $0xa8] sm:$0xff]
    %v2399 = vld [vmem:[#allocation13 + $0xb0] sm:$0xff]
    %v2400 = vld [vmem:[#allocation13 + $0xb8] sm:$0xff]
    %v2401 = vld [vmem:[#allocation13 + $0xc0] sm:$0xff]
    %v2402 = vld [vmem:[#allocation13 + $0xc8] sm:$0xff]
    %v2403 = vld [vmem:[#allocation13 + $0xd0] sm:$0xff]
    %v2404 = vld [vmem:[#allocation13 + $0xd8] sm:$0xff]
    %v2405 = vld [vmem:[#allocation13 + $0xe0] sm:$0xff]
    %v2406 = vld [vmem:[#allocation13 + $0xe8] sm:$0xff]
    %v2407 = vld [vmem:[#allocation13 + $0xf0] sm:$0xff]
    %v2408 = vld [vmem:[#allocation13 + $0xf8] sm:$0xff]
    %v2409 = vlaneseq
    %v2410 = vshrl.u32 %v2409, 7
    %v2411 = vsub.s32 3, %v2410
    %v2412 = vrot.slane %v289, %v2411
    %v2413 = vlaneseq
    %v2414 = vshrl.u32 %v2413, 7
    %v2415 = vsub.s32 3, %v2414
    %v2416 = vrot.slane %v290, %v2415
    %v2449 = vunpack.c.l.b16 %v2377
    %v2450 = vunpack.c.h.b16 %v2377
    %v2451 = vunpack.c.l.b16 %v2378
    %v2452 = vunpack.c.h.b16 %v2378
    %v2453 = vunpack.c.l.b16 %v2379
    %v2454 = vunpack.c.h.b16 %v2379
    %v2455 = vunpack.c.l.b16 %v2380
    %v2456 = vunpack.c.h.b16 %v2380
    %v2457 = vunpack.c.l.b16 %v2381
    %v2458 = vunpack.c.h.b16 %v2381
    %v2459 = vunpack.c.l.b16 %v2382
    %v2460 = vunpack.c.h.b16 %v2382
    %v2461 = vunpack.c.l.b16 %v2383
    %v2462 = vunpack.c.h.b16 %v2383
    %v2463 = vunpack.c.l.b16 %v2384
    %v2464 = vunpack.c.h.b16 %v2384
    %v2465 = vunpack.c.l.b16 %v2385
    %v2466 = vunpack.c.h.b16 %v2385
    %v2467 = vunpack.c.l.b16 %v2386
    %v2468 = vunpack.c.h.b16 %v2386
    %v2469 = vunpack.c.l.b16 %v2387
    %v2470 = vunpack.c.h.b16 %v2387
    %v2471 = vunpack.c.l.b16 %v2388
    %v2472 = vunpack.c.h.b16 %v2388
    %v2473 = vunpack.c.l.b16 %v2389
    %v2474 = vunpack.c.h.b16 %v2389
    %v2475 = vunpack.c.l.b16 %v2390
    %v2476 = vunpack.c.h.b16 %v2390
    %v2477 = vunpack.c.l.b16 %v2391
    %v2478 = vunpack.c.h.b16 %v2391
    %v2479 = vunpack.c.l.b16 %v2392
    %v2480 = vunpack.c.h.b16 %v2392
    %v2481 = vunpack.c.l.b16 %v2393
    %v2482 = vunpack.c.h.b16 %v2393
    %v2483 = vunpack.c.l.b16 %v2394
    %v2484 = vunpack.c.h.b16 %v2394
    %v2485 = vunpack.c.l.b16 %v2395
    %v2486 = vunpack.c.h.b16 %v2395
    %v2487 = vunpack.c.l.b16 %v2396
    %v2488 = vunpack.c.h.b16 %v2396
    %v2489 = vunpack.c.l.b16 %v2397
    %v2490 = vunpack.c.h.b16 %v2397
    %v2491 = vunpack.c.l.b16 %v2398
    %v2492 = vunpack.c.h.b16 %v2398
    %v2493 = vunpack.c.l.b16 %v2399
    %v2494 = vunpack.c.h.b16 %v2399
    %v2495 = vunpack.c.l.b16 %v2400
    %v2496 = vunpack.c.h.b16 %v2400
    %v2497 = vunpack.c.l.b16 %v2401
    %v2498 = vunpack.c.h.b16 %v2401
    %v2499 = vunpack.c.l.b16 %v2402
    %v2500 = vunpack.c.h.b16 %v2402
    %v2501 = vunpack.c.l.b16 %v2403
    %v2502 = vunpack.c.h.b16 %v2403
    %v2503 = vunpack.c.l.b16 %v2404
    %v2504 = vunpack.c.h.b16 %v2404
    %v2505 = vunpack.c.l.b16 %v2405
    %v2506 = vunpack.c.h.b16 %v2405
    %v2507 = vunpack.c.l.b16 %v2406
    %v2508 = vunpack.c.h.b16 %v2406
    %v2509 = vunpack.c.l.b16 %v2407
    %v2510 = vunpack.c.h.b16 %v2407
    %v2511 = vunpack.c.l.b16 %v2408
    %v2512 = vunpack.c.h.b16 %v2408
    %v2513 = vpack.c.b16 %v2451, %v2449
    %v2514 = vpack.c.b16 %v2452, %v2450
    %v2515 = vpack.c.b16 %v2455, %v2453
    %v2516 = vpack.c.b16 %v2456, %v2454
    %v2517 = vpack.c.b16 %v2459, %v2457
    %v2518 = vpack.c.b16 %v2460, %v2458
    %v2519 = vpack.c.b16 %v2463, %v2461
    %v2520 = vpack.c.b16 %v2464, %v2462
    %v2521 = vpack.c.b16 %v2467, %v2465
    %v2522 = vpack.c.b16 %v2468, %v2466
    %v2523 = vpack.c.b16 %v2471, %v2469
    %v2524 = vpack.c.b16 %v2472, %v2470
    %v2525 = vpack.c.b16 %v2475, %v2473
    %v2526 = vpack.c.b16 %v2476, %v2474
    %v2527 = vpack.c.b16 %v2479, %v2477
    %v2528 = vpack.c.b16 %v2480, %v2478
    %v2529 = vpack.c.b16 %v2483, %v2481
    %v2530 = vpack.c.b16 %v2484, %v2482
    %v2531 = vpack.c.b16 %v2487, %v2485
    %v2532 = vpack.c.b16 %v2488, %v2486
    %v2533 = vpack.c.b16 %v2491, %v2489
    %v2534 = vpack.c.b16 %v2492, %v2490
    %v2535 = vpack.c.b16 %v2495, %v2493
    %v2536 = vpack.c.b16 %v2496, %v2494
    %v2537 = vpack.c.b16 %v2499, %v2497
    %v2538 = vpack.c.b16 %v2500, %v2498
    %v2539 = vpack.c.b16 %v2503, %v2501
    %v2540 = vpack.c.b16 %v2504, %v2502
    %v2541 = vpack.c.b16 %v2507, %v2505
    %v2542 = vpack.c.b16 %v2508, %v2506
    %v2543 = vpack.c.b16 %v2511, %v2509
    %v2544 = vpack.c.b16 %v2512, %v2510
    %2577 = vmatprep.subr.bf16.mxu0 %v2528
    %2578 = vmatpush1.bf16.msra.mxu0 %v2527
    %2579 = vmatprep.subr.bf16.mxu0 %v2526
    %2580 = vmatpush1.bf16.msra.mxu0 %v2525
    %2581 = vmatprep.subr.bf16.mxu0 %v2524
    %2582 = vmatpush1.bf16.msra.mxu0 %v2523
    %2583 = vmatprep.subr.bf16.mxu0 %v2522
    %2584 = vmatpush1.bf16.msra.mxu0 %v2521
    %2585 = vmatprep.subr.bf16.mxu0 %v2520
    %2586 = vmatpush1.bf16.msra.mxu0 %v2519
    %2587 = vmatprep.subr.bf16.mxu0 %v2518
    %2588 = vmatpush1.bf16.msra.mxu0 %v2517
    %2589 = vmatprep.subr.bf16.mxu0 %v2516
    %2590 = vmatpush1.bf16.msra.mxu0 %v2515
    %2591 = vmatprep.subr.bf16.mxu0 %v2514
    %2592 = vmatpush1.bf16.msra.mxu0 %v2513
    %2593 = vmatprep.subr.bf16.mxu0 %v2544
    %2594 = vmatpush2.bf16.msra.mxu0 %v2543
    %2595 = vmatprep.subr.bf16.mxu0 %v2542
    %2596 = vmatpush2.bf16.msra.mxu0 %v2541
    %2597 = vmatprep.subr.bf16.mxu0 %v2540
    %2598 = vmatpush2.bf16.msra.mxu0 %v2539
    %2599 = vmatprep.subr.bf16.mxu0 %v2538
    %2600 = vmatpush2.bf16.msra.mxu0 %v2537
    %2601 = vmatprep.subr.bf16.mxu0 %v2536
    %2602 = vmatpush2.bf16.msra.mxu0 %v2535
    %2603 = vmatprep.subr.bf16.mxu0 %v2534
    %2604 = vmatpush2.bf16.msra.mxu0 %v2533
    %2605 = vmatprep.subr.bf16.mxu0 %v2532
    %2606 = vmatpush2.bf16.msra.mxu0 %v2531
    %2607 = vmatprep.subr.bf16.mxu0 %v2530
    %2608 = vmatpush2.bf16.msra.mxu0 %v2529
    %2609 = vmatprep.mubr.bf16.mxu0 %v2370
    %2610 = vmatmul.mubr.bf16.gmra.mxu0 %v2369
    %v2611 = vpop.f32.mrf.mxu0
    %v2612 = vadd.f32 %v2412, %v2611
    %v2613 = vpop.f32.mrf.mxu0
    %v2614 = vadd.f32 %v2416, %v2613
    %v2615 = vpop.f32.mrf.mxu0
    %v2616 = vadd.f32 %v2412, %v2615
    %v2617 = vpop.f32.mrf.mxu0
    %v2618 = vadd.f32 %v2416, %v2617
    %2619 = vmatprep.mubr.bf16.mxu0 %v2372
    %2620 = vmatmul.mubr.bf16.gmra.mxu0 %v2371
    %v2621 = vpop.f32.mrf.mxu0
    %v2622 = vadd.f32 %v2412, %v2621
    %v2623 = vpop.f32.mrf.mxu0
    %v2624 = vadd.f32 %v2416, %v2623
    %v2625 = vpop.f32.mrf.mxu0
    %v2626 = vadd.f32 %v2412, %v2625
    %v2627 = vpop.f32.mrf.mxu0
    %v2628 = vadd.f32 %v2416, %v2627
    %2629 = vmatprep.mubr.bf16.mxu0 %v2374
    %2630 = vmatmul.mubr.bf16.gmra.mxu0 %v2373
    %v2631 = vpop.f32.mrf.mxu0
    %v2632 = vadd.f32 %v2412, %v2631
    %v2633 = vpop.f32.mrf.mxu0
    %v2634 = vadd.f32 %v2416, %v2633
    %v2635 = vpop.f32.mrf.mxu0
    %v2636 = vadd.f32 %v2412, %v2635
    %v2637 = vpop.f32.mrf.mxu0
    %v2638 = vadd.f32 %v2416, %v2637
    %2639 = vmatprep.mubr.bf16.mxu0 %v2376
    %2640 = vmatmul.mubr.bf16.gmra.mxu0 %v2375
    %v2641 = vpop.f32.mrf.mxu0
    %v2642 = vadd.f32 %v2412, %v2641
    %v2643 = vpop.f32.mrf.mxu0
    %v2644 = vadd.f32 %v2416, %v2643
    %v2645 = vpop.f32.mrf.mxu0
    %v2646 = vadd.f32 %v2412, %v2645
    %v2647 = vpop.f32.mrf.mxu0
    %v2648 = vadd.f32 %v2416, %v2647
    %2649 = vdwg.mxu0
    %v2650 = vadd.f32 %v2612, %v225
    %v2651 = vadd.f32 %v2614, %v226
    %v2652 = vadd.f32 %v2616, %v227
    %v2653 = vadd.f32 %v2618, %v228
    %v2654 = vadd.f32 %v2622, %v229
    %v2655 = vadd.f32 %v2624, %v230
    %v2656 = vadd.f32 %v2626, %v231
    %v2657 = vadd.f32 %v2628, %v232
    %v2658 = vadd.f32 %v2632, %v233
    %v2659 = vadd.f32 %v2634, %v234
    %v2660 = vadd.f32 %v2636, %v235
    %v2661 = vadd.f32 %v2638, %v236
    %v2662 = vadd.f32 %v2642, %v237
    %v2663 = vadd.f32 %v2644, %v238
    %v2664 = vadd.f32 %v2646, %v239
    %v2665 = vadd.f32 %v2648, %v240
    %v2666 = vadd.f32 %v2650, %v2651
    %2667 = vadd.xlane.f32.xlu0 %v2666
    %v2668 = vpop.xlane.xlu0 %2667
    %v2669 = vadd.f32 %v2652, %v2653
    %2670 = vadd.xlane.f32.xlu0 %v2669
    %v2671 = vpop.xlane.xlu0 %2670
    %v2672 = vadd.f32 %v2654, %v2655
    %2673 = vadd.xlane.f32.xlu0 %v2672
    %v2674 = vpop.xlane.xlu0 %2673
    %v2675 = vadd.f32 %v2656, %v2657
    %2676 = vadd.xlane.f32.xlu0 %v2675
    %v2677 = vpop.xlane.xlu0 %2676
    %v2678 = vadd.f32 %v2658, %v2659
    %2679 = vadd.xlane.f32.xlu0 %v2678
    %v2680 = vpop.xlane.xlu0 %2679
    %v2681 = vadd.f32 %v2660, %v2661
    %2682 = vadd.xlane.f32.xlu0 %v2681
    %v2683 = vpop.xlane.xlu0 %2682
    %v2684 = vadd.f32 %v2662, %v2663
    %2685 = vadd.xlane.f32.xlu0 %v2684
    %v2686 = vpop.xlane.xlu0 %2685
    %v2687 = vadd.f32 %v2664, %v2665
    %2688 = vadd.xlane.f32.xlu0 %v2687
    %v2689 = vpop.xlane.xlu0 %2688
    %v2690 = vrcp.pop 256.0
    %v2691 = vmul.f32 %v2668, %v2690
    %v2692 = vmul.f32 %v2671, %v2690
    %v2693 = vmul.f32 %v2674, %v2690
    %v2694 = vmul.f32 %v2677, %v2690
    %v2695 = vmul.f32 %v2680, %v2690
    %v2696 = vmul.f32 %v2683, %v2690
    %v2697 = vmul.f32 %v2686, %v2690
    %v2698 = vmul.f32 %v2689, %v2690
    %v2699 = vsub.f32 %v2650, %v2691
    %v2700 = vsub.f32 %v2651, %v2691
    %v2701 = vsub.f32 %v2652, %v2692
    %v2702 = vsub.f32 %v2653, %v2692
    %v2703 = vsub.f32 %v2654, %v2693
    %v2704 = vsub.f32 %v2655, %v2693
    %v2705 = vsub.f32 %v2656, %v2694
    %v2706 = vsub.f32 %v2657, %v2694
    %v2707 = vsub.f32 %v2658, %v2695
    %v2708 = vsub.f32 %v2659, %v2695
    %v2709 = vsub.f32 %v2660, %v2696
    %v2710 = vsub.f32 %v2661, %v2696
    %v2711 = vsub.f32 %v2662, %v2697
    %v2712 = vsub.f32 %v2663, %v2697
    %v2713 = vsub.f32 %v2664, %v2698
    %v2714 = vsub.f32 %v2665, %v2698
    %v2715 = vmul.f32 %v2699, %v2699
    %v2716 = vmul.f32 %v2700, %v2700
    %v2717 = vmul.f32 %v2701, %v2701
    %v2718 = vmul.f32 %v2702, %v2702
    %v2719 = vmul.f32 %v2703, %v2703
    %v2720 = vmul.f32 %v2704, %v2704
    %v2721 = vmul.f32 %v2705, %v2705
    %v2722 = vmul.f32 %v2706, %v2706
    %v2723 = vmul.f32 %v2707, %v2707
    %v2724 = vmul.f32 %v2708, %v2708
    %v2725 = vmul.f32 %v2709, %v2709
    %v2726 = vmul.f32 %v2710, %v2710
    %v2727 = vmul.f32 %v2711, %v2711
    %v2728 = vmul.f32 %v2712, %v2712
    %v2729 = vmul.f32 %v2713, %v2713
    %v2730 = vmul.f32 %v2714, %v2714
    %v2731 = vadd.f32 %v2715, %v2716
    %2732 = vadd.xlane.f32.xlu0 %v2731
    %v2733 = vpop.xlane.xlu0 %2732
    %v2734 = vadd.f32 %v2717, %v2718
    %2735 = vadd.xlane.f32.xlu0 %v2734
    %v2736 = vpop.xlane.xlu0 %2735
    %v2737 = vadd.f32 %v2719, %v2720
    %2738 = vadd.xlane.f32.xlu0 %v2737
    %v2739 = vpop.xlane.xlu0 %2738
    %v2740 = vadd.f32 %v2721, %v2722
    %2741 = vadd.xlane.f32.xlu0 %v2740
    %v2742 = vpop.xlane.xlu0 %2741
    %v2743 = vadd.f32 %v2723, %v2724
    %2744 = vadd.xlane.f32.xlu0 %v2743
    %v2745 = vpop.xlane.xlu0 %2744
    %v2746 = vadd.f32 %v2725, %v2726
    %2747 = vadd.xlane.f32.xlu0 %v2746
    %v2748 = vpop.xlane.xlu0 %2747
    %v2749 = vadd.f32 %v2727, %v2728
    %2750 = vadd.xlane.f32.xlu0 %v2749
    %v2751 = vpop.xlane.xlu0 %2750
    %v2752 = vadd.f32 %v2729, %v2730
    %2753 = vadd.xlane.f32.xlu0 %v2752
    %v2754 = vpop.xlane.xlu0 %2753
    %v2755 = vmul.f32 %v2733, %v2690
    %v2756 = vmul.f32 %v2736, %v2690
    %v2757 = vmul.f32 %v2739, %v2690
    %v2758 = vmul.f32 %v2742, %v2690
    %v2759 = vmul.f32 %v2745, %v2690
    %v2760 = vmul.f32 %v2748, %v2690
    %v2761 = vmul.f32 %v2751, %v2690
    %v2762 = vmul.f32 %v2754, %v2690
    %v2763 = vadd.f32 %v2755, 1e-06
    %v2764 = vadd.f32 %v2756, 1e-06
    %v2765 = vadd.f32 %v2757, 1e-06
    %v2766 = vadd.f32 %v2758, 1e-06
    %v2767 = vadd.f32 %v2759, 1e-06
    %v2768 = vadd.f32 %v2760, 1e-06
    %v2769 = vadd.f32 %v2761, 1e-06
    %v2770 = vadd.f32 %v2762, 1e-06
    %v2771 = vrsqrt.pop %v2763
    %v2772 = vrsqrt.pop %v2764
    %v2773 = vrsqrt.pop %v2765
    %v2774 = vrsqrt.pop %v2766
    %v2775 = vrsqrt.pop %v2767
    %v2776 = vrsqrt.pop %v2768
    %v2777 = vrsqrt.pop %v2769
    %v2778 = vrsqrt.pop %v2770
    %v2779 = vmul.f32 %v2699, %v2771
    %v2780 = vmul.f32 %v2700, %v2771
    %v2781 = vmul.f32 %v2701, %v2772
    %v2782 = vmul.f32 %v2702, %v2772
    %v2783 = vmul.f32 %v2703, %v2773
    %v2784 = vmul.f32 %v2704, %v2773
    %v2785 = vmul.f32 %v2705, %v2774
    %v2786 = vmul.f32 %v2706, %v2774
    %v2787 = vmul.f32 %v2707, %v2775
    %v2788 = vmul.f32 %v2708, %v2775
    %v2789 = vmul.f32 %v2709, %v2776
    %v2790 = vmul.f32 %v2710, %v2776
    %v2791 = vmul.f32 %v2711, %v2777
    %v2792 = vmul.f32 %v2712, %v2777
    %v2793 = vmul.f32 %v2713, %v2778
    %v2794 = vmul.f32 %v2714, %v2778
    %v2795 = vlaneseq
    %v2796 = vshrl.u32 %v2795, 7
    %v2797 = vsub.s32 0, %v2796
    %v2798 = vrot.slane %v291, %v2797
    %v2799 = vlaneseq
    %v2800 = vshrl.u32 %v2799, 7
    %v2801 = vsub.s32 0, %v2800
    %v2802 = vrot.slane %v292, %v2801
    %v2803 = vmul.f32 %v2779, %v2798
    %v2804 = vmul.f32 %v2780, %v2802
    %v2805 = vmul.f32 %v2781, %v2798
    %v2806 = vmul.f32 %v2782, %v2802
    %v2807 = vmul.f32 %v2783, %v2798
    %v2808 = vmul.f32 %v2784, %v2802
    %v2809 = vmul.f32 %v2785, %v2798
    %v2810 = vmul.f32 %v2786, %v2802
    %v2811 = vmul.f32 %v2787, %v2798
    %v2812 = vmul.f32 %v2788, %v2802
    %v2813 = vmul.f32 %v2789, %v2798
    %v2814 = vmul.f32 %v2790, %v2802
    %v2815 = vmul.f32 %v2791, %v2798
    %v2816 = vmul.f32 %v2792, %v2802
    %v2817 = vmul.f32 %v2793, %v2798
    %v2818 = vmul.f32 %v2794, %v2802
    %v2819 = vlaneseq
    %v2820 = vshrl.u32 %v2819, 7
    %v2821 = vsub.s32 1, %v2820
    %v2822 = vrot.slane %v291, %v2821
    %v2823 = vlaneseq
    %v2824 = vshrl.u32 %v2823, 7
    %v2825 = vsub.s32 1, %v2824
    %v2826 = vrot.slane %v292, %v2825
    %v2827 = vadd.f32 %v2803, %v2822
    %v2828 = vadd.f32 %v2804, %v2826
    %v2829 = vadd.f32 %v2805, %v2822
    %v2830 = vadd.f32 %v2806, %v2826
    %v2831 = vadd.f32 %v2807, %v2822
    %v2832 = vadd.f32 %v2808, %v2826
    %v2833 = vadd.f32 %v2809, %v2822
    %v2834 = vadd.f32 %v2810, %v2826
    %v2835 = vadd.f32 %v2811, %v2822
    %v2836 = vadd.f32 %v2812, %v2826
    %v2837 = vadd.f32 %v2813, %v2822
    %v2838 = vadd.f32 %v2814, %v2826
    %v2839 = vadd.f32 %v2815, %v2822
    %v2840 = vadd.f32 %v2816, %v2826
    %v2841 = vadd.f32 %v2817, %v2822
    %v2842 = vadd.f32 %v2818, %v2826
    %v2843 = vpack.c.bf16 %v2829, %v2827
    %v2844 = vpack.c.bf16 %v2830, %v2828
    %v2845 = vpack.c.bf16 %v2833, %v2831
    %v2846 = vpack.c.bf16 %v2834, %v2832
    %v2847 = vpack.c.bf16 %v2837, %v2835
    %v2848 = vpack.c.bf16 %v2838, %v2836
    %v2849 = vpack.c.bf16 %v2841, %v2839
    %v2850 = vpack.c.bf16 %v2842, %v2840
    %v2851 = vpack.c.bf16 %v243, %v241
    %v2852 = vpack.c.bf16 %v244, %v242
    %v2853 = vpack.c.bf16 %v247, %v245
    %v2854 = vpack.c.bf16 %v248, %v246
    %v2855 = vpack.c.bf16 %v251, %v249
    %v2856 = vpack.c.bf16 %v252, %v250
    %v2857 = vpack.c.bf16 %v255, %v253
    %v2858 = vpack.c.bf16 %v256, %v254
    %v2859 = vpack.c.bf16 %v259, %v257
    %v2860 = vpack.c.bf16 %v260, %v258
    %v2861 = vpack.c.bf16 %v263, %v261
    %v2862 = vpack.c.bf16 %v264, %v262
    %v2863 = vpack.c.bf16 %v267, %v265
    %v2864 = vpack.c.bf16 %v268, %v266
    %v2865 = vpack.c.bf16 %v271, %v269
    %v2866 = vpack.c.bf16 %v272, %v270
    %v2867 = vld [vmem:[#allocation14] sm:$0xff]
    %v2868 = vld [vmem:[#allocation14 + $0x8] sm:$0xff]
    %v2869 = vld [vmem:[#allocation14 + $0x10] sm:$0xff]
    %v2870 = vld [vmem:[#allocation14 + $0x18] sm:$0xff]
    %v2871 = vld [vmem:[#allocation14 + $0x20] sm:$0xff]
    %v2872 = vld [vmem:[#allocation14 + $0x28] sm:$0xff]
    %v2873 = vld [vmem:[#allocation14 + $0x30] sm:$0xff]
    %v2874 = vld [vmem:[#allocation14 + $0x38] sm:$0xff]
    %v2875 = vld [vmem:[#allocation14 + $0x40] sm:$0xff]
    %v2876 = vld [vmem:[#allocation14 + $0x48] sm:$0xff]
    %v2877 = vld [vmem:[#allocation14 + $0x50] sm:$0xff]
    %v2878 = vld [vmem:[#allocation14 + $0x58] sm:$0xff]
    %v2879 = vld [vmem:[#allocation14 + $0x60] sm:$0xff]
    %v2880 = vld [vmem:[#allocation14 + $0x68] sm:$0xff]
    %v2881 = vld [vmem:[#allocation14 + $0x70] sm:$0xff]
    %v2882 = vld [vmem:[#allocation14 + $0x78] sm:$0xff]
    %v2883 = vld [vmem:[#allocation14 + $0x80] sm:$0xff]
    %v2884 = vld [vmem:[#allocation14 + $0x88] sm:$0xff]
    %v2885 = vld [vmem:[#allocation14 + $0x90] sm:$0xff]
    %v2886 = vld [vmem:[#allocation14 + $0x98] sm:$0xff]
    %v2887 = vld [vmem:[#allocation14 + $0xa0] sm:$0xff]
    %v2888 = vld [vmem:[#allocation14 + $0xa8] sm:$0xff]
    %v2889 = vld [vmem:[#allocation14 + $0xb0] sm:$0xff]
    %v2890 = vld [vmem:[#allocation14 + $0xb8] sm:$0xff]
    %v2891 = vld [vmem:[#allocation14 + $0xc0] sm:$0xff]
    %v2892 = vld [vmem:[#allocation14 + $0xc8] sm:$0xff]
    %v2893 = vld [vmem:[#allocation14 + $0xd0] sm:$0xff]
    %v2894 = vld [vmem:[#allocation14 + $0xd8] sm:$0xff]
    %v2895 = vld [vmem:[#allocation14 + $0xe0] sm:$0xff]
    %v2896 = vld [vmem:[#allocation14 + $0xe8] sm:$0xff]
    %v2897 = vld [vmem:[#allocation14 + $0xf0] sm:$0xff]
    %v2898 = vld [vmem:[#allocation14 + $0xf8] sm:$0xff]
    %v2899 = vlaneseq
    %v2900 = vshrl.u32 %v2899, 7
    %v2901 = vsub.s32 4, %v2900
    %v2902 = vrot.slane %v289, %v2901
    %v2903 = vlaneseq
    %v2904 = vshrl.u32 %v2903, 7
    %v2905 = vsub.s32 4, %v2904
    %v2906 = vrot.slane %v290, %v2905
    %v2939 = vunpack.c.l.b16 %v2867
    %v2940 = vunpack.c.h.b16 %v2867
    %v2941 = vunpack.c.l.b16 %v2868
    %v2942 = vunpack.c.h.b16 %v2868
    %v2943 = vunpack.c.l.b16 %v2869
    %v2944 = vunpack.c.h.b16 %v2869
    %v2945 = vunpack.c.l.b16 %v2870
    %v2946 = vunpack.c.h.b16 %v2870
    %v2947 = vunpack.c.l.b16 %v2871
    %v2948 = vunpack.c.h.b16 %v2871
    %v2949 = vunpack.c.l.b16 %v2872
    %v2950 = vunpack.c.h.b16 %v2872
    %v2951 = vunpack.c.l.b16 %v2873
    %v2952 = vunpack.c.h.b16 %v2873
    %v2953 = vunpack.c.l.b16 %v2874
    %v2954 = vunpack.c.h.b16 %v2874
    %v2955 = vunpack.c.l.b16 %v2875
    %v2956 = vunpack.c.h.b16 %v2875
    %v2957 = vunpack.c.l.b16 %v2876
    %v2958 = vunpack.c.h.b16 %v2876
    %v2959 = vunpack.c.l.b16 %v2877
    %v2960 = vunpack.c.h.b16 %v2877
    %v2961 = vunpack.c.l.b16 %v2878
    %v2962 = vunpack.c.h.b16 %v2878
    %v2963 = vunpack.c.l.b16 %v2879
    %v2964 = vunpack.c.h.b16 %v2879
    %v2965 = vunpack.c.l.b16 %v2880
    %v2966 = vunpack.c.h.b16 %v2880
    %v2967 = vunpack.c.l.b16 %v2881
    %v2968 = vunpack.c.h.b16 %v2881
    %v2969 = vunpack.c.l.b16 %v2882
    %v2970 = vunpack.c.h.b16 %v2882
    %v2971 = vunpack.c.l.b16 %v2883
    %v2972 = vunpack.c.h.b16 %v2883
    %v2973 = vunpack.c.l.b16 %v2884
    %v2974 = vunpack.c.h.b16 %v2884
    %v2975 = vunpack.c.l.b16 %v2885
    %v2976 = vunpack.c.h.b16 %v2885
    %v2977 = vunpack.c.l.b16 %v2886
    %v2978 = vunpack.c.h.b16 %v2886
    %v2979 = vunpack.c.l.b16 %v2887
    %v2980 = vunpack.c.h.b16 %v2887
    %v2981 = vunpack.c.l.b16 %v2888
    %v2982 = vunpack.c.h.b16 %v2888
    %v2983 = vunpack.c.l.b16 %v2889
    %v2984 = vunpack.c.h.b16 %v2889
    %v2985 = vunpack.c.l.b16 %v2890
    %v2986 = vunpack.c.h.b16 %v2890
    %v2987 = vunpack.c.l.b16 %v2891
    %v2988 = vunpack.c.h.b16 %v2891
    %v2989 = vunpack.c.l.b16 %v2892
    %v2990 = vunpack.c.h.b16 %v2892
    %v2991 = vunpack.c.l.b16 %v2893
    %v2992 = vunpack.c.h.b16 %v2893
    %v2993 = vunpack.c.l.b16 %v2894
    %v2994 = vunpack.c.h.b16 %v2894
    %v2995 = vunpack.c.l.b16 %v2895
    %v2996 = vunpack.c.h.b16 %v2895
    %v2997 = vunpack.c.l.b16 %v2896
    %v2998 = vunpack.c.h.b16 %v2896
    %v2999 = vunpack.c.l.b16 %v2897
    %v3000 = vunpack.c.h.b16 %v2897
    %v3001 = vunpack.c.l.b16 %v2898
    %v3002 = vunpack.c.h.b16 %v2898
    %v3003 = vpack.c.b16 %v2941, %v2939
    %v3004 = vpack.c.b16 %v2942, %v2940
    %v3005 = vpack.c.b16 %v2945, %v2943
    %v3006 = vpack.c.b16 %v2946, %v2944
    %v3007 = vpack.c.b16 %v2949, %v2947
    %v3008 = vpack.c.b16 %v2950, %v2948
    %v3009 = vpack.c.b16 %v2953, %v2951
    %v3010 = vpack.c.b16 %v2954, %v2952
    %v3011 = vpack.c.b16 %v2957, %v2955
    %v3012 = vpack.c.b16 %v2958, %v2956
    %v3013 = vpack.c.b16 %v2961, %v2959
    %v3014 = vpack.c.b16 %v2962, %v2960
    %v3015 = vpack.c.b16 %v2965, %v2963
    %v3016 = vpack.c.b16 %v2966, %v2964
    %v3017 = vpack.c.b16 %v2969, %v2967
    %v3018 = vpack.c.b16 %v2970, %v2968
    %v3019 = vpack.c.b16 %v2973, %v2971
    %v3020 = vpack.c.b16 %v2974, %v2972
    %v3021 = vpack.c.b16 %v2977, %v2975
    %v3022 = vpack.c.b16 %v2978, %v2976
    %v3023 = vpack.c.b16 %v2981, %v2979
    %v3024 = vpack.c.b16 %v2982, %v2980
    %v3025 = vpack.c.b16 %v2985, %v2983
    %v3026 = vpack.c.b16 %v2986, %v2984
    %v3027 = vpack.c.b16 %v2989, %v2987
    %v3028 = vpack.c.b16 %v2990, %v2988
    %v3029 = vpack.c.b16 %v2993, %v2991
    %v3030 = vpack.c.b16 %v2994, %v2992
    %v3031 = vpack.c.b16 %v2997, %v2995
    %v3032 = vpack.c.b16 %v2998, %v2996
    %v3033 = vpack.c.b16 %v3001, %v2999
    %v3034 = vpack.c.b16 %v3002, %v3000
    %3067 = vmatprep.subr.bf16.mxu0 %v3018
    %3068 = vmatpush1.bf16.msra.mxu0 %v3017
    %3069 = vmatprep.subr.bf16.mxu0 %v3016
    %3070 = vmatpush1.bf16.msra.mxu0 %v3015
    %3071 = vmatprep.subr.bf16.mxu0 %v3014
    %3072 = vmatpush1.bf16.msra.mxu0 %v3013
    %3073 = vmatprep.subr.bf16.mxu0 %v3012
    %3074 = vmatpush1.bf16.msra.mxu0 %v3011
    %3075 = vmatprep.subr.bf16.mxu0 %v3010
    %3076 = vmatpush1.bf16.msra.mxu0 %v3009
    %3077 = vmatprep.subr.bf16.mxu0 %v3008
    %3078 = vmatpush1.bf16.msra.mxu0 %v3007
    %3079 = vmatprep.subr.bf16.mxu0 %v3006
    %3080 = vmatpush1.bf16.msra.mxu0 %v3005
    %3081 = vmatprep.subr.bf16.mxu0 %v3004
    %3082 = vmatpush1.bf16.msra.mxu0 %v3003
    %3083 = vmatprep.subr.bf16.mxu0 %v3034
    %3084 = vmatpush2.bf16.msra.mxu0 %v3033
    %3085 = vmatprep.subr.bf16.mxu0 %v3032
    %3086 = vmatpush2.bf16.msra.mxu0 %v3031
    %3087 = vmatprep.subr.bf16.mxu0 %v3030
    %3088 = vmatpush2.bf16.msra.mxu0 %v3029
    %3089 = vmatprep.subr.bf16.mxu0 %v3028
    %3090 = vmatpush2.bf16.msra.mxu0 %v3027
    %3091 = vmatprep.subr.bf16.mxu0 %v3026
    %3092 = vmatpush2.bf16.msra.mxu0 %v3025
    %3093 = vmatprep.subr.bf16.mxu0 %v3024
    %3094 = vmatpush2.bf16.msra.mxu0 %v3023
    %3095 = vmatprep.subr.bf16.mxu0 %v3022
    %3096 = vmatpush2.bf16.msra.mxu0 %v3021
    %3097 = vmatprep.subr.bf16.mxu0 %v3020
    %3098 = vmatpush2.bf16.msra.mxu0 %v3019
    %3099 = vmatprep.mubr.bf16.mxu0 %v2844
    %3100 = vmatmul.mubr.bf16.gmra.mxu0 %v2843
    %v3101 = vpop.f32.mrf.mxu0
    %v3102 = vadd.f32 %v2902, %v3101
    %v3103 = vpop.f32.mrf.mxu0
    %v3104 = vadd.f32 %v2906, %v3103
    %v3105 = vpop.f32.mrf.mxu0
    %v3106 = vadd.f32 %v2902, %v3105
    %v3107 = vpop.f32.mrf.mxu0
    %v3108 = vadd.f32 %v2906, %v3107
    %3109 = vmatprep.mubr.bf16.mxu0 %v2846
    %3110 = vmatmul.mubr.bf16.gmra.mxu0 %v2845
    %v3111 = vpop.f32.mrf.mxu0
    %v3112 = vadd.f32 %v2902, %v3111
    %v3113 = vpop.f32.mrf.mxu0
    %v3114 = vadd.f32 %v2906, %v3113
    %v3115 = vpop.f32.mrf.mxu0
    %v3116 = vadd.f32 %v2902, %v3115
    %v3117 = vpop.f32.mrf.mxu0
    %v3118 = vadd.f32 %v2906, %v3117
    %3119 = vmatprep.mubr.bf16.mxu0 %v2848
    %3120 = vmatmul.mubr.bf16.gmra.mxu0 %v2847
    %v3121 = vpop.f32.mrf.mxu0
    %v3122 = vadd.f32 %v2902, %v3121
    %v3123 = vpop.f32.mrf.mxu0
    %v3124 = vadd.f32 %v2906, %v3123
    %v3125 = vpop.f32.mrf.mxu0
    %v3126 = vadd.f32 %v2902, %v3125
    %v3127 = vpop.f32.mrf.mxu0
    %v3128 = vadd.f32 %v2906, %v3127
    %3129 = vmatprep.mubr.bf16.mxu0 %v2850
    %3130 = vmatmul.mubr.bf16.gmra.mxu0 %v2849
    %v3131 = vpop.f32.mrf.mxu0
    %v3132 = vadd.f32 %v2902, %v3131
    %v3133 = vpop.f32.mrf.mxu0
    %v3134 = vadd.f32 %v2906, %v3133
    %v3135 = vpop.f32.mrf.mxu0
    %v3136 = vadd.f32 %v2902, %v3135
    %v3137 = vpop.f32.mrf.mxu0
    %v3138 = vadd.f32 %v2906, %v3137
    %3139 = vdwg.mxu0
    %v3140 = vld [vmem:[#allocation16] sm:$0xff]
    %v3141 = vld [vmem:[#allocation16 + $0x8] sm:$0xff]
    %v3142 = vld [vmem:[#allocation16 + $0x10] sm:$0xff]
    %v3143 = vld [vmem:[#allocation16 + $0x18] sm:$0xff]
    %v3144 = vld [vmem:[#allocation16 + $0x20] sm:$0xff]
    %v3145 = vld [vmem:[#allocation16 + $0x28] sm:$0xff]
    %v3146 = vld [vmem:[#allocation16 + $0x30] sm:$0xff]
    %v3147 = vld [vmem:[#allocation16 + $0x38] sm:$0xff]
    %v3148 = vld [vmem:[#allocation16 + $0x40] sm:$0xff]
    %v3149 = vld [vmem:[#allocation16 + $0x48] sm:$0xff]
    %v3150 = vld [vmem:[#allocation16 + $0x50] sm:$0xff]
    %v3151 = vld [vmem:[#allocation16 + $0x58] sm:$0xff]
    %v3152 = vld [vmem:[#allocation16 + $0x60] sm:$0xff]
    %v3153 = vld [vmem:[#allocation16 + $0x68] sm:$0xff]
    %v3154 = vld [vmem:[#allocation16 + $0x70] sm:$0xff]
    %v3155 = vld [vmem:[#allocation16 + $0x78] sm:$0xff]
    %v3156 = vld [vmem:[#allocation16 + $0x80] sm:$0xff]
    %v3157 = vld [vmem:[#allocation16 + $0x88] sm:$0xff]
    %v3158 = vld [vmem:[#allocation16 + $0x90] sm:$0xff]
    %v3159 = vld [vmem:[#allocation16 + $0x98] sm:$0xff]
    %v3160 = vld [vmem:[#allocation16 + $0xa0] sm:$0xff]
    %v3161 = vld [vmem:[#allocation16 + $0xa8] sm:$0xff]
    %v3162 = vld [vmem:[#allocation16 + $0xb0] sm:$0xff]
    %v3163 = vld [vmem:[#allocation16 + $0xb8] sm:$0xff]
    %v3164 = vld [vmem:[#allocation16 + $0xc0] sm:$0xff]
    %v3165 = vld [vmem:[#allocation16 + $0xc8] sm:$0xff]
    %v3166 = vld [vmem:[#allocation16 + $0xd0] sm:$0xff]
    %v3167 = vld [vmem:[#allocation16 + $0xd8] sm:$0xff]
    %v3168 = vld [vmem:[#allocation16 + $0xe0] sm:$0xff]
    %v3169 = vld [vmem:[#allocation16 + $0xe8] sm:$0xff]
    %v3170 = vld [vmem:[#allocation16 + $0xf0] sm:$0xff]
    %v3171 = vld [vmem:[#allocation16 + $0xf8] sm:$0xff]
    %v3172 = vld [vmem:[#allocation16 + $0x100] sm:$0xff]
    %v3173 = vld [vmem:[#allocation16 + $0x108] sm:$0xff]
    %v3174 = vld [vmem:[#allocation16 + $0x110] sm:$0xff]
    %v3175 = vld [vmem:[#allocation16 + $0x118] sm:$0xff]
    %v3176 = vld [vmem:[#allocation16 + $0x120] sm:$0xff]
    %v3177 = vld [vmem:[#allocation16 + $0x128] sm:$0xff]
    %v3178 = vld [vmem:[#allocation16 + $0x130] sm:$0xff]
    %v3179 = vld [vmem:[#allocation16 + $0x138] sm:$0xff]
    %v3180 = vld [vmem:[#allocation16 + $0x140] sm:$0xff]
    %v3181 = vld [vmem:[#allocation16 + $0x148] sm:$0xff]
    %v3182 = vld [vmem:[#allocation16 + $0x150] sm:$0xff]
    %v3183 = vld [vmem:[#allocation16 + $0x158] sm:$0xff]
    %v3184 = vld [vmem:[#allocation16 + $0x160] sm:$0xff]
    %v3185 = vld [vmem:[#allocation16 + $0x168] sm:$0xff]
    %v3186 = vld [vmem:[#allocation16 + $0x170] sm:$0xff]
    %v3187 = vld [vmem:[#allocation16 + $0x178] sm:$0xff]
    %v3188 = vld [vmem:[#allocation16 + $0x180] sm:$0xff]
    %v3189 = vld [vmem:[#allocation16 + $0x188] sm:$0xff]
    %v3190 = vld [vmem:[#allocation16 + $0x190] sm:$0xff]
    %v3191 = vld [vmem:[#allocation16 + $0x198] sm:$0xff]
    %v3192 = vld [vmem:[#allocation16 + $0x1a0] sm:$0xff]
    %v3193 = vld [vmem:[#allocation16 + $0x1a8] sm:$0xff]
    %v3194 = vld [vmem:[#allocation16 + $0x1b0] sm:$0xff]
    %v3195 = vld [vmem:[#allocation16 + $0x1b8] sm:$0xff]
    %v3196 = vld [vmem:[#allocation16 + $0x1c0] sm:$0xff]
    %v3197 = vld [vmem:[#allocation16 + $0x1c8] sm:$0xff]
    %v3198 = vld [vmem:[#allocation16 + $0x1d0] sm:$0xff]
    %v3199 = vld [vmem:[#allocation16 + $0x1d8] sm:$0xff]
    %v3200 = vld [vmem:[#allocation16 + $0x1e0] sm:$0xff]
    %v3201 = vld [vmem:[#allocation16 + $0x1e8] sm:$0xff]
    %v3202 = vld [vmem:[#allocation16 + $0x1f0] sm:$0xff]
    %v3203 = vld [vmem:[#allocation16 + $0x1f8] sm:$0xff]
    %v3268 = vunpack.c.l.b16 %v3140
    %v3269 = vunpack.c.h.b16 %v3140
    %v3270 = vunpack.c.l.b16 %v3141
    %v3271 = vunpack.c.h.b16 %v3141
    %v3272 = vunpack.c.l.b16 %v3142
    %v3273 = vunpack.c.h.b16 %v3142
    %v3274 = vunpack.c.l.b16 %v3143
    %v3275 = vunpack.c.h.b16 %v3143
    %v3276 = vunpack.c.l.b16 %v3144
    %v3277 = vunpack.c.h.b16 %v3144
    %v3278 = vunpack.c.l.b16 %v3145
    %v3279 = vunpack.c.h.b16 %v3145
    %v3280 = vunpack.c.l.b16 %v3146
    %v3281 = vunpack.c.h.b16 %v3146
    %v3282 = vunpack.c.l.b16 %v3147
    %v3283 = vunpack.c.h.b16 %v3147
    %v3284 = vunpack.c.l.b16 %v3148
    %v3285 = vunpack.c.h.b16 %v3148
    %v3286 = vunpack.c.l.b16 %v3149
    %v3287 = vunpack.c.h.b16 %v3149
    %v3288 = vunpack.c.l.b16 %v3150
    %v3289 = vunpack.c.h.b16 %v3150
    %v3290 = vunpack.c.l.b16 %v3151
    %v3291 = vunpack.c.h.b16 %v3151
    %v3292 = vunpack.c.l.b16 %v3152
    %v3293 = vunpack.c.h.b16 %v3152
    %v3294 = vunpack.c.l.b16 %v3153
    %v3295 = vunpack.c.h.b16 %v3153
    %v3296 = vunpack.c.l.b16 %v3154
    %v3297 = vunpack.c.h.b16 %v3154
    %v3298 = vunpack.c.l.b16 %v3155
    %v3299 = vunpack.c.h.b16 %v3155
    %v3300 = vunpack.c.l.b16 %v3156
    %v3301 = vunpack.c.h.b16 %v3156
    %v3302 = vunpack.c.l.b16 %v3157
    %v3303 = vunpack.c.h.b16 %v3157
    %v3304 = vunpack.c.l.b16 %v3158
    %v3305 = vunpack.c.h.b16 %v3158
    %v3306 = vunpack.c.l.b16 %v3159
    %v3307 = vunpack.c.h.b16 %v3159
    %v3308 = vunpack.c.l.b16 %v3160
    %v3309 = vunpack.c.h.b16 %v3160
    %v3310 = vunpack.c.l.b16 %v3161
    %v3311 = vunpack.c.h.b16 %v3161
    %v3312 = vunpack.c.l.b16 %v3162
    %v3313 = vunpack.c.h.b16 %v3162
    %v3314 = vunpack.c.l.b16 %v3163
    %v3315 = vunpack.c.h.b16 %v3163
    %v3316 = vunpack.c.l.b16 %v3164
    %v3317 = vunpack.c.h.b16 %v3164
    %v3318 = vunpack.c.l.b16 %v3165
    %v3319 = vunpack.c.h.b16 %v3165
    %v3320 = vunpack.c.l.b16 %v3166
    %v3321 = vunpack.c.h.b16 %v3166
    %v3322 = vunpack.c.l.b16 %v3167
    %v3323 = vunpack.c.h.b16 %v3167
    %v3324 = vunpack.c.l.b16 %v3168
    %v3325 = vunpack.c.h.b16 %v3168
    %v3326 = vunpack.c.l.b16 %v3169
    %v3327 = vunpack.c.h.b16 %v3169
    %v3328 = vunpack.c.l.b16 %v3170
    %v3329 = vunpack.c.h.b16 %v3170
    %v3330 = vunpack.c.l.b16 %v3171
    %v3331 = vunpack.c.h.b16 %v3171
    %v3332 = vunpack.c.l.b16 %v3172
    %v3333 = vunpack.c.h.b16 %v3172
    %v3334 = vunpack.c.l.b16 %v3173
    %v3335 = vunpack.c.h.b16 %v3173
    %v3336 = vunpack.c.l.b16 %v3174
    %v3337 = vunpack.c.h.b16 %v3174
    %v3338 = vunpack.c.l.b16 %v3175
    %v3339 = vunpack.c.h.b16 %v3175
    %v3340 = vunpack.c.l.b16 %v3176
    %v3341 = vunpack.c.h.b16 %v3176
    %v3342 = vunpack.c.l.b16 %v3177
    %v3343 = vunpack.c.h.b16 %v3177
    %v3344 = vunpack.c.l.b16 %v3178
    %v3345 = vunpack.c.h.b16 %v3178
    %v3346 = vunpack.c.l.b16 %v3179
    %v3347 = vunpack.c.h.b16 %v3179
    %v3348 = vunpack.c.l.b16 %v3180
    %v3349 = vunpack.c.h.b16 %v3180
    %v3350 = vunpack.c.l.b16 %v3181
    %v3351 = vunpack.c.h.b16 %v3181
    %v3352 = vunpack.c.l.b16 %v3182
    %v3353 = vunpack.c.h.b16 %v3182
    %v3354 = vunpack.c.l.b16 %v3183
    %v3355 = vunpack.c.h.b16 %v3183
    %v3356 = vunpack.c.l.b16 %v3184
    %v3357 = vunpack.c.h.b16 %v3184
    %v3358 = vunpack.c.l.b16 %v3185
    %v3359 = vunpack.c.h.b16 %v3185
    %v3360 = vunpack.c.l.b16 %v3186
    %v3361 = vunpack.c.h.b16 %v3186
    %v3362 = vunpack.c.l.b16 %v3187
    %v3363 = vunpack.c.h.b16 %v3187
    %v3364 = vunpack.c.l.b16 %v3188
    %v3365 = vunpack.c.h.b16 %v3188
    %v3366 = vunpack.c.l.b16 %v3189
    %v3367 = vunpack.c.h.b16 %v3189
    %v3368 = vunpack.c.l.b16 %v3190
    %v3369 = vunpack.c.h.b16 %v3190
    %v3370 = vunpack.c.l.b16 %v3191
    %v3371 = vunpack.c.h.b16 %v3191
    %v3372 = vunpack.c.l.b16 %v3192
    %v3373 = vunpack.c.h.b16 %v3192
    %v3374 = vunpack.c.l.b16 %v3193
    %v3375 = vunpack.c.h.b16 %v3193
    %v3376 = vunpack.c.l.b16 %v3194
    %v3377 = vunpack.c.h.b16 %v3194
    %v3378 = vunpack.c.l.b16 %v3195
    %v3379 = vunpack.c.h.b16 %v3195
    %v3380 = vunpack.c.l.b16 %v3196
    %v3381 = vunpack.c.h.b16 %v3196
    %v3382 = vunpack.c.l.b16 %v3197
    %v3383 = vunpack.c.h.b16 %v3197
    %v3384 = vunpack.c.l.b16 %v3198
    %v3385 = vunpack.c.h.b16 %v3198
    %v3386 = vunpack.c.l.b16 %v3199
    %v3387 = vunpack.c.h.b16 %v3199
    %v3388 = vunpack.c.l.b16 %v3200
    %v3389 = vunpack.c.h.b16 %v3200
    %v3390 = vunpack.c.l.b16 %v3201
    %v3391 = vunpack.c.h.b16 %v3201
    %v3392 = vunpack.c.l.b16 %v3202
    %v3393 = vunpack.c.h.b16 %v3202
    %v3394 = vunpack.c.l.b16 %v3203
    %v3395 = vunpack.c.h.b16 %v3203
    %v3396 = vpack.c.b16 %v3272, %v3268
    %v3397 = vpack.c.b16 %v3273, %v3269
    %v3398 = vpack.c.b16 %v3274, %v3270
    %v3399 = vpack.c.b16 %v3275, %v3271
    %v3400 = vpack.c.b16 %v3280, %v3276
    %v3401 = vpack.c.b16 %v3281, %v3277
    %v3402 = vpack.c.b16 %v3282, %v3278
    %v3403 = vpack.c.b16 %v3283, %v3279
    %v3404 = vpack.c.b16 %v3288, %v3284
    %v3405 = vpack.c.b16 %v3289, %v3285
    %v3406 = vpack.c.b16 %v3290, %v3286
    %v3407 = vpack.c.b16 %v3291, %v3287
    %v3408 = vpack.c.b16 %v3296, %v3292
    %v3409 = vpack.c.b16 %v3297, %v3293
    %v3410 = vpack.c.b16 %v3298, %v3294
    %v3411 = vpack.c.b16 %v3299, %v3295
    %v3412 = vpack.c.b16 %v3304, %v3300
    %v3413 = vpack.c.b16 %v3305, %v3301
    %v3414 = vpack.c.b16 %v3306, %v3302
    %v3415 = vpack.c.b16 %v3307, %v3303
    %v3416 = vpack.c.b16 %v3312, %v3308
    %v3417 = vpack.c.b16 %v3313, %v3309
    %v3418 = vpack.c.b16 %v3314, %v3310
    %v3419 = vpack.c.b16 %v3315, %v3311
    %v3420 = vpack.c.b16 %v3320, %v3316
    %v3421 = vpack.c.b16 %v3321, %v3317
    %v3422 = vpack.c.b16 %v3322, %v3318
    %v3423 = vpack.c.b16 %v3323, %v3319
    %v3424 = vpack.c.b16 %v3328, %v3324
    %v3425 = vpack.c.b16 %v3329, %v3325
    %v3426 = vpack.c.b16 %v3330, %v3326
    %v3427 = vpack.c.b16 %v3331, %v3327
    %v3428 = vpack.c.b16 %v3336, %v3332
    %v3429 = vpack.c.b16 %v3337, %v3333
    %v3430 = vpack.c.b16 %v3338, %v3334
    %v3431 = vpack.c.b16 %v3339, %v3335
    %v3432 = vpack.c.b16 %v3344, %v3340
    %v3433 = vpack.c.b16 %v3345, %v3341
    %v3434 = vpack.c.b16 %v3346, %v3342
    %v3435 = vpack.c.b16 %v3347, %v3343
    %v3436 = vpack.c.b16 %v3352, %v3348
    %v3437 = vpack.c.b16 %v3353, %v3349
    %v3438 = vpack.c.b16 %v3354, %v3350
    %v3439 = vpack.c.b16 %v3355, %v3351
    %v3440 = vpack.c.b16 %v3360, %v3356
    %v3441 = vpack.c.b16 %v3361, %v3357
    %v3442 = vpack.c.b16 %v3362, %v3358
    %v3443 = vpack.c.b16 %v3363, %v3359
    %v3444 = vpack.c.b16 %v3368, %v3364
    %v3445 = vpack.c.b16 %v3369, %v3365
    %v3446 = vpack.c.b16 %v3370, %v3366
    %v3447 = vpack.c.b16 %v3371, %v3367
    %v3448 = vpack.c.b16 %v3376, %v3372
    %v3449 = vpack.c.b16 %v3377, %v3373
    %v3450 = vpack.c.b16 %v3378, %v3374
    %v3451 = vpack.c.b16 %v3379, %v3375
    %v3452 = vpack.c.b16 %v3384, %v3380
    %v3453 = vpack.c.b16 %v3385, %v3381
    %v3454 = vpack.c.b16 %v3386, %v3382
    %v3455 = vpack.c.b16 %v3387, %v3383
    %v3456 = vpack.c.b16 %v3392, %v3388
    %v3457 = vpack.c.b16 %v3393, %v3389
    %v3458 = vpack.c.b16 %v3394, %v3390
    %v3459 = vpack.c.b16 %v3395, %v3391
    %3524 = vmatprep.subr.bf16.mxu0 %v3425
    %3525 = vmatpush1.bf16.msra.mxu0 %v3424
    %3526 = vmatprep.subr.bf16.mxu0 %v3421
    %3527 = vmatpush1.bf16.msra.mxu0 %v3420
    %3528 = vmatprep.subr.bf16.mxu0 %v3417
    %3529 = vmatpush1.bf16.msra.mxu0 %v3416
    %3530 = vmatprep.subr.bf16.mxu0 %v3413
    %3531 = vmatpush1.bf16.msra.mxu0 %v3412
    %3532 = vmatprep.subr.bf16.mxu0 %v3409
    %3533 = vmatpush1.bf16.msra.mxu0 %v3408
    %3534 = vmatprep.subr.bf16.mxu0 %v3405
    %3535 = vmatpush1.bf16.msra.mxu0 %v3404
    %3536 = vmatprep.subr.bf16.mxu0 %v3401
    %3537 = vmatpush1.bf16.msra.mxu0 %v3400
    %3538 = vmatprep.subr.bf16.mxu0 %v3397
    %3539 = vmatpush1.bf16.msra.mxu0 %v3396
    %3540 = vmatprep.subr.bf16.mxu0 %v3457
    %3541 = vmatpush2.bf16.msra.mxu0 %v3456
    %3542 = vmatprep.subr.bf16.mxu0 %v3453
    %3543 = vmatpush2.bf16.msra.mxu0 %v3452
    %3544 = vmatprep.subr.bf16.mxu0 %v3449
    %3545 = vmatpush2.bf16.msra.mxu0 %v3448
    %3546 = vmatprep.subr.bf16.mxu0 %v3445
    %3547 = vmatpush2.bf16.msra.mxu0 %v3444
    %3548 = vmatprep.subr.bf16.mxu0 %v3441
    %3549 = vmatpush2.bf16.msra.mxu0 %v3440
    %3550 = vmatprep.subr.bf16.mxu0 %v3437
    %3551 = vmatpush2.bf16.msra.mxu0 %v3436
    %3552 = vmatprep.subr.bf16.mxu0 %v3433
    %3553 = vmatpush2.bf16.msra.mxu0 %v3432
    %3554 = vmatprep.subr.bf16.mxu0 %v3429
    %3555 = vmatpush2.bf16.msra.mxu0 %v3428
    %3556 = vmatprep.mubr.bf16.mxu0 %v2852
    %3557 = vmatmul.mubr.bf16.gmra.mxu0 %v2851
    %v3558 = vpop.f32.mrf.mxu0
    %v3559 = vadd.f32 0.0, %v3558
    %v3560 = vpop.f32.mrf.mxu0
    %v3561 = vadd.f32 0.0, %v3560
    %v3562 = vpop.f32.mrf.mxu0
    %v3563 = vadd.f32 0.0, %v3562
    %v3564 = vpop.f32.mrf.mxu0
    %v3565 = vadd.f32 0.0, %v3564
    %3566 = vmatprep.mubr.bf16.mxu0 %v2854
    %3567 = vmatmul.mubr.bf16.gmra.mxu0 %v2853
    %v3568 = vpop.f32.mrf.mxu0
    %v3569 = vadd.f32 0.0, %v3568
    %v3570 = vpop.f32.mrf.mxu0
    %v3571 = vadd.f32 0.0, %v3570
    %v3572 = vpop.f32.mrf.mxu0
    %v3573 = vadd.f32 0.0, %v3572
    %v3574 = vpop.f32.mrf.mxu0
    %v3575 = vadd.f32 0.0, %v3574
    %3576 = vmatprep.mubr.bf16.mxu0 %v2856
    %3577 = vmatmul.mubr.bf16.gmra.mxu0 %v2855
    %v3578 = vpop.f32.mrf.mxu0
    %v3579 = vadd.f32 0.0, %v3578
    %v3580 = vpop.f32.mrf.mxu0
    %v3581 = vadd.f32 0.0, %v3580
    %v3582 = vpop.f32.mrf.mxu0
    %v3583 = vadd.f32 0.0, %v3582
    %v3584 = vpop.f32.mrf.mxu0
    %v3585 = vadd.f32 0.0, %v3584
    %3586 = vmatprep.mubr.bf16.mxu0 %v2858
    %3587 = vmatmul.mubr.bf16.gmra.mxu0 %v2857
    %v3588 = vpop.f32.mrf.mxu0
    %v3589 = vadd.f32 0.0, %v3588
    %v3590 = vpop.f32.mrf.mxu0
    %v3591 = vadd.f32 0.0, %v3590
    %v3592 = vpop.f32.mrf.mxu0
    %v3593 = vadd.f32 0.0, %v3592
    %v3594 = vpop.f32.mrf.mxu0
    %v3595 = vadd.f32 0.0, %v3594
    %3596 = vmatprep.mubr.bf16.mxu0 %v2860
    %3597 = vmatmul.mubr.bf16.gmra.mxu0 %v2859
    %v3598 = vpop.f32.mrf.mxu0
    %v3599 = vadd.f32 0.0, %v3598
    %v3600 = vpop.f32.mrf.mxu0
    %v3601 = vadd.f32 0.0, %v3600
    %v3602 = vpop.f32.mrf.mxu0
    %v3603 = vadd.f32 0.0, %v3602
    %v3604 = vpop.f32.mrf.mxu0
    %v3605 = vadd.f32 0.0, %v3604
    %3606 = vmatprep.mubr.bf16.mxu0 %v2862
    %3607 = vmatmul.mubr.bf16.gmra.mxu0 %v2861
    %v3608 = vpop.f32.mrf.mxu0
    %v3609 = vadd.f32 0.0, %v3608
    %v3610 = vpop.f32.mrf.mxu0
    %v3611 = vadd.f32 0.0, %v3610
    %v3612 = vpop.f32.mrf.mxu0
    %v3613 = vadd.f32 0.0, %v3612
    %v3614 = vpop.f32.mrf.mxu0
    %v3615 = vadd.f32 0.0, %v3614
    %3616 = vmatprep.mubr.bf16.mxu0 %v2864
    %3617 = vmatmul.mubr.bf16.gmra.mxu0 %v2863
    %v3618 = vpop.f32.mrf.mxu0
    %v3619 = vadd.f32 0.0, %v3618
    %v3620 = vpop.f32.mrf.mxu0
    %v3621 = vadd.f32 0.0, %v3620
    %v3622 = vpop.f32.mrf.mxu0
    %v3623 = vadd.f32 0.0, %v3622
    %v3624 = vpop.f32.mrf.mxu0
    %v3625 = vadd.f32 0.0, %v3624
    %3626 = vmatprep.mubr.bf16.mxu0 %v2866
    %3627 = vmatmul.mubr.bf16.gmra.mxu0 %v2865
    %v3628 = vpop.f32.mrf.mxu0
    %v3629 = vadd.f32 0.0, %v3628
    %v3630 = vpop.f32.mrf.mxu0
    %v3631 = vadd.f32 0.0, %v3630
    %v3632 = vpop.f32.mrf.mxu0
    %v3633 = vadd.f32 0.0, %v3632
    %v3634 = vpop.f32.mrf.mxu0
    %v3635 = vadd.f32 0.0, %v3634
    %3636 = vdwg.mxu0
    %3637 = vmatprep.subr.bf16.mxu0 %v3427
    %3638 = vmatpush1.bf16.msra.mxu0 %v3426
    %3639 = vmatprep.subr.bf16.mxu0 %v3423
    %3640 = vmatpush1.bf16.msra.mxu0 %v3422
    %3641 = vmatprep.subr.bf16.mxu0 %v3419
    %3642 = vmatpush1.bf16.msra.mxu0 %v3418
    %3643 = vmatprep.subr.bf16.mxu0 %v3415
    %3644 = vmatpush1.bf16.msra.mxu0 %v3414
    %3645 = vmatprep.subr.bf16.mxu0 %v3411
    %3646 = vmatpush1.bf16.msra.mxu0 %v3410
    %3647 = vmatprep.subr.bf16.mxu0 %v3407
    %3648 = vmatpush1.bf16.msra.mxu0 %v3406
    %3649 = vmatprep.subr.bf16.mxu0 %v3403
    %3650 = vmatpush1.bf16.msra.mxu0 %v3402
    %3651 = vmatprep.subr.bf16.mxu0 %v3399
    %3652 = vmatpush1.bf16.msra.mxu0 %v3398
    %3653 = vmatprep.subr.bf16.mxu0 %v3459
    %3654 = vmatpush2.bf16.msra.mxu0 %v3458
    %3655 = vmatprep.subr.bf16.mxu0 %v3455
    %3656 = vmatpush2.bf16.msra.mxu0 %v3454
    %3657 = vmatprep.subr.bf16.mxu0 %v3451
    %3658 = vmatpush2.bf16.msra.mxu0 %v3450
    %3659 = vmatprep.subr.bf16.mxu0 %v3447
    %3660 = vmatpush2.bf16.msra.mxu0 %v3446
    %3661 = vmatprep.subr.bf16.mxu0 %v3443
    %3662 = vmatpush2.bf16.msra.mxu0 %v3442
    %3663 = vmatprep.subr.bf16.mxu0 %v3439
    %3664 = vmatpush2.bf16.msra.mxu0 %v3438
    %3665 = vmatprep.subr.bf16.mxu0 %v3435
    %3666 = vmatpush2.bf16.msra.mxu0 %v3434
    %3667 = vmatprep.subr.bf16.mxu0 %v3431
    %3668 = vmatpush2.bf16.msra.mxu0 %v3430
    %3669 = vmatprep.mubr.bf16.mxu0 %v2852
    %3670 = vmatmul.mubr.bf16.gmra.mxu0 %v2851
    %v3671 = vpop.f32.mrf.mxu0
    %v3672 = vadd.f32 0.0, %v3671
    %v3673 = vpop.f32.mrf.mxu0
    %v3674 = vadd.f32 0.0, %v3673
    %v3675 = vpop.f32.mrf.mxu0
    %v3676 = vadd.f32 0.0, %v3675
    %v3677 = vpop.f32.mrf.mxu0
    %v3678 = vadd.f32 0.0, %v3677
    %3679 = vmatprep.mubr.bf16.mxu0 %v2854
    %3680 = vmatmul.mubr.bf16.gmra.mxu0 %v2853
    %v3681 = vpop.f32.mrf.mxu0
    %v3682 = vadd.f32 0.0, %v3681
    %v3683 = vpop.f32.mrf.mxu0
    %v3684 = vadd.f32 0.0, %v3683
    %v3685 = vpop.f32.mrf.mxu0
    %v3686 = vadd.f32 0.0, %v3685
    %v3687 = vpop.f32.mrf.mxu0
    %v3688 = vadd.f32 0.0, %v3687
    %3689 = vmatprep.mubr.bf16.mxu0 %v2856
    %3690 = vmatmul.mubr.bf16.gmra.mxu0 %v2855
    %v3691 = vpop.f32.mrf.mxu0
    %v3692 = vadd.f32 0.0, %v3691
    %v3693 = vpop.f32.mrf.mxu0
    %v3694 = vadd.f32 0.0, %v3693
    %v3695 = vpop.f32.mrf.mxu0
    %v3696 = vadd.f32 0.0, %v3695
    %v3697 = vpop.f32.mrf.mxu0
    %v3698 = vadd.f32 0.0, %v3697
    %3699 = vmatprep.mubr.bf16.mxu0 %v2858
    %3700 = vmatmul.mubr.bf16.gmra.mxu0 %v2857
    %v3701 = vpop.f32.mrf.mxu0
    %v3702 = vadd.f32 0.0, %v3701
    %v3703 = vpop.f32.mrf.mxu0
    %v3704 = vadd.f32 0.0, %v3703
    %v3705 = vpop.f32.mrf.mxu0
    %v3706 = vadd.f32 0.0, %v3705
    %v3707 = vpop.f32.mrf.mxu0
    %v3708 = vadd.f32 0.0, %v3707
    %3709 = vmatprep.mubr.bf16.mxu0 %v2860
    %3710 = vmatmul.mubr.bf16.gmra.mxu0 %v2859
    %v3711 = vpop.f32.mrf.mxu0
    %v3712 = vadd.f32 0.0, %v3711
    %v3713 = vpop.f32.mrf.mxu0
    %v3714 = vadd.f32 0.0, %v3713
    %v3715 = vpop.f32.mrf.mxu0
    %v3716 = vadd.f32 0.0, %v3715
    %v3717 = vpop.f32.mrf.mxu0
    %v3718 = vadd.f32 0.0, %v3717
    %3719 = vmatprep.mubr.bf16.mxu0 %v2862
    %3720 = vmatmul.mubr.bf16.gmra.mxu0 %v2861
    %v3721 = vpop.f32.mrf.mxu0
    %v3722 = vadd.f32 0.0, %v3721
    %v3723 = vpop.f32.mrf.mxu0
    %v3724 = vadd.f32 0.0, %v3723
    %v3725 = vpop.f32.mrf.mxu0
    %v3726 = vadd.f32 0.0, %v3725
    %v3727 = vpop.f32.mrf.mxu0
    %v3728 = vadd.f32 0.0, %v3727
    %3729 = vmatprep.mubr.bf16.mxu0 %v2864
    %3730 = vmatmul.mubr.bf16.gmra.mxu0 %v2863
    %v3731 = vpop.f32.mrf.mxu0
    %v3732 = vadd.f32 0.0, %v3731
    %v3733 = vpop.f32.mrf.mxu0
    %v3734 = vadd.f32 0.0, %v3733
    %v3735 = vpop.f32.mrf.mxu0
    %v3736 = vadd.f32 0.0, %v3735
    %v3737 = vpop.f32.mrf.mxu0
    %v3738 = vadd.f32 0.0, %v3737
    %3739 = vmatprep.mubr.bf16.mxu0 %v2866
    %3740 = vmatmul.mubr.bf16.gmra.mxu0 %v2865
    %v3741 = vpop.f32.mrf.mxu0
    %v3742 = vadd.f32 0.0, %v3741
    %v3743 = vpop.f32.mrf.mxu0
    %v3744 = vadd.f32 0.0, %v3743
    %v3745 = vpop.f32.mrf.mxu0
    %v3746 = vadd.f32 0.0, %v3745
    %v3747 = vpop.f32.mrf.mxu0
    %v3748 = vadd.f32 0.0, %v3747
    %3749 = vdwg.mxu0
    %v3750 = vlaneseq
    %v3751 = vshrl.u32 %v3750, 7
    %v3752 = vsub.s32 5, %v3751
    %v3753 = vrot.slane %v289, %v3752
    %v3754 = vlaneseq
    %v3755 = vshrl.u32 %v3754, 7
    %v3756 = vsub.s32 5, %v3755
    %v3757 = vrot.slane %v290, %v3756
    %v3758 = vadd.f32 %v3559, %v3753
    %v3759 = vadd.f32 %v3561, %v3757
    %v3760 = vadd.f32 %v3563, %v3753
    %v3761 = vadd.f32 %v3565, %v3757
    %v3762 = vadd.f32 %v3569, %v3753
    %v3763 = vadd.f32 %v3571, %v3757
    %v3764 = vadd.f32 %v3573, %v3753
    %v3765 = vadd.f32 %v3575, %v3757
    %v3766 = vadd.f32 %v3579, %v3753
    %v3767 = vadd.f32 %v3581, %v3757
    %v3768 = vadd.f32 %v3583, %v3753
    %v3769 = vadd.f32 %v3585, %v3757
    %v3770 = vadd.f32 %v3589, %v3753
    %v3771 = vadd.f32 %v3591, %v3757
    %v3772 = vadd.f32 %v3593, %v3753
    %v3773 = vadd.f32 %v3595, %v3757
    %v3774 = vadd.f32 %v3599, %v3753
    %v3775 = vadd.f32 %v3601, %v3757
    %v3776 = vadd.f32 %v3603, %v3753
    %v3777 = vadd.f32 %v3605, %v3757
    %v3778 = vadd.f32 %v3609, %v3753
    %v3779 = vadd.f32 %v3611, %v3757
    %v3780 = vadd.f32 %v3613, %v3753
    %v3781 = vadd.f32 %v3615, %v3757
    %v3782 = vadd.f32 %v3619, %v3753
    %v3783 = vadd.f32 %v3621, %v3757
    %v3784 = vadd.f32 %v3623, %v3753
    %v3785 = vadd.f32 %v3625, %v3757
    %v3786 = vadd.f32 %v3629, %v3753
    %v3787 = vadd.f32 %v3631, %v3757
    %v3788 = vadd.f32 %v3633, %v3753
    %v3789 = vadd.f32 %v3635, %v3757
    %v3790 = vlaneseq
    %v3791 = vshrl.u32 %v3790, 7
    %v3792 = vsub.s32 6, %v3791
    %v3793 = vrot.slane %v289, %v3792
    %v3794 = vlaneseq
    %v3795 = vshrl.u32 %v3794, 7
    %v3796 = vsub.s32 6, %v3795
    %v3797 = vrot.slane %v290, %v3796
    %v3798 = vadd.f32 %v3672, %v3793
    %v3799 = vadd.f32 %v3674, %v3797
    %v3800 = vadd.f32 %v3676, %v3793
    %v3801 = vadd.f32 %v3678, %v3797
    %v3802 = vadd.f32 %v3682, %v3793
    %v3803 = vadd.f32 %v3684, %v3797
    %v3804 = vadd.f32 %v3686, %v3793
    %v3805 = vadd.f32 %v3688, %v3797
    %v3806 = vadd.f32 %v3692, %v3793
    %v3807 = vadd.f32 %v3694, %v3797
    %v3808 = vadd.f32 %v3696, %v3793
    %v3809 = vadd.f32 %v3698, %v3797
    %v3810 = vadd.f32 %v3702, %v3793
    %v3811 = vadd.f32 %v3704, %v3797
    %v3812 = vadd.f32 %v3706, %v3793
    %v3813 = vadd.f32 %v3708, %v3797
    %v3814 = vadd.f32 %v3712, %v3793
    %v3815 = vadd.f32 %v3714, %v3797
    %v3816 = vadd.f32 %v3716, %v3793
    %v3817 = vadd.f32 %v3718, %v3797
    %v3818 = vadd.f32 %v3722, %v3793
    %v3819 = vadd.f32 %v3724, %v3797
    %v3820 = vadd.f32 %v3726, %v3793
    %v3821 = vadd.f32 %v3728, %v3797
    %v3822 = vadd.f32 %v3732, %v3793
    %v3823 = vadd.f32 %v3734, %v3797
    %v3824 = vadd.f32 %v3736, %v3793
    %v3825 = vadd.f32 %v3738, %v3797
    %v3826 = vadd.f32 %v3742, %v3793
    %v3827 = vadd.f32 %v3744, %v3797
    %v3828 = vadd.f32 %v3746, %v3793
    %v3829 = vadd.f32 %v3748, %v3797
    %v3830 = vpack.c.bf16 %v3106, %v3102
    %v3831 = vpack.c.bf16 %v3116, %v3112
    %v3832 = vpack.c.bf16 %v3126, %v3122
    %v3833 = vpack.c.bf16 %v3136, %v3132
    %v3834 = vpack.c.bf16 %v3760, %v3758
    %v3835 = vpack.c.bf16 %v3764, %v3762
    %v3836 = vpack.c.bf16 %v3768, %v3766
    %v3837 = vpack.c.bf16 %v3772, %v3770
    %v3838 = vpack.c.bf16 %v3776, %v3774
    %v3839 = vpack.c.bf16 %v3780, %v3778
    %v3840 = vpack.c.bf16 %v3784, %v3782
    %v3841 = vpack.c.bf16 %v3788, %v3786
    %v3842 = vpack.c.bf16 %v3800, %v3798
    %v3843 = vpack.c.bf16 %v3804, %v3802
    %v3844 = vpack.c.bf16 %v3808, %v3806
    %v3845 = vpack.c.bf16 %v3812, %v3810
    %v3846 = vpack.c.bf16 %v3816, %v3814
    %v3847 = vpack.c.bf16 %v3820, %v3818
    %v3848 = vpack.c.bf16 %v3824, %v3822
    %v3849 = vpack.c.bf16 %v3828, %v3826
    %v3851 = vsel %vm1164, %v3830, 0
    %v3854 = vsel %vm1164, %v3831, 0
    %v3857 = vsel %vm1164, %v3832, 0
    %v3860 = vsel %vm1164, %v3833, 0
    %v3863 = vsel %vm1164, %v3834, 0
    %v3866 = vsel %vm1164, %v3835, 0
    %v3869 = vsel %vm1164, %v3836, 0
    %v3872 = vsel %vm1164, %v3837, 0
    %v3875 = vsel %vm1164, %v3838, 0
    %v3878 = vsel %vm1164, %v3839, 0
    %v3881 = vsel %vm1164, %v3840, 0
    %v3884 = vsel %vm1164, %v3841, 0
    %3886 = vmatprep.subr.bf16.mxu0 0
    %3887 = vmatpush1.bf16.xpose.msra.mxu0 %v3884
    %3888 = vmatprep.subr.bf16.mxu0 0
    %3889 = vmatpush1.bf16.xpose.msra.mxu0 %v3881
    %3890 = vmatprep.subr.bf16.mxu0 0
    %3891 = vmatpush1.bf16.xpose.msra.mxu0 %v3878
    %3892 = vmatprep.subr.bf16.mxu0 0
    %3893 = vmatpush1.bf16.xpose.msra.mxu0 %v3875
    %3894 = vmatprep.subr.bf16.mxu0 0
    %3895 = vmatpush1.bf16.xpose.msra.mxu0 %v3872
    %3896 = vmatprep.subr.bf16.mxu0 0
    %3897 = vmatpush1.bf16.xpose.msra.mxu0 %v3869
    %3898 = vmatprep.subr.bf16.mxu0 0
    %3899 = vmatpush1.bf16.xpose.msra.mxu0 %v3866
    %3900 = vmatprep.subr.bf16.mxu0 0
    %3901 = vmatpush1.bf16.xpose.msra.mxu0 %v3863
    %3902 = vmatprep.subr.bf16.mxu0 0
    %3903 = vmatpush2.bf16.xpose.msra.mxu0 0
    %3904 = vmatprep.subr.bf16.mxu0 0
    %3905 = vmatpush2.bf16.xpose.msra.mxu0 0
    %3906 = vmatprep.subr.bf16.mxu0 0
    %3907 = vmatpush2.bf16.xpose.msra.mxu0 0
    %3908 = vmatprep.subr.bf16.mxu0 0
    %3909 = vmatpush2.bf16.xpose.msra.mxu0 0
    %3910 = vmatprep.subr.bf16.mxu0 0
    %3911 = vmatpush2.bf16.xpose.msra.mxu0 0
    %3912 = vmatprep.subr.bf16.mxu0 0
    %3913 = vmatpush2.bf16.xpose.msra.mxu0 0
    %3914 = vmatprep.subr.bf16.mxu0 0
    %3915 = vmatpush2.bf16.xpose.msra.mxu0 0
    %3916 = vmatprep.subr.bf16.mxu0 0
    %3917 = vmatpush2.bf16.xpose.msra.mxu0 0
    %3918 = vmatprep.mubr.bf16.mxu0 0
    %3919 = vmatmul.mubr.bf16.gmra.mxu0 %v3851
    %v3920 = vpop.f32.mrf.mxu0
    %v3921 = vadd.f32 %v281, %v3920
    %v3922 = vpop.f32.mrf.mxu0
    %v3923 = vpop.f32.mrf.mxu0
    %v3924 = vadd.f32 %v282, %v3923
    %v3925 = vpop.f32.mrf.mxu0
    %3926 = vmatprep.mubr.bf16.mxu0 0
    %3927 = vmatmul.mubr.bf16.gmra.mxu0 %v3854
    %v3928 = vpop.f32.mrf.mxu0
    %v3929 = vadd.f32 %v283, %v3928
    %v3930 = vpop.f32.mrf.mxu0
    %v3931 = vpop.f32.mrf.mxu0
    %v3932 = vadd.f32 %v284, %v3931
    %v3933 = vpop.f32.mrf.mxu0
    %3934 = vmatprep.mubr.bf16.mxu0 0
    %3935 = vmatmul.mubr.bf16.gmra.mxu0 %v3857
    %v3936 = vpop.f32.mrf.mxu0
    %v3937 = vadd.f32 %v285, %v3936
    %v3938 = vpop.f32.mrf.mxu0
    %v3939 = vpop.f32.mrf.mxu0
    %v3940 = vadd.f32 %v286, %v3939
    %v3941 = vpop.f32.mrf.mxu0
    %3942 = vmatprep.mubr.bf16.mxu0 0
    %3943 = vmatmul.mubr.bf16.gmra.mxu0 %v3860
    %v3944 = vpop.f32.mrf.mxu0
    %v3945 = vadd.f32 %v287, %v3944
    %v3946 = vpop.f32.mrf.mxu0
    %v3947 = vpop.f32.mrf.mxu0
    %v3948 = vadd.f32 %v288, %v3947
    %v3949 = vpop.f32.mrf.mxu0
    %3950 = vdwg.mxu0
    %3951 = vmax.xlane.f32.xlu0 %v3921
    %v3952 = vpop.xlane.xlu0 %3951
    %3953 = vmax.xlane.f32.xlu0 %v3924
    %v3954 = vpop.xlane.xlu0 %3953
    %3955 = vmax.xlane.f32.xlu0 %v3929
    %v3956 = vpop.xlane.xlu0 %3955
    %3957 = vmax.xlane.f32.xlu0 %v3932
    %v3958 = vpop.xlane.xlu0 %3957
    %3959 = vmax.xlane.f32.xlu0 %v3937
    %v3960 = vpop.xlane.xlu0 %3959
    %3961 = vmax.xlane.f32.xlu0 %v3940
    %v3962 = vpop.xlane.xlu0 %3961
    %3963 = vmax.xlane.f32.xlu0 %v3945
    %v3964 = vpop.xlane.xlu0 %3963
    %3965 = vmax.xlane.f32.xlu0 %v3948
    %v3966 = vpop.xlane.xlu0 %3965
    %v3967 = vsub.f32 %v3921, %v3952
    %v3968 = vsub.f32 %v3924, %v3954
    %v3969 = vsub.f32 %v3929, %v3956
    %v3970 = vsub.f32 %v3932, %v3958
    %v3971 = vsub.f32 %v3937, %v3960
    %v3972 = vsub.f32 %v3940, %v3962
    %v3973 = vsub.f32 %v3945, %v3964
    %v3974 = vsub.f32 %v3948, %v3966
    %v3975 = vmul.f32 %v3967, 1.442695
    %v3976 = vpow.pop %v3975
    %v3977 = vmul.f32 %v3968, 1.442695
    %v3978 = vpow.pop %v3977
    %v3979 = vmul.f32 %v3969, 1.442695
    %v3980 = vpow.pop %v3979
    %v3981 = vmul.f32 %v3970, 1.442695
    %v3982 = vpow.pop %v3981
    %v3983 = vmul.f32 %v3971, 1.442695
    %v3984 = vpow.pop %v3983
    %v3985 = vmul.f32 %v3972, 1.442695
    %v3986 = vpow.pop %v3985
    %v3987 = vmul.f32 %v3973, 1.442695
    %v3988 = vpow.pop %v3987
    %v3989 = vmul.f32 %v3974, 1.442695
    %v3990 = vpow.pop %v3989
    %3991 = vadd.xlane.f32.xlu0 %v3976
    %v3992 = vpop.xlane.xlu0 %3991
    %3993 = vadd.xlane.f32.xlu0 %v3978
    %v3994 = vpop.xlane.xlu0 %3993
    %3995 = vadd.xlane.f32.xlu0 %v3980
    %v3996 = vpop.xlane.xlu0 %3995
    %3997 = vadd.xlane.f32.xlu0 %v3982
    %v3998 = vpop.xlane.xlu0 %3997
    %3999 = vadd.xlane.f32.xlu0 %v3984
    %v4000 = vpop.xlane.xlu0 %3999
    %4001 = vadd.xlane.f32.xlu0 %v3986
    %v4002 = vpop.xlane.xlu0 %4001
    %4003 = vadd.xlane.f32.xlu0 %v3988
    %v4004 = vpop.xlane.xlu0 %4003
    %4005 = vadd.xlane.f32.xlu0 %v3990
    %v4006 = vpop.xlane.xlu0 %4005
    %v4007 = vrcp.pop %v3992
    %v4008 = vrcp.pop %v3994
    %v4009 = vrcp.pop %v3996
    %v4010 = vrcp.pop %v3998
    %v4011 = vrcp.pop %v4000
    %v4012 = vrcp.pop %v4002
    %v4013 = vrcp.pop %v4004
    %v4014 = vrcp.pop %v4006
    %v4015 = vmul.f32 %v3976, %v4007
    %v4016 = vmul.f32 %v3978, %v4008
    %v4017 = vmul.f32 %v3980, %v4009
    %v4018 = vmul.f32 %v3982, %v4010
    %v4019 = vmul.f32 %v3984, %v4011
    %v4020 = vmul.f32 %v3986, %v4012
    %v4021 = vmul.f32 %v3988, %v4013
    %v4022 = vmul.f32 %v3990, %v4014
    %v4023 = vpack.c.bf16 %v4016, %v4015
    %v4024 = vpack.c.bf16 %v4018, %v4017
    %v4025 = vpack.c.bf16 %v4020, %v4019
    %v4026 = vpack.c.bf16 %v4022, %v4021
    %4027 = vmatprep.subr.bf16.mxu0 0
    %4028 = vmatpush1.bf16.msra.mxu0 %v3849
    %4029 = vmatprep.subr.bf16.mxu0 0
    %4030 = vmatpush1.bf16.msra.mxu0 %v3848
    %4031 = vmatprep.subr.bf16.mxu0 0
    %4032 = vmatpush1.bf16.msra.mxu0 %v3847
    %4033 = vmatprep.subr.bf16.mxu0 0
    %4034 = vmatpush1.bf16.msra.mxu0 %v3846
    %4035 = vmatprep.subr.bf16.mxu0 0
    %4036 = vmatpush1.bf16.msra.mxu0 %v3845
    %4037 = vmatprep.subr.bf16.mxu0 0
    %4038 = vmatpush1.bf16.msra.mxu0 %v3844
    %4039 = vmatprep.subr.bf16.mxu0 0
    %4040 = vmatpush1.bf16.msra.mxu0 %v3843
    %4041 = vmatprep.subr.bf16.mxu0 0
    %4042 = vmatpush1.bf16.msra.mxu0 %v3842
    %4043 = vmatprep.subr.bf16.mxu0 0
    %4044 = vmatpush2.bf16.msra.mxu0 0
    %4045 = vmatprep.subr.bf16.mxu0 0
    %4046 = vmatpush2.bf16.msra.mxu0 0
    %4047 = vmatprep.subr.bf16.mxu0 0
    %4048 = vmatpush2.bf16.msra.mxu0 0
    %4049 = vmatprep.subr.bf16.mxu0 0
    %4050 = vmatpush2.bf16.msra.mxu0 0
    %4051 = vmatprep.subr.bf16.mxu0 0
    %4052 = vmatpush2.bf16.msra.mxu0 0
    %4053 = vmatprep.subr.bf16.mxu0 0
    %4054 = vmatpush2.bf16.msra.mxu0 0
    %4055 = vmatprep.subr.bf16.mxu0 0
    %4056 = vmatpush2.bf16.msra.mxu0 0
    %4057 = vmatprep.subr.bf16.mxu0 0
    %4058 = vmatpush2.bf16.msra.mxu0 0
    %4059 = vmatprep.mubr.bf16.mxu0 0
    %4060 = vmatmul.mubr.bf16.gmra.mxu0 %v4023
    %v4061 = vpop.f32.mrf.mxu0
    %v4062 = vadd.f32 0.0, %v4061
    %v4063 = vpop.f32.mrf.mxu0
    %v4064 = vpop.f32.mrf.mxu0
    %v4065 = vadd.f32 0.0, %v4064
    %v4066 = vpop.f32.mrf.mxu0
    %4067 = vmatprep.mubr.bf16.mxu0 0
    %4068 = vmatmul.mubr.bf16.gmra.mxu0 %v4024
    %v4069 = vpop.f32.mrf.mxu0
    %v4070 = vadd.f32 0.0, %v4069
    %v4071 = vpop.f32.mrf.mxu0
    %v4072 = vpop.f32.mrf.mxu0
    %v4073 = vadd.f32 0.0, %v4072
    %v4074 = vpop.f32.mrf.mxu0
    %4075 = vmatprep.mubr.bf16.mxu0 0
    %4076 = vmatmul.mubr.bf16.gmra.mxu0 %v4025
    %v4077 = vpop.f32.mrf.mxu0
    %v4078 = vadd.f32 0.0, %v4077
    %v4079 = vpop.f32.mrf.mxu0
    %v4080 = vpop.f32.mrf.mxu0
    %v4081 = vadd.f32 0.0, %v4080
    %v4082 = vpop.f32.mrf.mxu0
    %4083 = vmatprep.mubr.bf16.mxu0 0
    %4084 = vmatmul.mubr.bf16.gmra.mxu0 %v4026
    %v4085 = vpop.f32.mrf.mxu0
    %v4086 = vadd.f32 0.0, %v4085
    %v4087 = vpop.f32.mrf.mxu0
    %v4088 = vpop.f32.mrf.mxu0
    %v4089 = vadd.f32 0.0, %v4088
    %v4090 = vpop.f32.mrf.mxu0
    %4091 = vdwg.mxu0
    %4096 = vrot.lane.b32.xlu0 %v3830, 64
    %v4097 = vpop.permute.xlu0 %4096
    %4098 = vrot.lane.b32.xlu0 %v3831, 64
    %v4099 = vpop.permute.xlu0 %4098
    %4100 = vrot.lane.b32.xlu0 %v3832, 64
    %v4101 = vpop.permute.xlu0 %4100
    %4102 = vrot.lane.b32.xlu0 %v3833, 64
    %v4103 = vpop.permute.xlu0 %4102
    %4112 = vrot.lane.b32.xlu0 %v3834, 64
    %v4113 = vpop.permute.xlu0 %4112
    %4114 = vrot.lane.b32.xlu0 %v3835, 64
    %v4115 = vpop.permute.xlu0 %4114
    %4116 = vrot.lane.b32.xlu0 %v3836, 64
    %v4117 = vpop.permute.xlu0 %4116
    %4118 = vrot.lane.b32.xlu0 %v3837, 64
    %v4119 = vpop.permute.xlu0 %4118
    %4120 = vrot.lane.b32.xlu0 %v3838, 64
    %v4121 = vpop.permute.xlu0 %4120
    %4122 = vrot.lane.b32.xlu0 %v3839, 64
    %v4123 = vpop.permute.xlu0 %4122
    %4124 = vrot.lane.b32.xlu0 %v3840, 64
    %v4125 = vpop.permute.xlu0 %4124
    %4126 = vrot.lane.b32.xlu0 %v3841, 64
    %v4127 = vpop.permute.xlu0 %4126
    %v4129 = vsel %vm1164, %v4097, 0
    %v4132 = vsel %vm1164, %v4099, 0
    %v4135 = vsel %vm1164, %v4101, 0
    %v4138 = vsel %vm1164, %v4103, 0
    %v4141 = vsel %vm1164, %v4113, 0
    %v4144 = vsel %vm1164, %v4115, 0
    %v4147 = vsel %vm1164, %v4117, 0
    %v4150 = vsel %vm1164, %v4119, 0
    %v4153 = vsel %vm1164, %v4121, 0
    %v4156 = vsel %vm1164, %v4123, 0
    %v4159 = vsel %vm1164, %v4125, 0
    %v4162 = vsel %vm1164, %v4127, 0
    %4164 = vmatprep.subr.bf16.mxu0 0
    %4165 = vmatpush1.bf16.xpose.msra.mxu0 %v4162
    %4166 = vmatprep.subr.bf16.mxu0 0
    %4167 = vmatpush1.bf16.xpose.msra.mxu0 %v4159
    %4168 = vmatprep.subr.bf16.mxu0 0
    %4169 = vmatpush1.bf16.xpose.msra.mxu0 %v4156
    %4170 = vmatprep.subr.bf16.mxu0 0
    %4171 = vmatpush1.bf16.xpose.msra.mxu0 %v4153
    %4172 = vmatprep.subr.bf16.mxu0 0
    %4173 = vmatpush1.bf16.xpose.msra.mxu0 %v4150
    %4174 = vmatprep.subr.bf16.mxu0 0
    %4175 = vmatpush1.bf16.xpose.msra.mxu0 %v4147
    %4176 = vmatprep.subr.bf16.mxu0 0
    %4177 = vmatpush1.bf16.xpose.msra.mxu0 %v4144
    %4178 = vmatprep.subr.bf16.mxu0 0
    %4179 = vmatpush1.bf16.xpose.msra.mxu0 %v4141
    %4180 = vmatprep.subr.bf16.mxu0 0
    %4181 = vmatpush2.bf16.xpose.msra.mxu0 0
    %4182 = vmatprep.subr.bf16.mxu0 0
    %4183 = vmatpush2.bf16.xpose.msra.mxu0 0
    %4184 = vmatprep.subr.bf16.mxu0 0
    %4185 = vmatpush2.bf16.xpose.msra.mxu0 0
    %4186 = vmatprep.subr.bf16.mxu0 0
    %4187 = vmatpush2.bf16.xpose.msra.mxu0 0
    %4188 = vmatprep.subr.bf16.mxu0 0
    %4189 = vmatpush2.bf16.xpose.msra.mxu0 0
    %4190 = vmatprep.subr.bf16.mxu0 0
    %4191 = vmatpush2.bf16.xpose.msra.mxu0 0
    %4192 = vmatprep.subr.bf16.mxu0 0
    %4193 = vmatpush2.bf16.xpose.msra.mxu0 0
    %4194 = vmatprep.subr.bf16.mxu0 0
    %4195 = vmatpush2.bf16.xpose.msra.mxu0 0
    %4196 = vmatprep.mubr.bf16.mxu0 0
    %4197 = vmatmul.mubr.bf16.gmra.mxu0 %v4129
    %v4198 = vpop.f32.mrf.mxu0
    %v4199 = vadd.f32 %v281, %v4198
    %v4200 = vpop.f32.mrf.mxu0
    %v4201 = vpop.f32.mrf.mxu0
    %v4202 = vadd.f32 %v282, %v4201
    %v4203 = vpop.f32.mrf.mxu0
    %4204 = vmatprep.mubr.bf16.mxu0 0
    %4205 = vmatmul.mubr.bf16.gmra.mxu0 %v4132
    %v4206 = vpop.f32.mrf.mxu0
    %v4207 = vadd.f32 %v283, %v4206
    %v4208 = vpop.f32.mrf.mxu0
    %v4209 = vpop.f32.mrf.mxu0
    %v4210 = vadd.f32 %v284, %v4209
    %v4211 = vpop.f32.mrf.mxu0
    %4212 = vmatprep.mubr.bf16.mxu0 0
    %4213 = vmatmul.mubr.bf16.gmra.mxu0 %v4135
    %v4214 = vpop.f32.mrf.mxu0
    %v4215 = vadd.f32 %v285, %v4214
    %v4216 = vpop.f32.mrf.mxu0
    %v4217 = vpop.f32.mrf.mxu0
    %v4218 = vadd.f32 %v286, %v4217
    %v4219 = vpop.f32.mrf.mxu0
    %4220 = vmatprep.mubr.bf16.mxu0 0
    %4221 = vmatmul.mubr.bf16.gmra.mxu0 %v4138
    %v4222 = vpop.f32.mrf.mxu0
    %v4223 = vadd.f32 %v287, %v4222
    %v4224 = vpop.f32.mrf.mxu0
    %v4225 = vpop.f32.mrf.mxu0
    %v4226 = vadd.f32 %v288, %v4225
    %v4227 = vpop.f32.mrf.mxu0
    %4228 = vdwg.mxu0
    %4229 = vmax.xlane.f32.xlu0 %v4199
    %v4230 = vpop.xlane.xlu0 %4229
    %4231 = vmax.xlane.f32.xlu0 %v4202
    %v4232 = vpop.xlane.xlu0 %4231
    %4233 = vmax.xlane.f32.xlu0 %v4207
    %v4234 = vpop.xlane.xlu0 %4233
    %4235 = vmax.xlane.f32.xlu0 %v4210
    %v4236 = vpop.xlane.xlu0 %4235
    %4237 = vmax.xlane.f32.xlu0 %v4215
    %v4238 = vpop.xlane.xlu0 %4237
    %4239 = vmax.xlane.f32.xlu0 %v4218
    %v4240 = vpop.xlane.xlu0 %4239
    %4241 = vmax.xlane.f32.xlu0 %v4223
    %v4242 = vpop.xlane.xlu0 %4241
    %4243 = vmax.xlane.f32.xlu0 %v4226
    %v4244 = vpop.xlane.xlu0 %4243
    %v4245 = vsub.f32 %v4199, %v4230
    %v4246 = vsub.f32 %v4202, %v4232
    %v4247 = vsub.f32 %v4207, %v4234
    %v4248 = vsub.f32 %v4210, %v4236
    %v4249 = vsub.f32 %v4215, %v4238
    %v4250 = vsub.f32 %v4218, %v4240
    %v4251 = vsub.f32 %v4223, %v4242
    %v4252 = vsub.f32 %v4226, %v4244
    %v4253 = vmul.f32 %v4245, 1.442695
    %v4254 = vpow.pop %v4253
    %v4255 = vmul.f32 %v4246, 1.442695
    %v4256 = vpow.pop %v4255
    %v4257 = vmul.f32 %v4247, 1.442695
    %v4258 = vpow.pop %v4257
    %v4259 = vmul.f32 %v4248, 1.442695
    %v4260 = vpow.pop %v4259
    %v4261 = vmul.f32 %v4249, 1.442695
    %v4262 = vpow.pop %v4261
    %v4263 = vmul.f32 %v4250, 1.442695
    %v4264 = vpow.pop %v4263
    %v4265 = vmul.f32 %v4251, 1.442695
    %v4266 = vpow.pop %v4265
    %v4267 = vmul.f32 %v4252, 1.442695
    %v4268 = vpow.pop %v4267
    %4269 = vadd.xlane.f32.xlu0 %v4254
    %v4270 = vpop.xlane.xlu0 %4269
    %4271 = vadd.xlane.f32.xlu0 %v4256
    %v4272 = vpop.xlane.xlu0 %4271
    %4273 = vadd.xlane.f32.xlu0 %v4258
    %v4274 = vpop.xlane.xlu0 %4273
    %4275 = vadd.xlane.f32.xlu0 %v4260
    %v4276 = vpop.xlane.xlu0 %4275
    %4277 = vadd.xlane.f32.xlu0 %v4262
    %v4278 = vpop.xlane.xlu0 %4277
    %4279 = vadd.xlane.f32.xlu0 %v4264
    %v4280 = vpop.xlane.xlu0 %4279
    %4281 = vadd.xlane.f32.xlu0 %v4266
    %v4282 = vpop.xlane.xlu0 %4281
    %4283 = vadd.xlane.f32.xlu0 %v4268
    %v4284 = vpop.xlane.xlu0 %4283
    %v4285 = vrcp.pop %v4270
    %v4286 = vrcp.pop %v4272
    %v4287 = vrcp.pop %v4274
    %v4288 = vrcp.pop %v4276
    %v4289 = vrcp.pop %v4278
    %v4290 = vrcp.pop %v4280
    %v4291 = vrcp.pop %v4282
    %v4292 = vrcp.pop %v4284
    %v4293 = vmul.f32 %v4254, %v4285
    %v4294 = vmul.f32 %v4256, %v4286
    %v4295 = vmul.f32 %v4258, %v4287
    %v4296 = vmul.f32 %v4260, %v4288
    %v4297 = vmul.f32 %v4262, %v4289
    %v4298 = vmul.f32 %v4264, %v4290
    %v4299 = vmul.f32 %v4266, %v4291
    %v4300 = vmul.f32 %v4268, %v4292
    %v4301 = vpack.c.bf16 %v4294, %v4293
    %v4302 = vpack.c.bf16 %v4296, %v4295
    %v4303 = vpack.c.bf16 %v4298, %v4297
    %v4304 = vpack.c.bf16 %v4300, %v4299
    %4313 = vrot.lane.b32.xlu0 %v3842, 64
    %v4314 = vpop.permute.xlu0 %4313
    %4315 = vrot.lane.b32.xlu0 %v3843, 64
    %v4316 = vpop.permute.xlu0 %4315
    %4317 = vrot.lane.b32.xlu0 %v3844, 64
    %v4318 = vpop.permute.xlu0 %4317
    %4319 = vrot.lane.b32.xlu0 %v3845, 64
    %v4320 = vpop.permute.xlu0 %4319
    %4321 = vrot.lane.b32.xlu0 %v3846, 64
    %v4322 = vpop.permute.xlu0 %4321
    %4323 = vrot.lane.b32.xlu0 %v3847, 64
    %v4324 = vpop.permute.xlu0 %4323
    %4325 = vrot.lane.b32.xlu0 %v3848, 64
    %v4326 = vpop.permute.xlu0 %4325
    %4327 = vrot.lane.b32.xlu0 %v3849, 64
    %v4328 = vpop.permute.xlu0 %4327
    %4337 = vmatprep.subr.bf16.mxu0 0
    %4338 = vmatpush1.bf16.msra.mxu0 %v4328
    %4339 = vmatprep.subr.bf16.mxu0 0
    %4340 = vmatpush1.bf16.msra.mxu0 %v4326
    %4341 = vmatprep.subr.bf16.mxu0 0
    %4342 = vmatpush1.bf16.msra.mxu0 %v4324
    %4343 = vmatprep.subr.bf16.mxu0 0
    %4344 = vmatpush1.bf16.msra.mxu0 %v4322
    %4345 = vmatprep.subr.bf16.mxu0 0
    %4346 = vmatpush1.bf16.msra.mxu0 %v4320
    %4347 = vmatprep.subr.bf16.mxu0 0
    %4348 = vmatpush1.bf16.msra.mxu0 %v4318
    %4349 = vmatprep.subr.bf16.mxu0 0
    %4350 = vmatpush1.bf16.msra.mxu0 %v4316
    %4351 = vmatprep.subr.bf16.mxu0 0
    %4352 = vmatpush1.bf16.msra.mxu0 %v4314
    %4353 = vmatprep.subr.bf16.mxu0 0
    %4354 = vmatpush2.bf16.msra.mxu0 0
    %4355 = vmatprep.subr.bf16.mxu0 0
    %4356 = vmatpush2.bf16.msra.mxu0 0
    %4357 = vmatprep.subr.bf16.mxu0 0
    %4358 = vmatpush2.bf16.msra.mxu0 0
    %4359 = vmatprep.subr.bf16.mxu0 0
    %4360 = vmatpush2.bf16.msra.mxu0 0
    %4361 = vmatprep.subr.bf16.mxu0 0
    %4362 = vmatpush2.bf16.msra.mxu0 0
    %4363 = vmatprep.subr.bf16.mxu0 0
    %4364 = vmatpush2.bf16.msra.mxu0 0
    %4365 = vmatprep.subr.bf16.mxu0 0
    %4366 = vmatpush2.bf16.msra.mxu0 0
    %4367 = vmatprep.subr.bf16.mxu0 0
    %4368 = vmatpush2.bf16.msra.mxu0 0
    %4369 = vmatprep.mubr.bf16.mxu0 0
    %4370 = vmatmul.mubr.bf16.gmra.mxu0 %v4301
    %v4371 = vpop.f32.mrf.mxu0
    %v4372 = vadd.f32 0.0, %v4371
    %v4373 = vpop.f32.mrf.mxu0
    %v4374 = vpop.f32.mrf.mxu0
    %v4375 = vadd.f32 0.0, %v4374
    %v4376 = vpop.f32.mrf.mxu0
    %4377 = vmatprep.mubr.bf16.mxu0 0
    %4378 = vmatmul.mubr.bf16.gmra.mxu0 %v4302
    %v4379 = vpop.f32.mrf.mxu0
    %v4380 = vadd.f32 0.0, %v4379
    %v4381 = vpop.f32.mrf.mxu0
    %v4382 = vpop.f32.mrf.mxu0
    %v4383 = vadd.f32 0.0, %v4382
    %v4384 = vpop.f32.mrf.mxu0
    %4385 = vmatprep.mubr.bf16.mxu0 0
    %4386 = vmatmul.mubr.bf16.gmra.mxu0 %v4303
    %v4387 = vpop.f32.mrf.mxu0
    %v4388 = vadd.f32 0.0, %v4387
    %v4389 = vpop.f32.mrf.mxu0
    %v4390 = vpop.f32.mrf.mxu0
    %v4391 = vadd.f32 0.0, %v4390
    %v4392 = vpop.f32.mrf.mxu0
    %4393 = vmatprep.mubr.bf16.mxu0 0
    %4394 = vmatmul.mubr.bf16.gmra.mxu0 %v4304
    %v4395 = vpop.f32.mrf.mxu0
    %v4396 = vadd.f32 0.0, %v4395
    %v4397 = vpop.f32.mrf.mxu0
    %v4398 = vpop.f32.mrf.mxu0
    %v4399 = vadd.f32 0.0, %v4398
    %v4400 = vpop.f32.mrf.mxu0
    %4401 = vdwg.mxu0
    %v4402 = vpack.c.bf16 %v3108, %v3104
    %v4403 = vpack.c.bf16 %v3118, %v3114
    %v4404 = vpack.c.bf16 %v3128, %v3124
    %v4405 = vpack.c.bf16 %v3138, %v3134
    %v4406 = vpack.c.bf16 %v3761, %v3759
    %v4407 = vpack.c.bf16 %v3765, %v3763
    %v4408 = vpack.c.bf16 %v3769, %v3767
    %v4409 = vpack.c.bf16 %v3773, %v3771
    %v4410 = vpack.c.bf16 %v3777, %v3775
    %v4411 = vpack.c.bf16 %v3781, %v3779
    %v4412 = vpack.c.bf16 %v3785, %v3783
    %v4413 = vpack.c.bf16 %v3789, %v3787
    %v4414 = vpack.c.bf16 %v3801, %v3799
    %v4415 = vpack.c.bf16 %v3805, %v3803
    %v4416 = vpack.c.bf16 %v3809, %v3807
    %v4417 = vpack.c.bf16 %v3813, %v3811
    %v4418 = vpack.c.bf16 %v3817, %v3815
    %v4419 = vpack.c.bf16 %v3821, %v3819
    %v4420 = vpack.c.bf16 %v3825, %v3823
    %v4421 = vpack.c.bf16 %v3829, %v3827
    %v4423 = vsel %vm1164, %v4402, 0
    %v4426 = vsel %vm1164, %v4403, 0
    %v4429 = vsel %vm1164, %v4404, 0
    %v4432 = vsel %vm1164, %v4405, 0
    %v4435 = vsel %vm1164, %v4406, 0
    %v4438 = vsel %vm1164, %v4407, 0
    %v4441 = vsel %vm1164, %v4408, 0
    %v4444 = vsel %vm1164, %v4409, 0
    %v4447 = vsel %vm1164, %v4410, 0
    %v4450 = vsel %vm1164, %v4411, 0
    %v4453 = vsel %vm1164, %v4412, 0
    %v4456 = vsel %vm1164, %v4413, 0
    %4458 = vmatprep.subr.bf16.mxu0 0
    %4459 = vmatpush1.bf16.xpose.msra.mxu0 %v4456
    %4460 = vmatprep.subr.bf16.mxu0 0
    %4461 = vmatpush1.bf16.xpose.msra.mxu0 %v4453
    %4462 = vmatprep.subr.bf16.mxu0 0
    %4463 = vmatpush1.bf16.xpose.msra.mxu0 %v4450
    %4464 = vmatprep.subr.bf16.mxu0 0
    %4465 = vmatpush1.bf16.xpose.msra.mxu0 %v4447
    %4466 = vmatprep.subr.bf16.mxu0 0
    %4467 = vmatpush1.bf16.xpose.msra.mxu0 %v4444
    %4468 = vmatprep.subr.bf16.mxu0 0
    %4469 = vmatpush1.bf16.xpose.msra.mxu0 %v4441
    %4470 = vmatprep.subr.bf16.mxu0 0
    %4471 = vmatpush1.bf16.xpose.msra.mxu0 %v4438
    %4472 = vmatprep.subr.bf16.mxu0 0
    %4473 = vmatpush1.bf16.xpose.msra.mxu0 %v4435
    %4474 = vmatprep.subr.bf16.mxu0 0
    %4475 = vmatpush2.bf16.xpose.msra.mxu0 0
    %4476 = vmatprep.subr.bf16.mxu0 0
    %4477 = vmatpush2.bf16.xpose.msra.mxu0 0
    %4478 = vmatprep.subr.bf16.mxu0 0
    %4479 = vmatpush2.bf16.xpose.msra.mxu0 0
    %4480 = vmatprep.subr.bf16.mxu0 0
    %4481 = vmatpush2.bf16.xpose.msra.mxu0 0
    %4482 = vmatprep.subr.bf16.mxu0 0
    %4483 = vmatpush2.bf16.xpose.msra.mxu0 0
    %4484 = vmatprep.subr.bf16.mxu0 0
    %4485 = vmatpush2.bf16.xpose.msra.mxu0 0
    %4486 = vmatprep.subr.bf16.mxu0 0
    %4487 = vmatpush2.bf16.xpose.msra.mxu0 0
    %4488 = vmatprep.subr.bf16.mxu0 0
    %4489 = vmatpush2.bf16.xpose.msra.mxu0 0
    %4490 = vmatprep.mubr.bf16.mxu0 0
    %4491 = vmatmul.mubr.bf16.gmra.mxu0 %v4423
    %v4492 = vpop.f32.mrf.mxu0
    %v4493 = vadd.f32 %v281, %v4492
    %v4494 = vpop.f32.mrf.mxu0
    %v4495 = vpop.f32.mrf.mxu0
    %v4496 = vadd.f32 %v282, %v4495
    %v4497 = vpop.f32.mrf.mxu0
    %4498 = vmatprep.mubr.bf16.mxu0 0
    %4499 = vmatmul.mubr.bf16.gmra.mxu0 %v4426
    %v4500 = vpop.f32.mrf.mxu0
    %v4501 = vadd.f32 %v283, %v4500
    %v4502 = vpop.f32.mrf.mxu0
    %v4503 = vpop.f32.mrf.mxu0
    %v4504 = vadd.f32 %v284, %v4503
    %v4505 = vpop.f32.mrf.mxu0
    %4506 = vmatprep.mubr.bf16.mxu0 0
    %4507 = vmatmul.mubr.bf16.gmra.mxu0 %v4429
    %v4508 = vpop.f32.mrf.mxu0
    %v4509 = vadd.f32 %v285, %v4508
    %v4510 = vpop.f32.mrf.mxu0
    %v4511 = vpop.f32.mrf.mxu0
    %v4512 = vadd.f32 %v286, %v4511
    %v4513 = vpop.f32.mrf.mxu0
    %4514 = vmatprep.mubr.bf16.mxu0 0
    %4515 = vmatmul.mubr.bf16.gmra.mxu0 %v4432
    %v4516 = vpop.f32.mrf.mxu0
    %v4517 = vadd.f32 %v287, %v4516
    %v4518 = vpop.f32.mrf.mxu0
    %v4519 = vpop.f32.mrf.mxu0
    %v4520 = vadd.f32 %v288, %v4519
    %v4521 = vpop.f32.mrf.mxu0
    %4522 = vdwg.mxu0
    %4523 = vmax.xlane.f32.xlu0 %v4493
    %v4524 = vpop.xlane.xlu0 %4523
    %4525 = vmax.xlane.f32.xlu0 %v4496
    %v4526 = vpop.xlane.xlu0 %4525
    %4527 = vmax.xlane.f32.xlu0 %v4501
    %v4528 = vpop.xlane.xlu0 %4527
    %4529 = vmax.xlane.f32.xlu0 %v4504
    %v4530 = vpop.xlane.xlu0 %4529
    %4531 = vmax.xlane.f32.xlu0 %v4509
    %v4532 = vpop.xlane.xlu0 %4531
    %4533 = vmax.xlane.f32.xlu0 %v4512
    %v4534 = vpop.xlane.xlu0 %4533
    %4535 = vmax.xlane.f32.xlu0 %v4517
    %v4536 = vpop.xlane.xlu0 %4535
    %4537 = vmax.xlane.f32.xlu0 %v4520
    %v4538 = vpop.xlane.xlu0 %4537
    %v4539 = vsub.f32 %v4493, %v4524
    %v4540 = vsub.f32 %v4496, %v4526
    %v4541 = vsub.f32 %v4501, %v4528
    %v4542 = vsub.f32 %v4504, %v4530
    %v4543 = vsub.f32 %v4509, %v4532
    %v4544 = vsub.f32 %v4512, %v4534
    %v4545 = vsub.f32 %v4517, %v4536
    %v4546 = vsub.f32 %v4520, %v4538
    %v4547 = vmul.f32 %v4539, 1.442695
    %v4548 = vpow.pop %v4547
    %v4549 = vmul.f32 %v4540, 1.442695
    %v4550 = vpow.pop %v4549
    %v4551 = vmul.f32 %v4541, 1.442695
    %v4552 = vpow.pop %v4551
    %v4553 = vmul.f32 %v4542, 1.442695
    %v4554 = vpow.pop %v4553
    %v4555 = vmul.f32 %v4543, 1.442695
    %v4556 = vpow.pop %v4555
    %v4557 = vmul.f32 %v4544, 1.442695
    %v4558 = vpow.pop %v4557
    %v4559 = vmul.f32 %v4545, 1.442695
    %v4560 = vpow.pop %v4559
    %v4561 = vmul.f32 %v4546, 1.442695
    %v4562 = vpow.pop %v4561
    %4563 = vadd.xlane.f32.xlu0 %v4548
    %v4564 = vpop.xlane.xlu0 %4563
    %4565 = vadd.xlane.f32.xlu0 %v4550
    %v4566 = vpop.xlane.xlu0 %4565
    %4567 = vadd.xlane.f32.xlu0 %v4552
    %v4568 = vpop.xlane.xlu0 %4567
    %4569 = vadd.xlane.f32.xlu0 %v4554
    %v4570 = vpop.xlane.xlu0 %4569
    %4571 = vadd.xlane.f32.xlu0 %v4556
    %v4572 = vpop.xlane.xlu0 %4571
    %4573 = vadd.xlane.f32.xlu0 %v4558
    %v4574 = vpop.xlane.xlu0 %4573
    %4575 = vadd.xlane.f32.xlu0 %v4560
    %v4576 = vpop.xlane.xlu0 %4575
    %4577 = vadd.xlane.f32.xlu0 %v4562
    %v4578 = vpop.xlane.xlu0 %4577
    %v4579 = vrcp.pop %v4564
    %v4580 = vrcp.pop %v4566
    %v4581 = vrcp.pop %v4568
    %v4582 = vrcp.pop %v4570
    %v4583 = vrcp.pop %v4572
    %v4584 = vrcp.pop %v4574
    %v4585 = vrcp.pop %v4576
    %v4586 = vrcp.pop %v4578
    %v4587 = vmul.f32 %v4548, %v4579
    %v4588 = vmul.f32 %v4550, %v4580
    %v4589 = vmul.f32 %v4552, %v4581
    %v4590 = vmul.f32 %v4554, %v4582
    %v4591 = vmul.f32 %v4556, %v4583
    %v4592 = vmul.f32 %v4558, %v4584
    %v4593 = vmul.f32 %v4560, %v4585
    %v4594 = vmul.f32 %v4562, %v4586
    %v4595 = vpack.c.bf16 %v4588, %v4587
    %v4596 = vpack.c.bf16 %v4590, %v4589
    %v4597 = vpack.c.bf16 %v4592, %v4591
    %v4598 = vpack.c.bf16 %v4594, %v4593
    %4599 = vmatprep.subr.bf16.mxu0 0
    %4600 = vmatpush1.bf16.msra.mxu0 %v4421
    %4601 = vmatprep.subr.bf16.mxu0 0
    %4602 = vmatpush1.bf16.msra.mxu0 %v4420
    %4603 = vmatprep.subr.bf16.mxu0 0
    %4604 = vmatpush1.bf16.msra.mxu0 %v4419
    %4605 = vmatprep.subr.bf16.mxu0 0
    %4606 = vmatpush1.bf16.msra.mxu0 %v4418
    %4607 = vmatprep.subr.bf16.mxu0 0
    %4608 = vmatpush1.bf16.msra.mxu0 %v4417
    %4609 = vmatprep.subr.bf16.mxu0 0
    %4610 = vmatpush1.bf16.msra.mxu0 %v4416
    %4611 = vmatprep.subr.bf16.mxu0 0
    %4612 = vmatpush1.bf16.msra.mxu0 %v4415
    %4613 = vmatprep.subr.bf16.mxu0 0
    %4614 = vmatpush1.bf16.msra.mxu0 %v4414
    %4615 = vmatprep.subr.bf16.mxu0 0
    %4616 = vmatpush2.bf16.msra.mxu0 0
    %4617 = vmatprep.subr.bf16.mxu0 0
    %4618 = vmatpush2.bf16.msra.mxu0 0
    %4619 = vmatprep.subr.bf16.mxu0 0
    %4620 = vmatpush2.bf16.msra.mxu0 0
    %4621 = vmatprep.subr.bf16.mxu0 0
    %4622 = vmatpush2.bf16.msra.mxu0 0
    %4623 = vmatprep.subr.bf16.mxu0 0
    %4624 = vmatpush2.bf16.msra.mxu0 0
    %4625 = vmatprep.subr.bf16.mxu0 0
    %4626 = vmatpush2.bf16.msra.mxu0 0
    %4627 = vmatprep.subr.bf16.mxu0 0
    %4628 = vmatpush2.bf16.msra.mxu0 0
    %4629 = vmatprep.subr.bf16.mxu0 0
    %4630 = vmatpush2.bf16.msra.mxu0 0
    %4631 = vmatprep.mubr.bf16.mxu0 0
    %4632 = vmatmul.mubr.bf16.gmra.mxu0 %v4595
    %v4633 = vpop.f32.mrf.mxu0
    %v4634 = vadd.f32 0.0, %v4633
    %v4635 = vpop.f32.mrf.mxu0
    %v4636 = vpop.f32.mrf.mxu0
    %v4637 = vadd.f32 0.0, %v4636
    %v4638 = vpop.f32.mrf.mxu0
    %4639 = vmatprep.mubr.bf16.mxu0 0
    %4640 = vmatmul.mubr.bf16.gmra.mxu0 %v4596
    %v4641 = vpop.f32.mrf.mxu0
    %v4642 = vadd.f32 0.0, %v4641
    %v4643 = vpop.f32.mrf.mxu0
    %v4644 = vpop.f32.mrf.mxu0
    %v4645 = vadd.f32 0.0, %v4644
    %v4646 = vpop.f32.mrf.mxu0
    %4647 = vmatprep.mubr.bf16.mxu0 0
    %4648 = vmatmul.mubr.bf16.gmra.mxu0 %v4597
    %v4649 = vpop.f32.mrf.mxu0
    %v4650 = vadd.f32 0.0, %v4649
    %v4651 = vpop.f32.mrf.mxu0
    %v4652 = vpop.f32.mrf.mxu0
    %v4653 = vadd.f32 0.0, %v4652
    %v4654 = vpop.f32.mrf.mxu0
    %4655 = vmatprep.mubr.bf16.mxu0 0
    %4656 = vmatmul.mubr.bf16.gmra.mxu0 %v4598
    %v4657 = vpop.f32.mrf.mxu0
    %v4658 = vadd.f32 0.0, %v4657
    %v4659 = vpop.f32.mrf.mxu0
    %v4660 = vpop.f32.mrf.mxu0
    %v4661 = vadd.f32 0.0, %v4660
    %v4662 = vpop.f32.mrf.mxu0
    %4663 = vdwg.mxu0
    %4668 = vrot.lane.b32.xlu0 %v4402, 64
    %v4669 = vpop.permute.xlu0 %4668
    %4670 = vrot.lane.b32.xlu0 %v4403, 64
    %v4671 = vpop.permute.xlu0 %4670
    %4672 = vrot.lane.b32.xlu0 %v4404, 64
    %v4673 = vpop.permute.xlu0 %4672
    %4674 = vrot.lane.b32.xlu0 %v4405, 64
    %v4675 = vpop.permute.xlu0 %4674
    %4684 = vrot.lane.b32.xlu0 %v4406, 64
    %v4685 = vpop.permute.xlu0 %4684
    %4686 = vrot.lane.b32.xlu0 %v4407, 64
    %v4687 = vpop.permute.xlu0 %4686
    %4688 = vrot.lane.b32.xlu0 %v4408, 64
    %v4689 = vpop.permute.xlu0 %4688
    %4690 = vrot.lane.b32.xlu0 %v4409, 64
    %v4691 = vpop.permute.xlu0 %4690
    %4692 = vrot.lane.b32.xlu0 %v4410, 64
    %v4693 = vpop.permute.xlu0 %4692
    %4694 = vrot.lane.b32.xlu0 %v4411, 64
    %v4695 = vpop.permute.xlu0 %4694
    %4696 = vrot.lane.b32.xlu0 %v4412, 64
    %v4697 = vpop.permute.xlu0 %4696
    %4698 = vrot.lane.b32.xlu0 %v4413, 64
    %v4699 = vpop.permute.xlu0 %4698
    %v4701 = vsel %vm1164, %v4669, 0
    %v4704 = vsel %vm1164, %v4671, 0
    %v4707 = vsel %vm1164, %v4673, 0
    %v4710 = vsel %vm1164, %v4675, 0
    %v4713 = vsel %vm1164, %v4685, 0
    %v4716 = vsel %vm1164, %v4687, 0
    %v4719 = vsel %vm1164, %v4689, 0
    %v4722 = vsel %vm1164, %v4691, 0
    %v4725 = vsel %vm1164, %v4693, 0
    %v4728 = vsel %vm1164, %v4695, 0
    %v4731 = vsel %vm1164, %v4697, 0
    %v4734 = vsel %vm1164, %v4699, 0
    %4736 = vmatprep.subr.bf16.mxu0 0
    %4737 = vmatpush1.bf16.xpose.msra.mxu0 %v4734
    %4738 = vmatprep.subr.bf16.mxu0 0
    %4739 = vmatpush1.bf16.xpose.msra.mxu0 %v4731
    %4740 = vmatprep.subr.bf16.mxu0 0
    %4741 = vmatpush1.bf16.xpose.msra.mxu0 %v4728
    %4742 = vmatprep.subr.bf16.mxu0 0
    %4743 = vmatpush1.bf16.xpose.msra.mxu0 %v4725
    %4744 = vmatprep.subr.bf16.mxu0 0
    %4745 = vmatpush1.bf16.xpose.msra.mxu0 %v4722
    %4746 = vmatprep.subr.bf16.mxu0 0
    %4747 = vmatpush1.bf16.xpose.msra.mxu0 %v4719
    %4748 = vmatprep.subr.bf16.mxu0 0
    %4749 = vmatpush1.bf16.xpose.msra.mxu0 %v4716
    %4750 = vmatprep.subr.bf16.mxu0 0
    %4751 = vmatpush1.bf16.xpose.msra.mxu0 %v4713
    %4752 = vmatprep.subr.bf16.mxu0 0
    %4753 = vmatpush2.bf16.xpose.msra.mxu0 0
    %4754 = vmatprep.subr.bf16.mxu0 0
    %4755 = vmatpush2.bf16.xpose.msra.mxu0 0
    %4756 = vmatprep.subr.bf16.mxu0 0
    %4757 = vmatpush2.bf16.xpose.msra.mxu0 0
    %4758 = vmatprep.subr.bf16.mxu0 0
    %4759 = vmatpush2.bf16.xpose.msra.mxu0 0
    %4760 = vmatprep.subr.bf16.mxu0 0
    %4761 = vmatpush2.bf16.xpose.msra.mxu0 0
    %4762 = vmatprep.subr.bf16.mxu0 0
    %4763 = vmatpush2.bf16.xpose.msra.mxu0 0
    %4764 = vmatprep.subr.bf16.mxu0 0
    %4765 = vmatpush2.bf16.xpose.msra.mxu0 0
    %4766 = vmatprep.subr.bf16.mxu0 0
    %4767 = vmatpush2.bf16.xpose.msra.mxu0 0
    %4768 = vmatprep.mubr.bf16.mxu0 0
    %4769 = vmatmul.mubr.bf16.gmra.mxu0 %v4701
    %v4770 = vpop.f32.mrf.mxu0
    %v4771 = vadd.f32 %v281, %v4770
    %v4772 = vpop.f32.mrf.mxu0
    %v4773 = vpop.f32.mrf.mxu0
    %v4774 = vadd.f32 %v282, %v4773
    %v4775 = vpop.f32.mrf.mxu0
    %4776 = vmatprep.mubr.bf16.mxu0 0
    %4777 = vmatmul.mubr.bf16.gmra.mxu0 %v4704
    %v4778 = vpop.f32.mrf.mxu0
    %v4779 = vadd.f32 %v283, %v4778
    %v4780 = vpop.f32.mrf.mxu0
    %v4781 = vpop.f32.mrf.mxu0
    %v4782 = vadd.f32 %v284, %v4781
    %v4783 = vpop.f32.mrf.mxu0
    %4784 = vmatprep.mubr.bf16.mxu0 0
    %4785 = vmatmul.mubr.bf16.gmra.mxu0 %v4707
    %v4786 = vpop.f32.mrf.mxu0
    %v4787 = vadd.f32 %v285, %v4786
    %v4788 = vpop.f32.mrf.mxu0
    %v4789 = vpop.f32.mrf.mxu0
    %v4790 = vadd.f32 %v286, %v4789
    %v4791 = vpop.f32.mrf.mxu0
    %4792 = vmatprep.mubr.bf16.mxu0 0
    %4793 = vmatmul.mubr.bf16.gmra.mxu0 %v4710
    %v4794 = vpop.f32.mrf.mxu0
    %v4795 = vadd.f32 %v287, %v4794
    %v4796 = vpop.f32.mrf.mxu0
    %v4797 = vpop.f32.mrf.mxu0
    %v4798 = vadd.f32 %v288, %v4797
    %v4799 = vpop.f32.mrf.mxu0
    %4800 = vdwg.mxu0
    %4801 = vmax.xlane.f32.xlu0 %v4771
    %v4802 = vpop.xlane.xlu0 %4801
    %4803 = vmax.xlane.f32.xlu0 %v4774
    %v4804 = vpop.xlane.xlu0 %4803
    %4805 = vmax.xlane.f32.xlu0 %v4779
    %v4806 = vpop.xlane.xlu0 %4805
    %4807 = vmax.xlane.f32.xlu0 %v4782
    %v4808 = vpop.xlane.xlu0 %4807
    %4809 = vmax.xlane.f32.xlu0 %v4787
    %v4810 = vpop.xlane.xlu0 %4809
    %4811 = vmax.xlane.f32.xlu0 %v4790
    %v4812 = vpop.xlane.xlu0 %4811
    %4813 = vmax.xlane.f32.xlu0 %v4795
    %v4814 = vpop.xlane.xlu0 %4813
    %4815 = vmax.xlane.f32.xlu0 %v4798
    %v4816 = vpop.xlane.xlu0 %4815
    %v4817 = vsub.f32 %v4771, %v4802
    %v4818 = vsub.f32 %v4774, %v4804
    %v4819 = vsub.f32 %v4779, %v4806
    %v4820 = vsub.f32 %v4782, %v4808
    %v4821 = vsub.f32 %v4787, %v4810
    %v4822 = vsub.f32 %v4790, %v4812
    %v4823 = vsub.f32 %v4795, %v4814
    %v4824 = vsub.f32 %v4798, %v4816
    %v4825 = vmul.f32 %v4817, 1.442695
    %v4826 = vpow.pop %v4825
    %v4827 = vmul.f32 %v4818, 1.442695
    %v4828 = vpow.pop %v4827
    %v4829 = vmul.f32 %v4819, 1.442695
    %v4830 = vpow.pop %v4829
    %v4831 = vmul.f32 %v4820, 1.442695
    %v4832 = vpow.pop %v4831
    %v4833 = vmul.f32 %v4821, 1.442695
    %v4834 = vpow.pop %v4833
    %v4835 = vmul.f32 %v4822, 1.442695
    %v4836 = vpow.pop %v4835
    %v4837 = vmul.f32 %v4823, 1.442695
    %v4838 = vpow.pop %v4837
    %v4839 = vmul.f32 %v4824, 1.442695
    %v4840 = vpow.pop %v4839
    %4841 = vadd.xlane.f32.xlu0 %v4826
    %v4842 = vpop.xlane.xlu0 %4841
    %4843 = vadd.xlane.f32.xlu0 %v4828
    %v4844 = vpop.xlane.xlu0 %4843
    %4845 = vadd.xlane.f32.xlu0 %v4830
    %v4846 = vpop.xlane.xlu0 %4845
    %4847 = vadd.xlane.f32.xlu0 %v4832
    %v4848 = vpop.xlane.xlu0 %4847
    %4849 = vadd.xlane.f32.xlu0 %v4834
    %v4850 = vpop.xlane.xlu0 %4849
    %4851 = vadd.xlane.f32.xlu0 %v4836
    %v4852 = vpop.xlane.xlu0 %4851
    %4853 = vadd.xlane.f32.xlu0 %v4838
    %v4854 = vpop.xlane.xlu0 %4853
    %4855 = vadd.xlane.f32.xlu0 %v4840
    %v4856 = vpop.xlane.xlu0 %4855
    %v4857 = vrcp.pop %v4842
    %v4858 = vrcp.pop %v4844
    %v4859 = vrcp.pop %v4846
    %v4860 = vrcp.pop %v4848
    %v4861 = vrcp.pop %v4850
    %v4862 = vrcp.pop %v4852
    %v4863 = vrcp.pop %v4854
    %v4864 = vrcp.pop %v4856
    %v4865 = vmul.f32 %v4826, %v4857
    %v4866 = vmul.f32 %v4828, %v4858
    %v4867 = vmul.f32 %v4830, %v4859
    %v4868 = vmul.f32 %v4832, %v4860
    %v4869 = vmul.f32 %v4834, %v4861
    %v4870 = vmul.f32 %v4836, %v4862
    %v4871 = vmul.f32 %v4838, %v4863
    %v4872 = vmul.f32 %v4840, %v4864
    %v4873 = vpack.c.bf16 %v4866, %v4865
    %v4874 = vpack.c.bf16 %v4868, %v4867
    %v4875 = vpack.c.bf16 %v4870, %v4869
    %v4876 = vpack.c.bf16 %v4872, %v4871
    %4885 = vrot.lane.b32.xlu0 %v4414, 64
    %v4886 = vpop.permute.xlu0 %4885
    %4887 = vrot.lane.b32.xlu0 %v4415, 64
    %v4888 = vpop.permute.xlu0 %4887
    %4889 = vrot.lane.b32.xlu0 %v4416, 64
    %v4890 = vpop.permute.xlu0 %4889
    %4891 = vrot.lane.b32.xlu0 %v4417, 64
    %v4892 = vpop.permute.xlu0 %4891
    %4893 = vrot.lane.b32.xlu0 %v4418, 64
    %v4894 = vpop.permute.xlu0 %4893
    %4895 = vrot.lane.b32.xlu0 %v4419, 64
    %v4896 = vpop.permute.xlu0 %4895
    %4897 = vrot.lane.b32.xlu0 %v4420, 64
    %v4898 = vpop.permute.xlu0 %4897
    %4899 = vrot.lane.b32.xlu0 %v4421, 64
    %v4900 = vpop.permute.xlu0 %4899
    %4909 = vmatprep.subr.bf16.mxu0 0
    %4910 = vmatpush1.bf16.msra.mxu0 %v4900
    %4911 = vmatprep.subr.bf16.mxu0 0
    %4912 = vmatpush1.bf16.msra.mxu0 %v4898
    %4913 = vmatprep.subr.bf16.mxu0 0
    %4914 = vmatpush1.bf16.msra.mxu0 %v4896
    %4915 = vmatprep.subr.bf16.mxu0 0
    %4916 = vmatpush1.bf16.msra.mxu0 %v4894
    %4917 = vmatprep.subr.bf16.mxu0 0
    %4918 = vmatpush1.bf16.msra.mxu0 %v4892
    %4919 = vmatprep.subr.bf16.mxu0 0
    %4920 = vmatpush1.bf16.msra.mxu0 %v4890
    %4921 = vmatprep.subr.bf16.mxu0 0
    %4922 = vmatpush1.bf16.msra.mxu0 %v4888
    %4923 = vmatprep.subr.bf16.mxu0 0
    %4924 = vmatpush1.bf16.msra.mxu0 %v4886
    %4925 = vmatprep.subr.bf16.mxu0 0
    %4926 = vmatpush2.bf16.msra.mxu0 0
    %4927 = vmatprep.subr.bf16.mxu0 0
    %4928 = vmatpush2.bf16.msra.mxu0 0
    %4929 = vmatprep.subr.bf16.mxu0 0
    %4930 = vmatpush2.bf16.msra.mxu0 0
    %4931 = vmatprep.subr.bf16.mxu0 0
    %4932 = vmatpush2.bf16.msra.mxu0 0
    %4933 = vmatprep.subr.bf16.mxu0 0
    %4934 = vmatpush2.bf16.msra.mxu0 0
    %4935 = vmatprep.subr.bf16.mxu0 0
    %4936 = vmatpush2.bf16.msra.mxu0 0
    %4937 = vmatprep.subr.bf16.mxu0 0
    %4938 = vmatpush2.bf16.msra.mxu0 0
    %4939 = vmatprep.subr.bf16.mxu0 0
    %4940 = vmatpush2.bf16.msra.mxu0 0
    %4941 = vmatprep.mubr.bf16.mxu0 0
    %4942 = vmatmul.mubr.bf16.gmra.mxu0 %v4873
    %v4943 = vpop.f32.mrf.mxu0
    %v4944 = vadd.f32 0.0, %v4943
    %v4945 = vpop.f32.mrf.mxu0
    %v4946 = vpop.f32.mrf.mxu0
    %v4947 = vadd.f32 0.0, %v4946
    %v4948 = vpop.f32.mrf.mxu0
    %4949 = vmatprep.mubr.bf16.mxu0 0
    %4950 = vmatmul.mubr.bf16.gmra.mxu0 %v4874
    %v4951 = vpop.f32.mrf.mxu0
    %v4952 = vadd.f32 0.0, %v4951
    %v4953 = vpop.f32.mrf.mxu0
    %v4954 = vpop.f32.mrf.mxu0
    %v4955 = vadd.f32 0.0, %v4954
    %v4956 = vpop.f32.mrf.mxu0
    %4957 = vmatprep.mubr.bf16.mxu0 0
    %4958 = vmatmul.mubr.bf16.gmra.mxu0 %v4875
    %v4959 = vpop.f32.mrf.mxu0
    %v4960 = vadd.f32 0.0, %v4959
    %v4961 = vpop.f32.mrf.mxu0
    %v4962 = vpop.f32.mrf.mxu0
    %v4963 = vadd.f32 0.0, %v4962
    %v4964 = vpop.f32.mrf.mxu0
    %4965 = vmatprep.mubr.bf16.mxu0 0
    %4966 = vmatmul.mubr.bf16.gmra.mxu0 %v4876
    %v4967 = vpop.f32.mrf.mxu0
    %v4968 = vadd.f32 0.0, %v4967
    %v4969 = vpop.f32.mrf.mxu0
    %v4970 = vpop.f32.mrf.mxu0
    %v4971 = vadd.f32 0.0, %v4970
    %v4972 = vpop.f32.mrf.mxu0
    %4973 = vdwg.mxu0
    %4982 = vrot.lane.b32.xlu0 %v4372, 64
    %v4983 = vpop.permute.xlu0 %4982
    %4984 = vrot.lane.b32.xlu0 %v4375, 64
    %v4985 = vpop.permute.xlu0 %4984
    %4986 = vrot.lane.b32.xlu0 %v4380, 64
    %v4987 = vpop.permute.xlu0 %4986
    %4988 = vrot.lane.b32.xlu0 %v4383, 64
    %v4989 = vpop.permute.xlu0 %4988
    %4990 = vrot.lane.b32.xlu0 %v4388, 64
    %v4991 = vpop.permute.xlu0 %4990
    %4992 = vrot.lane.b32.xlu0 %v4391, 64
    %v4993 = vpop.permute.xlu0 %4992
    %4994 = vrot.lane.b32.xlu0 %v4396, 64
    %v4995 = vpop.permute.xlu0 %4994
    %4996 = vrot.lane.b32.xlu0 %v4399, 64
    %v4997 = vpop.permute.xlu0 %4996
    %5014 = vrot.lane.b32.xlu0 %v4944, 64
    %v5015 = vpop.permute.xlu0 %5014
    %5016 = vrot.lane.b32.xlu0 %v4947, 64
    %v5017 = vpop.permute.xlu0 %5016
    %5018 = vrot.lane.b32.xlu0 %v4952, 64
    %v5019 = vpop.permute.xlu0 %5018
    %5020 = vrot.lane.b32.xlu0 %v4955, 64
    %v5021 = vpop.permute.xlu0 %5020
    %5022 = vrot.lane.b32.xlu0 %v4960, 64
    %v5023 = vpop.permute.xlu0 %5022
    %5024 = vrot.lane.b32.xlu0 %v4963, 64
    %v5025 = vpop.permute.xlu0 %5024
    %5026 = vrot.lane.b32.xlu0 %v4968, 64
    %v5027 = vpop.permute.xlu0 %5026
    %5028 = vrot.lane.b32.xlu0 %v4971, 64
    %v5029 = vpop.permute.xlu0 %5028
    %v5038 = vsel %vm1164, %v4062, %v4983
    %v5039 = vsel %vm1164, %v4065, %v4985
    %v5040 = vsel %vm1164, %v4070, %v4987
    %v5041 = vsel %vm1164, %v4073, %v4989
    %v5042 = vsel %vm1164, %v4078, %v4991
    %v5043 = vsel %vm1164, %v4081, %v4993
    %v5044 = vsel %vm1164, %v4086, %v4995
    %v5045 = vsel %vm1164, %v4089, %v4997
    %v5046 = vsel %vm1164, %v4634, %v5015
    %v5047 = vsel %vm1164, %v4637, %v5017
    %v5048 = vsel %vm1164, %v4642, %v5019
    %v5049 = vsel %vm1164, %v4645, %v5021
    %v5050 = vsel %vm1164, %v4650, %v5023
    %v5051 = vsel %vm1164, %v4653, %v5025
    %v5052 = vsel %vm1164, %v4658, %v5027
    %v5053 = vsel %vm1164, %v4661, %v5029
    %v5054 = vpack.c.bf16 %v5039, %v5038
    %v5055 = vpack.c.bf16 %v5047, %v5046
    %v5056 = vpack.c.bf16 %v5041, %v5040
    %v5057 = vpack.c.bf16 %v5049, %v5048
    %v5058 = vpack.c.bf16 %v5043, %v5042
    %v5059 = vpack.c.bf16 %v5051, %v5050
    %v5060 = vpack.c.bf16 %v5045, %v5044
    %v5061 = vpack.c.bf16 %v5053, %v5052
    %v5062 = vld [vmem:[#allocation17] sm:$0xff]
    %v5063 = vld [vmem:[#allocation17 + $0x8] sm:$0xff]
    %v5064 = vld [vmem:[#allocation17 + $0x10] sm:$0xff]
    %v5065 = vld [vmem:[#allocation17 + $0x18] sm:$0xff]
    %v5066 = vld [vmem:[#allocation17 + $0x20] sm:$0xff]
    %v5067 = vld [vmem:[#allocation17 + $0x28] sm:$0xff]
    %v5068 = vld [vmem:[#allocation17 + $0x30] sm:$0xff]
    %v5069 = vld [vmem:[#allocation17 + $0x38] sm:$0xff]
    %v5070 = vld [vmem:[#allocation17 + $0x40] sm:$0xff]
    %v5071 = vld [vmem:[#allocation17 + $0x48] sm:$0xff]
    %v5072 = vld [vmem:[#allocation17 + $0x50] sm:$0xff]
    %v5073 = vld [vmem:[#allocation17 + $0x58] sm:$0xff]
    %v5074 = vld [vmem:[#allocation17 + $0x60] sm:$0xff]
    %v5075 = vld [vmem:[#allocation17 + $0x68] sm:$0xff]
    %v5076 = vld [vmem:[#allocation17 + $0x70] sm:$0xff]
    %v5077 = vld [vmem:[#allocation17 + $0x78] sm:$0xff]
    %v5078 = vld [vmem:[#allocation17 + $0x80] sm:$0xff]
    %v5079 = vld [vmem:[#allocation17 + $0x88] sm:$0xff]
    %v5080 = vld [vmem:[#allocation17 + $0x90] sm:$0xff]
    %v5081 = vld [vmem:[#allocation17 + $0x98] sm:$0xff]
    %v5082 = vld [vmem:[#allocation17 + $0xa0] sm:$0xff]
    %v5083 = vld [vmem:[#allocation17 + $0xa8] sm:$0xff]
    %v5084 = vld [vmem:[#allocation17 + $0xb0] sm:$0xff]
    %v5085 = vld [vmem:[#allocation17 + $0xb8] sm:$0xff]
    %v5086 = vld [vmem:[#allocation17 + $0xc0] sm:$0xff]
    %v5087 = vld [vmem:[#allocation17 + $0xc8] sm:$0xff]
    %v5088 = vld [vmem:[#allocation17 + $0xd0] sm:$0xff]
    %v5089 = vld [vmem:[#allocation17 + $0xd8] sm:$0xff]
    %v5090 = vld [vmem:[#allocation17 + $0xe0] sm:$0xff]
    %v5091 = vld [vmem:[#allocation17 + $0xe8] sm:$0xff]
    %v5092 = vld [vmem:[#allocation17 + $0xf0] sm:$0xff]
    %v5093 = vld [vmem:[#allocation17 + $0xf8] sm:$0xff]
    %v5094 = vlaneseq
    %v5095 = vshrl.u32 %v5094, 7
    %v5096 = vsub.s32 7, %v5095
    %v5097 = vrot.slane %v289, %v5096
    %v5098 = vlaneseq
    %v5099 = vshrl.u32 %v5098, 7
    %v5100 = vsub.s32 7, %v5099
    %v5101 = vrot.slane %v290, %v5100
    %v5134 = vunpack.c.l.b16 %v5062
    %v5135 = vunpack.c.h.b16 %v5062
    %v5136 = vunpack.c.l.b16 %v5063
    %v5137 = vunpack.c.h.b16 %v5063
    %v5138 = vunpack.c.l.b16 %v5064
    %v5139 = vunpack.c.h.b16 %v5064
    %v5140 = vunpack.c.l.b16 %v5065
    %v5141 = vunpack.c.h.b16 %v5065
    %v5142 = vunpack.c.l.b16 %v5066
    %v5143 = vunpack.c.h.b16 %v5066
    %v5144 = vunpack.c.l.b16 %v5067
    %v5145 = vunpack.c.h.b16 %v5067
    %v5146 = vunpack.c.l.b16 %v5068
    %v5147 = vunpack.c.h.b16 %v5068
    %v5148 = vunpack.c.l.b16 %v5069
    %v5149 = vunpack.c.h.b16 %v5069
    %v5150 = vunpack.c.l.b16 %v5070
    %v5151 = vunpack.c.h.b16 %v5070
    %v5152 = vunpack.c.l.b16 %v5071
    %v5153 = vunpack.c.h.b16 %v5071
    %v5154 = vunpack.c.l.b16 %v5072
    %v5155 = vunpack.c.h.b16 %v5072
    %v5156 = vunpack.c.l.b16 %v5073
    %v5157 = vunpack.c.h.b16 %v5073
    %v5158 = vunpack.c.l.b16 %v5074
    %v5159 = vunpack.c.h.b16 %v5074
    %v5160 = vunpack.c.l.b16 %v5075
    %v5161 = vunpack.c.h.b16 %v5075
    %v5162 = vunpack.c.l.b16 %v5076
    %v5163 = vunpack.c.h.b16 %v5076
    %v5164 = vunpack.c.l.b16 %v5077
    %v5165 = vunpack.c.h.b16 %v5077
    %v5166 = vunpack.c.l.b16 %v5078
    %v5167 = vunpack.c.h.b16 %v5078
    %v5168 = vunpack.c.l.b16 %v5079
    %v5169 = vunpack.c.h.b16 %v5079
    %v5170 = vunpack.c.l.b16 %v5080
    %v5171 = vunpack.c.h.b16 %v5080
    %v5172 = vunpack.c.l.b16 %v5081
    %v5173 = vunpack.c.h.b16 %v5081
    %v5174 = vunpack.c.l.b16 %v5082
    %v5175 = vunpack.c.h.b16 %v5082
    %v5176 = vunpack.c.l.b16 %v5083
    %v5177 = vunpack.c.h.b16 %v5083
    %v5178 = vunpack.c.l.b16 %v5084
    %v5179 = vunpack.c.h.b16 %v5084
    %v5180 = vunpack.c.l.b16 %v5085
    %v5181 = vunpack.c.h.b16 %v5085
    %v5182 = vunpack.c.l.b16 %v5086
    %v5183 = vunpack.c.h.b16 %v5086
    %v5184 = vunpack.c.l.b16 %v5087
    %v5185 = vunpack.c.h.b16 %v5087
    %v5186 = vunpack.c.l.b16 %v5088
    %v5187 = vunpack.c.h.b16 %v5088
    %v5188 = vunpack.c.l.b16 %v5089
    %v5189 = vunpack.c.h.b16 %v5089
    %v5190 = vunpack.c.l.b16 %v5090
    %v5191 = vunpack.c.h.b16 %v5090
    %v5192 = vunpack.c.l.b16 %v5091
    %v5193 = vunpack.c.h.b16 %v5091
    %v5194 = vunpack.c.l.b16 %v5092
    %v5195 = vunpack.c.h.b16 %v5092
    %v5196 = vunpack.c.l.b16 %v5093
    %v5197 = vunpack.c.h.b16 %v5093
    %v5198 = vpack.c.b16 %v5136, %v5134
    %v5199 = vpack.c.b16 %v5137, %v5135
    %v5200 = vpack.c.b16 %v5140, %v5138
    %v5201 = vpack.c.b16 %v5141, %v5139
    %v5202 = vpack.c.b16 %v5144, %v5142
    %v5203 = vpack.c.b16 %v5145, %v5143
    %v5204 = vpack.c.b16 %v5148, %v5146
    %v5205 = vpack.c.b16 %v5149, %v5147
    %v5206 = vpack.c.b16 %v5152, %v5150
    %v5207 = vpack.c.b16 %v5153, %v5151
    %v5208 = vpack.c.b16 %v5156, %v5154
    %v5209 = vpack.c.b16 %v5157, %v5155
    %v5210 = vpack.c.b16 %v5160, %v5158
    %v5211 = vpack.c.b16 %v5161, %v5159
    %v5212 = vpack.c.b16 %v5164, %v5162
    %v5213 = vpack.c.b16 %v5165, %v5163
    %v5214 = vpack.c.b16 %v5168, %v5166
    %v5215 = vpack.c.b16 %v5169, %v5167
    %v5216 = vpack.c.b16 %v5172, %v5170
    %v5217 = vpack.c.b16 %v5173, %v5171
    %v5218 = vpack.c.b16 %v5176, %v5174
    %v5219 = vpack.c.b16 %v5177, %v5175
    %v5220 = vpack.c.b16 %v5180, %v5178
    %v5221 = vpack.c.b16 %v5181, %v5179
    %v5222 = vpack.c.b16 %v5184, %v5182
    %v5223 = vpack.c.b16 %v5185, %v5183
    %v5224 = vpack.c.b16 %v5188, %v5186
    %v5225 = vpack.c.b16 %v5189, %v5187
    %v5226 = vpack.c.b16 %v5192, %v5190
    %v5227 = vpack.c.b16 %v5193, %v5191
    %v5228 = vpack.c.b16 %v5196, %v5194
    %v5229 = vpack.c.b16 %v5197, %v5195
    %5262 = vmatprep.subr.bf16.mxu0 %v5213
    %5263 = vmatpush1.bf16.msra.mxu0 %v5212
    %5264 = vmatprep.subr.bf16.mxu0 %v5211
    %5265 = vmatpush1.bf16.msra.mxu0 %v5210
    %5266 = vmatprep.subr.bf16.mxu0 %v5209
    %5267 = vmatpush1.bf16.msra.mxu0 %v5208
    %5268 = vmatprep.subr.bf16.mxu0 %v5207
    %5269 = vmatpush1.bf16.msra.mxu0 %v5206
    %5270 = vmatprep.subr.bf16.mxu0 %v5205
    %5271 = vmatpush1.bf16.msra.mxu0 %v5204
    %5272 = vmatprep.subr.bf16.mxu0 %v5203
    %5273 = vmatpush1.bf16.msra.mxu0 %v5202
    %5274 = vmatprep.subr.bf16.mxu0 %v5201
    %5275 = vmatpush1.bf16.msra.mxu0 %v5200
    %5276 = vmatprep.subr.bf16.mxu0 %v5199
    %5277 = vmatpush1.bf16.msra.mxu0 %v5198
    %5278 = vmatprep.subr.bf16.mxu0 %v5229
    %5279 = vmatpush2.bf16.msra.mxu0 %v5228
    %5280 = vmatprep.subr.bf16.mxu0 %v5227
    %5281 = vmatpush2.bf16.msra.mxu0 %v5226
    %5282 = vmatprep.subr.bf16.mxu0 %v5225
    %5283 = vmatpush2.bf16.msra.mxu0 %v5224
    %5284 = vmatprep.subr.bf16.mxu0 %v5223
    %5285 = vmatpush2.bf16.msra.mxu0 %v5222
    %5286 = vmatprep.subr.bf16.mxu0 %v5221
    %5287 = vmatpush2.bf16.msra.mxu0 %v5220
    %5288 = vmatprep.subr.bf16.mxu0 %v5219
    %5289 = vmatpush2.bf16.msra.mxu0 %v5218
    %5290 = vmatprep.subr.bf16.mxu0 %v5217
    %5291 = vmatpush2.bf16.msra.mxu0 %v5216
    %5292 = vmatprep.subr.bf16.mxu0 %v5215
    %5293 = vmatpush2.bf16.msra.mxu0 %v5214
    %5294 = vmatprep.mubr.bf16.mxu0 %v5055
    %5295 = vmatmul.mubr.bf16.gmra.mxu0 %v5054
    %v5296 = vpop.f32.mrf.mxu0
    %v5297 = vadd.f32 %v5097, %v5296
    %v5298 = vpop.f32.mrf.mxu0
    %v5299 = vadd.f32 %v5101, %v5298
    %v5300 = vpop.f32.mrf.mxu0
    %v5301 = vadd.f32 %v5097, %v5300
    %v5302 = vpop.f32.mrf.mxu0
    %v5303 = vadd.f32 %v5101, %v5302
    %5304 = vmatprep.mubr.bf16.mxu0 %v5057
    %5305 = vmatmul.mubr.bf16.gmra.mxu0 %v5056
    %v5306 = vpop.f32.mrf.mxu0
    %v5307 = vadd.f32 %v5097, %v5306
    %v5308 = vpop.f32.mrf.mxu0
    %v5309 = vadd.f32 %v5101, %v5308
    %v5310 = vpop.f32.mrf.mxu0
    %v5311 = vadd.f32 %v5097, %v5310
    %v5312 = vpop.f32.mrf.mxu0
    %v5313 = vadd.f32 %v5101, %v5312
    %5314 = vmatprep.mubr.bf16.mxu0 %v5059
    %5315 = vmatmul.mubr.bf16.gmra.mxu0 %v5058
    %v5316 = vpop.f32.mrf.mxu0
    %v5317 = vadd.f32 %v5097, %v5316
    %v5318 = vpop.f32.mrf.mxu0
    %v5319 = vadd.f32 %v5101, %v5318
    %v5320 = vpop.f32.mrf.mxu0
    %v5321 = vadd.f32 %v5097, %v5320
    %v5322 = vpop.f32.mrf.mxu0
    %v5323 = vadd.f32 %v5101, %v5322
    %5324 = vmatprep.mubr.bf16.mxu0 %v5061
    %5325 = vmatmul.mubr.bf16.gmra.mxu0 %v5060
    %v5326 = vpop.f32.mrf.mxu0
    %v5327 = vadd.f32 %v5097, %v5326
    %v5328 = vpop.f32.mrf.mxu0
    %v5329 = vadd.f32 %v5101, %v5328
    %v5330 = vpop.f32.mrf.mxu0
    %v5331 = vadd.f32 %v5097, %v5330
    %v5332 = vpop.f32.mrf.mxu0
    %v5333 = vadd.f32 %v5101, %v5332
    %5334 = vdwg.mxu0
    %v5335 = vadd.f32 %v5297, %v2827
    %v5336 = vadd.f32 %v5299, %v2828
    %v5337 = vadd.f32 %v5301, %v2829
    %v5338 = vadd.f32 %v5303, %v2830
    %v5339 = vadd.f32 %v5307, %v2831
    %v5340 = vadd.f32 %v5309, %v2832
    %v5341 = vadd.f32 %v5311, %v2833
    %v5342 = vadd.f32 %v5313, %v2834
    %v5343 = vadd.f32 %v5317, %v2835
    %v5344 = vadd.f32 %v5319, %v2836
    %v5345 = vadd.f32 %v5321, %v2837
    %v5346 = vadd.f32 %v5323, %v2838
    %v5347 = vadd.f32 %v5327, %v2839
    %v5348 = vadd.f32 %v5329, %v2840
    %v5349 = vadd.f32 %v5331, %v2841
    %v5350 = vadd.f32 %v5333, %v2842
    %v5351 = vadd.f32 %v5335, %v5336
    %5352 = vadd.xlane.f32.xlu0 %v5351
    %v5353 = vpop.xlane.xlu0 %5352
    %v5354 = vadd.f32 %v5337, %v5338
    %5355 = vadd.xlane.f32.xlu0 %v5354
    %v5356 = vpop.xlane.xlu0 %5355
    %v5357 = vadd.f32 %v5339, %v5340
    %5358 = vadd.xlane.f32.xlu0 %v5357
    %v5359 = vpop.xlane.xlu0 %5358
    %v5360 = vadd.f32 %v5341, %v5342
    %5361 = vadd.xlane.f32.xlu0 %v5360
    %v5362 = vpop.xlane.xlu0 %5361
    %v5363 = vadd.f32 %v5343, %v5344
    %5364 = vadd.xlane.f32.xlu0 %v5363
    %v5365 = vpop.xlane.xlu0 %5364
    %v5366 = vadd.f32 %v5345, %v5346
    %5367 = vadd.xlane.f32.xlu0 %v5366
    %v5368 = vpop.xlane.xlu0 %5367
    %v5369 = vadd.f32 %v5347, %v5348
    %5370 = vadd.xlane.f32.xlu0 %v5369
    %v5371 = vpop.xlane.xlu0 %5370
    %v5372 = vadd.f32 %v5349, %v5350
    %5373 = vadd.xlane.f32.xlu0 %v5372
    %v5374 = vpop.xlane.xlu0 %5373
    %v5375 = vmul.f32 %v5353, %v2690
    %v5376 = vmul.f32 %v5356, %v2690
    %v5377 = vmul.f32 %v5359, %v2690
    %v5378 = vmul.f32 %v5362, %v2690
    %v5379 = vmul.f32 %v5365, %v2690
    %v5380 = vmul.f32 %v5368, %v2690
    %v5381 = vmul.f32 %v5371, %v2690
    %v5382 = vmul.f32 %v5374, %v2690
    %v5383 = vsub.f32 %v5335, %v5375
    %v5384 = vsub.f32 %v5336, %v5375
    %v5385 = vsub.f32 %v5337, %v5376
    %v5386 = vsub.f32 %v5338, %v5376
    %v5387 = vsub.f32 %v5339, %v5377
    %v5388 = vsub.f32 %v5340, %v5377
    %v5389 = vsub.f32 %v5341, %v5378
    %v5390 = vsub.f32 %v5342, %v5378
    %v5391 = vsub.f32 %v5343, %v5379
    %v5392 = vsub.f32 %v5344, %v5379
    %v5393 = vsub.f32 %v5345, %v5380
    %v5394 = vsub.f32 %v5346, %v5380
    %v5395 = vsub.f32 %v5347, %v5381
    %v5396 = vsub.f32 %v5348, %v5381
    %v5397 = vsub.f32 %v5349, %v5382
    %v5398 = vsub.f32 %v5350, %v5382
    %v5399 = vmul.f32 %v5383, %v5383
    %v5400 = vmul.f32 %v5384, %v5384
    %v5401 = vmul.f32 %v5385, %v5385
    %v5402 = vmul.f32 %v5386, %v5386
    %v5403 = vmul.f32 %v5387, %v5387
    %v5404 = vmul.f32 %v5388, %v5388
    %v5405 = vmul.f32 %v5389, %v5389
    %v5406 = vmul.f32 %v5390, %v5390
    %v5407 = vmul.f32 %v5391, %v5391
    %v5408 = vmul.f32 %v5392, %v5392
    %v5409 = vmul.f32 %v5393, %v5393
    %v5410 = vmul.f32 %v5394, %v5394
    %v5411 = vmul.f32 %v5395, %v5395
    %v5412 = vmul.f32 %v5396, %v5396
    %v5413 = vmul.f32 %v5397, %v5397
    %v5414 = vmul.f32 %v5398, %v5398
    %v5415 = vadd.f32 %v5399, %v5400
    %5416 = vadd.xlane.f32.xlu0 %v5415
    %v5417 = vpop.xlane.xlu0 %5416
    %v5418 = vadd.f32 %v5401, %v5402
    %5419 = vadd.xlane.f32.xlu0 %v5418
    %v5420 = vpop.xlane.xlu0 %5419
    %v5421 = vadd.f32 %v5403, %v5404
    %5422 = vadd.xlane.f32.xlu0 %v5421
    %v5423 = vpop.xlane.xlu0 %5422
    %v5424 = vadd.f32 %v5405, %v5406
    %5425 = vadd.xlane.f32.xlu0 %v5424
    %v5426 = vpop.xlane.xlu0 %5425
    %v5427 = vadd.f32 %v5407, %v5408
    %5428 = vadd.xlane.f32.xlu0 %v5427
    %v5429 = vpop.xlane.xlu0 %5428
    %v5430 = vadd.f32 %v5409, %v5410
    %5431 = vadd.xlane.f32.xlu0 %v5430
    %v5432 = vpop.xlane.xlu0 %5431
    %v5433 = vadd.f32 %v5411, %v5412
    %5434 = vadd.xlane.f32.xlu0 %v5433
    %v5435 = vpop.xlane.xlu0 %5434
    %v5436 = vadd.f32 %v5413, %v5414
    %5437 = vadd.xlane.f32.xlu0 %v5436
    %v5438 = vpop.xlane.xlu0 %5437
    %v5439 = vmul.f32 %v5417, %v2690
    %v5440 = vmul.f32 %v5420, %v2690
    %v5441 = vmul.f32 %v5423, %v2690
    %v5442 = vmul.f32 %v5426, %v2690
    %v5443 = vmul.f32 %v5429, %v2690
    %v5444 = vmul.f32 %v5432, %v2690
    %v5445 = vmul.f32 %v5435, %v2690
    %v5446 = vmul.f32 %v5438, %v2690
    %v5447 = vadd.f32 %v5439, 1e-06
    %v5448 = vadd.f32 %v5440, 1e-06
    %v5449 = vadd.f32 %v5441, 1e-06
    %v5450 = vadd.f32 %v5442, 1e-06
    %v5451 = vadd.f32 %v5443, 1e-06
    %v5452 = vadd.f32 %v5444, 1e-06
    %v5453 = vadd.f32 %v5445, 1e-06
    %v5454 = vadd.f32 %v5446, 1e-06
    %v5455 = vrsqrt.pop %v5447
    %v5456 = vrsqrt.pop %v5448
    %v5457 = vrsqrt.pop %v5449
    %v5458 = vrsqrt.pop %v5450
    %v5459 = vrsqrt.pop %v5451
    %v5460 = vrsqrt.pop %v5452
    %v5461 = vrsqrt.pop %v5453
    %v5462 = vrsqrt.pop %v5454
    %v5463 = vmul.f32 %v5383, %v5455
    %v5464 = vmul.f32 %v5384, %v5455
    %v5465 = vmul.f32 %v5385, %v5456
    %v5466 = vmul.f32 %v5386, %v5456
    %v5467 = vmul.f32 %v5387, %v5457
    %v5468 = vmul.f32 %v5388, %v5457
    %v5469 = vmul.f32 %v5389, %v5458
    %v5470 = vmul.f32 %v5390, %v5458
    %v5471 = vmul.f32 %v5391, %v5459
    %v5472 = vmul.f32 %v5392, %v5459
    %v5473 = vmul.f32 %v5393, %v5460
    %v5474 = vmul.f32 %v5394, %v5460
    %v5475 = vmul.f32 %v5395, %v5461
    %v5476 = vmul.f32 %v5396, %v5461
    %v5477 = vmul.f32 %v5397, %v5462
    %v5478 = vmul.f32 %v5398, %v5462
    %v5479 = vlaneseq
    %v5480 = vshrl.u32 %v5479, 7
    %v5481 = vsub.s32 2, %v5480
    %v5482 = vrot.slane %v291, %v5481
    %v5483 = vlaneseq
    %v5484 = vshrl.u32 %v5483, 7
    %v5485 = vsub.s32 2, %v5484
    %v5486 = vrot.slane %v292, %v5485
    %v5487 = vmul.f32 %v5463, %v5482
    %v5488 = vmul.f32 %v5464, %v5486
    %v5489 = vmul.f32 %v5465, %v5482
    %v5490 = vmul.f32 %v5466, %v5486
    %v5491 = vmul.f32 %v5467, %v5482
    %v5492 = vmul.f32 %v5468, %v5486
    %v5493 = vmul.f32 %v5469, %v5482
    %v5494 = vmul.f32 %v5470, %v5486
    %v5495 = vmul.f32 %v5471, %v5482
    %v5496 = vmul.f32 %v5472, %v5486
    %v5497 = vmul.f32 %v5473, %v5482
    %v5498 = vmul.f32 %v5474, %v5486
    %v5499 = vmul.f32 %v5475, %v5482
    %v5500 = vmul.f32 %v5476, %v5486
    %v5501 = vmul.f32 %v5477, %v5482
    %v5502 = vmul.f32 %v5478, %v5486
    %v5503 = vlaneseq
    %v5504 = vshrl.u32 %v5503, 7
    %v5505 = vsub.s32 3, %v5504
    %v5506 = vrot.slane %v291, %v5505
    %v5507 = vlaneseq
    %v5508 = vshrl.u32 %v5507, 7
    %v5509 = vsub.s32 3, %v5508
    %v5510 = vrot.slane %v292, %v5509
    %v5511 = vadd.f32 %v5487, %v5506
    %v5512 = vadd.f32 %v5488, %v5510
    %v5513 = vadd.f32 %v5489, %v5506
    %v5514 = vadd.f32 %v5490, %v5510
    %v5515 = vadd.f32 %v5491, %v5506
    %v5516 = vadd.f32 %v5492, %v5510
    %v5517 = vadd.f32 %v5493, %v5506
    %v5518 = vadd.f32 %v5494, %v5510
    %v5519 = vadd.f32 %v5495, %v5506
    %v5520 = vadd.f32 %v5496, %v5510
    %v5521 = vadd.f32 %v5497, %v5506
    %v5522 = vadd.f32 %v5498, %v5510
    %v5523 = vadd.f32 %v5499, %v5506
    %v5524 = vadd.f32 %v5500, %v5510
    %v5525 = vadd.f32 %v5501, %v5506
    %v5526 = vadd.f32 %v5502, %v5510
    %v5527 = vpack.c.bf16 %v5513, %v5511
    %v5528 = vpack.c.bf16 %v5514, %v5512
    %v5529 = vpack.c.bf16 %v5517, %v5515
    %v5530 = vpack.c.bf16 %v5518, %v5516
    %v5531 = vpack.c.bf16 %v5521, %v5519
    %v5532 = vpack.c.bf16 %v5522, %v5520
    %v5533 = vpack.c.bf16 %v5525, %v5523
    %v5534 = vpack.c.bf16 %v5526, %v5524
    %v5535 = vld [vmem:[#allocation19] sm:$0xff]
    %v5536 = vld [vmem:[#allocation19 + $0x8] sm:$0xff]
    %v5537 = vld [vmem:[#allocation19 + $0x10] sm:$0xff]
    %v5538 = vld [vmem:[#allocation19 + $0x18] sm:$0xff]
    %v5539 = vld [vmem:[#allocation19 + $0x20] sm:$0xff]
    %v5540 = vld [vmem:[#allocation19 + $0x28] sm:$0xff]
    %v5541 = vld [vmem:[#allocation19 + $0x30] sm:$0xff]
    %v5542 = vld [vmem:[#allocation19 + $0x38] sm:$0xff]
    %v5543 = vld [vmem:[#allocation19 + $0x40] sm:$0xff]
    %v5544 = vld [vmem:[#allocation19 + $0x48] sm:$0xff]
    %v5545 = vld [vmem:[#allocation19 + $0x50] sm:$0xff]
    %v5546 = vld [vmem:[#allocation19 + $0x58] sm:$0xff]
    %v5547 = vld [vmem:[#allocation19 + $0x60] sm:$0xff]
    %v5548 = vld [vmem:[#allocation19 + $0x68] sm:$0xff]
    %v5549 = vld [vmem:[#allocation19 + $0x70] sm:$0xff]
    %v5550 = vld [vmem:[#allocation19 + $0x78] sm:$0xff]
    %v5551 = vld [vmem:[#allocation19 + $0x80] sm:$0xff]
    %v5552 = vld [vmem:[#allocation19 + $0x88] sm:$0xff]
    %v5553 = vld [vmem:[#allocation19 + $0x90] sm:$0xff]
    %v5554 = vld [vmem:[#allocation19 + $0x98] sm:$0xff]
    %v5555 = vld [vmem:[#allocation19 + $0xa0] sm:$0xff]
    %v5556 = vld [vmem:[#allocation19 + $0xa8] sm:$0xff]
    %v5557 = vld [vmem:[#allocation19 + $0xb0] sm:$0xff]
    %v5558 = vld [vmem:[#allocation19 + $0xb8] sm:$0xff]
    %v5559 = vld [vmem:[#allocation19 + $0xc0] sm:$0xff]
    %v5560 = vld [vmem:[#allocation19 + $0xc8] sm:$0xff]
    %v5561 = vld [vmem:[#allocation19 + $0xd0] sm:$0xff]
    %v5562 = vld [vmem:[#allocation19 + $0xd8] sm:$0xff]
    %v5563 = vld [vmem:[#allocation19 + $0xe0] sm:$0xff]
    %v5564 = vld [vmem:[#allocation19 + $0xe8] sm:$0xff]
    %v5565 = vld [vmem:[#allocation19 + $0xf0] sm:$0xff]
    %v5566 = vld [vmem:[#allocation19 + $0xf8] sm:$0xff]
    %v5567 = vld [vmem:[#allocation19 + $0x100] sm:$0xff]
    %v5568 = vld [vmem:[#allocation19 + $0x108] sm:$0xff]
    %v5569 = vld [vmem:[#allocation19 + $0x110] sm:$0xff]
    %v5570 = vld [vmem:[#allocation19 + $0x118] sm:$0xff]
    %v5571 = vld [vmem:[#allocation19 + $0x120] sm:$0xff]
    %v5572 = vld [vmem:[#allocation19 + $0x128] sm:$0xff]
    %v5573 = vld [vmem:[#allocation19 + $0x130] sm:$0xff]
    %v5574 = vld [vmem:[#allocation19 + $0x138] sm:$0xff]
    %v5575 = vld [vmem:[#allocation19 + $0x140] sm:$0xff]
    %v5576 = vld [vmem:[#allocation19 + $0x148] sm:$0xff]
    %v5577 = vld [vmem:[#allocation19 + $0x150] sm:$0xff]
    %v5578 = vld [vmem:[#allocation19 + $0x158] sm:$0xff]
    %v5579 = vld [vmem:[#allocation19 + $0x160] sm:$0xff]
    %v5580 = vld [vmem:[#allocation19 + $0x168] sm:$0xff]
    %v5581 = vld [vmem:[#allocation19 + $0x170] sm:$0xff]
    %v5582 = vld [vmem:[#allocation19 + $0x178] sm:$0xff]
    %v5583 = vld [vmem:[#allocation19 + $0x180] sm:$0xff]
    %v5584 = vld [vmem:[#allocation19 + $0x188] sm:$0xff]
    %v5585 = vld [vmem:[#allocation19 + $0x190] sm:$0xff]
    %v5586 = vld [vmem:[#allocation19 + $0x198] sm:$0xff]
    %v5587 = vld [vmem:[#allocation19 + $0x1a0] sm:$0xff]
    %v5588 = vld [vmem:[#allocation19 + $0x1a8] sm:$0xff]
    %v5589 = vld [vmem:[#allocation19 + $0x1b0] sm:$0xff]
    %v5590 = vld [vmem:[#allocation19 + $0x1b8] sm:$0xff]
    %v5591 = vld [vmem:[#allocation19 + $0x1c0] sm:$0xff]
    %v5592 = vld [vmem:[#allocation19 + $0x1c8] sm:$0xff]
    %v5593 = vld [vmem:[#allocation19 + $0x1d0] sm:$0xff]
    %v5594 = vld [vmem:[#allocation19 + $0x1d8] sm:$0xff]
    %v5595 = vld [vmem:[#allocation19 + $0x1e0] sm:$0xff]
    %v5596 = vld [vmem:[#allocation19 + $0x1e8] sm:$0xff]
    %v5597 = vld [vmem:[#allocation19 + $0x1f0] sm:$0xff]
    %v5598 = vld [vmem:[#allocation19 + $0x1f8] sm:$0xff]
    %v5599 = vld [vmem:[%s11] sm:$0xf]
    %v5601 = vlaneseq
    %v5602 = vshrl.u32 %v5601, 7
    %v5603 = vsub.s32 0, %v5602
    %v5604 = vrot.slane %v5599, %v5603
    %v5605 = vlaneseq
    %v5606 = vshrl.u32 %v5605, 7
    %v5607 = vsub.s32 1, %v5606
    %v5608 = vrot.slane %v5599, %v5607
    %v5609 = vlaneseq
    %v5610 = vshrl.u32 %v5609, 7
    %v5611 = vsub.s32 2, %v5610
    %v5612 = vrot.slane %v5599, %v5611
    %v5613 = vlaneseq
    %v5614 = vshrl.u32 %v5613, 7
    %v5615 = vsub.s32 3, %v5614
    %v5616 = vrot.slane %v5599, %v5615
    %v5685 = vunpack.c.l.b16 %v5535
    %v5686 = vunpack.c.h.b16 %v5535
    %v5687 = vunpack.c.l.b16 %v5536
    %v5688 = vunpack.c.h.b16 %v5536
    %v5689 = vunpack.c.l.b16 %v5537
    %v5690 = vunpack.c.h.b16 %v5537
    %v5691 = vunpack.c.l.b16 %v5538
    %v5692 = vunpack.c.h.b16 %v5538
    %v5693 = vunpack.c.l.b16 %v5539
    %v5694 = vunpack.c.h.b16 %v5539
    %v5695 = vunpack.c.l.b16 %v5540
    %v5696 = vunpack.c.h.b16 %v5540
    %v5697 = vunpack.c.l.b16 %v5541
    %v5698 = vunpack.c.h.b16 %v5541
    %v5699 = vunpack.c.l.b16 %v5542
    %v5700 = vunpack.c.h.b16 %v5542
    %v5701 = vunpack.c.l.b16 %v5543
    %v5702 = vunpack.c.h.b16 %v5543
    %v5703 = vunpack.c.l.b16 %v5544
    %v5704 = vunpack.c.h.b16 %v5544
    %v5705 = vunpack.c.l.b16 %v5545
    %v5706 = vunpack.c.h.b16 %v5545
    %v5707 = vunpack.c.l.b16 %v5546
    %v5708 = vunpack.c.h.b16 %v5546
    %v5709 = vunpack.c.l.b16 %v5547
    %v5710 = vunpack.c.h.b16 %v5547
    %v5711 = vunpack.c.l.b16 %v5548
    %v5712 = vunpack.c.h.b16 %v5548
    %v5713 = vunpack.c.l.b16 %v5549
    %v5714 = vunpack.c.h.b16 %v5549
    %v5715 = vunpack.c.l.b16 %v5550
    %v5716 = vunpack.c.h.b16 %v5550
    %v5717 = vunpack.c.l.b16 %v5551
    %v5718 = vunpack.c.h.b16 %v5551
    %v5719 = vunpack.c.l.b16 %v5552
    %v5720 = vunpack.c.h.b16 %v5552
    %v5721 = vunpack.c.l.b16 %v5553
    %v5722 = vunpack.c.h.b16 %v5553
    %v5723 = vunpack.c.l.b16 %v5554
    %v5724 = vunpack.c.h.b16 %v5554
    %v5725 = vunpack.c.l.b16 %v5555
    %v5726 = vunpack.c.h.b16 %v5555
    %v5727 = vunpack.c.l.b16 %v5556
    %v5728 = vunpack.c.h.b16 %v5556
    %v5729 = vunpack.c.l.b16 %v5557
    %v5730 = vunpack.c.h.b16 %v5557
    %v5731 = vunpack.c.l.b16 %v5558
    %v5732 = vunpack.c.h.b16 %v5558
    %v5733 = vunpack.c.l.b16 %v5559
    %v5734 = vunpack.c.h.b16 %v5559
    %v5735 = vunpack.c.l.b16 %v5560
    %v5736 = vunpack.c.h.b16 %v5560
    %v5737 = vunpack.c.l.b16 %v5561
    %v5738 = vunpack.c.h.b16 %v5561
    %v5739 = vunpack.c.l.b16 %v5562
    %v5740 = vunpack.c.h.b16 %v5562
    %v5741 = vunpack.c.l.b16 %v5563
    %v5742 = vunpack.c.h.b16 %v5563
    %v5743 = vunpack.c.l.b16 %v5564
    %v5744 = vunpack.c.h.b16 %v5564
    %v5745 = vunpack.c.l.b16 %v5565
    %v5746 = vunpack.c.h.b16 %v5565
    %v5747 = vunpack.c.l.b16 %v5566
    %v5748 = vunpack.c.h.b16 %v5566
    %v5749 = vunpack.c.l.b16 %v5567
    %v5750 = vunpack.c.h.b16 %v5567
    %v5751 = vunpack.c.l.b16 %v5568
    %v5752 = vunpack.c.h.b16 %v5568
    %v5753 = vunpack.c.l.b16 %v5569
    %v5754 = vunpack.c.h.b16 %v5569
    %v5755 = vunpack.c.l.b16 %v5570
    %v5756 = vunpack.c.h.b16 %v5570
    %v5757 = vunpack.c.l.b16 %v5571
    %v5758 = vunpack.c.h.b16 %v5571
    %v5759 = vunpack.c.l.b16 %v5572
    %v5760 = vunpack.c.h.b16 %v5572
    %v5761 = vunpack.c.l.b16 %v5573
    %v5762 = vunpack.c.h.b16 %v5573
    %v5763 = vunpack.c.l.b16 %v5574
    %v5764 = vunpack.c.h.b16 %v5574
    %v5765 = vunpack.c.l.b16 %v5575
    %v5766 = vunpack.c.h.b16 %v5575
    %v5767 = vunpack.c.l.b16 %v5576
    %v5768 = vunpack.c.h.b16 %v5576
    %v5769 = vunpack.c.l.b16 %v5577
    %v5770 = vunpack.c.h.b16 %v5577
    %v5771 = vunpack.c.l.b16 %v5578
    %v5772 = vunpack.c.h.b16 %v5578
    %v5773 = vunpack.c.l.b16 %v5579
    %v5774 = vunpack.c.h.b16 %v5579
    %v5775 = vunpack.c.l.b16 %v5580
    %v5776 = vunpack.c.h.b16 %v5580
    %v5777 = vunpack.c.l.b16 %v5581
    %v5778 = vunpack.c.h.b16 %v5581
    %v5779 = vunpack.c.l.b16 %v5582
    %v5780 = vunpack.c.h.b16 %v5582
    %v5781 = vunpack.c.l.b16 %v5583
    %v5782 = vunpack.c.h.b16 %v5583
    %v5783 = vunpack.c.l.b16 %v5584
    %v5784 = vunpack.c.h.b16 %v5584
    %v5785 = vunpack.c.l.b16 %v5585
    %v5786 = vunpack.c.h.b16 %v5585
    %v5787 = vunpack.c.l.b16 %v5586
    %v5788 = vunpack.c.h.b16 %v5586
    %v5789 = vunpack.c.l.b16 %v5587
    %v5790 = vunpack.c.h.b16 %v5587
    %v5791 = vunpack.c.l.b16 %v5588
    %v5792 = vunpack.c.h.b16 %v5588
    %v5793 = vunpack.c.l.b16 %v5589
    %v5794 = vunpack.c.h.b16 %v5589
    %v5795 = vunpack.c.l.b16 %v5590
    %v5796 = vunpack.c.h.b16 %v5590
    %v5797 = vunpack.c.l.b16 %v5591
    %v5798 = vunpack.c.h.b16 %v5591
    %v5799 = vunpack.c.l.b16 %v5592
    %v5800 = vunpack.c.h.b16 %v5592
    %v5801 = vunpack.c.l.b16 %v5593
    %v5802 = vunpack.c.h.b16 %v5593
    %v5803 = vunpack.c.l.b16 %v5594
    %v5804 = vunpack.c.h.b16 %v5594
    %v5805 = vunpack.c.l.b16 %v5595
    %v5806 = vunpack.c.h.b16 %v5595
    %v5807 = vunpack.c.l.b16 %v5596
    %v5808 = vunpack.c.h.b16 %v5596
    %v5809 = vunpack.c.l.b16 %v5597
    %v5810 = vunpack.c.h.b16 %v5597
    %v5811 = vunpack.c.l.b16 %v5598
    %v5812 = vunpack.c.h.b16 %v5598
    %v5813 = vpack.c.b16 %v5689, %v5685
    %v5814 = vpack.c.b16 %v5690, %v5686
    %v5815 = vpack.c.b16 %v5691, %v5687
    %v5816 = vpack.c.b16 %v5692, %v5688
    %v5817 = vpack.c.b16 %v5697, %v5693
    %v5818 = vpack.c.b16 %v5698, %v5694
    %v5819 = vpack.c.b16 %v5699, %v5695
    %v5820 = vpack.c.b16 %v5700, %v5696
    %v5821 = vpack.c.b16 %v5705, %v5701
    %v5822 = vpack.c.b16 %v5706, %v5702
    %v5823 = vpack.c.b16 %v5707, %v5703
    %v5824 = vpack.c.b16 %v5708, %v5704
    %v5825 = vpack.c.b16 %v5713, %v5709
    %v5826 = vpack.c.b16 %v5714, %v5710
    %v5827 = vpack.c.b16 %v5715, %v5711
    %v5828 = vpack.c.b16 %v5716, %v5712
    %v5829 = vpack.c.b16 %v5721, %v5717
    %v5830 = vpack.c.b16 %v5722, %v5718
    %v5831 = vpack.c.b16 %v5723, %v5719
    %v5832 = vpack.c.b16 %v5724, %v5720
    %v5833 = vpack.c.b16 %v5729, %v5725
    %v5834 = vpack.c.b16 %v5730, %v5726
    %v5835 = vpack.c.b16 %v5731, %v5727
    %v5836 = vpack.c.b16 %v5732, %v5728
    %v5837 = vpack.c.b16 %v5737, %v5733
    %v5838 = vpack.c.b16 %v5738, %v5734
    %v5839 = vpack.c.b16 %v5739, %v5735
    %v5840 = vpack.c.b16 %v5740, %v5736
    %v5841 = vpack.c.b16 %v5745, %v5741
    %v5842 = vpack.c.b16 %v5746, %v5742
    %v5843 = vpack.c.b16 %v5747, %v5743
    %v5844 = vpack.c.b16 %v5748, %v5744
    %v5845 = vpack.c.b16 %v5753, %v5749
    %v5846 = vpack.c.b16 %v5754, %v5750
    %v5847 = vpack.c.b16 %v5755, %v5751
    %v5848 = vpack.c.b16 %v5756, %v5752
    %v5849 = vpack.c.b16 %v5761, %v5757
    %v5850 = vpack.c.b16 %v5762, %v5758
    %v5851 = vpack.c.b16 %v5763, %v5759
    %v5852 = vpack.c.b16 %v5764, %v5760
    %v5853 = vpack.c.b16 %v5769, %v5765
    %v5854 = vpack.c.b16 %v5770, %v5766
    %v5855 = vpack.c.b16 %v5771, %v5767
    %v5856 = vpack.c.b16 %v5772, %v5768
    %v5857 = vpack.c.b16 %v5777, %v5773
    %v5858 = vpack.c.b16 %v5778, %v5774
    %v5859 = vpack.c.b16 %v5779, %v5775
    %v5860 = vpack.c.b16 %v5780, %v5776
    %v5861 = vpack.c.b16 %v5785, %v5781
    %v5862 = vpack.c.b16 %v5786, %v5782
    %v5863 = vpack.c.b16 %v5787, %v5783
    %v5864 = vpack.c.b16 %v5788, %v5784
    %v5865 = vpack.c.b16 %v5793, %v5789
    %v5866 = vpack.c.b16 %v5794, %v5790
    %v5867 = vpack.c.b16 %v5795, %v5791
    %v5868 = vpack.c.b16 %v5796, %v5792
    %v5869 = vpack.c.b16 %v5801, %v5797
    %v5870 = vpack.c.b16 %v5802, %v5798
    %v5871 = vpack.c.b16 %v5803, %v5799
    %v5872 = vpack.c.b16 %v5804, %v5800
    %v5873 = vpack.c.b16 %v5809, %v5805
    %v5874 = vpack.c.b16 %v5810, %v5806
    %v5875 = vpack.c.b16 %v5811, %v5807
    %v5876 = vpack.c.b16 %v5812, %v5808
    %5941 = vmatprep.subr.bf16.mxu0 %v5842
    %5942 = vmatpush1.bf16.msra.mxu0 %v5841
    %5943 = vmatprep.subr.bf16.mxu0 %v5838
    %5944 = vmatpush1.bf16.msra.mxu0 %v5837
    %5945 = vmatprep.subr.bf16.mxu0 %v5834
    %5946 = vmatpush1.bf16.msra.mxu0 %v5833
    %5947 = vmatprep.subr.bf16.mxu0 %v5830
    %5948 = vmatpush1.bf16.msra.mxu0 %v5829
    %5949 = vmatprep.subr.bf16.mxu0 %v5826
    %5950 = vmatpush1.bf16.msra.mxu0 %v5825
    %5951 = vmatprep.subr.bf16.mxu0 %v5822
    %5952 = vmatpush1.bf16.msra.mxu0 %v5821
    %5953 = vmatprep.subr.bf16.mxu0 %v5818
    %5954 = vmatpush1.bf16.msra.mxu0 %v5817
    %5955 = vmatprep.subr.bf16.mxu0 %v5814
    %5956 = vmatpush1.bf16.msra.mxu0 %v5813
    %5957 = vmatprep.subr.bf16.mxu0 %v5874
    %5958 = vmatpush2.bf16.msra.mxu0 %v5873
    %5959 = vmatprep.subr.bf16.mxu0 %v5870
    %5960 = vmatpush2.bf16.msra.mxu0 %v5869
    %5961 = vmatprep.subr.bf16.mxu0 %v5866
    %5962 = vmatpush2.bf16.msra.mxu0 %v5865
    %5963 = vmatprep.subr.bf16.mxu0 %v5862
    %5964 = vmatpush2.bf16.msra.mxu0 %v5861
    %5965 = vmatprep.subr.bf16.mxu0 %v5858
    %5966 = vmatpush2.bf16.msra.mxu0 %v5857
    %5967 = vmatprep.subr.bf16.mxu0 %v5854
    %5968 = vmatpush2.bf16.msra.mxu0 %v5853
    %5969 = vmatprep.subr.bf16.mxu0 %v5850
    %5970 = vmatpush2.bf16.msra.mxu0 %v5849
    %5971 = vmatprep.subr.bf16.mxu0 %v5846
    %5972 = vmatpush2.bf16.msra.mxu0 %v5845
    %5973 = vmatprep.mubr.bf16.mxu0 %v5528
    %5974 = vmatmul.mubr.bf16.gmra.mxu0 %v5527
    %v5975 = vpop.f32.mrf.mxu0
    %v5976 = vadd.f32 %v5604, %v5975
    %v5977 = vpop.f32.mrf.mxu0
    %v5978 = vadd.f32 %v5608, %v5977
    %v5979 = vpop.f32.mrf.mxu0
    %v5980 = vadd.f32 %v5604, %v5979
    %v5981 = vpop.f32.mrf.mxu0
    %v5982 = vadd.f32 %v5608, %v5981
    %5983 = vmatprep.mubr.bf16.mxu0 %v5530
    %5984 = vmatmul.mubr.bf16.gmra.mxu0 %v5529
    %v5985 = vpop.f32.mrf.mxu0
    %v5986 = vadd.f32 %v5604, %v5985
    %v5987 = vpop.f32.mrf.mxu0
    %v5988 = vadd.f32 %v5608, %v5987
    %v5989 = vpop.f32.mrf.mxu0
    %v5990 = vadd.f32 %v5604, %v5989
    %v5991 = vpop.f32.mrf.mxu0
    %v5992 = vadd.f32 %v5608, %v5991
    %5993 = vmatprep.mubr.bf16.mxu0 %v5532
    %5994 = vmatmul.mubr.bf16.gmra.mxu0 %v5531
    %v5995 = vpop.f32.mrf.mxu0
    %v5996 = vadd.f32 %v5604, %v5995
    %v5997 = vpop.f32.mrf.mxu0
    %v5998 = vadd.f32 %v5608, %v5997
    %v5999 = vpop.f32.mrf.mxu0
    %v6000 = vadd.f32 %v5604, %v5999
    %v6001 = vpop.f32.mrf.mxu0
    %v6002 = vadd.f32 %v5608, %v6001
    %6003 = vmatprep.mubr.bf16.mxu0 %v5534
    %6004 = vmatmul.mubr.bf16.gmra.mxu0 %v5533
    %v6005 = vpop.f32.mrf.mxu0
    %v6006 = vadd.f32 %v5604, %v6005
    %v6007 = vpop.f32.mrf.mxu0
    %v6008 = vadd.f32 %v5608, %v6007
    %v6009 = vpop.f32.mrf.mxu0
    %v6010 = vadd.f32 %v5604, %v6009
    %v6011 = vpop.f32.mrf.mxu0
    %v6012 = vadd.f32 %v5608, %v6011
    %6013 = vdwg.mxu0
    %6014 = vmatprep.subr.bf16.mxu0 %v5844
    %6015 = vmatpush1.bf16.msra.mxu0 %v5843
    %6016 = vmatprep.subr.bf16.mxu0 %v5840
    %6017 = vmatpush1.bf16.msra.mxu0 %v5839
    %6018 = vmatprep.subr.bf16.mxu0 %v5836
    %6019 = vmatpush1.bf16.msra.mxu0 %v5835
    %6020 = vmatprep.subr.bf16.mxu0 %v5832
    %6021 = vmatpush1.bf16.msra.mxu0 %v5831
    %6022 = vmatprep.subr.bf16.mxu0 %v5828
    %6023 = vmatpush1.bf16.msra.mxu0 %v5827
    %6024 = vmatprep.subr.bf16.mxu0 %v5824
    %6025 = vmatpush1.bf16.msra.mxu0 %v5823
    %6026 = vmatprep.subr.bf16.mxu0 %v5820
    %6027 = vmatpush1.bf16.msra.mxu0 %v5819
    %6028 = vmatprep.subr.bf16.mxu0 %v5816
    %6029 = vmatpush1.bf16.msra.mxu0 %v5815
    %6030 = vmatprep.subr.bf16.mxu0 %v5876
    %6031 = vmatpush2.bf16.msra.mxu0 %v5875
    %6032 = vmatprep.subr.bf16.mxu0 %v5872
    %6033 = vmatpush2.bf16.msra.mxu0 %v5871
    %6034 = vmatprep.subr.bf16.mxu0 %v5868
    %6035 = vmatpush2.bf16.msra.mxu0 %v5867
    %6036 = vmatprep.subr.bf16.mxu0 %v5864
    %6037 = vmatpush2.bf16.msra.mxu0 %v5863
    %6038 = vmatprep.subr.bf16.mxu0 %v5860
    %6039 = vmatpush2.bf16.msra.mxu0 %v5859
    %6040 = vmatprep.subr.bf16.mxu0 %v5856
    %6041 = vmatpush2.bf16.msra.mxu0 %v5855
    %6042 = vmatprep.subr.bf16.mxu0 %v5852
    %6043 = vmatpush2.bf16.msra.mxu0 %v5851
    %6044 = vmatprep.subr.bf16.mxu0 %v5848
    %6045 = vmatpush2.bf16.msra.mxu0 %v5847
    %6046 = vmatprep.mubr.bf16.mxu0 %v5528
    %6047 = vmatmul.mubr.bf16.gmra.mxu0 %v5527
    %v6048 = vpop.f32.mrf.mxu0
    %v6049 = vadd.f32 %v5612, %v6048
    %v6050 = vpop.f32.mrf.mxu0
    %v6051 = vadd.f32 %v5616, %v6050
    %v6052 = vpop.f32.mrf.mxu0
    %v6053 = vadd.f32 %v5612, %v6052
    %v6054 = vpop.f32.mrf.mxu0
    %v6055 = vadd.f32 %v5616, %v6054
    %6056 = vmatprep.mubr.bf16.mxu0 %v5530
    %6057 = vmatmul.mubr.bf16.gmra.mxu0 %v5529
    %v6058 = vpop.f32.mrf.mxu0
    %v6059 = vadd.f32 %v5612, %v6058
    %v6060 = vpop.f32.mrf.mxu0
    %v6061 = vadd.f32 %v5616, %v6060
    %v6062 = vpop.f32.mrf.mxu0
    %v6063 = vadd.f32 %v5612, %v6062
    %v6064 = vpop.f32.mrf.mxu0
    %v6065 = vadd.f32 %v5616, %v6064
    %6066 = vmatprep.mubr.bf16.mxu0 %v5532
    %6067 = vmatmul.mubr.bf16.gmra.mxu0 %v5531
    %v6068 = vpop.f32.mrf.mxu0
    %v6069 = vadd.f32 %v5612, %v6068
    %v6070 = vpop.f32.mrf.mxu0
    %v6071 = vadd.f32 %v5616, %v6070
    %v6072 = vpop.f32.mrf.mxu0
    %v6073 = vadd.f32 %v5612, %v6072
    %v6074 = vpop.f32.mrf.mxu0
    %v6075 = vadd.f32 %v5616, %v6074
    %6076 = vmatprep.mubr.bf16.mxu0 %v5534
    %6077 = vmatmul.mubr.bf16.gmra.mxu0 %v5533
    %v6078 = vpop.f32.mrf.mxu0
    %v6079 = vadd.f32 %v5612, %v6078
    %v6080 = vpop.f32.mrf.mxu0
    %v6081 = vadd.f32 %v5616, %v6080
    %v6082 = vpop.f32.mrf.mxu0
    %v6083 = vadd.f32 %v5612, %v6082
    %v6084 = vpop.f32.mrf.mxu0
    %v6085 = vadd.f32 %v5616, %v6084
    %6086 = vdwg.mxu0
    %v6087 = vmul.f32 %v5976, 0.5
    %v6088 = vmul.f32 %v5978, 0.5
    %v6089 = vmul.f32 %v6049, 0.5
    %v6090 = vmul.f32 %v6051, 0.5
    %v6091 = vmul.f32 %v5980, 0.5
    %v6092 = vmul.f32 %v5982, 0.5
    %v6093 = vmul.f32 %v6053, 0.5
    %v6094 = vmul.f32 %v6055, 0.5
    %v6095 = vmul.f32 %v5986, 0.5
    %v6096 = vmul.f32 %v5988, 0.5
    %v6097 = vmul.f32 %v6059, 0.5
    %v6098 = vmul.f32 %v6061, 0.5
    %v6099 = vmul.f32 %v5990, 0.5
    %v6100 = vmul.f32 %v5992, 0.5
    %v6101 = vmul.f32 %v6063, 0.5
    %v6102 = vmul.f32 %v6065, 0.5
    %v6103 = vmul.f32 %v5996, 0.5
    %v6104 = vmul.f32 %v5998, 0.5
    %v6105 = vmul.f32 %v6069, 0.5
    %v6106 = vmul.f32 %v6071, 0.5
    %v6107 = vmul.f32 %v6000, 0.5
    %v6108 = vmul.f32 %v6002, 0.5
    %v6109 = vmul.f32 %v6073, 0.5
    %v6110 = vmul.f32 %v6075, 0.5
    %v6111 = vmul.f32 %v6006, 0.5
    %v6112 = vmul.f32 %v6008, 0.5
    %v6113 = vmul.f32 %v6079, 0.5
    %v6114 = vmul.f32 %v6081, 0.5
    %v6115 = vmul.f32 %v6010, 0.5
    %v6116 = vmul.f32 %v6012, 0.5
    %v6117 = vmul.f32 %v6083, 0.5
    %v6118 = vmul.f32 %v6085, 0.5
    %v6119 = vmul.f32 %v5976, 0.044715
    %v6120 = vmul.f32 %v5978, 0.044715
    %v6121 = vmul.f32 %v6049, 0.044715
    %v6122 = vmul.f32 %v6051, 0.044715
    %v6123 = vmul.f32 %v5980, 0.044715
    %v6124 = vmul.f32 %v5982, 0.044715
    %v6125 = vmul.f32 %v6053, 0.044715
    %v6126 = vmul.f32 %v6055, 0.044715
    %v6127 = vmul.f32 %v5986, 0.044715
    %v6128 = vmul.f32 %v5988, 0.044715
    %v6129 = vmul.f32 %v6059, 0.044715
    %v6130 = vmul.f32 %v6061, 0.044715
    %v6131 = vmul.f32 %v5990, 0.044715
    %v6132 = vmul.f32 %v5992, 0.044715
    %v6133 = vmul.f32 %v6063, 0.044715
    %v6134 = vmul.f32 %v6065, 0.044715
    %v6135 = vmul.f32 %v5996, 0.044715
    %v6136 = vmul.f32 %v5998, 0.044715
    %v6137 = vmul.f32 %v6069, 0.044715
    %v6138 = vmul.f32 %v6071, 0.044715
    %v6139 = vmul.f32 %v6000, 0.044715
    %v6140 = vmul.f32 %v6002, 0.044715
    %v6141 = vmul.f32 %v6073, 0.044715
    %v6142 = vmul.f32 %v6075, 0.044715
    %v6143 = vmul.f32 %v6006, 0.044715
    %v6144 = vmul.f32 %v6008, 0.044715
    %v6145 = vmul.f32 %v6079, 0.044715
    %v6146 = vmul.f32 %v6081, 0.044715
    %v6147 = vmul.f32 %v6010, 0.044715
    %v6148 = vmul.f32 %v6012, 0.044715
    %v6149 = vmul.f32 %v6083, 0.044715
    %v6150 = vmul.f32 %v6085, 0.044715
    %v6151 = vmul.f32 %v6119, %v5976
    %v6152 = vmul.f32 %v6120, %v5978
    %v6153 = vmul.f32 %v6121, %v6049
    %v6154 = vmul.f32 %v6122, %v6051
    %v6155 = vmul.f32 %v6123, %v5980
    %v6156 = vmul.f32 %v6124, %v5982
    %v6157 = vmul.f32 %v6125, %v6053
    %v6158 = vmul.f32 %v6126, %v6055
    %v6159 = vmul.f32 %v6127, %v5986
    %v6160 = vmul.f32 %v6128, %v5988
    %v6161 = vmul.f32 %v6129, %v6059
    %v6162 = vmul.f32 %v6130, %v6061
    %v6163 = vmul.f32 %v6131, %v5990
    %v6164 = vmul.f32 %v6132, %v5992
    %v6165 = vmul.f32 %v6133, %v6063
    %v6166 = vmul.f32 %v6134, %v6065
    %v6167 = vmul.f32 %v6135, %v5996
    %v6168 = vmul.f32 %v6136, %v5998
    %v6169 = vmul.f32 %v6137, %v6069
    %v6170 = vmul.f32 %v6138, %v6071
    %v6171 = vmul.f32 %v6139, %v6000
    %v6172 = vmul.f32 %v6140, %v6002
    %v6173 = vmul.f32 %v6141, %v6073
    %v6174 = vmul.f32 %v6142, %v6075
    %v6175 = vmul.f32 %v6143, %v6006
    %v6176 = vmul.f32 %v6144, %v6008
    %v6177 = vmul.f32 %v6145, %v6079
    %v6178 = vmul.f32 %v6146, %v6081
    %v6179 = vmul.f32 %v6147, %v6010
    %v6180 = vmul.f32 %v6148, %v6012
    %v6181 = vmul.f32 %v6149, %v6083
    %v6182 = vmul.f32 %v6150, %v6085
    %v6183 = vmul.f32 %v6151, %v5976
    %v6184 = vmul.f32 %v6152, %v5978
    %v6185 = vmul.f32 %v6153, %v6049
    %v6186 = vmul.f32 %v6154, %v6051
    %v6187 = vmul.f32 %v6155, %v5980
    %v6188 = vmul.f32 %v6156, %v5982
    %v6189 = vmul.f32 %v6157, %v6053
    %v6190 = vmul.f32 %v6158, %v6055
    %v6191 = vmul.f32 %v6159, %v5986
    %v6192 = vmul.f32 %v6160, %v5988
    %v6193 = vmul.f32 %v6161, %v6059
    %v6194 = vmul.f32 %v6162, %v6061
    %v6195 = vmul.f32 %v6163, %v5990
    %v6196 = vmul.f32 %v6164, %v5992
    %v6197 = vmul.f32 %v6165, %v6063
    %v6198 = vmul.f32 %v6166, %v6065
    %v6199 = vmul.f32 %v6167, %v5996
    %v6200 = vmul.f32 %v6168, %v5998
    %v6201 = vmul.f32 %v6169, %v6069
    %v6202 = vmul.f32 %v6170, %v6071
    %v6203 = vmul.f32 %v6171, %v6000
    %v6204 = vmul.f32 %v6172, %v6002
    %v6205 = vmul.f32 %v6173, %v6073
    %v6206 = vmul.f32 %v6174, %v6075
    %v6207 = vmul.f32 %v6175, %v6006
    %v6208 = vmul.f32 %v6176, %v6008
    %v6209 = vmul.f32 %v6177, %v6079
    %v6210 = vmul.f32 %v6178, %v6081
    %v6211 = vmul.f32 %v6179, %v6010
    %v6212 = vmul.f32 %v6180, %v6012
    %v6213 = vmul.f32 %v6181, %v6083
    %v6214 = vmul.f32 %v6182, %v6085
    %v6215 = vadd.f32 %v5976, %v6183
    %v6216 = vadd.f32 %v5978, %v6184
    %v6217 = vadd.f32 %v6049, %v6185
    %v6218 = vadd.f32 %v6051, %v6186
    %v6219 = vadd.f32 %v5980, %v6187
    %v6220 = vadd.f32 %v5982, %v6188
    %v6221 = vadd.f32 %v6053, %v6189
    %v6222 = vadd.f32 %v6055, %v6190
    %v6223 = vadd.f32 %v5986, %v6191
    %v6224 = vadd.f32 %v5988, %v6192
    %v6225 = vadd.f32 %v6059, %v6193
    %v6226 = vadd.f32 %v6061, %v6194
    %v6227 = vadd.f32 %v5990, %v6195
    %v6228 = vadd.f32 %v5992, %v6196
    %v6229 = vadd.f32 %v6063, %v6197
    %v6230 = vadd.f32 %v6065, %v6198
    %v6231 = vadd.f32 %v5996, %v6199
    %v6232 = vadd.f32 %v5998, %v6200
    %v6233 = vadd.f32 %v6069, %v6201
    %v6234 = vadd.f32 %v6071, %v6202
    %v6235 = vadd.f32 %v6000, %v6203
    %v6236 = vadd.f32 %v6002, %v6204
    %v6237 = vadd.f32 %v6073, %v6205
    %v6238 = vadd.f32 %v6075, %v6206
    %v6239 = vadd.f32 %v6006, %v6207
    %v6240 = vadd.f32 %v6008, %v6208
    %v6241 = vadd.f32 %v6079, %v6209
    %v6242 = vadd.f32 %v6081, %v6210
    %v6243 = vadd.f32 %v6010, %v6211
    %v6244 = vadd.f32 %v6012, %v6212
    %v6245 = vadd.f32 %v6083, %v6213
    %v6246 = vadd.f32 %v6085, %v6214
    %v6247 = vmul.f32 %v6215, 0.7978846
    %v6248 = vmul.f32 %v6216, 0.7978846
    %v6249 = vmul.f32 %v6217, 0.7978846
    %v6250 = vmul.f32 %v6218, 0.7978846
    %v6251 = vmul.f32 %v6219, 0.7978846
    %v6252 = vmul.f32 %v6220, 0.7978846
    %v6253 = vmul.f32 %v6221, 0.7978846
    %v6254 = vmul.f32 %v6222, 0.7978846
    %v6255 = vmul.f32 %v6223, 0.7978846
    %v6256 = vmul.f32 %v6224, 0.7978846
    %v6257 = vmul.f32 %v6225, 0.7978846
    %v6258 = vmul.f32 %v6226, 0.7978846
    %v6259 = vmul.f32 %v6227, 0.7978846
    %v6260 = vmul.f32 %v6228, 0.7978846
    %v6261 = vmul.f32 %v6229, 0.7978846
    %v6262 = vmul.f32 %v6230, 0.7978846
    %v6263 = vmul.f32 %v6231, 0.7978846
    %v6264 = vmul.f32 %v6232, 0.7978846
    %v6265 = vmul.f32 %v6233, 0.7978846
    %v6266 = vmul.f32 %v6234, 0.7978846
    %v6267 = vmul.f32 %v6235, 0.7978846
    %v6268 = vmul.f32 %v6236, 0.7978846
    %v6269 = vmul.f32 %v6237, 0.7978846
    %v6270 = vmul.f32 %v6238, 0.7978846
    %v6271 = vmul.f32 %v6239, 0.7978846
    %v6272 = vmul.f32 %v6240, 0.7978846
    %v6273 = vmul.f32 %v6241, 0.7978846
    %v6274 = vmul.f32 %v6242, 0.7978846
    %v6275 = vmul.f32 %v6243, 0.7978846
    %v6276 = vmul.f32 %v6244, 0.7978846
    %v6277 = vmul.f32 %v6245, 0.7978846
    %v6278 = vmul.f32 %v6246, 0.7978846
    %v6279 = vtanh.pop %v6247
    %v6280 = vtanh.pop %v6248
    %v6281 = vtanh.pop %v6249
    %v6282 = vtanh.pop %v6250
    %v6283 = vtanh.pop %v6251
    %v6284 = vtanh.pop %v6252
    %v6285 = vtanh.pop %v6253
    %v6286 = vtanh.pop %v6254
    %v6287 = vtanh.pop %v6255
    %v6288 = vtanh.pop %v6256
    %v6289 = vtanh.pop %v6257
    %v6290 = vtanh.pop %v6258
    %v6291 = vtanh.pop %v6259
    %v6292 = vtanh.pop %v6260
    %v6293 = vtanh.pop %v6261
    %v6294 = vtanh.pop %v6262
    %v6295 = vtanh.pop %v6263
    %v6296 = vtanh.pop %v6264
    %v6297 = vtanh.pop %v6265
    %v6298 = vtanh.pop %v6266
    %v6299 = vtanh.pop %v6267
    %v6300 = vtanh.pop %v6268
    %v6301 = vtanh.pop %v6269
    %v6302 = vtanh.pop %v6270
    %v6303 = vtanh.pop %v6271
    %v6304 = vtanh.pop %v6272
    %v6305 = vtanh.pop %v6273
    %v6306 = vtanh.pop %v6274
    %v6307 = vtanh.pop %v6275
    %v6308 = vtanh.pop %v6276
    %v6309 = vtanh.pop %v6277
    %v6310 = vtanh.pop %v6278
    %v6311 = vadd.f32 %v6279, 1.0
    %v6312 = vadd.f32 %v6280, 1.0
    %v6313 = vadd.f32 %v6281, 1.0
    %v6314 = vadd.f32 %v6282, 1.0
    %v6315 = vadd.f32 %v6283, 1.0
    %v6316 = vadd.f32 %v6284, 1.0
    %v6317 = vadd.f32 %v6285, 1.0
    %v6318 = vadd.f32 %v6286, 1.0
    %v6319 = vadd.f32 %v6287, 1.0
    %v6320 = vadd.f32 %v6288, 1.0
    %v6321 = vadd.f32 %v6289, 1.0
    %v6322 = vadd.f32 %v6290, 1.0
    %v6323 = vadd.f32 %v6291, 1.0
    %v6324 = vadd.f32 %v6292, 1.0
    %v6325 = vadd.f32 %v6293, 1.0
    %v6326 = vadd.f32 %v6294, 1.0
    %v6327 = vadd.f32 %v6295, 1.0
    %v6328 = vadd.f32 %v6296, 1.0
    %v6329 = vadd.f32 %v6297, 1.0
    %v6330 = vadd.f32 %v6298, 1.0
    %v6331 = vadd.f32 %v6299, 1.0
    %v6332 = vadd.f32 %v6300, 1.0
    %v6333 = vadd.f32 %v6301, 1.0
    %v6334 = vadd.f32 %v6302, 1.0
    %v6335 = vadd.f32 %v6303, 1.0
    %v6336 = vadd.f32 %v6304, 1.0
    %v6337 = vadd.f32 %v6305, 1.0
    %v6338 = vadd.f32 %v6306, 1.0
    %v6339 = vadd.f32 %v6307, 1.0
    %v6340 = vadd.f32 %v6308, 1.0
    %v6341 = vadd.f32 %v6309, 1.0
    %v6342 = vadd.f32 %v6310, 1.0
    %v6343 = vmul.f32 %v6087, %v6311
    %v6344 = vmul.f32 %v6088, %v6312
    %v6345 = vmul.f32 %v6089, %v6313
    %v6346 = vmul.f32 %v6090, %v6314
    %v6347 = vmul.f32 %v6091, %v6315
    %v6348 = vmul.f32 %v6092, %v6316
    %v6349 = vmul.f32 %v6093, %v6317
    %v6350 = vmul.f32 %v6094, %v6318
    %v6351 = vmul.f32 %v6095, %v6319
    %v6352 = vmul.f32 %v6096, %v6320
    %v6353 = vmul.f32 %v6097, %v6321
    %v6354 = vmul.f32 %v6098, %v6322
    %v6355 = vmul.f32 %v6099, %v6323
    %v6356 = vmul.f32 %v6100, %v6324
    %v6357 = vmul.f32 %v6101, %v6325
    %v6358 = vmul.f32 %v6102, %v6326
    %v6359 = vmul.f32 %v6103, %v6327
    %v6360 = vmul.f32 %v6104, %v6328
    %v6361 = vmul.f32 %v6105, %v6329
    %v6362 = vmul.f32 %v6106, %v6330
    %v6363 = vmul.f32 %v6107, %v6331
    %v6364 = vmul.f32 %v6108, %v6332
    %v6365 = vmul.f32 %v6109, %v6333
    %v6366 = vmul.f32 %v6110, %v6334
    %v6367 = vmul.f32 %v6111, %v6335
    %v6368 = vmul.f32 %v6112, %v6336
    %v6369 = vmul.f32 %v6113, %v6337
    %v6370 = vmul.f32 %v6114, %v6338
    %v6371 = vmul.f32 %v6115, %v6339
    %v6372 = vmul.f32 %v6116, %v6340
    %v6373 = vmul.f32 %v6117, %v6341
    %v6374 = vmul.f32 %v6118, %v6342
    %v6375 = vpack.c.bf16 %v6347, %v6343
    %v6376 = vpack.c.bf16 %v6348, %v6344
    %v6377 = vpack.c.bf16 %v6349, %v6345
    %v6378 = vpack.c.bf16 %v6350, %v6346
    %v6379 = vpack.c.bf16 %v6355, %v6351
    %v6380 = vpack.c.bf16 %v6356, %v6352
    %v6381 = vpack.c.bf16 %v6357, %v6353
    %v6382 = vpack.c.bf16 %v6358, %v6354
    %v6383 = vpack.c.bf16 %v6363, %v6359
    %v6384 = vpack.c.bf16 %v6364, %v6360
    %v6385 = vpack.c.bf16 %v6365, %v6361
    %v6386 = vpack.c.bf16 %v6366, %v6362
    %v6387 = vpack.c.bf16 %v6371, %v6367
    %v6388 = vpack.c.bf16 %v6372, %v6368
    %v6389 = vpack.c.bf16 %v6373, %v6369
    %v6390 = vpack.c.bf16 %v6374, %v6370
    %v6391 = vld [vmem:[#allocation20] sm:$0xff]
    %v6392 = vld [vmem:[#allocation20 + $0x8] sm:$0xff]
    %v6393 = vld [vmem:[#allocation20 + $0x10] sm:$0xff]
    %v6394 = vld [vmem:[#allocation20 + $0x18] sm:$0xff]
    %v6395 = vld [vmem:[#allocation20 + $0x20] sm:$0xff]
    %v6396 = vld [vmem:[#allocation20 + $0x28] sm:$0xff]
    %v6397 = vld [vmem:[#allocation20 + $0x30] sm:$0xff]
    %v6398 = vld [vmem:[#allocation20 + $0x38] sm:$0xff]
    %v6399 = vld [vmem:[#allocation20 + $0x40] sm:$0xff]
    %v6400 = vld [vmem:[#allocation20 + $0x48] sm:$0xff]
    %v6401 = vld [vmem:[#allocation20 + $0x50] sm:$0xff]
    %v6402 = vld [vmem:[#allocation20 + $0x58] sm:$0xff]
    %v6403 = vld [vmem:[#allocation20 + $0x60] sm:$0xff]
    %v6404 = vld [vmem:[#allocation20 + $0x68] sm:$0xff]
    %v6405 = vld [vmem:[#allocation20 + $0x70] sm:$0xff]
    %v6406 = vld [vmem:[#allocation20 + $0x78] sm:$0xff]
    %v6407 = vld [vmem:[#allocation20 + $0x80] sm:$0xff]
    %v6408 = vld [vmem:[#allocation20 + $0x88] sm:$0xff]
    %v6409 = vld [vmem:[#allocation20 + $0x90] sm:$0xff]
    %v6410 = vld [vmem:[#allocation20 + $0x98] sm:$0xff]
    %v6411 = vld [vmem:[#allocation20 + $0xa0] sm:$0xff]
    %v6412 = vld [vmem:[#allocation20 + $0xa8] sm:$0xff]
    %v6413 = vld [vmem:[#allocation20 + $0xb0] sm:$0xff]
    %v6414 = vld [vmem:[#allocation20 + $0xb8] sm:$0xff]
    %v6415 = vld [vmem:[#allocation20 + $0xc0] sm:$0xff]
    %v6416 = vld [vmem:[#allocation20 + $0xc8] sm:$0xff]
    %v6417 = vld [vmem:[#allocation20 + $0xd0] sm:$0xff]
    %v6418 = vld [vmem:[#allocation20 + $0xd8] sm:$0xff]
    %v6419 = vld [vmem:[#allocation20 + $0xe0] sm:$0xff]
    %v6420 = vld [vmem:[#allocation20 + $0xe8] sm:$0xff]
    %v6421 = vld [vmem:[#allocation20 + $0xf0] sm:$0xff]
    %v6422 = vld [vmem:[#allocation20 + $0xf8] sm:$0xff]
    %v6423 = vld [vmem:[#allocation20 + $0x100] sm:$0xff]
    %v6424 = vld [vmem:[#allocation20 + $0x108] sm:$0xff]
    %v6425 = vld [vmem:[#allocation20 + $0x110] sm:$0xff]
    %v6426 = vld [vmem:[#allocation20 + $0x118] sm:$0xff]
    %v6427 = vld [vmem:[#allocation20 + $0x120] sm:$0xff]
    %v6428 = vld [vmem:[#allocation20 + $0x128] sm:$0xff]
    %v6429 = vld [vmem:[#allocation20 + $0x130] sm:$0xff]
    %v6430 = vld [vmem:[#allocation20 + $0x138] sm:$0xff]
    %v6431 = vld [vmem:[#allocation20 + $0x140] sm:$0xff]
    %v6432 = vld [vmem:[#allocation20 + $0x148] sm:$0xff]
    %v6433 = vld [vmem:[#allocation20 + $0x150] sm:$0xff]
    %v6434 = vld [vmem:[#allocation20 + $0x158] sm:$0xff]
    %v6435 = vld [vmem:[#allocation20 + $0x160] sm:$0xff]
    %v6436 = vld [vmem:[#allocation20 + $0x168] sm:$0xff]
    %v6437 = vld [vmem:[#allocation20 + $0x170] sm:$0xff]
    %v6438 = vld [vmem:[#allocation20 + $0x178] sm:$0xff]
    %v6439 = vld [vmem:[#allocation20 + $0x180] sm:$0xff]
    %v6440 = vld [vmem:[#allocation20 + $0x188] sm:$0xff]
    %v6441 = vld [vmem:[#allocation20 + $0x190] sm:$0xff]
    %v6442 = vld [vmem:[#allocation20 + $0x198] sm:$0xff]
    %v6443 = vld [vmem:[#allocation20 + $0x1a0] sm:$0xff]
    %v6444 = vld [vmem:[#allocation20 + $0x1a8] sm:$0xff]
    %v6445 = vld [vmem:[#allocation20 + $0x1b0] sm:$0xff]
    %v6446 = vld [vmem:[#allocation20 + $0x1b8] sm:$0xff]
    %v6447 = vld [vmem:[#allocation20 + $0x1c0] sm:$0xff]
    %v6448 = vld [vmem:[#allocation20 + $0x1c8] sm:$0xff]
    %v6449 = vld [vmem:[#allocation20 + $0x1d0] sm:$0xff]
    %v6450 = vld [vmem:[#allocation20 + $0x1d8] sm:$0xff]
    %v6451 = vld [vmem:[#allocation20 + $0x1e0] sm:$0xff]
    %v6452 = vld [vmem:[#allocation20 + $0x1e8] sm:$0xff]
    %v6453 = vld [vmem:[#allocation20 + $0x1f0] sm:$0xff]
    %v6454 = vld [vmem:[#allocation20 + $0x1f8] sm:$0xff]
    %v6455 = vlaneseq
    %v6456 = vshrl.u32 %v6455, 7
    %v6457 = vsub.s32 6, %v6456
    %v6458 = vrot.slane %v291, %v6457
    %v6459 = vlaneseq
    %v6460 = vshrl.u32 %v6459, 7
    %v6461 = vsub.s32 6, %v6460
    %v6462 = vrot.slane %v292, %v6461
    %v6527 = vunpack.c.l.b16 %v6391
    %v6528 = vunpack.c.h.b16 %v6391
    %v6529 = vunpack.c.l.b16 %v6392
    %v6530 = vunpack.c.h.b16 %v6392
    %v6531 = vunpack.c.l.b16 %v6393
    %v6532 = vunpack.c.h.b16 %v6393
    %v6533 = vunpack.c.l.b16 %v6394
    %v6534 = vunpack.c.h.b16 %v6394
    %v6535 = vunpack.c.l.b16 %v6395
    %v6536 = vunpack.c.h.b16 %v6395
    %v6537 = vunpack.c.l.b16 %v6396
    %v6538 = vunpack.c.h.b16 %v6396
    %v6539 = vunpack.c.l.b16 %v6397
    %v6540 = vunpack.c.h.b16 %v6397
    %v6541 = vunpack.c.l.b16 %v6398
    %v6542 = vunpack.c.h.b16 %v6398
    %v6543 = vunpack.c.l.b16 %v6399
    %v6544 = vunpack.c.h.b16 %v6399
    %v6545 = vunpack.c.l.b16 %v6400
    %v6546 = vunpack.c.h.b16 %v6400
    %v6547 = vunpack.c.l.b16 %v6401
    %v6548 = vunpack.c.h.b16 %v6401
    %v6549 = vunpack.c.l.b16 %v6402
    %v6550 = vunpack.c.h.b16 %v6402
    %v6551 = vunpack.c.l.b16 %v6403
    %v6552 = vunpack.c.h.b16 %v6403
    %v6553 = vunpack.c.l.b16 %v6404
    %v6554 = vunpack.c.h.b16 %v6404
    %v6555 = vunpack.c.l.b16 %v6405
    %v6556 = vunpack.c.h.b16 %v6405
    %v6557 = vunpack.c.l.b16 %v6406
    %v6558 = vunpack.c.h.b16 %v6406
    %v6559 = vunpack.c.l.b16 %v6407
    %v6560 = vunpack.c.h.b16 %v6407
    %v6561 = vunpack.c.l.b16 %v6408
    %v6562 = vunpack.c.h.b16 %v6408
    %v6563 = vunpack.c.l.b16 %v6409
    %v6564 = vunpack.c.h.b16 %v6409
    %v6565 = vunpack.c.l.b16 %v6410
    %v6566 = vunpack.c.h.b16 %v6410
    %v6567 = vunpack.c.l.b16 %v6411
    %v6568 = vunpack.c.h.b16 %v6411
    %v6569 = vunpack.c.l.b16 %v6412
    %v6570 = vunpack.c.h.b16 %v6412
    %v6571 = vunpack.c.l.b16 %v6413
    %v6572 = vunpack.c.h.b16 %v6413
    %v6573 = vunpack.c.l.b16 %v6414
    %v6574 = vunpack.c.h.b16 %v6414
    %v6575 = vunpack.c.l.b16 %v6415
    %v6576 = vunpack.c.h.b16 %v6415
    %v6577 = vunpack.c.l.b16 %v6416
    %v6578 = vunpack.c.h.b16 %v6416
    %v6579 = vunpack.c.l.b16 %v6417
    %v6580 = vunpack.c.h.b16 %v6417
    %v6581 = vunpack.c.l.b16 %v6418
    %v6582 = vunpack.c.h.b16 %v6418
    %v6583 = vunpack.c.l.b16 %v6419
    %v6584 = vunpack.c.h.b16 %v6419
    %v6585 = vunpack.c.l.b16 %v6420
    %v6586 = vunpack.c.h.b16 %v6420
    %v6587 = vunpack.c.l.b16 %v6421
    %v6588 = vunpack.c.h.b16 %v6421
    %v6589 = vunpack.c.l.b16 %v6422
    %v6590 = vunpack.c.h.b16 %v6422
    %v6591 = vunpack.c.l.b16 %v6423
    %v6592 = vunpack.c.h.b16 %v6423
    %v6593 = vunpack.c.l.b16 %v6424
    %v6594 = vunpack.c.h.b16 %v6424
    %v6595 = vunpack.c.l.b16 %v6425
    %v6596 = vunpack.c.h.b16 %v6425
    %v6597 = vunpack.c.l.b16 %v6426
    %v6598 = vunpack.c.h.b16 %v6426
    %v6599 = vunpack.c.l.b16 %v6427
    %v6600 = vunpack.c.h.b16 %v6427
    %v6601 = vunpack.c.l.b16 %v6428
    %v6602 = vunpack.c.h.b16 %v6428
    %v6603 = vunpack.c.l.b16 %v6429
    %v6604 = vunpack.c.h.b16 %v6429
    %v6605 = vunpack.c.l.b16 %v6430
    %v6606 = vunpack.c.h.b16 %v6430
    %v6607 = vunpack.c.l.b16 %v6431
    %v6608 = vunpack.c.h.b16 %v6431
    %v6609 = vunpack.c.l.b16 %v6432
    %v6610 = vunpack.c.h.b16 %v6432
    %v6611 = vunpack.c.l.b16 %v6433
    %v6612 = vunpack.c.h.b16 %v6433
    %v6613 = vunpack.c.l.b16 %v6434
    %v6614 = vunpack.c.h.b16 %v6434
    %v6615 = vunpack.c.l.b16 %v6435
    %v6616 = vunpack.c.h.b16 %v6435
    %v6617 = vunpack.c.l.b16 %v6436
    %v6618 = vunpack.c.h.b16 %v6436
    %v6619 = vunpack.c.l.b16 %v6437
    %v6620 = vunpack.c.h.b16 %v6437
    %v6621 = vunpack.c.l.b16 %v6438
    %v6622 = vunpack.c.h.b16 %v6438
    %v6623 = vunpack.c.l.b16 %v6439
    %v6624 = vunpack.c.h.b16 %v6439
    %v6625 = vunpack.c.l.b16 %v6440
    %v6626 = vunpack.c.h.b16 %v6440
    %v6627 = vunpack.c.l.b16 %v6441
    %v6628 = vunpack.c.h.b16 %v6441
    %v6629 = vunpack.c.l.b16 %v6442
    %v6630 = vunpack.c.h.b16 %v6442
    %v6631 = vunpack.c.l.b16 %v6443
    %v6632 = vunpack.c.h.b16 %v6443
    %v6633 = vunpack.c.l.b16 %v6444
    %v6634 = vunpack.c.h.b16 %v6444
    %v6635 = vunpack.c.l.b16 %v6445
    %v6636 = vunpack.c.h.b16 %v6445
    %v6637 = vunpack.c.l.b16 %v6446
    %v6638 = vunpack.c.h.b16 %v6446
    %v6639 = vunpack.c.l.b16 %v6447
    %v6640 = vunpack.c.h.b16 %v6447
    %v6641 = vunpack.c.l.b16 %v6448
    %v6642 = vunpack.c.h.b16 %v6448
    %v6643 = vunpack.c.l.b16 %v6449
    %v6644 = vunpack.c.h.b16 %v6449
    %v6645 = vunpack.c.l.b16 %v6450
    %v6646 = vunpack.c.h.b16 %v6450
    %v6647 = vunpack.c.l.b16 %v6451
    %v6648 = vunpack.c.h.b16 %v6451
    %v6649 = vunpack.c.l.b16 %v6452
    %v6650 = vunpack.c.h.b16 %v6452
    %v6651 = vunpack.c.l.b16 %v6453
    %v6652 = vunpack.c.h.b16 %v6453
    %v6653 = vunpack.c.l.b16 %v6454
    %v6654 = vunpack.c.h.b16 %v6454
    %v6655 = vpack.c.b16 %v6529, %v6527
    %v6656 = vpack.c.b16 %v6530, %v6528
    %v6657 = vpack.c.b16 %v6533, %v6531
    %v6658 = vpack.c.b16 %v6534, %v6532
    %v6659 = vpack.c.b16 %v6537, %v6535
    %v6660 = vpack.c.b16 %v6538, %v6536
    %v6661 = vpack.c.b16 %v6541, %v6539
    %v6662 = vpack.c.b16 %v6542, %v6540
    %v6663 = vpack.c.b16 %v6545, %v6543
    %v6664 = vpack.c.b16 %v6546, %v6544
    %v6665 = vpack.c.b16 %v6549, %v6547
    %v6666 = vpack.c.b16 %v6550, %v6548
    %v6667 = vpack.c.b16 %v6553, %v6551
    %v6668 = vpack.c.b16 %v6554, %v6552
    %v6669 = vpack.c.b16 %v6557, %v6555
    %v6670 = vpack.c.b16 %v6558, %v6556
    %v6671 = vpack.c.b16 %v6561, %v6559
    %v6672 = vpack.c.b16 %v6562, %v6560
    %v6673 = vpack.c.b16 %v6565, %v6563
    %v6674 = vpack.c.b16 %v6566, %v6564
    %v6675 = vpack.c.b16 %v6569, %v6567
    %v6676 = vpack.c.b16 %v6570, %v6568
    %v6677 = vpack.c.b16 %v6573, %v6571
    %v6678 = vpack.c.b16 %v6574, %v6572
    %v6679 = vpack.c.b16 %v6577, %v6575
    %v6680 = vpack.c.b16 %v6578, %v6576
    %v6681 = vpack.c.b16 %v6581, %v6579
    %v6682 = vpack.c.b16 %v6582, %v6580
    %v6683 = vpack.c.b16 %v6585, %v6583
    %v6684 = vpack.c.b16 %v6586, %v6584
    %v6685 = vpack.c.b16 %v6589, %v6587
    %v6686 = vpack.c.b16 %v6590, %v6588
    %v6687 = vpack.c.b16 %v6593, %v6591
    %v6688 = vpack.c.b16 %v6594, %v6592
    %v6689 = vpack.c.b16 %v6597, %v6595
    %v6690 = vpack.c.b16 %v6598, %v6596
    %v6691 = vpack.c.b16 %v6601, %v6599
    %v6692 = vpack.c.b16 %v6602, %v6600
    %v6693 = vpack.c.b16 %v6605, %v6603
    %v6694 = vpack.c.b16 %v6606, %v6604
    %v6695 = vpack.c.b16 %v6609, %v6607
    %v6696 = vpack.c.b16 %v6610, %v6608
    %v6697 = vpack.c.b16 %v6613, %v6611
    %v6698 = vpack.c.b16 %v6614, %v6612
    %v6699 = vpack.c.b16 %v6617, %v6615
    %v6700 = vpack.c.b16 %v6618, %v6616
    %v6701 = vpack.c.b16 %v6621, %v6619
    %v6702 = vpack.c.b16 %v6622, %v6620
    %v6703 = vpack.c.b16 %v6625, %v6623
    %v6704 = vpack.c.b16 %v6626, %v6624
    %v6705 = vpack.c.b16 %v6629, %v6627
    %v6706 = vpack.c.b16 %v6630, %v6628
    %v6707 = vpack.c.b16 %v6633, %v6631
    %v6708 = vpack.c.b16 %v6634, %v6632
    %v6709 = vpack.c.b16 %v6637, %v6635
    %v6710 = vpack.c.b16 %v6638, %v6636
    %v6711 = vpack.c.b16 %v6641, %v6639
    %v6712 = vpack.c.b16 %v6642, %v6640
    %v6713 = vpack.c.b16 %v6645, %v6643
    %v6714 = vpack.c.b16 %v6646, %v6644
    %v6715 = vpack.c.b16 %v6649, %v6647
    %v6716 = vpack.c.b16 %v6650, %v6648
    %v6717 = vpack.c.b16 %v6653, %v6651
    %v6718 = vpack.c.b16 %v6654, %v6652
    %6783 = vmatprep.subr.bf16.mxu0 %v6670
    %6784 = vmatpush1.bf16.msra.mxu0 %v6669
    %6785 = vmatprep.subr.bf16.mxu0 %v6668
    %6786 = vmatpush1.bf16.msra.mxu0 %v6667
    %6787 = vmatprep.subr.bf16.mxu0 %v6666
    %6788 = vmatpush1.bf16.msra.mxu0 %v6665
    %6789 = vmatprep.subr.bf16.mxu0 %v6664
    %6790 = vmatpush1.bf16.msra.mxu0 %v6663
    %6791 = vmatprep.subr.bf16.mxu0 %v6662
    %6792 = vmatpush1.bf16.msra.mxu0 %v6661
    %6793 = vmatprep.subr.bf16.mxu0 %v6660
    %6794 = vmatpush1.bf16.msra.mxu0 %v6659
    %6795 = vmatprep.subr.bf16.mxu0 %v6658
    %6796 = vmatpush1.bf16.msra.mxu0 %v6657
    %6797 = vmatprep.subr.bf16.mxu0 %v6656
    %6798 = vmatpush1.bf16.msra.mxu0 %v6655
    %6799 = vmatprep.subr.bf16.mxu0 %v6686
    %6800 = vmatpush2.bf16.msra.mxu0 %v6685
    %6801 = vmatprep.subr.bf16.mxu0 %v6684
    %6802 = vmatpush2.bf16.msra.mxu0 %v6683
    %6803 = vmatprep.subr.bf16.mxu0 %v6682
    %6804 = vmatpush2.bf16.msra.mxu0 %v6681
    %6805 = vmatprep.subr.bf16.mxu0 %v6680
    %6806 = vmatpush2.bf16.msra.mxu0 %v6679
    %6807 = vmatprep.subr.bf16.mxu0 %v6678
    %6808 = vmatpush2.bf16.msra.mxu0 %v6677
    %6809 = vmatprep.subr.bf16.mxu0 %v6676
    %6810 = vmatpush2.bf16.msra.mxu0 %v6675
    %6811 = vmatprep.subr.bf16.mxu0 %v6674
    %6812 = vmatpush2.bf16.msra.mxu0 %v6673
    %6813 = vmatprep.subr.bf16.mxu0 %v6672
    %6814 = vmatpush2.bf16.msra.mxu0 %v6671
    %6815 = vmatprep.mubr.bf16.mxu0 %v6376
    %6816 = vmatmul.mubr.bf16.gmra.mxu0 %v6375
    %v6817 = vpop.f32.mrf.mxu0
    %v6818 = vadd.f32 %v6458, %v6817
    %v6819 = vpop.f32.mrf.mxu0
    %v6820 = vadd.f32 %v6462, %v6819
    %v6821 = vpop.f32.mrf.mxu0
    %v6822 = vadd.f32 %v6458, %v6821
    %v6823 = vpop.f32.mrf.mxu0
    %v6824 = vadd.f32 %v6462, %v6823
    %6825 = vmatprep.mubr.bf16.mxu0 %v6380
    %6826 = vmatmul.mubr.bf16.gmra.mxu0 %v6379
    %v6827 = vpop.f32.mrf.mxu0
    %v6828 = vadd.f32 %v6458, %v6827
    %v6829 = vpop.f32.mrf.mxu0
    %v6830 = vadd.f32 %v6462, %v6829
    %v6831 = vpop.f32.mrf.mxu0
    %v6832 = vadd.f32 %v6458, %v6831
    %v6833 = vpop.f32.mrf.mxu0
    %v6834 = vadd.f32 %v6462, %v6833
    %6835 = vmatprep.mubr.bf16.mxu0 %v6384
    %6836 = vmatmul.mubr.bf16.gmra.mxu0 %v6383
    %v6837 = vpop.f32.mrf.mxu0
    %v6838 = vadd.f32 %v6458, %v6837
    %v6839 = vpop.f32.mrf.mxu0
    %v6840 = vadd.f32 %v6462, %v6839
    %v6841 = vpop.f32.mrf.mxu0
    %v6842 = vadd.f32 %v6458, %v6841
    %v6843 = vpop.f32.mrf.mxu0
    %v6844 = vadd.f32 %v6462, %v6843
    %6845 = vmatprep.mubr.bf16.mxu0 %v6388
    %6846 = vmatmul.mubr.bf16.gmra.mxu0 %v6387
    %v6847 = vpop.f32.mrf.mxu0
    %v6848 = vadd.f32 %v6458, %v6847
    %v6849 = vpop.f32.mrf.mxu0
    %v6850 = vadd.f32 %v6462, %v6849
    %v6851 = vpop.f32.mrf.mxu0
    %v6852 = vadd.f32 %v6458, %v6851
    %v6853 = vpop.f32.mrf.mxu0
    %v6854 = vadd.f32 %v6462, %v6853
    %6855 = vdwg.mxu0
    %6856 = vmatprep.subr.bf16.mxu0 %v6702
    %6857 = vmatpush1.bf16.msra.mxu0 %v6701
    %6858 = vmatprep.subr.bf16.mxu0 %v6700
    %6859 = vmatpush1.bf16.msra.mxu0 %v6699
    %6860 = vmatprep.subr.bf16.mxu0 %v6698
    %6861 = vmatpush1.bf16.msra.mxu0 %v6697
    %6862 = vmatprep.subr.bf16.mxu0 %v6696
    %6863 = vmatpush1.bf16.msra.mxu0 %v6695
    %6864 = vmatprep.subr.bf16.mxu0 %v6694
    %6865 = vmatpush1.bf16.msra.mxu0 %v6693
    %6866 = vmatprep.subr.bf16.mxu0 %v6692
    %6867 = vmatpush1.bf16.msra.mxu0 %v6691
    %6868 = vmatprep.subr.bf16.mxu0 %v6690
    %6869 = vmatpush1.bf16.msra.mxu0 %v6689
    %6870 = vmatprep.subr.bf16.mxu0 %v6688
    %6871 = vmatpush1.bf16.msra.mxu0 %v6687
    %6872 = vmatprep.subr.bf16.mxu0 %v6718
    %6873 = vmatpush2.bf16.msra.mxu0 %v6717
    %6874 = vmatprep.subr.bf16.mxu0 %v6716
    %6875 = vmatpush2.bf16.msra.mxu0 %v6715
    %6876 = vmatprep.subr.bf16.mxu0 %v6714
    %6877 = vmatpush2.bf16.msra.mxu0 %v6713
    %6878 = vmatprep.subr.bf16.mxu0 %v6712
    %6879 = vmatpush2.bf16.msra.mxu0 %v6711
    %6880 = vmatprep.subr.bf16.mxu0 %v6710
    %6881 = vmatpush2.bf16.msra.mxu0 %v6709
    %6882 = vmatprep.subr.bf16.mxu0 %v6708
    %6883 = vmatpush2.bf16.msra.mxu0 %v6707
    %6884 = vmatprep.subr.bf16.mxu0 %v6706
    %6885 = vmatpush2.bf16.msra.mxu0 %v6705
    %6886 = vmatprep.subr.bf16.mxu0 %v6704
    %6887 = vmatpush2.bf16.msra.mxu0 %v6703
    %6888 = vmatprep.mubr.bf16.mxu0 %v6378
    %6889 = vmatmul.mubr.bf16.gmra.mxu0 %v6377
    %v6890 = vpop.f32.mrf.mxu0
    %v6891 = vadd.f32 %v6818, %v6890
    %v6892 = vpop.f32.mrf.mxu0
    %v6893 = vadd.f32 %v6820, %v6892
    %v6894 = vpop.f32.mrf.mxu0
    %v6895 = vadd.f32 %v6822, %v6894
    %v6896 = vpop.f32.mrf.mxu0
    %v6897 = vadd.f32 %v6824, %v6896
    %6898 = vmatprep.mubr.bf16.mxu0 %v6382
    %6899 = vmatmul.mubr.bf16.gmra.mxu0 %v6381
    %v6900 = vpop.f32.mrf.mxu0
    %v6901 = vadd.f32 %v6828, %v6900
    %v6902 = vpop.f32.mrf.mxu0
    %v6903 = vadd.f32 %v6830, %v6902
    %v6904 = vpop.f32.mrf.mxu0
    %v6905 = vadd.f32 %v6832, %v6904
    %v6906 = vpop.f32.mrf.mxu0
    %v6907 = vadd.f32 %v6834, %v6906
    %6908 = vmatprep.mubr.bf16.mxu0 %v6386
    %6909 = vmatmul.mubr.bf16.gmra.mxu0 %v6385
    %v6910 = vpop.f32.mrf.mxu0
    %v6911 = vadd.f32 %v6838, %v6910
    %v6912 = vpop.f32.mrf.mxu0
    %v6913 = vadd.f32 %v6840, %v6912
    %v6914 = vpop.f32.mrf.mxu0
    %v6915 = vadd.f32 %v6842, %v6914
    %v6916 = vpop.f32.mrf.mxu0
    %v6917 = vadd.f32 %v6844, %v6916
    %6918 = vmatprep.mubr.bf16.mxu0 %v6390
    %6919 = vmatmul.mubr.bf16.gmra.mxu0 %v6389
    %v6920 = vpop.f32.mrf.mxu0
    %v6921 = vadd.f32 %v6848, %v6920
    %v6922 = vpop.f32.mrf.mxu0
    %v6923 = vadd.f32 %v6850, %v6922
    %v6924 = vpop.f32.mrf.mxu0
    %v6925 = vadd.f32 %v6852, %v6924
    %v6926 = vpop.f32.mrf.mxu0
    %v6927 = vadd.f32 %v6854, %v6926
    %6928 = vdwg.mxu0
    %v6929 = vadd.f32 %v6891, %v5511
    %v6930 = vadd.f32 %v6893, %v5512
    %v6931 = vadd.f32 %v6895, %v5513
    %v6932 = vadd.f32 %v6897, %v5514
    %v6933 = vadd.f32 %v6901, %v5515
    %v6934 = vadd.f32 %v6903, %v5516
    %v6935 = vadd.f32 %v6905, %v5517
    %v6936 = vadd.f32 %v6907, %v5518
    %v6937 = vadd.f32 %v6911, %v5519
    %v6938 = vadd.f32 %v6913, %v5520
    %v6939 = vadd.f32 %v6915, %v5521
    %v6940 = vadd.f32 %v6917, %v5522
    %v6941 = vadd.f32 %v6921, %v5523
    %v6942 = vadd.f32 %v6923, %v5524
    %v6943 = vadd.f32 %v6925, %v5525
    %v6944 = vadd.f32 %v6927, %v5526
    %v6945 = vadd.f32 %v6929, %v6930
    %6946 = vadd.xlane.f32.xlu0 %v6945
    %v6947 = vpop.xlane.xlu0 %6946
    %v6948 = vadd.f32 %v6931, %v6932
    %6949 = vadd.xlane.f32.xlu0 %v6948
    %v6950 = vpop.xlane.xlu0 %6949
    %v6951 = vadd.f32 %v6933, %v6934
    %6952 = vadd.xlane.f32.xlu0 %v6951
    %v6953 = vpop.xlane.xlu0 %6952
    %v6954 = vadd.f32 %v6935, %v6936
    %6955 = vadd.xlane.f32.xlu0 %v6954
    %v6956 = vpop.xlane.xlu0 %6955
    %v6957 = vadd.f32 %v6937, %v6938
    %6958 = vadd.xlane.f32.xlu0 %v6957
    %v6959 = vpop.xlane.xlu0 %6958
    %v6960 = vadd.f32 %v6939, %v6940
    %6961 = vadd.xlane.f32.xlu0 %v6960
    %v6962 = vpop.xlane.xlu0 %6961
    %v6963 = vadd.f32 %v6941, %v6942
    %6964 = vadd.xlane.f32.xlu0 %v6963
    %v6965 = vpop.xlane.xlu0 %6964
    %v6966 = vadd.f32 %v6943, %v6944
    %6967 = vadd.xlane.f32.xlu0 %v6966
    %v6968 = vpop.xlane.xlu0 %6967
    %v6969 = vmul.f32 %v6947, %v2690
    %v6970 = vmul.f32 %v6950, %v2690
    %v6971 = vmul.f32 %v6953, %v2690
    %v6972 = vmul.f32 %v6956, %v2690
    %v6973 = vmul.f32 %v6959, %v2690
    %v6974 = vmul.f32 %v6962, %v2690
    %v6975 = vmul.f32 %v6965, %v2690
    %v6976 = vmul.f32 %v6968, %v2690
    %v6977 = vsub.f32 %v6929, %v6969
    %v6978 = vsub.f32 %v6930, %v6969
    %v6979 = vsub.f32 %v6931, %v6970
    %v6980 = vsub.f32 %v6932, %v6970
    %v6981 = vsub.f32 %v6933, %v6971
    %v6982 = vsub.f32 %v6934, %v6971
    %v6983 = vsub.f32 %v6935, %v6972
    %v6984 = vsub.f32 %v6936, %v6972
    %v6985 = vsub.f32 %v6937, %v6973
    %v6986 = vsub.f32 %v6938, %v6973
    %v6987 = vsub.f32 %v6939, %v6974
    %v6988 = vsub.f32 %v6940, %v6974
    %v6989 = vsub.f32 %v6941, %v6975
    %v6990 = vsub.f32 %v6942, %v6975
    %v6991 = vsub.f32 %v6943, %v6976
    %v6992 = vsub.f32 %v6944, %v6976
    %v6993 = vmul.f32 %v6977, %v6977
    %v6994 = vmul.f32 %v6978, %v6978
    %v6995 = vmul.f32 %v6979, %v6979
    %v6996 = vmul.f32 %v6980, %v6980
    %v6997 = vmul.f32 %v6981, %v6981
    %v6998 = vmul.f32 %v6982, %v6982
    %v6999 = vmul.f32 %v6983, %v6983
    %v7000 = vmul.f32 %v6984, %v6984
    %v7001 = vmul.f32 %v6985, %v6985
    %v7002 = vmul.f32 %v6986, %v6986
    %v7003 = vmul.f32 %v6987, %v6987
    %v7004 = vmul.f32 %v6988, %v6988
    %v7005 = vmul.f32 %v6989, %v6989
    %v7006 = vmul.f32 %v6990, %v6990
    %v7007 = vmul.f32 %v6991, %v6991
    %v7008 = vmul.f32 %v6992, %v6992
    %v7009 = vadd.f32 %v6993, %v6994
    %7010 = vadd.xlane.f32.xlu0 %v7009
    %v7011 = vpop.xlane.xlu0 %7010
    %v7012 = vadd.f32 %v6995, %v6996
    %7013 = vadd.xlane.f32.xlu0 %v7012
    %v7014 = vpop.xlane.xlu0 %7013
    %v7015 = vadd.f32 %v6997, %v6998
    %7016 = vadd.xlane.f32.xlu0 %v7015
    %v7017 = vpop.xlane.xlu0 %7016
    %v7018 = vadd.f32 %v6999, %v7000
    %7019 = vadd.xlane.f32.xlu0 %v7018
    %v7020 = vpop.xlane.xlu0 %7019
    %v7021 = vadd.f32 %v7001, %v7002
    %7022 = vadd.xlane.f32.xlu0 %v7021
    %v7023 = vpop.xlane.xlu0 %7022
    %v7024 = vadd.f32 %v7003, %v7004
    %7025 = vadd.xlane.f32.xlu0 %v7024
    %v7026 = vpop.xlane.xlu0 %7025
    %v7027 = vadd.f32 %v7005, %v7006
    %7028 = vadd.xlane.f32.xlu0 %v7027
    %v7029 = vpop.xlane.xlu0 %7028
    %v7030 = vadd.f32 %v7007, %v7008
    %7031 = vadd.xlane.f32.xlu0 %v7030
    %v7032 = vpop.xlane.xlu0 %7031
    %v7033 = vmul.f32 %v7011, %v2690
    %v7034 = vmul.f32 %v7014, %v2690
    %v7035 = vmul.f32 %v7017, %v2690
    %v7036 = vmul.f32 %v7020, %v2690
    %v7037 = vmul.f32 %v7023, %v2690
    %v7038 = vmul.f32 %v7026, %v2690
    %v7039 = vmul.f32 %v7029, %v2690
    %v7040 = vmul.f32 %v7032, %v2690
    %v7041 = vadd.f32 %v7033, 1e-06
    %v7042 = vadd.f32 %v7034, 1e-06
    %v7043 = vadd.f32 %v7035, 1e-06
    %v7044 = vadd.f32 %v7036, 1e-06
    %v7045 = vadd.f32 %v7037, 1e-06
    %v7046 = vadd.f32 %v7038, 1e-06
    %v7047 = vadd.f32 %v7039, 1e-06
    %v7048 = vadd.f32 %v7040, 1e-06
    %v7049 = vrsqrt.pop %v7041
    %v7050 = vrsqrt.pop %v7042
    %v7051 = vrsqrt.pop %v7043
    %v7052 = vrsqrt.pop %v7044
    %v7053 = vrsqrt.pop %v7045
    %v7054 = vrsqrt.pop %v7046
    %v7055 = vrsqrt.pop %v7047
    %v7056 = vrsqrt.pop %v7048
    %v7057 = vmul.f32 %v6977, %v7049
    %v7058 = vmul.f32 %v6978, %v7049
    %v7059 = vmul.f32 %v6979, %v7050
    %v7060 = vmul.f32 %v6980, %v7050
    %v7061 = vmul.f32 %v6981, %v7051
    %v7062 = vmul.f32 %v6982, %v7051
    %v7063 = vmul.f32 %v6983, %v7052
    %v7064 = vmul.f32 %v6984, %v7052
    %v7065 = vmul.f32 %v6985, %v7053
    %v7066 = vmul.f32 %v6986, %v7053
    %v7067 = vmul.f32 %v6987, %v7054
    %v7068 = vmul.f32 %v6988, %v7054
    %v7069 = vmul.f32 %v6989, %v7055
    %v7070 = vmul.f32 %v6990, %v7055
    %v7071 = vmul.f32 %v6991, %v7056
    %v7072 = vmul.f32 %v6992, %v7056
    %v7073 = vlaneseq
    %v7074 = vshrl.u32 %v7073, 7
    %v7075 = vsub.s32 4, %v7074
    %v7076 = vrot.slane %v291, %v7075
    %v7077 = vlaneseq
    %v7078 = vshrl.u32 %v7077, 7
    %v7079 = vsub.s32 4, %v7078
    %v7080 = vrot.slane %v292, %v7079
    %v7081 = vmul.f32 %v7057, %v7076
    %v7082 = vmul.f32 %v7058, %v7080
    %v7083 = vmul.f32 %v7059, %v7076
    %v7084 = vmul.f32 %v7060, %v7080
    %v7085 = vmul.f32 %v7061, %v7076
    %v7086 = vmul.f32 %v7062, %v7080
    %v7087 = vmul.f32 %v7063, %v7076
    %v7088 = vmul.f32 %v7064, %v7080
    %v7089 = vmul.f32 %v7065, %v7076
    %v7090 = vmul.f32 %v7066, %v7080
    %v7091 = vmul.f32 %v7067, %v7076
    %v7092 = vmul.f32 %v7068, %v7080
    %v7093 = vmul.f32 %v7069, %v7076
    %v7094 = vmul.f32 %v7070, %v7080
    %v7095 = vmul.f32 %v7071, %v7076
    %v7096 = vmul.f32 %v7072, %v7080
    %v7097 = vlaneseq
    %v7098 = vshrl.u32 %v7097, 7
    %v7099 = vsub.s32 5, %v7098
    %v7100 = vrot.slane %v291, %v7099
    %v7101 = vlaneseq
    %v7102 = vshrl.u32 %v7101, 7
    %v7103 = vsub.s32 5, %v7102
    %v7104 = vrot.slane %v292, %v7103
    %v7105 = vadd.f32 %v7081, %v7100
    %v7106 = vadd.f32 %v7082, %v7104
    %v7107 = vadd.f32 %v7083, %v7100
    %v7108 = vadd.f32 %v7084, %v7104
    %v7109 = vadd.f32 %v7085, %v7100
    %v7110 = vadd.f32 %v7086, %v7104
    %v7111 = vadd.f32 %v7087, %v7100
    %v7112 = vadd.f32 %v7088, %v7104
    %v7113 = vadd.f32 %v7089, %v7100
    %v7114 = vadd.f32 %v7090, %v7104
    %v7115 = vadd.f32 %v7091, %v7100
    %v7116 = vadd.f32 %v7092, %v7104
    %v7117 = vadd.f32 %v7093, %v7100
    %v7118 = vadd.f32 %v7094, %v7104
    %v7119 = vadd.f32 %v7095, %v7100
    %v7120 = vadd.f32 %v7096, %v7104
    %7121 = vst [vmem:[#allocation23] sm:$0xff] %v7105
    %7122 = vst [vmem:[#allocation23 + $0x8] sm:$0xff] %v7106
    %7123 = vst [vmem:[#allocation23 + $0x10] sm:$0xff] %v7107
    %7124 = vst [vmem:[#allocation23 + $0x18] sm:$0xff] %v7108
    %7125 = vst [vmem:[#allocation23 + $0x20] sm:$0xff] %v7109
    %7126 = vst [vmem:[#allocation23 + $0x28] sm:$0xff] %v7110
    %7127 = vst [vmem:[#allocation23 + $0x30] sm:$0xff] %v7111
    %7128 = vst [vmem:[#allocation23 + $0x38] sm:$0xff] %v7112
    %7129 = vst [vmem:[#allocation23 + $0x40] sm:$0xff] %v7113
    %7130 = vst [vmem:[#allocation23 + $0x48] sm:$0xff] %v7114
    %7131 = vst [vmem:[#allocation23 + $0x50] sm:$0xff] %v7115
    %7132 = vst [vmem:[#allocation23 + $0x58] sm:$0xff] %v7116
    %7133 = vst [vmem:[#allocation23 + $0x60] sm:$0xff] %v7117
    %7134 = vst [vmem:[#allocation23 + $0x68] sm:$0xff] %v7118
    %7135 = vst [vmem:[#allocation23 + $0x70] sm:$0xff] %v7119
    %7136 = vst [vmem:[#allocation23 + $0x78] sm:$0xff] %v7120
    // Predicated region
    $region110: #{decoder_block.1} parent=1 // pred_check
      _
    $region111: #{decoder_block.1} parent=1 // pred_check_branch
      %7138 = sbr.rel (0) target = $region113
    $region112: #{decoder_block.1} parent=1 // pred_region
      %s7140 = ssub.s32 2048, 2048
      %7141 = vsyncadd [#allocation4], %s7140
      %s7142 = sshll.u32 [#allocation23], 4
      %s7143 = int_to_ptr.vmem [resolvable:$true] %s7142
      %7148 = dma.vmem_to_hbm [thread:$0]  %s7143, 2048, %s14, [#allocation4], 256, 256, 16
    $region113: #{decoder_block.1} parent=1 // pred_fallthru
      _
    // Predicated region
    $region114: #{decoder_block.1} parent=1 // pred_check
      _
    $region115: #{decoder_block.1} parent=1 // pred_check_branch
      %7150 = sbr.rel (0) target = $region117
    $region116: #{decoder_block.1} parent=1 // pred_region
      %7151 = dma.done [#allocation4], 2048
    $region117: #{decoder_block.1} parent=1 // pred_fallthru
      _
    %7152 = vsyncpa [#allocation3], 1
    %7153 = vsyncpa [#allocation6], 1
    %7154 = vsyncpa [#allocation9], 1
    %7155 = vsyncpa [#allocation12], 1
    %7156 = vsyncpa [#allocation15], 1
    %7157 = vsyncpa [#allocation18], 1
    %7158 = vsyncpa [#allocation21], 1
    %7159 = vsyncpa [#allocation4], 1

</llo_original>
